<compile_context>
chip_gen: v7x
topology: tpu7x:2x2x1
jax: 0.10.0
libtpu: 0.0.40
codegen_flags: <defaults>
</compile_context>

<pallas_src>
import functools

import jax
import jax.numpy as jnp
from jax.experimental import pallas as pl
from jax.experimental.pallas import tpu as pltpu


# ----------------------------- Pallas kernel ------------------------------- #

def _gemm_bias_act_kernel(w_ref, p_ref, b_ref, o_ref, *, relu):
    # w_ref: (1, O, K) bf16   p_ref: (1, K, tm) bf16
    # b_ref: (O, 1)  f32      o_ref: (1, O, tm) out_dtype
    acc = jnp.dot(w_ref[0], p_ref[0], preferred_element_type=jnp.float32)
    out = acc + b_ref[...]
    if relu:
        out = jnp.maximum(out, 0.0)
    o_ref[0] = out.astype(o_ref.dtype)


def _choose_tm(M, K, O, out_bytes):
    """Pick lane-tile tm and (possibly padded) Mp under a v7x-safe VMEM budget."""
    budget = 40 << 20  # conservative: v7x has 64 MiB VMEM per TensorCore

    def fits(tm):
        blk = O * K * 2 + 8 * 128 * 4 + tm * (K * 2 + O * out_bytes)
        return 2 * blk <= budget  # double-buffered

    # Prefer >=2 lane-dense blocks so the "parallel" axis can feed both v7x TCs.
    for tm in (2048, 1024, 512, 256):
        if M % tm == 0 and M // tm >= 2 and fits(tm):
            return tm, M
    # Single full-width block (block dim == array dim -> no 128 constraint).
    if fits(M):
        return M, M
    # Fallback: pad the ragged tail (not hit at the shapes in this script).
    # TODO(synk): mask the tail store in-kernel instead of padding in HBM.
    for tm in (2048, 1024, 512, 256, 128):
        if fits(tm):
            return tm, ((M + tm - 1) // tm) * tm
    return 128, ((M + 127) // 128) * 128


def _fused_gemm(w, p_bf, bias, *, relu, out_dtype):
    """out[g, O, M] = act(w[g, O, K] @ p[g, K, M] + bias[O]).

    w: float32 [G, O, K] (cast to bf16 here), p_bf: bf16 [G, K, M],
    bias: f32 [O]. Output: out_dtype [G, O, M], lane axis = M.
    """
    G, O, K = w.shape
    _, _, M = p_bf.shape
    out_bytes = jnp.dtype(out_dtype).itemsize
    tm, Mp = _choose_tm(M, K, O, out_bytes)
    if Mp != M:
        p_bf = jnp.pad(p_bf, ((0, 0), (0, 0), (0, Mp - M)))
    n_blk = Mp // tm

    w_bf = w.astype(jnp.bfloat16)
    bias2 = bias.reshape(O, 1).astype(jnp.float32)

    in_specs = [
        pl.BlockSpec((1, O, K), lambda g, i: (g, 0, 0)),
        pl.BlockSpec((1, K, tm), lambda g, i: (g, 0, i)),
        pl.BlockSpec((O, 1), lambda g, i: (0, 0)),       # resident (constant index)
    ]
    out_spec = pl.BlockSpec((1, O, tm), lambda g, i: (g, 0, i))

    # Double-buffered block footprint -> explicit VMEM limit (v7x: 64 MiB/TC).
    blk_bytes = 2 * (O * K * 2 + K * tm * 2 + 8 * 128 * 4 + O * tm * out_bytes)
    vmem_limit = int(min(max(2 * blk_bytes + (2 << 20), 8 << 20), 56 << 20))

    out = pl.pallas_call(
        functools.partial(_gemm_bias_act_kernel, relu=relu),
        out_shape=jax.ShapeDtypeStruct((G, O, Mp), out_dtype),
        grid_spec=pltpu.PrefetchScalarGridSpec(
            num_scalar_prefetch=0,
            grid=(G, n_blk),
            in_specs=in_specs,
            out_specs=out_spec,
        ),
        compiler_params=pltpu.CompilerParams(
            dimension_semantics=("parallel", "parallel"),
            vmem_limit_bytes=vmem_limit,
        ),
        cost_estimate=pl.CostEstimate(
            flops=2 * G * O * K * Mp,
            transcendentals=0,
            bytes_accessed=int(G * (2 * O * K + 2 * K * Mp + out_bytes * O * Mp) + 4 * O),
        ),
    )(w_bf, p_bf, bias2)

    return out[:, :, :M] if Mp != M else out


# ------------------------------- JAX glue ---------------------------------- #
# Activations are kept channel-first [C, N, D, H, W] in bf16 between layers.

def _fold_bn(w_flat, bn_params, eps=1e-5):
    """Fold eval-mode BN into a per-out-channel weight scale + bias (f32)."""
    gamma, beta, mean, var = bn_params
    scale = gamma / jnp.sqrt(var + eps)
    return w_flat * scale[:, None], beta - mean * scale


def _im2col_3x3x3(xp_cf, stride):
    """xp_cf: already-padded [C, N, Dp, Hp, Wp] bf16 -> ([27*C, M] bf16, dims)."""
    Cc, N, Dp, Hp, Wp = xp_cf.shape
    Do = (Dp - 3) // stride + 1
    Ho = (Hp - 3) // stride + 1
    Wo = (Wp - 3) // stride + 1
    taps = []
    for kd in range(3):
        for kh in range(3):
            for kw in range(3):
                taps.append(xp_cf[:, :,
                                  kd:kd + stride * Do:stride,
                                  kh:kh + stride * Ho:stride,
                                  kw:kw + stride * Wo:stride])
    patches = jnp.stack(taps, axis=0).reshape(27 * Cc, N * Do * Ho * Wo)
    return patches, (N, Do, Ho, Wo)


def _flatten_conv_weight(w):
    """[O, I, 3, 3, 3] -> [O, 27*I] with (tap-major, channel-minor) K order."""
    O = w.shape[0]
    return jnp.transpose(w, (0, 2, 3, 4, 1)).reshape(O, -1)


def _conv3_bn_act(x_cf, w, bn_params, *, stride, relu, out_dtype):
    """3x3x3 Conv3d (pad=1) + folded BN (+ ReLU), one fused GEMM."""
    O = w.shape[0]
    xp = jnp.pad(x_cf, ((0, 0), (0, 0), (1, 1), (1, 1), (1, 1)))
    patches, (N, Do, Ho, Wo) = _im2col_3x3x3(xp, stride)
    w_flat, bias = _fold_bn(_flatten_conv_weight(w), bn_params)
    out = _fused_gemm(w_flat[None], patches[None], bias, relu=relu, out_dtype=out_dtype)
    return out[0].reshape(O, N, Do, Ho, Wo)


def _deconv3_polyphase(x_cf, w_t, bn_params, *, redir_x, redir_w, redir_bn, out_dtype):
    """ConvTranspose3d(k=3, s=2, p=1, op=1) + BN, fused 1x1x1 redir-conv+BN, ReLU.

    Polyphase decomposition: 8 output-parity stride-1 sub-GEMMs over the
    un-dilated input (no zero-inflated tensor). The redir conv is fused into
    each sub-GEMM by concatenating its input channels along K.

    x_cf:    deconv input [Cin, N, D, H, W] bf16
    w_t:     ConvTranspose weight [Cin, Cout, 3, 3, 3]
    redir_x: redir-conv input [Cr, N, 2D, 2H, 2W] bf16 (spatial == deconv output)
    """
    Cin, Cout = int(w_t.shape[0]), int(w_t.shape[1])
    _, N, D, H, W = x_cf.shape

    # Equivalent forward-conv kernel: flip spatially, swap channel axes; fold BN.
    w_eq = jnp.transpose(jnp.flip(w_t, axis=(2, 3, 4)), (1, 0, 2, 3, 4))  # [Cout, Cin, 3,3,3]
    gamma, beta, mean, var = bn_params
    scale = gamma / jnp.sqrt(var + 1e-5)
    w_eq = w_eq * scale[:, None, None, None, None]
    bias_deconv = beta - mean * scale

    rw, rbias = _fold_bn(redir_w.reshape(Cout, -1), redir_bn)     # [Cout, Cr], [Cout]
    bias = (bias_deconv + rbias).astype(jnp.float32)

    # +1 zero pad at the far end of each axis for the odd-parity "+1" taps.
    xp = jnp.pad(x_cf, ((0, 0), (0, 0), (0, 1), (0, 1), (0, 1)))
    M = N * D * H * W
    Cr = int(redir_x.shape[0])

    # Per-axis polyphase: output parity 0 <- w_eq tap 1 @ input offset 0;
    #                     output parity 1 <- taps (0, +0) and (2, +1).
    AX = {0: ((1, 0),), 1: ((0, 0), (2, 1))}

    per_phase = []
    for pd in (0, 1):
        for ph in (0, 1):
            for pw in (0, 1):
                taps = [(td, th, tw, od, oh, ow)
                        for (td, od) in AX[pd]
                        for (th, oh) in AX[ph]
                        for (tw, ow) in AX[pw]]
                w_cat = jnp.concatenate(
                    [w_eq[:, :, td, th, tw] for (td, th, tw, od, oh, ow) in taps] + [rw],
                    axis=1)                                       # [Cout, ntaps*Cin + Cr]
                p_cat = jnp.concatenate(
                    [xp[:, :, od:od + D, oh:oh + H, ow:ow + W].reshape(Cin, M)
                     for (td, th, tw, od, oh, ow) in taps]
                    + [redir_x[:, :, pd::2, ph::2, pw::2].reshape(Cr, M)],
                    axis=0)                                       # [ntaps*Cin + Cr, M] bf16
                per_phase.append((w_cat, p_cat))

    # Batch phases with equal K into a single grouped pallas call.
    groups = {}
    for idx, (w_cat, p_cat) in enumerate(per_phase):
        groups.setdefault(int(w_cat.shape[1]), []).append((idx, w_cat, p_cat))

    phase_out = [None] * 8
    for _, items in sorted(groups.items()):
        w_g = jnp.stack([w for _, w, _ in items], axis=0)
        p_g = jnp.stack([p for _, _, p in items], axis=0)
        out_g = _fused_gemm(w_g, p_g, bias, relu=True, out_dtype=out_dtype)  # [G, Cout, M]
        for gi, (idx, _, _) in enumerate(items):
            phase_out[idx] = out_g[gi]

    # Interleave the 8 parity phases into [Cout, N, 2D, 2H, 2W].
    stacked = jnp.stack(phase_out, axis=0).reshape(2, 2, 2, Cout, N, D, H, W)
    return jnp.transpose(stacked, (3, 4, 5, 0, 6, 1, 7, 2)).reshape(
        Cout, N, 2 * D, 2 * H, 2 * W)


def hourglass_forward(x, params):
    """x: [N, C, D, H, W] f32 (NCDHW, PyTorch layout)."""
    pp = params
    bf = jnp.bfloat16
    x_cf = jnp.transpose(x, (1, 0, 2, 3, 4)).astype(bf)            # [C, N, D, H, W] bf16

    c1 = _conv3_bn_act(x_cf, pp["conv1_w"], pp["conv1_bn"], stride=2, relu=True, out_dtype=bf)
    c2 = _conv3_bn_act(c1,   pp["conv2_w"], pp["conv2_bn"], stride=1, relu=True, out_dtype=bf)
    c3 = _conv3_bn_act(c2,   pp["conv3_w"], pp["conv3_bn"], stride=2, relu=True, out_dtype=bf)
    c4 = _conv3_bn_act(c3,   pp["conv4_w"], pp["conv4_bn"], stride=1, relu=True, out_dtype=bf)

    # conv5 = ReLU(BN(deconv(c4)) + BN(redir2(c2)))  -- redir fused into the GEMM K axis
    c5 = _deconv3_polyphase(c4, pp["conv5_w"], pp["conv5_bn"],
                            redir_x=c2, redir_w=pp["redir2_w"], redir_bn=pp["redir2_bn"],
                            out_dtype=bf)
    # conv6 = ReLU(BN(deconv(c5)) + BN(redir1(x)))   -- final layer stores f32
    c6 = _deconv3_polyphase(c5, pp["conv6_w"], pp["conv6_bn"],
                            redir_x=x_cf, redir_w=pp["redir1_w"], redir_bn=pp["redir1_bn"],
                            out_dtype=jnp.float32)

    return jnp.transpose(c6, (1, 0, 2, 3, 4))                      # back to NCDHW


# ------------------------------ reference ---------------------------------- #

def _ref_hourglass(x, pp, eps=1e-5):
    def bn(y, bn_params):
        g, b, m, v = bn_params
        sh = (1, -1, 1, 1, 1)
        return (y - m.reshape(sh)) / jnp.sqrt(v.reshape(sh) + eps) * g.reshape(sh) \
            + b.reshape(sh)

    def conv(t, w, stride, pad):
        return jax.lax.conv_general_dilated(
            t, w, window_strides=(stride,) * 3, padding=((pad, pad),) * 3,
            dimension_numbers=("NCDHW", "OIDHW", "NCDHW"))

    def deconv(t, w_t):
        # ConvTranspose3d(k=3, s=2, p=1, output_padding=1)
        w_eq = jnp.transpose(jnp.flip(w_t, axis=(2, 3, 4)), (1, 0, 2, 3, 4))
        return jax.lax.conv_general_dilated(
            t, w_eq, window_strides=(1, 1, 1), padding=((1, 2),) * 3,
            lhs_dilation=(2, 2, 2),
            dimension_numbers=("NCDHW", "OIDHW", "NCDHW"))

    relu = lambda t: jnp.maximum(t, 0.0)
    c1 = relu(bn(conv(x, pp["conv1_w"], 2, 1), pp["conv1_bn"]))
    c2 = relu(bn(conv(c1, pp["conv2_w"], 1, 1), pp["conv2_bn"]))
    c3 = relu(bn(conv(c2, pp["conv3_w"], 2, 1), pp["conv3_bn"]))
    c4 = relu(bn(conv(c3, pp["conv4_w"], 1, 1), pp["conv4_bn"]))
    r2 = bn(conv(c2, pp["redir2_w"], 1, 0), pp["redir2_bn"])
    c5 = relu(bn(deconv(c4, pp["conv5_w"]), pp["conv5_bn"]) + r2)
    r1 = bn(conv(x, pp["redir1_w"], 1, 0), pp["redir1_bn"])
    c6 = relu(bn(deconv(c5, pp["conv6_w"]), pp["conv6_bn"]) + r1)
    return c6


# --------------------------------- main ------------------------------------ #

def _make_bn(key, ch):
    k1, k2, k3, k4 = jax.random.split(key, 4)
    g = 1.0 + 0.1 * jax.random.normal(k1, (ch,), jnp.float32)
    b = 0.1 * jax.random.normal(k2, (ch,), jnp.float32)
    m = 0.1 * jax.random.normal(k3, (ch,), jnp.float32)
    v = jax.random.uniform(k4, (ch,), jnp.float32, minval=0.5, maxval=1.5)
    return (g, b, m, v)


if __name__ == "__main__":
    key = jax.random.PRNGKey(0)
    N, C, D, H, W = 2, 4, 8, 16, 16        # spatial dims divisible by 4 (two stride-2 stages)
    C2 = 2 * C

    keys = jax.random.split(key, 17)
    x = jax.random.normal(keys[0], (N, C, D, H, W), jnp.float32)

    params = {
        # Conv3d weights: [out, in, 3, 3, 3]
        "conv1_w": 0.1 * jax.random.normal(keys[1], (C2, C, 3, 3, 3), jnp.float32),
        "conv1_bn": _make_bn(keys[2], C2),
        "conv2_w": 0.1 * jax.random.normal(keys[3], (C2, C2, 3, 3, 3), jnp.float32),
        "conv2_bn": _make_bn(keys[4], C2),
        "conv3_w": 0.1 * jax.random.normal(keys[5], (C2, C2, 3, 3, 3), jnp.float32),
        "conv3_bn": _make_bn(keys[6], C2),
        "conv4_w": 0.1 * jax.random.normal(keys[7], (C2, C2, 3, 3, 3), jnp.float32),
        "conv4_bn": _make_bn(keys[8], C2),
        # ConvTranspose3d weights: [in, out, 3, 3, 3]
        "conv5_w": 0.1 * jax.random.normal(keys[9], (C2, C2, 3, 3, 3), jnp.float32),
        "conv5_bn": _make_bn(keys[10], C2),
        "conv6_w": 0.1 * jax.random.normal(keys[11], (C2, C, 3, 3, 3), jnp.float32),
        "conv6_bn": _make_bn(keys[12], C),
        # 1x1x1 redir convs: [out, in, 1, 1, 1]
        "redir1_w": 0.1 * jax.random.normal(keys[13], (C, C, 1, 1, 1), jnp.float32),
        "redir1_bn": _make_bn(keys[14], C),
        "redir2_w": 0.1 * jax.random.normal(keys[15], (C2, C2, 1, 1, 1), jnp.float32),
        "redir2_bn": _make_bn(keys[16], C2),
    }

    fwd = jax.jit(hourglass_forward)
    out = jax.block_until_ready(fwd(x, params))

    ref = jax.block_until_ready(jax.jit(_ref_hourglass)(x, params))

    assert out.shape == (N, C, D, H, W), out.shape
    max_err = float(jnp.max(jnp.abs(out - ref)))
    # bf16 MXU operands / bf16 intermediates through 6 chained layers.
    assert jnp.allclose(out, ref, atol=5e-2, rtol=5e-2), max_err
    print("KERNEL_OK")
</pallas_src>

<mosaic_0001>
module attributes {stable_mosaic.version = 11 : i64} {
  func.func @_gemm_bias_act_kernel(%arg0: i32, %arg1: i32, %arg2: memref<1x8x108xbf16, #tpu.memory_space<vmem>>, %arg3: memref<1x108x256xbf16, #tpu.memory_space<vmem>>, %arg4: memref<8x1xf32, #tpu.memory_space<vmem>>, %arg5: memref<1x8x256xbf16, #tpu.memory_space<vmem>>) attributes {dimension_semantics = [#tpu.dimension_semantics<parallel>, #tpu.dimension_semantics<parallel>], iteration_bounds = array<i64: 1, 2>, scalar_prefetch = 0 : i64, scratch_operands = 0 : i64, tpu.core_type = #tpu.core_type<tc>, window_params = [{transform_indices = @transform_0, window_bounds = array<i64: 1, 8, 108>}, {transform_indices = @transform_1, window_bounds = array<i64: 1, 108, 256>}, {pipeline_mode = #tpu.pipeline_mode<synchronous>, transform_indices = @transform_2, window_bounds = array<i64: 8, 1>}, {transform_indices = @transform_3, window_bounds = array<i64: 1, 8, 256>}]} {
    %c0 = arith.constant 0 : index
    %c0_0 = arith.constant 0 : index
    %c0_1 = arith.constant 0 : index
    %0 = vector.load %arg2[%c0, %c0_0, %c0_1] : memref<1x8x108xbf16, #tpu.memory_space<vmem>>, vector<1x8x108xbf16>
    %1 = vector.shape_cast %0 : vector<1x8x108xbf16> to vector<8x108xbf16>
    %c0_2 = arith.constant 0 : index
    %c0_3 = arith.constant 0 : index
    %c0_4 = arith.constant 0 : index
    %2 = vector.load %arg3[%c0_2, %c0_3, %c0_4] : memref<1x108x256xbf16, #tpu.memory_space<vmem>>, vector<1x108x256xbf16>
    %3 = vector.shape_cast %2 : vector<1x108x256xbf16> to vector<108x256xbf16>
    %cst = arith.constant dense<0.000000e+00> : vector<8x256xf32>
    %4 = tpu.matmul %1, %3, %cst {dimension_numbers = #tpu.dot_dimension_numbers<[1], [0], [0], [1], [0, 0, 1, 1], [], []>} : vector<8x108xbf16>, vector<108x256xbf16>, vector<8x256xf32> -> vector<8x256xf32>
    %c0_5 = arith.constant 0 : index
    %c0_6 = arith.constant 0 : index
    %5 = vector.load %arg4[%c0_5, %c0_6] : memref<8x1xf32, #tpu.memory_space<vmem>>, vector<8x1xf32>
    %6 = vector.broadcast %5 : vector<8x1xf32> to vector<8x256xf32>
    %7 = arith.addf %4, %6 : vector<8x256xf32>
    %cst_7 = arith.constant 0.000000e+00 : f32
    %8 = vector.broadcast %cst_7 : f32 to vector<8x256xf32>
    %9 = arith.maximumf %7, %8 : vector<8x256xf32>
    %10 = arith.truncf %9 : vector<8x256xf32> to vector<8x256xbf16>
    %c0_8 = arith.constant 0 : index
    %c0_9 = arith.constant 0 : index
    %c0_10 = arith.constant 0 : index
    %11 = vector.load %arg5[%c0_8, %c0_9, %c0_10] : memref<1x8x256xbf16, #tpu.memory_space<vmem>>, vector<1x8x256xbf16>
    %12 = vector.shape_cast %11 : vector<1x8x256xbf16> to vector<8x256xbf16>
    %13 = vector.shape_cast %10 : vector<8x256xbf16> to vector<1x8x256xbf16>
    tpu.vector_store %arg5[%c0_8, %c0_9, %c0_10], %13 {strides = array<i32>} : memref<1x8x256xbf16, #tpu.memory_space<vmem>>, vector<1x8x256xbf16>,
    return
  }
  func.func @transform_0(%arg0: i32, %arg1: i32) -> (i32, i32, i32) {
    %c0_i32 = arith.constant 0 : i32
    %c0_i32_0 = arith.constant 0 : i32
    %c0_i32_1 = arith.constant 0 : i32
    return %arg0, %c0_i32, %c0_i32_0 : i32, i32, i32
  }
  func.func @transform_1(%arg0: i32, %arg1: i32) -> (i32, i32, i32) {
    %c0_i32 = arith.constant 0 : i32
    %c0_i32_0 = arith.constant 0 : i32
    return %arg0, %c0_i32, %arg1 : i32, i32, i32
  }
  func.func @transform_2(%arg0: i32, %arg1: i32) -> (i32, i32) {
    %c0_i32 = arith.constant 0 : i32
    %c0_i32_0 = arith.constant 0 : i32
    %c0_i32_1 = arith.constant 0 : i32
    return %c0_i32, %c0_i32_0 : i32, i32
  }
  func.func @transform_3(%arg0: i32, %arg1: i32) -> (i32, i32, i32) {
    %c0_i32 = arith.constant 0 : i32
    %c0_i32_0 = arith.constant 0 : i32
    return %arg0, %c0_i32, %arg1 : i32, i32, i32
  }
}

module attributes {stable_mosaic.version = 11 : i64} {
  func.func @_gemm_bias_act_kernel(%arg0: i32, %arg1: i32, %arg2: memref<1x8x216xbf16, #tpu.memory_space<vmem>>, %arg3: memref<1x216x256xbf16, #tpu.memory_space<vmem>>, %arg4: memref<8x1xf32, #tpu.memory_space<vmem>>, %arg5: memref<1x8x256xbf16, #tpu.memory_space<vmem>>) attributes {dimension_semantics = [#tpu.dimension_semantics<parallel>, #tpu.dimension_semantics<parallel>], iteration_bounds = array<i64: 1, 2>, scalar_prefetch = 0 : i64, scratch_operands = 0 : i64, tpu.core_type = #tpu.core_type<tc>, window_params = [{transform_indices = @transform_0, window_bounds = array<i64: 1, 8, 216>}, {transform_indices = @transform_1, window_bounds = array<i64: 1, 216, 256>}, {pipeline_mode = #tpu.pipeline_mode<synchronous>, transform_indices = @transform_2, window_bounds = array<i64: 8, 1>}, {transform_indices = @transform_3, window_bounds = array<i64: 1, 8, 256>}]} {
    %c0 = arith.constant 0 : index
    %c0_0 = arith.constant 0 : index
    %c0_1 = arith.constant 0 : index
    %0 = vector.load %arg2[%c0, %c0_0, %c0_1] : memref<1x8x216xbf16, #tpu.memory_space<vmem>>, vector<1x8x216xbf16>
    %1 = vector.shape_cast %0 : vector<1x8x216xbf16> to vector<8x216xbf16>
    %c0_2 = arith.constant 0 : index
    %c0_3 = arith.constant 0 : index
    %c0_4 = arith.constant 0 : index
    %2 = vector.load %arg3[%c0_2, %c0_3, %c0_4] : memref<1x216x256xbf16, #tpu.memory_space<vmem>>, vector<1x216x256xbf16>
    %3 = vector.shape_cast %2 : vector<1x216x256xbf16> to vector<216x256xbf16>
    %cst = arith.constant dense<0.000000e+00> : vector<8x256xf32>
    %4 = tpu.matmul %1, %3, %cst {dimension_numbers = #tpu.dot_dimension_numbers<[1], [0], [0], [1], [0, 0, 1, 1], [], []>} : vector<8x216xbf16>, vector<216x256xbf16>, vector<8x256xf32> -> vector<8x256xf32>
    %c0_5 = arith.constant 0 : index
    %c0_6 = arith.constant 0 : index
    %5 = vector.load %arg4[%c0_5, %c0_6] : memref<8x1xf32, #tpu.memory_space<vmem>>, vector<8x1xf32>
    %6 = vector.broadcast %5 : vector<8x1xf32> to vector<8x256xf32>
    %7 = arith.addf %4, %6 : vector<8x256xf32>
    %cst_7 = arith.constant 0.000000e+00 : f32
    %8 = vector.broadcast %cst_7 : f32 to vector<8x256xf32>
    %9 = arith.maximumf %7, %8 : vector<8x256xf32>
    %10 = arith.truncf %9 : vector<8x256xf32> to vector<8x256xbf16>
    %c0_8 = arith.constant 0 : index
    %c0_9 = arith.constant 0 : index
    %c0_10 = arith.constant 0 : index
    %11 = vector.load %arg5[%c0_8, %c0_9, %c0_10] : memref<1x8x256xbf16, #tpu.memory_space<vmem>>, vector<1x8x256xbf16>
    %12 = vector.shape_cast %11 : vector<1x8x256xbf16> to vector<8x256xbf16>
    %13 = vector.shape_cast %10 : vector<8x256xbf16> to vector<1x8x256xbf16>
    tpu.vector_store %arg5[%c0_8, %c0_9, %c0_10], %13 {strides = array<i32>} : memref<1x8x256xbf16, #tpu.memory_space<vmem>>, vector<1x8x256xbf16>,
    return
  }
  func.func @transform_0(%arg0: i32, %arg1: i32) -> (i32, i32, i32) {
    %c0_i32 = arith.constant 0 : i32
    %c0_i32_0 = arith.constant 0 : i32
    %c0_i32_1 = arith.constant 0 : i32
    return %arg0, %c0_i32, %c0_i32_0 : i32, i32, i32
  }
  func.func @transform_1(%arg0: i32, %arg1: i32) -> (i32, i32, i32) {
    %c0_i32 = arith.constant 0 : i32
    %c0_i32_0 = arith.constant 0 : i32
    return %arg0, %c0_i32, %arg1 : i32, i32, i32
  }
  func.func @transform_2(%arg0: i32, %arg1: i32) -> (i32, i32) {
    %c0_i32 = arith.constant 0 : i32
    %c0_i32_0 = arith.constant 0 : i32
    %c0_i32_1 = arith.constant 0 : i32
    return %c0_i32, %c0_i32_0 : i32, i32
  }
  func.func @transform_3(%arg0: i32, %arg1: i32) -> (i32, i32, i32) {
    %c0_i32 = arith.constant 0 : i32
    %c0_i32_0 = arith.constant 0 : i32
    return %arg0, %c0_i32, %arg1 : i32, i32, i32
  }
}

module attributes {stable_mosaic.version = 11 : i64} {
  func.func @_gemm_bias_act_kernel(%arg0: i32, %arg1: i32, %arg2: memref<1x8x216xbf16, #tpu.memory_space<vmem>>, %arg3: memref<1x216x64xbf16, #tpu.memory_space<vmem>>, %arg4: memref<8x1xf32, #tpu.memory_space<vmem>>, %arg5: memref<1x8x64xbf16, #tpu.memory_space<vmem>>) attributes {dimension_semantics = [#tpu.dimension_semantics<parallel>, #tpu.dimension_semantics<parallel>], iteration_bounds = array<i64: 1, 1>, scalar_prefetch = 0 : i64, scratch_operands = 0 : i64, tpu.core_type = #tpu.core_type<tc>, window_params = [{transform_indices = @transform_0, window_bounds = array<i64: 1, 8, 216>}, {transform_indices = @transform_1, window_bounds = array<i64: 1, 216, 64>}, {pipeline_mode = #tpu.pipeline_mode<synchronous>, transform_indices = @transform_2, window_bounds = array<i64: 8, 1>}, {transform_indices = @transform_3, window_bounds = array<i64: 1, 8, 64>}]} {
    %c0 = arith.constant 0 : index
    %c0_0 = arith.constant 0 : index
    %c0_1 = arith.constant 0 : index
    %0 = vector.load %arg2[%c0, %c0_0, %c0_1] : memref<1x8x216xbf16, #tpu.memory_space<vmem>>, vector<1x8x216xbf16>
    %1 = vector.shape_cast %0 : vector<1x8x216xbf16> to vector<8x216xbf16>
    %c0_2 = arith.constant 0 : index
    %c0_3 = arith.constant 0 : index
    %c0_4 = arith.constant 0 : index
    %2 = vector.load %arg3[%c0_2, %c0_3, %c0_4] : memref<1x216x64xbf16, #tpu.memory_space<vmem>>, vector<1x216x64xbf16>
    %3 = vector.shape_cast %2 : vector<1x216x64xbf16> to vector<216x64xbf16>
    %cst = arith.constant dense<0.000000e+00> : vector<8x64xf32>
    %4 = tpu.matmul %1, %3, %cst {dimension_numbers = #tpu.dot_dimension_numbers<[1], [0], [0], [1], [0, 0, 1, 1], [], []>} : vector<8x216xbf16>, vector<216x64xbf16>, vector<8x64xf32> -> vector<8x64xf32>
    %c0_5 = arith.constant 0 : index
    %c0_6 = arith.constant 0 : index
    %5 = vector.load %arg4[%c0_5, %c0_6] : memref<8x1xf32, #tpu.memory_space<vmem>>, vector<8x1xf32>
    %6 = vector.broadcast %5 : vector<8x1xf32> to vector<8x64xf32>
    %7 = arith.addf %4, %6 : vector<8x64xf32>
    %cst_7 = arith.constant 0.000000e+00 : f32
    %8 = vector.broadcast %cst_7 : f32 to vector<8x64xf32>
    %9 = arith.maximumf %7, %8 : vector<8x64xf32>
    %10 = arith.truncf %9 : vector<8x64xf32> to vector<8x64xbf16>
    %c0_8 = arith.constant 0 : index
    %c0_9 = arith.constant 0 : index
    %c0_10 = arith.constant 0 : index
    %11 = vector.load %arg5[%c0_8, %c0_9, %c0_10] : memref<1x8x64xbf16, #tpu.memory_space<vmem>>, vector<1x8x64xbf16>
    %12 = vector.shape_cast %11 : vector<1x8x64xbf16> to vector<8x64xbf16>
    %13 = vector.shape_cast %10 : vector<8x64xbf16> to vector<1x8x64xbf16>
    tpu.vector_store %arg5[%c0_8, %c0_9, %c0_10], %13 {strides = array<i32>} : memref<1x8x64xbf16, #tpu.memory_space<vmem>>, vector<1x8x64xbf16>,
    return
  }
  func.func @transform_0(%arg0: i32, %arg1: i32) -> (i32, i32, i32) {
    %c0_i32 = arith.constant 0 : i32
    %c0_i32_0 = arith.constant 0 : i32
    %c0_i32_1 = arith.constant 0 : i32
    return %arg0, %c0_i32, %c0_i32_0 : i32, i32, i32
  }
  func.func @transform_1(%arg0: i32, %arg1: i32) -> (i32, i32, i32) {
    %c0_i32 = arith.constant 0 : i32
    %c0_i32_0 = arith.constant 0 : i32
    return %arg0, %c0_i32, %arg1 : i32, i32, i32
  }
  func.func @transform_2(%arg0: i32, %arg1: i32) -> (i32, i32) {
    %c0_i32 = arith.constant 0 : i32
    %c0_i32_0 = arith.constant 0 : i32
    %c0_i32_1 = arith.constant 0 : i32
    return %c0_i32, %c0_i32_0 : i32, i32
  }
  func.func @transform_3(%arg0: i32, %arg1: i32) -> (i32, i32, i32) {
    %c0_i32 = arith.constant 0 : i32
    %c0_i32_0 = arith.constant 0 : i32
    return %arg0, %c0_i32, %arg1 : i32, i32, i32
  }
}

module attributes {stable_mosaic.version = 11 : i64} {
  func.func @_gemm_bias_act_kernel(%arg0: i32, %arg1: i32, %arg2: memref<1x8x16xbf16, #tpu.memory_space<vmem>>, %arg3: memref<1x16x64xbf16, #tpu.memory_space<vmem>>, %arg4: memref<8x1xf32, #tpu.memory_space<vmem>>, %arg5: memref<1x8x64xbf16, #tpu.memory_space<vmem>>) attributes {dimension_semantics = [#tpu.dimension_semantics<parallel>, #tpu.dimension_semantics<parallel>], iteration_bounds = array<i64: 1, 1>, scalar_prefetch = 0 : i64, scratch_operands = 0 : i64, tpu.core_type = #tpu.core_type<tc>, window_params = [{transform_indices = @transform_0, window_bounds = array<i64: 1, 8, 16>}, {transform_indices = @transform_1, window_bounds = array<i64: 1, 16, 64>}, {pipeline_mode = #tpu.pipeline_mode<synchronous>, transform_indices = @transform_2, window_bounds = array<i64: 8, 1>}, {transform_indices = @transform_3, window_bounds = array<i64: 1, 8, 64>}]} {
    %c0 = arith.constant 0 : index
    %c0_0 = arith.constant 0 : index
    %c0_1 = arith.constant 0 : index
    %0 = vector.load %arg2[%c0, %c0_0, %c0_1] : memref<1x8x16xbf16, #tpu.memory_space<vmem>>, vector<1x8x16xbf16>
    %1 = vector.shape_cast %0 : vector<1x8x16xbf16> to vector<8x16xbf16>
    %c0_2 = arith.constant 0 : index
    %c0_3 = arith.constant 0 : index
    %c0_4 = arith.constant 0 : index
    %2 = vector.load %arg3[%c0_2, %c0_3, %c0_4] : memref<1x16x64xbf16, #tpu.memory_space<vmem>>, vector<1x16x64xbf16>
    %3 = vector.shape_cast %2 : vector<1x16x64xbf16> to vector<16x64xbf16>
    %cst = arith.constant dense<0.000000e+00> : vector<8x64xf32>
    %4 = tpu.matmul %1, %3, %cst {dimension_numbers = #tpu.dot_dimension_numbers<[1], [0], [0], [1], [0, 0, 1, 1], [], []>} : vector<8x16xbf16>, vector<16x64xbf16>, vector<8x64xf32> -> vector<8x64xf32>
    %c0_5 = arith.constant 0 : index
    %c0_6 = arith.constant 0 : index
    %5 = vector.load %arg4[%c0_5, %c0_6] : memref<8x1xf32, #tpu.memory_space<vmem>>, vector<8x1xf32>
    %6 = vector.broadcast %5 : vector<8x1xf32> to vector<8x64xf32>
    %7 = arith.addf %4, %6 : vector<8x64xf32>
    %cst_7 = arith.constant 0.000000e+00 : f32
    %8 = vector.broadcast %cst_7 : f32 to vector<8x64xf32>
    %9 = arith.maximumf %7, %8 : vector<8x64xf32>
    %10 = arith.truncf %9 : vector<8x64xf32> to vector<8x64xbf16>
    %c0_8 = arith.constant 0 : index
    %c0_9 = arith.constant 0 : index
    %c0_10 = arith.constant 0 : index
    %11 = vector.load %arg5[%c0_8, %c0_9, %c0_10] : memref<1x8x64xbf16, #tpu.memory_space<vmem>>, vector<1x8x64xbf16>
    %12 = vector.shape_cast %11 : vector<1x8x64xbf16> to vector<8x64xbf16>
    %13 = vector.shape_cast %10 : vector<8x64xbf16> to vector<1x8x64xbf16>
    tpu.vector_store %arg5[%c0_8, %c0_9, %c0_10], %13 {strides = array<i32>} : memref<1x8x64xbf16, #tpu.memory_space<vmem>>, vector<1x8x64xbf16>,
    return
  }
  func.func @transform_0(%arg0: i32, %arg1: i32) -> (i32, i32, i32) {
    %c0_i32 = arith.constant 0 : i32
    %c0_i32_0 = arith.constant 0 : i32
    %c0_i32_1 = arith.constant 0 : i32
    return %arg0, %c0_i32, %c0_i32_0 : i32, i32, i32
  }
  func.func @transform_1(%arg0: i32, %arg1: i32) -> (i32, i32, i32) {
    %c0_i32 = arith.constant 0 : i32
    %c0_i32_0 = arith.constant 0 : i32
    return %arg0, %c0_i32, %arg1 : i32, i32, i32
  }
  func.func @transform_2(%arg0: i32, %arg1: i32) -> (i32, i32) {
    %c0_i32 = arith.constant 0 : i32
    %c0_i32_0 = arith.constant 0 : i32
    %c0_i32_1 = arith.constant 0 : i32
    return %c0_i32, %c0_i32_0 : i32, i32
  }
  func.func @transform_3(%arg0: i32, %arg1: i32) -> (i32, i32, i32) {
    %c0_i32 = arith.constant 0 : i32
    %c0_i32_0 = arith.constant 0 : i32
    return %arg0, %c0_i32, %arg1 : i32, i32, i32
  }
}

module attributes {stable_mosaic.version = 11 : i64} {
  func.func @_gemm_bias_act_kernel(%arg0: i32, %arg1: i32, %arg2: memref<1x8x24xbf16, #tpu.memory_space<vmem>>, %arg3: memref<1x24x64xbf16, #tpu.memory_space<vmem>>, %arg4: memref<8x1xf32, #tpu.memory_space<vmem>>, %arg5: memref<1x8x64xbf16, #tpu.memory_space<vmem>>) attributes {dimension_semantics = [#tpu.dimension_semantics<parallel>, #tpu.dimension_semantics<parallel>], iteration_bounds = array<i64: 3, 1>, scalar_prefetch = 0 : i64, scratch_operands = 0 : i64, tpu.core_type = #tpu.core_type<tc>, window_params = [{transform_indices = @transform_0, window_bounds = array<i64: 1, 8, 24>}, {transform_indices = @transform_1, window_bounds = array<i64: 1, 24, 64>}, {pipeline_mode = #tpu.pipeline_mode<synchronous>, transform_indices = @transform_2, window_bounds = array<i64: 8, 1>}, {transform_indices = @transform_3, window_bounds = array<i64: 1, 8, 64>}]} {
    %c0 = arith.constant 0 : index
    %c0_0 = arith.constant 0 : index
    %c0_1 = arith.constant 0 : index
    %0 = vector.load %arg2[%c0, %c0_0, %c0_1] : memref<1x8x24xbf16, #tpu.memory_space<vmem>>, vector<1x8x24xbf16>
    %1 = vector.shape_cast %0 : vector<1x8x24xbf16> to vector<8x24xbf16>
    %c0_2 = arith.constant 0 : index
    %c0_3 = arith.constant 0 : index
    %c0_4 = arith.constant 0 : index
    %2 = vector.load %arg3[%c0_2, %c0_3, %c0_4] : memref<1x24x64xbf16, #tpu.memory_space<vmem>>, vector<1x24x64xbf16>
    %3 = vector.shape_cast %2 : vector<1x24x64xbf16> to vector<24x64xbf16>
    %cst = arith.constant dense<0.000000e+00> : vector<8x64xf32>
    %4 = tpu.matmul %1, %3, %cst {dimension_numbers = #tpu.dot_dimension_numbers<[1], [0], [0], [1], [0, 0, 1, 1], [], []>} : vector<8x24xbf16>, vector<24x64xbf16>, vector<8x64xf32> -> vector<8x64xf32>
    %c0_5 = arith.constant 0 : index
    %c0_6 = arith.constant 0 : index
    %5 = vector.load %arg4[%c0_5, %c0_6] : memref<8x1xf32, #tpu.memory_space<vmem>>, vector<8x1xf32>
    %6 = vector.broadcast %5 : vector<8x1xf32> to vector<8x64xf32>
    %7 = arith.addf %4, %6 : vector<8x64xf32>
    %cst_7 = arith.constant 0.000000e+00 : f32
    %8 = vector.broadcast %cst_7 : f32 to vector<8x64xf32>
    %9 = arith.maximumf %7, %8 : vector<8x64xf32>
    %10 = arith.truncf %9 : vector<8x64xf32> to vector<8x64xbf16>
    %c0_8 = arith.constant 0 : index
    %c0_9 = arith.constant 0 : index
    %c0_10 = arith.constant 0 : index
    %11 = vector.load %arg5[%c0_8, %c0_9, %c0_10] : memref<1x8x64xbf16, #tpu.memory_space<vmem>>, vector<1x8x64xbf16>
    %12 = vector.shape_cast %11 : vector<1x8x64xbf16> to vector<8x64xbf16>
    %13 = vector.shape_cast %10 : vector<8x64xbf16> to vector<1x8x64xbf16>
    tpu.vector_store %arg5[%c0_8, %c0_9, %c0_10], %13 {strides = array<i32>} : memref<1x8x64xbf16, #tpu.memory_space<vmem>>, vector<1x8x64xbf16>,
    return
  }
  func.func @transform_0(%arg0: i32, %arg1: i32) -> (i32, i32, i32) {
    %c0_i32 = arith.constant 0 : i32
    %c0_i32_0 = arith.constant 0 : i32
    %c0_i32_1 = arith.constant 0 : i32
    return %arg0, %c0_i32, %c0_i32_0 : i32, i32, i32
  }
  func.func @transform_1(%arg0: i32, %arg1: i32) -> (i32, i32, i32) {
    %c0_i32 = arith.constant 0 : i32
    %c0_i32_0 = arith.constant 0 : i32
    return %arg0, %c0_i32, %arg1 : i32, i32, i32
  }
  func.func @transform_2(%arg0: i32, %arg1: i32) -> (i32, i32) {
    %c0_i32 = arith.constant 0 : i32
    %c0_i32_0 = arith.constant 0 : i32
    %c0_i32_1 = arith.constant 0 : i32
    return %c0_i32, %c0_i32_0 : i32, i32
  }
  func.func @transform_3(%arg0: i32, %arg1: i32) -> (i32, i32, i32) {
    %c0_i32 = arith.constant 0 : i32
    %c0_i32_0 = arith.constant 0 : i32
    return %arg0, %c0_i32, %arg1 : i32, i32, i32
  }
}

module attributes {stable_mosaic.version = 11 : i64} {
  func.func @_gemm_bias_act_kernel(%arg0: i32, %arg1: i32, %arg2: memref<1x8x40xbf16, #tpu.memory_space<vmem>>, %arg3: memref<1x40x64xbf16, #tpu.memory_space<vmem>>, %arg4: memref<8x1xf32, #tpu.memory_space<vmem>>, %arg5: memref<1x8x64xbf16, #tpu.memory_space<vmem>>) attributes {dimension_semantics = [#tpu.dimension_semantics<parallel>, #tpu.dimension_semantics<parallel>], iteration_bounds = array<i64: 3, 1>, scalar_prefetch = 0 : i64, scratch_operands = 0 : i64, tpu.core_type = #tpu.core_type<tc>, window_params = [{transform_indices = @transform_0, window_bounds = array<i64: 1, 8, 40>}, {transform_indices = @transform_1, window_bounds = array<i64: 1, 40, 64>}, {pipeline_mode = #tpu.pipeline_mode<synchronous>, transform_indices = @transform_2, window_bounds = array<i64: 8, 1>}, {transform_indices = @transform_3, window_bounds = array<i64: 1, 8, 64>}]} {
    %c0 = arith.constant 0 : index
    %c0_0 = arith.constant 0 : index
    %c0_1 = arith.constant 0 : index
    %0 = vector.load %arg2[%c0, %c0_0, %c0_1] : memref<1x8x40xbf16, #tpu.memory_space<vmem>>, vector<1x8x40xbf16>
    %1 = vector.shape_cast %0 : vector<1x8x40xbf16> to vector<8x40xbf16>
    %c0_2 = arith.constant 0 : index
    %c0_3 = arith.constant 0 : index
    %c0_4 = arith.constant 0 : index
    %2 = vector.load %arg3[%c0_2, %c0_3, %c0_4] : memref<1x40x64xbf16, #tpu.memory_space<vmem>>, vector<1x40x64xbf16>
    %3 = vector.shape_cast %2 : vector<1x40x64xbf16> to vector<40x64xbf16>
    %cst = arith.constant dense<0.000000e+00> : vector<8x64xf32>
    %4 = tpu.matmul %1, %3, %cst {dimension_numbers = #tpu.dot_dimension_numbers<[1], [0], [0], [1], [0, 0, 1, 1], [], []>} : vector<8x40xbf16>, vector<40x64xbf16>, vector<8x64xf32> -> vector<8x64xf32>
    %c0_5 = arith.constant 0 : index
    %c0_6 = arith.constant 0 : index
    %5 = vector.load %arg4[%c0_5, %c0_6] : memref<8x1xf32, #tpu.memory_space<vmem>>, vector<8x1xf32>
    %6 = vector.broadcast %5 : vector<8x1xf32> to vector<8x64xf32>
    %7 = arith.addf %4, %6 : vector<8x64xf32>
    %cst_7 = arith.constant 0.000000e+00 : f32
    %8 = vector.broadcast %cst_7 : f32 to vector<8x64xf32>
    %9 = arith.maximumf %7, %8 : vector<8x64xf32>
    %10 = arith.truncf %9 : vector<8x64xf32> to vector<8x64xbf16>
    %c0_8 = arith.constant 0 : index
    %c0_9 = arith.constant 0 : index
    %c0_10 = arith.constant 0 : index
    %11 = vector.load %arg5[%c0_8, %c0_9, %c0_10] : memref<1x8x64xbf16, #tpu.memory_space<vmem>>, vector<1x8x64xbf16>
    %12 = vector.shape_cast %11 : vector<1x8x64xbf16> to vector<8x64xbf16>
    %13 = vector.shape_cast %10 : vector<8x64xbf16> to vector<1x8x64xbf16>
    tpu.vector_store %arg5[%c0_8, %c0_9, %c0_10], %13 {strides = array<i32>} : memref<1x8x64xbf16, #tpu.memory_space<vmem>>, vector<1x8x64xbf16>,
    return
  }
  func.func @transform_0(%arg0: i32, %arg1: i32) -> (i32, i32, i32) {
    %c0_i32 = arith.constant 0 : i32
    %c0_i32_0 = arith.constant 0 : i32
    %c0_i32_1 = arith.constant 0 : i32
    return %arg0, %c0_i32, %c0_i32_0 : i32, i32, i32
  }
  func.func @transform_1(%arg0: i32, %arg1: i32) -> (i32, i32, i32) {
    %c0_i32 = arith.constant 0 : i32
    %c0_i32_0 = arith.constant 0 : i32
    return %arg0, %c0_i32, %arg1 : i32, i32, i32
  }
  func.func @transform_2(%arg0: i32, %arg1: i32) -> (i32, i32) {
    %c0_i32 = arith.constant 0 : i32
    %c0_i32_0 = arith.constant 0 : i32
    %c0_i32_1 = arith.constant 0 : i32
    return %c0_i32, %c0_i32_0 : i32, i32
  }
  func.func @transform_3(%arg0: i32, %arg1: i32) -> (i32, i32, i32) {
    %c0_i32 = arith.constant 0 : i32
    %c0_i32_0 = arith.constant 0 : i32
    return %arg0, %c0_i32, %arg1 : i32, i32, i32
  }
}

module attributes {stable_mosaic.version = 11 : i64} {
  func.func @_gemm_bias_act_kernel(%arg0: i32, %arg1: i32, %arg2: memref<1x8x72xbf16, #tpu.memory_space<vmem>>, %arg3: memref<1x72x64xbf16, #tpu.memory_space<vmem>>, %arg4: memref<8x1xf32, #tpu.memory_space<vmem>>, %arg5: memref<1x8x64xbf16, #tpu.memory_space<vmem>>) attributes {dimension_semantics = [#tpu.dimension_semantics<parallel>, #tpu.dimension_semantics<parallel>], iteration_bounds = array<i64: 1, 1>, scalar_prefetch = 0 : i64, scratch_operands = 0 : i64, tpu.core_type = #tpu.core_type<tc>, window_params = [{transform_indices = @transform_0, window_bounds = array<i64: 1, 8, 72>}, {transform_indices = @transform_1, window_bounds = array<i64: 1, 72, 64>}, {pipeline_mode = #tpu.pipeline_mode<synchronous>, transform_indices = @transform_2, window_bounds = array<i64: 8, 1>}, {transform_indices = @transform_3, window_bounds = array<i64: 1, 8, 64>}]} {
    %c0 = arith.constant 0 : index
    %c0_0 = arith.constant 0 : index
    %c0_1 = arith.constant 0 : index
    %0 = vector.load %arg2[%c0, %c0_0, %c0_1] : memref<1x8x72xbf16, #tpu.memory_space<vmem>>, vector<1x8x72xbf16>
    %1 = vector.shape_cast %0 : vector<1x8x72xbf16> to vector<8x72xbf16>
    %c0_2 = arith.constant 0 : index
    %c0_3 = arith.constant 0 : index
    %c0_4 = arith.constant 0 : index
    %2 = vector.load %arg3[%c0_2, %c0_3, %c0_4] : memref<1x72x64xbf16, #tpu.memory_space<vmem>>, vector<1x72x64xbf16>
    %3 = vector.shape_cast %2 : vector<1x72x64xbf16> to vector<72x64xbf16>
    %cst = arith.constant dense<0.000000e+00> : vector<8x64xf32>
    %4 = tpu.matmul %1, %3, %cst {dimension_numbers = #tpu.dot_dimension_numbers<[1], [0], [0], [1], [0, 0, 1, 1], [], []>} : vector<8x72xbf16>, vector<72x64xbf16>, vector<8x64xf32> -> vector<8x64xf32>
    %c0_5 = arith.constant 0 : index
    %c0_6 = arith.constant 0 : index
    %5 = vector.load %arg4[%c0_5, %c0_6] : memref<8x1xf32, #tpu.memory_space<vmem>>, vector<8x1xf32>
    %6 = vector.broadcast %5 : vector<8x1xf32> to vector<8x64xf32>
    %7 = arith.addf %4, %6 : vector<8x64xf32>
    %cst_7 = arith.constant 0.000000e+00 : f32
    %8 = vector.broadcast %cst_7 : f32 to vector<8x64xf32>
    %9 = arith.maximumf %7, %8 : vector<8x64xf32>
    %10 = arith.truncf %9 : vector<8x64xf32> to vector<8x64xbf16>
    %c0_8 = arith.constant 0 : index
    %c0_9 = arith.constant 0 : index
    %c0_10 = arith.constant 0 : index
    %11 = vector.load %arg5[%c0_8, %c0_9, %c0_10] : memref<1x8x64xbf16, #tpu.memory_space<vmem>>, vector<1x8x64xbf16>
    %12 = vector.shape_cast %11 : vector<1x8x64xbf16> to vector<8x64xbf16>
    %13 = vector.shape_cast %10 : vector<8x64xbf16> to vector<1x8x64xbf16>
    tpu.vector_store %arg5[%c0_8, %c0_9, %c0_10], %13 {strides = array<i32>} : memref<1x8x64xbf16, #tpu.memory_space<vmem>>, vector<1x8x64xbf16>,
    return
  }
  func.func @transform_0(%arg0: i32, %arg1: i32) -> (i32, i32, i32) {
    %c0_i32 = arith.constant 0 : i32
    %c0_i32_0 = arith.constant 0 : i32
    %c0_i32_1 = arith.constant 0 : i32
    return %arg0, %c0_i32, %c0_i32_0 : i32, i32, i32
  }
  func.func @transform_1(%arg0: i32, %arg1: i32) -> (i32, i32, i32) {
    %c0_i32 = arith.constant 0 : i32
    %c0_i32_0 = arith.constant 0 : i32
    return %arg0, %c0_i32, %arg1 : i32, i32, i32
  }
  func.func @transform_2(%arg0: i32, %arg1: i32) -> (i32, i32) {
    %c0_i32 = arith.constant 0 : i32
    %c0_i32_0 = arith.constant 0 : i32
    %c0_i32_1 = arith.constant 0 : i32
    return %c0_i32, %c0_i32_0 : i32, i32
  }
  func.func @transform_3(%arg0: i32, %arg1: i32) -> (i32, i32, i32) {
    %c0_i32 = arith.constant 0 : i32
    %c0_i32_0 = arith.constant 0 : i32
    return %arg0, %c0_i32, %arg1 : i32, i32, i32
  }
}

module attributes {stable_mosaic.version = 11 : i64} {
  func.func @_gemm_bias_act_kernel(%arg0: i32, %arg1: i32, %arg2: memref<1x4x12xbf16, #tpu.memory_space<vmem>>, %arg3: memref<1x12x256xbf16, #tpu.memory_space<vmem>>, %arg4: memref<4x1xf32, #tpu.memory_space<vmem>>, %arg5: memref<1x4x256xf32, #tpu.memory_space<vmem>>) attributes {dimension_semantics = [#tpu.dimension_semantics<parallel>, #tpu.dimension_semantics<parallel>], iteration_bounds = array<i64: 1, 2>, scalar_prefetch = 0 : i64, scratch_operands = 0 : i64, tpu.core_type = #tpu.core_type<tc>, window_params = [{transform_indices = @transform_0, window_bounds = array<i64: 1, 4, 12>}, {transform_indices = @transform_1, window_bounds = array<i64: 1, 12, 256>}, {pipeline_mode = #tpu.pipeline_mode<synchronous>, transform_indices = @transform_2, window_bounds = array<i64: 4, 1>}, {transform_indices = @transform_3, window_bounds = array<i64: 1, 4, 256>}]} {
    %c0 = arith.constant 0 : index
    %c0_0 = arith.constant 0 : index
    %c0_1 = arith.constant 0 : index
    %0 = vector.load %arg2[%c0, %c0_0, %c0_1] : memref<1x4x12xbf16, #tpu.memory_space<vmem>>, vector<1x4x12xbf16>
    %1 = vector.shape_cast %0 : vector<1x4x12xbf16> to vector<4x12xbf16>
    %c0_2 = arith.constant 0 : index
    %c0_3 = arith.constant 0 : index
    %c0_4 = arith.constant 0 : index
    %2 = vector.load %arg3[%c0_2, %c0_3, %c0_4] : memref<1x12x256xbf16, #tpu.memory_space<vmem>>, vector<1x12x256xbf16>
    %3 = vector.shape_cast %2 : vector<1x12x256xbf16> to vector<12x256xbf16>
    %cst = arith.constant dense<0.000000e+00> : vector<4x256xf32>
    %4 = tpu.matmul %1, %3, %cst {dimension_numbers = #tpu.dot_dimension_numbers<[1], [0], [0], [1], [0, 0, 1, 1], [], []>} : vector<4x12xbf16>, vector<12x256xbf16>, vector<4x256xf32> -> vector<4x256xf32>
    %c0_5 = arith.constant 0 : index
    %c0_6 = arith.constant 0 : index
    %5 = vector.load %arg4[%c0_5, %c0_6] : memref<4x1xf32, #tpu.memory_space<vmem>>, vector<4x1xf32>
    %6 = vector.broadcast %5 : vector<4x1xf32> to vector<4x256xf32>
    %7 = arith.addf %4, %6 : vector<4x256xf32>
    %cst_7 = arith.constant 0.000000e+00 : f32
    %8 = vector.broadcast %cst_7 : f32 to vector<4x256xf32>
    %9 = arith.maximumf %7, %8 : vector<4x256xf32>
    %c0_8 = arith.constant 0 : index
    %c0_9 = arith.constant 0 : index
    %c0_10 = arith.constant 0 : index
    %10 = vector.load %arg5[%c0_8, %c0_9, %c0_10] : memref<1x4x256xf32, #tpu.memory_space<vmem>>, vector<1x4x256xf32>
    %11 = vector.shape_cast %10 : vector<1x4x256xf32> to vector<4x256xf32>
    %12 = vector.shape_cast %9 : vector<4x256xf32> to vector<1x4x256xf32>
    tpu.vector_store %arg5[%c0_8, %c0_9, %c0_10], %12 {strides = array<i32>} : memref<1x4x256xf32, #tpu.memory_space<vmem>>, vector<1x4x256xf32>,
    return
  }
  func.func @transform_0(%arg0: i32, %arg1: i32) -> (i32, i32, i32) {
    %c0_i32 = arith.constant 0 : i32
    %c0_i32_0 = arith.constant 0 : i32
    %c0_i32_1 = arith.constant 0 : i32
    return %arg0, %c0_i32, %c0_i32_0 : i32, i32, i32
  }
  func.func @transform_1(%arg0: i32, %arg1: i32) -> (i32, i32, i32) {
    %c0_i32 = arith.constant 0 : i32
    %c0_i32_0 = arith.constant 0 : i32
    return %arg0, %c0_i32, %arg1 : i32, i32, i32
  }
  func.func @transform_2(%arg0: i32, %arg1: i32) -> (i32, i32) {
    %c0_i32 = arith.constant 0 : i32
    %c0_i32_0 = arith.constant 0 : i32
    %c0_i32_1 = arith.constant 0 : i32
    return %c0_i32, %c0_i32_0 : i32, i32
  }
  func.func @transform_3(%arg0: i32, %arg1: i32) -> (i32, i32, i32) {
    %c0_i32 = arith.constant 0 : i32
    %c0_i32_0 = arith.constant 0 : i32
    return %arg0, %c0_i32, %arg1 : i32, i32, i32
  }
}

module attributes {stable_mosaic.version = 11 : i64} {
  func.func @_gemm_bias_act_kernel(%arg0: i32, %arg1: i32, %arg2: memref<1x4x20xbf16, #tpu.memory_space<vmem>>, %arg3: memref<1x20x256xbf16, #tpu.memory_space<vmem>>, %arg4: memref<4x1xf32, #tpu.memory_space<vmem>>, %arg5: memref<1x4x256xf32, #tpu.memory_space<vmem>>) attributes {dimension_semantics = [#tpu.dimension_semantics<parallel>, #tpu.dimension_semantics<parallel>], iteration_bounds = array<i64: 3, 2>, scalar_prefetch = 0 : i64, scratch_operands = 0 : i64, tpu.core_type = #tpu.core_type<tc>, window_params = [{transform_indices = @transform_0, window_bounds = array<i64: 1, 4, 20>}, {transform_indices = @transform_1, window_bounds = array<i64: 1, 20, 256>}, {pipeline_mode = #tpu.pipeline_mode<synchronous>, transform_indices = @transform_2, window_bounds = array<i64: 4, 1>}, {transform_indices = @transform_3, window_bounds = array<i64: 1, 4, 256>}]} {
    %c0 = arith.constant 0 : index
    %c0_0 = arith.constant 0 : index
    %c0_1 = arith.constant 0 : index
    %0 = vector.load %arg2[%c0, %c0_0, %c0_1] : memref<1x4x20xbf16, #tpu.memory_space<vmem>>, vector<1x4x20xbf16>
    %1 = vector.shape_cast %0 : vector<1x4x20xbf16> to vector<4x20xbf16>
    %c0_2 = arith.constant 0 : index
    %c0_3 = arith.constant 0 : index
    %c0_4 = arith.constant 0 : index
    %2 = vector.load %arg3[%c0_2, %c0_3, %c0_4] : memref<1x20x256xbf16, #tpu.memory_space<vmem>>, vector<1x20x256xbf16>
    %3 = vector.shape_cast %2 : vector<1x20x256xbf16> to vector<20x256xbf16>
    %cst = arith.constant dense<0.000000e+00> : vector<4x256xf32>
    %4 = tpu.matmul %1, %3, %cst {dimension_numbers = #tpu.dot_dimension_numbers<[1], [0], [0], [1], [0, 0, 1, 1], [], []>} : vector<4x20xbf16>, vector<20x256xbf16>, vector<4x256xf32> -> vector<4x256xf32>
    %c0_5 = arith.constant 0 : index
    %c0_6 = arith.constant 0 : index
    %5 = vector.load %arg4[%c0_5, %c0_6] : memref<4x1xf32, #tpu.memory_space<vmem>>, vector<4x1xf32>
    %6 = vector.broadcast %5 : vector<4x1xf32> to vector<4x256xf32>
    %7 = arith.addf %4, %6 : vector<4x256xf32>
    %cst_7 = arith.constant 0.000000e+00 : f32
    %8 = vector.broadcast %cst_7 : f32 to vector<4x256xf32>
    %9 = arith.maximumf %7, %8 : vector<4x256xf32>
    %c0_8 = arith.constant 0 : index
    %c0_9 = arith.constant 0 : index
    %c0_10 = arith.constant 0 : index
    %10 = vector.load %arg5[%c0_8, %c0_9, %c0_10] : memref<1x4x256xf32, #tpu.memory_space<vmem>>, vector<1x4x256xf32>
    %11 = vector.shape_cast %10 : vector<1x4x256xf32> to vector<4x256xf32>
    %12 = vector.shape_cast %9 : vector<4x256xf32> to vector<1x4x256xf32>
    tpu.vector_store %arg5[%c0_8, %c0_9, %c0_10], %12 {strides = array<i32>} : memref<1x4x256xf32, #tpu.memory_space<vmem>>, vector<1x4x256xf32>,
    return
  }
  func.func @transform_0(%arg0: i32, %arg1: i32) -> (i32, i32, i32) {
    %c0_i32 = arith.constant 0 : i32
    %c0_i32_0 = arith.constant 0 : i32
    %c0_i32_1 = arith.constant 0 : i32
    return %arg0, %c0_i32, %c0_i32_0 : i32, i32, i32
  }
  func.func @transform_1(%arg0: i32, %arg1: i32) -> (i32, i32, i32) {
    %c0_i32 = arith.constant 0 : i32
    %c0_i32_0 = arith.constant 0 : i32
    return %arg0, %c0_i32, %arg1 : i32, i32, i32
  }
  func.func @transform_2(%arg0: i32, %arg1: i32) -> (i32, i32) {
    %c0_i32 = arith.constant 0 : i32
    %c0_i32_0 = arith.constant 0 : i32
    %c0_i32_1 = arith.constant 0 : i32
    return %c0_i32, %c0_i32_0 : i32, i32
  }
  func.func @transform_3(%arg0: i32, %arg1: i32) -> (i32, i32, i32) {
    %c0_i32 = arith.constant 0 : i32
    %c0_i32_0 = arith.constant 0 : i32
    return %arg0, %c0_i32, %arg1 : i32, i32, i32
  }
}

module attributes {stable_mosaic.version = 11 : i64} {
  func.func @_gemm_bias_act_kernel(%arg0: i32, %arg1: i32, %arg2: memref<1x4x36xbf16, #tpu.memory_space<vmem>>, %arg3: memref<1x36x256xbf16, #tpu.memory_space<vmem>>, %arg4: memref<4x1xf32, #tpu.memory_space<vmem>>, %arg5: memref<1x4x256xf32, #tpu.memory_space<vmem>>) attributes {dimension_semantics = [#tpu.dimension_semantics<parallel>, #tpu.dimension_semantics<parallel>], iteration_bounds = array<i64: 3, 2>, scalar_prefetch = 0 : i64, scratch_operands = 0 : i64, tpu.core_type = #tpu.core_type<tc>, window_params = [{transform_indices = @transform_0, window_bounds = array<i64: 1, 4, 36>}, {transform_indices = @transform_1, window_bounds = array<i64: 1, 36, 256>}, {pipeline_mode = #tpu.pipeline_mode<synchronous>, transform_indices = @transform_2, window_bounds = array<i64: 4, 1>}, {transform_indices = @transform_3, window_bounds = array<i64: 1, 4, 256>}]} {
    %c0 = arith.constant 0 : index
    %c0_0 = arith.constant 0 : index
    %c0_1 = arith.constant 0 : index
    %0 = vector.load %arg2[%c0, %c0_0, %c0_1] : memref<1x4x36xbf16, #tpu.memory_space<vmem>>, vector<1x4x36xbf16>
    %1 = vector.shape_cast %0 : vector<1x4x36xbf16> to vector<4x36xbf16>
    %c0_2 = arith.constant 0 : index
    %c0_3 = arith.constant 0 : index
    %c0_4 = arith.constant 0 : index
    %2 = vector.load %arg3[%c0_2, %c0_3, %c0_4] : memref<1x36x256xbf16, #tpu.memory_space<vmem>>, vector<1x36x256xbf16>
    %3 = vector.shape_cast %2 : vector<1x36x256xbf16> to vector<36x256xbf16>
    %cst = arith.constant dense<0.000000e+00> : vector<4x256xf32>
    %4 = tpu.matmul %1, %3, %cst {dimension_numbers = #tpu.dot_dimension_numbers<[1], [0], [0], [1], [0, 0, 1, 1], [], []>} : vector<4x36xbf16>, vector<36x256xbf16>, vector<4x256xf32> -> vector<4x256xf32>
    %c0_5 = arith.constant 0 : index
    %c0_6 = arith.constant 0 : index
    %5 = vector.load %arg4[%c0_5, %c0_6] : memref<4x1xf32, #tpu.memory_space<vmem>>, vector<4x1xf32>
    %6 = vector.broadcast %5 : vector<4x1xf32> to vector<4x256xf32>
    %7 = arith.addf %4, %6 : vector<4x256xf32>
    %cst_7 = arith.constant 0.000000e+00 : f32
    %8 = vector.broadcast %cst_7 : f32 to vector<4x256xf32>
    %9 = arith.maximumf %7, %8 : vector<4x256xf32>
    %c0_8 = arith.constant 0 : index
    %c0_9 = arith.constant 0 : index
    %c0_10 = arith.constant 0 : index
    %10 = vector.load %arg5[%c0_8, %c0_9, %c0_10] : memref<1x4x256xf32, #tpu.memory_space<vmem>>, vector<1x4x256xf32>
    %11 = vector.shape_cast %10 : vector<1x4x256xf32> to vector<4x256xf32>
    %12 = vector.shape_cast %9 : vector<4x256xf32> to vector<1x4x256xf32>
    tpu.vector_store %arg5[%c0_8, %c0_9, %c0_10], %12 {strides = array<i32>} : memref<1x4x256xf32, #tpu.memory_space<vmem>>, vector<1x4x256xf32>,
    return
  }
  func.func @transform_0(%arg0: i32, %arg1: i32) -> (i32, i32, i32) {
    %c0_i32 = arith.constant 0 : i32
    %c0_i32_0 = arith.constant 0 : i32
    %c0_i32_1 = arith.constant 0 : i32
    return %arg0, %c0_i32, %c0_i32_0 : i32, i32, i32
  }
  func.func @transform_1(%arg0: i32, %arg1: i32) -> (i32, i32, i32) {
    %c0_i32 = arith.constant 0 : i32
    %c0_i32_0 = arith.constant 0 : i32
    return %arg0, %c0_i32, %arg1 : i32, i32, i32
  }
  func.func @transform_2(%arg0: i32, %arg1: i32) -> (i32, i32) {
    %c0_i32 = arith.constant 0 : i32
    %c0_i32_0 = arith.constant 0 : i32
    %c0_i32_1 = arith.constant 0 : i32
    return %c0_i32, %c0_i32_0 : i32, i32
  }
  func.func @transform_3(%arg0: i32, %arg1: i32) -> (i32, i32, i32) {
    %c0_i32 = arith.constant 0 : i32
    %c0_i32_0 = arith.constant 0 : i32
    return %arg0, %c0_i32, %arg1 : i32, i32, i32
  }
}

module attributes {stable_mosaic.version = 11 : i64} {
  func.func @_gemm_bias_act_kernel(%arg0: i32, %arg1: i32, %arg2: memref<1x4x68xbf16, #tpu.memory_space<vmem>>, %arg3: memref<1x68x256xbf16, #tpu.memory_space<vmem>>, %arg4: memref<4x1xf32, #tpu.memory_space<vmem>>, %arg5: memref<1x4x256xf32, #tpu.memory_space<vmem>>) attributes {dimension_semantics = [#tpu.dimension_semantics<parallel>, #tpu.dimension_semantics<parallel>], iteration_bounds = array<i64: 1, 2>, scalar_prefetch = 0 : i64, scratch_operands = 0 : i64, tpu.core_type = #tpu.core_type<tc>, window_params = [{transform_indices = @transform_0, window_bounds = array<i64: 1, 4, 68>}, {transform_indices = @transform_1, window_bounds = array<i64: 1, 68, 256>}, {pipeline_mode = #tpu.pipeline_mode<synchronous>, transform_indices = @transform_2, window_bounds = array<i64: 4, 1>}, {transform_indices = @transform_3, window_bounds = array<i64: 1, 4, 256>}]} {
    %c0 = arith.constant 0 : index
    %c0_0 = arith.constant 0 : index
    %c0_1 = arith.constant 0 : index
    %0 = vector.load %arg2[%c0, %c0_0, %c0_1] : memref<1x4x68xbf16, #tpu.memory_space<vmem>>, vector<1x4x68xbf16>
    %1 = vector.shape_cast %0 : vector<1x4x68xbf16> to vector<4x68xbf16>
    %c0_2 = arith.constant 0 : index
    %c0_3 = arith.constant 0 : index
    %c0_4 = arith.constant 0 : index
    %2 = vector.load %arg3[%c0_2, %c0_3, %c0_4] : memref<1x68x256xbf16, #tpu.memory_space<vmem>>, vector<1x68x256xbf16>
    %3 = vector.shape_cast %2 : vector<1x68x256xbf16> to vector<68x256xbf16>
    %cst = arith.constant dense<0.000000e+00> : vector<4x256xf32>
    %4 = tpu.matmul %1, %3, %cst {dimension_numbers = #tpu.dot_dimension_numbers<[1], [0], [0], [1], [0, 0, 1, 1], [], []>} : vector<4x68xbf16>, vector<68x256xbf16>, vector<4x256xf32> -> vector<4x256xf32>
    %c0_5 = arith.constant 0 : index
    %c0_6 = arith.constant 0 : index
    %5 = vector.load %arg4[%c0_5, %c0_6] : memref<4x1xf32, #tpu.memory_space<vmem>>, vector<4x1xf32>
    %6 = vector.broadcast %5 : vector<4x1xf32> to vector<4x256xf32>
    %7 = arith.addf %4, %6 : vector<4x256xf32>
    %cst_7 = arith.constant 0.000000e+00 : f32
    %8 = vector.broadcast %cst_7 : f32 to vector<4x256xf32>
    %9 = arith.maximumf %7, %8 : vector<4x256xf32>
    %c0_8 = arith.constant 0 : index
    %c0_9 = arith.constant 0 : index
    %c0_10 = arith.constant 0 : index
    %10 = vector.load %arg5[%c0_8, %c0_9, %c0_10] : memref<1x4x256xf32, #tpu.memory_space<vmem>>, vector<1x4x256xf32>
    %11 = vector.shape_cast %10 : vector<1x4x256xf32> to vector<4x256xf32>
    %12 = vector.shape_cast %9 : vector<4x256xf32> to vector<1x4x256xf32>
    tpu.vector_store %arg5[%c0_8, %c0_9, %c0_10], %12 {strides = array<i32>} : memref<1x4x256xf32, #tpu.memory_space<vmem>>, vector<1x4x256xf32>,
    return
  }
  func.func @transform_0(%arg0: i32, %arg1: i32) -> (i32, i32, i32) {
    %c0_i32 = arith.constant 0 : i32
    %c0_i32_0 = arith.constant 0 : i32
    %c0_i32_1 = arith.constant 0 : i32
    return %arg0, %c0_i32, %c0_i32_0 : i32, i32, i32
  }
  func.func @transform_1(%arg0: i32, %arg1: i32) -> (i32, i32, i32) {
    %c0_i32 = arith.constant 0 : i32
    %c0_i32_0 = arith.constant 0 : i32
    return %arg0, %c0_i32, %arg1 : i32, i32, i32
  }
  func.func @transform_2(%arg0: i32, %arg1: i32) -> (i32, i32) {
    %c0_i32 = arith.constant 0 : i32
    %c0_i32_0 = arith.constant 0 : i32
    %c0_i32_1 = arith.constant 0 : i32
    return %c0_i32, %c0_i32_0 : i32, i32
  }
  func.func @transform_3(%arg0: i32, %arg1: i32) -> (i32, i32, i32) {
    %c0_i32 = arith.constant 0 : i32
    %c0_i32_0 = arith.constant 0 : i32
    return %arg0, %c0_i32, %arg1 : i32, i32, i32
  }
}

</mosaic_0001>

<llo_original>
// kernel: custom-call.5
$region0: #{custom-call.5}
  %s0 = inlined_call_operand.vmem [shape: bf16[8,8,64], index: 0, kind: output, shape index: {}]

// kernel: custom-call
$region0: #{custom-call}
  %s0 = inlined_call_operand.vmem [shape: f32[8,4,512], index: 0, kind: output, shape index: {}]

// kernel: squeeze.58
$region0: #{squeeze.58}
  %s0 = inlined_call_operand.vmem [shape: bf16[1,8,512], index: 0, kind: input, shape index: {}]
  %s1 = inlined_call_operand.vmem [shape: bf16[8,2,4,8,8], index: 1, kind: output, shape index: {}]
  $region1: #{squeeze.58} parent=0
    #allocation0 [shape = 'u8[262144]{0}', space=vmem, size = 0x40000, scoped, tag = 'scoped mem for output reshape']
    #allocation1 [shape = 'u8[16384]{0}', space=vmem, size = 0x4000, scoped, tag = 'scoped mem for input reshape']
    %s3 = smul.u32 4, 2
    %s4 = sshllo.u32 0, %s3
    %s5 = smul.addr 4, 3
    %s6 = scalar_lea.vmem %s0, %s5
    %s7 = sshrl.u32 %s4, 1
    %s8 = sor.u32 %s4, %s7
    %s9 = sand.u32 %s8, 85
    %s10 = sshrl.u32 %s9, 1
    %s11 = sor.u32 %s9, %s10
    %s12 = sand.u32 51, %s11
    %s13 = sshrl.u32 %s12, 2
    %s14 = sor.u32 %s12, %s13
    %s15 = sand.u32 15, %s14
    %v16 = vld [vmem:[%s6] sm:%s15]
    %v17 = vunpack.c.l.bf16 %v16
    %v18 = vunpack.c.h.bf16 %v16
    %s19 = scalar_lea.vmem [#allocation1], 24
    %20 = vst [vmem:[%s19] sm:%s4] %v17
    %s21 = smul.addr 4, 2
    %s22 = scalar_lea.vmem %s0, %s21
    %s23 = sshrl.u32 %s4, 1
    %s24 = sor.u32 %s4, %s23
    %s25 = sand.u32 %s24, 85
    %s26 = sshrl.u32 %s25, 1
    %s27 = sor.u32 %s25, %s26
    %s28 = sand.u32 51, %s27
    %s29 = sshrl.u32 %s28, 2
    %s30 = sor.u32 %s28, %s29
    %s31 = sand.u32 15, %s30
    %v32 = vld [vmem:[%s22] sm:%s31]
    %v33 = vunpack.c.l.bf16 %v32
    %v34 = vunpack.c.h.bf16 %v32
    %s35 = scalar_lea.vmem [#allocation1], 16
    %36 = vst [vmem:[%s35] sm:%s4] %v33
    %s37 = scalar_lea.vmem %s0, 4
    %s38 = sshrl.u32 %s4, 1
    %s39 = sor.u32 %s4, %s38
    %s40 = sand.u32 %s39, 85
    %s41 = sshrl.u32 %s40, 1
    %s42 = sor.u32 %s40, %s41
    %s43 = sand.u32 51, %s42
    %s44 = sshrl.u32 %s43, 2
    %s45 = sor.u32 %s43, %s44
    %s46 = sand.u32 15, %s45
    %v47 = vld [vmem:[%s37] sm:%s46]
    %v48 = vunpack.c.l.bf16 %v47
    %v49 = vunpack.c.h.bf16 %v47
    %s50 = scalar_lea.vmem [#allocation1], 8
    %51 = vst [vmem:[%s50] sm:%s4] %v48
    %s52 = sshrl.u32 %s4, 1
    %s53 = sor.u32 %s4, %s52
    %s54 = sand.u32 %s53, 85
    %s55 = sshrl.u32 %s54, 1
    %s56 = sor.u32 %s54, %s55
    %s57 = sand.u32 51, %s56
    %s58 = sshrl.u32 %s57, 2
    %s59 = sor.u32 %s57, %s58
    %s60 = sand.u32 15, %s59
    %v61 = vld [vmem:[%s0] sm:%s60]
    %v62 = vunpack.c.l.bf16 %v61
    %v63 = vunpack.c.h.bf16 %v61
    %64 = vst [vmem:[#allocation1] sm:%s4] %v62
    %v65 = vld [vmem:[#allocation1] sm:$0xff]
    %vm66 = vcmask 64512
    %67 = vst.msk [vmem:[#allocation0] sm:$0x1] %vm66, %v65
    %s68 = scalar_lea.vmem [#allocation0], 63
    %69 = vst.msk [vmem:[%s68] sm:$0x2] %vm66, %v65
    %s70 = scalar_lea.vmem [#allocation0], 126
    %71 = vst.msk [vmem:[%s70] sm:$0x4] %vm66, %v65
    %s72 = scalar_lea.vmem [#allocation0], 189
    %73 = vst.msk [vmem:[%s72] sm:$0x8] %vm66, %v65
    %s74 = scalar_lea.vmem [#allocation0], 252
    %75 = vst.msk [vmem:[%s74] sm:$0x10] %vm66, %v65
    %s76 = scalar_lea.vmem [#allocation0], 315
    %77 = vst.msk [vmem:[%s76] sm:$0x20] %vm66, %v65
    %s78 = scalar_lea.vmem [#allocation0], 378
    %79 = vst.msk [vmem:[%s78] sm:$0x40] %vm66, %v65
    %s80 = scalar_lea.vmem [#allocation0], 441
    %81 = vst.msk [vmem:[%s80] sm:$0x80] %vm66, %v65
    %s82 = scalar_lea.vmem [#allocation1], 8
    %v83 = vld [vmem:[%s82] sm:$0xff]
    %vm84 = vcmask 64512
    %s85 = scalar_lea.vmem [#allocation0], 16
    %86 = vst.msk [vmem:[%s85] sm:$0x1] %vm84, %v83
    %s87 = scalar_lea.vmem [#allocation0], 79
    %88 = vst.msk [vmem:[%s87] sm:$0x2] %vm84, %v83
    %s89 = scalar_lea.vmem [#allocation0], 142
    %90 = vst.msk [vmem:[%s89] sm:$0x4] %vm84, %v83
    %s91 = scalar_lea.vmem [#allocation0], 205
    %92 = vst.msk [vmem:[%s91] sm:$0x8] %vm84, %v83
    %s93 = scalar_lea.vmem [#allocation0], 268
    %94 = vst.msk [vmem:[%s93] sm:$0x10] %vm84, %v83
    %s95 = scalar_lea.vmem [#allocation0], 331
    %96 = vst.msk [vmem:[%s95] sm:$0x20] %vm84, %v83
    %s97 = scalar_lea.vmem [#allocation0], 394
    %98 = vst.msk [vmem:[%s97] sm:$0x40] %vm84, %v83
    %s99 = scalar_lea.vmem [#allocation0], 457
    %100 = vst.msk [vmem:[%s99] sm:$0x80] %vm84, %v83
    %s101 = scalar_lea.vmem [#allocation1], 16
    %v102 = vld [vmem:[%s101] sm:$0xff]
    %vm103 = vcmask 64512
    %s104 = scalar_lea.vmem [#allocation0], 32
    %105 = vst.msk [vmem:[%s104] sm:$0x1] %vm103, %v102
    %s106 = scalar_lea.vmem [#allocation0], 95
    %107 = vst.msk [vmem:[%s106] sm:$0x2] %vm103, %v102
    %s108 = scalar_lea.vmem [#allocation0], 158
    %109 = vst.msk [vmem:[%s108] sm:$0x4] %vm103, %v102
    %s110 = scalar_lea.vmem [#allocation0], 221
    %111 = vst.msk [vmem:[%s110] sm:$0x8] %vm103, %v102
    %s112 = scalar_lea.vmem [#allocation0], 284
    %113 = vst.msk [vmem:[%s112] sm:$0x10] %vm103, %v102
    %s114 = scalar_lea.vmem [#allocation0], 347
    %115 = vst.msk [vmem:[%s114] sm:$0x20] %vm103, %v102
    %s116 = scalar_lea.vmem [#allocation0], 410
    %117 = vst.msk [vmem:[%s116] sm:$0x40] %vm103, %v102
    %s118 = scalar_lea.vmem [#allocation0], 473
    %119 = vst.msk [vmem:[%s118] sm:$0x80] %vm103, %v102
    %s120 = scalar_lea.vmem [#allocation1], 24
    %v121 = vld [vmem:[%s120] sm:$0xff]
    %vm122 = vcmask 64512
    %s123 = scalar_lea.vmem [#allocation0], 48
    %124 = vst.msk [vmem:[%s123] sm:$0x1] %vm122, %v121
    %s125 = scalar_lea.vmem [#allocation0], 111
    %126 = vst.msk [vmem:[%s125] sm:$0x2] %vm122, %v121
    %s127 = scalar_lea.vmem [#allocation0], 174
    %128 = vst.msk [vmem:[%s127] sm:$0x4] %vm122, %v121
    %s129 = scalar_lea.vmem [#allocation0], 237
    %130 = vst.msk [vmem:[%s129] sm:$0x8] %vm122, %v121
    %s131 = scalar_lea.vmem [#allocation0], 300
    %132 = vst.msk [vmem:[%s131] sm:$0x10] %vm122, %v121
    %s133 = scalar_lea.vmem [#allocation0], 363
    %134 = vst.msk [vmem:[%s133] sm:$0x20] %vm122, %v121
    %s135 = scalar_lea.vmem [#allocation0], 426
    %136 = vst.msk [vmem:[%s135] sm:$0x40] %vm122, %v121
    %s137 = scalar_lea.vmem [#allocation0], 489
    %138 = vst.msk [vmem:[%s137] sm:$0x80] %vm122, %v121
    %v139 = vld.sshfl [vmem:[#allocation1] sm:$0xff pattern:$0xb3a29180]
    %140 = vrot.lane.b32.xlu0 %v139, 120
    %v141 = vpop.permute.xlu0 %140
    %vm142 = vcmask 64512
    %s143 = scalar_lea.vmem [#allocation0], 1
    %144 = vst.msk [vmem:[%s143] ss:$16 sm:$0x3] %vm142, %v141
    %s145 = scalar_lea.vmem [#allocation0], 33
    %146 = vst.msk [vmem:[%s145] ss:$16 sm:$0xc] %vm142, %v141
    %s147 = scalar_lea.vmem [#allocation0], 65
    %148 = vst.msk [vmem:[%s147] ss:$16 sm:$0x30] %vm142, %v141
    %s149 = scalar_lea.vmem [#allocation0], 97
    %150 = vst.msk [vmem:[%s149] ss:$16 sm:$0xc0] %vm142, %v141
    %s151 = scalar_lea.vmem [#allocation1], 4
    %v152 = vld.sshfl [vmem:[%s151] sm:$0xff pattern:$0xb3a29180]
    %153 = vrot.lane.b32.xlu0 %v152, 120
    %v154 = vpop.permute.xlu0 %153
    %vm155 = vcmask 64512
    %s156 = scalar_lea.vmem [#allocation0], 257
    %157 = vst.msk [vmem:[%s156] ss:$16 sm:$0x3] %vm155, %v154
    %s158 = scalar_lea.vmem [#allocation0], 289
    %159 = vst.msk [vmem:[%s158] ss:$16 sm:$0xc] %vm155, %v154
    %s160 = scalar_lea.vmem [#allocation0], 321
    %161 = vst.msk [vmem:[%s160] ss:$16 sm:$0x30] %vm155, %v154
    %s162 = scalar_lea.vmem [#allocation0], 353
    %163 = vst.msk [vmem:[%s162] ss:$16 sm:$0xc0] %vm155, %v154
    %s164 = scalar_lea.vmem [#allocation1], 16
    %v165 = vld.sshfl [vmem:[%s164] sm:$0xff pattern:$0xb3a29180]
    %166 = vrot.lane.b32.xlu0 %v165, 120
    %v167 = vpop.permute.xlu0 %166
    %vm168 = vcmask 64512
    %s169 = scalar_lea.vmem [#allocation0], 33
    %170 = vst.msk [vmem:[%s169] ss:$16 sm:$0x3] %vm168, %v167
    %s171 = scalar_lea.vmem [#allocation0], 65
    %172 = vst.msk [vmem:[%s171] ss:$16 sm:$0xc] %vm168, %v167
    %s173 = scalar_lea.vmem [#allocation0], 97
    %174 = vst.msk [vmem:[%s173] ss:$16 sm:$0x30] %vm168, %v167
    %s175 = scalar_lea.vmem [#allocation0], 129
    %176 = vst.msk [vmem:[%s175] ss:$16 sm:$0xc0] %vm168, %v167
    %s177 = scalar_lea.vmem [#allocation1], 20
    %v178 = vld.sshfl [vmem:[%s177] sm:$0xff pattern:$0xb3a29180]
    %179 = vrot.lane.b32.xlu0 %v178, 120
    %v180 = vpop.permute.xlu0 %179
    %vm181 = vcmask 64512
    %s182 = scalar_lea.vmem [#allocation0], 289
    %183 = vst.msk [vmem:[%s182] ss:$16 sm:$0x3] %vm181, %v180
    %s184 = scalar_lea.vmem [#allocation0], 321
    %185 = vst.msk [vmem:[%s184] ss:$16 sm:$0xc] %vm181, %v180
    %s186 = scalar_lea.vmem [#allocation0], 353
    %187 = vst.msk [vmem:[%s186] ss:$16 sm:$0x30] %vm181, %v180
    %s188 = scalar_lea.vmem [#allocation0], 385
    %189 = vst.msk [vmem:[%s188] ss:$16 sm:$0xc0] %vm181, %v180
    %v190 = vld.sshfl [vmem:[#allocation1] sm:$0xff pattern:$0xb3a29180]
    %191 = vrot.lane.b32.xlu0 %v190, 112
    %v192 = vpop.permute.xlu0 %191
    %vm193 = vcmask 64512
    %s194 = scalar_lea.vmem [#allocation0], 2
    %195 = vst.msk [vmem:[%s194] ss:$16 sm:$0x3] %vm193, %v192
    %s196 = scalar_lea.vmem [#allocation0], 34
    %197 = vst.msk [vmem:[%s196] ss:$16 sm:$0xc] %vm193, %v192
    %s198 = scalar_lea.vmem [#allocation0], 66
    %199 = vst.msk [vmem:[%s198] ss:$16 sm:$0x30] %vm193, %v192
    %s200 = scalar_lea.vmem [#allocation0], 98
    %201 = vst.msk [vmem:[%s200] ss:$16 sm:$0xc0] %vm193, %v192
    %s202 = scalar_lea.vmem [#allocation1], 4
    %v203 = vld.sshfl [vmem:[%s202] sm:$0xff pattern:$0xb3a29180]
    %204 = vrot.lane.b32.xlu0 %v203, 112
    %v205 = vpop.permute.xlu0 %204
    %vm206 = vcmask 64512
    %s207 = scalar_lea.vmem [#allocation0], 258
    %208 = vst.msk [vmem:[%s207] ss:$16 sm:$0x3] %vm206, %v205
    %s209 = scalar_lea.vmem [#allocation0], 290
    %210 = vst.msk [vmem:[%s209] ss:$16 sm:$0xc] %vm206, %v205
    %s211 = scalar_lea.vmem [#allocation0], 322
    %212 = vst.msk [vmem:[%s211] ss:$16 sm:$0x30] %vm206, %v205
    %s213 = scalar_lea.vmem [#allocation0], 354
    %214 = vst.msk [vmem:[%s213] ss:$16 sm:$0xc0] %vm206, %v205
    %s215 = scalar_lea.vmem [#allocation1], 16
    %v216 = vld.sshfl [vmem:[%s215] sm:$0xff pattern:$0xb3a29180]
    %217 = vrot.lane.b32.xlu0 %v216, 112
    %v218 = vpop.permute.xlu0 %217
    %vm219 = vcmask 64512
    %s220 = scalar_lea.vmem [#allocation0], 34
    %221 = vst.msk [vmem:[%s220] ss:$16 sm:$0x3] %vm219, %v218
    %s222 = scalar_lea.vmem [#allocation0], 66
    %223 = vst.msk [vmem:[%s222] ss:$16 sm:$0xc] %vm219, %v218
    %s224 = scalar_lea.vmem [#allocation0], 98
    %225 = vst.msk [vmem:[%s224] ss:$16 sm:$0x30] %vm219, %v218
    %s226 = scalar_lea.vmem [#allocation0], 130
    %227 = vst.msk [vmem:[%s226] ss:$16 sm:$0xc0] %vm219, %v218
    %s228 = scalar_lea.vmem [#allocation1], 20
    %v229 = vld.sshfl [vmem:[%s228] sm:$0xff pattern:$0xb3a29180]
    %230 = vrot.lane.b32.xlu0 %v229, 112
    %v231 = vpop.permute.xlu0 %230
    %vm232 = vcmask 64512
    %s233 = scalar_lea.vmem [#allocation0], 290
    %234 = vst.msk [vmem:[%s233] ss:$16 sm:$0x3] %vm232, %v231
    %s235 = scalar_lea.vmem [#allocation0], 322
    %236 = vst.msk [vmem:[%s235] ss:$16 sm:$0xc] %vm232, %v231
    %s237 = scalar_lea.vmem [#allocation0], 354
    %238 = vst.msk [vmem:[%s237] ss:$16 sm:$0x30] %vm232, %v231
    %s239 = scalar_lea.vmem [#allocation0], 386
    %240 = vst.msk [vmem:[%s239] ss:$16 sm:$0xc0] %vm232, %v231
    %v241 = vld.sshfl [vmem:[#allocation1] sm:$0xff pattern:$0xb3a29180]
    %242 = vrot.lane.b32.xlu0 %v241, 104
    %v243 = vpop.permute.xlu0 %242
    %vm244 = vcmask 64512
    %s245 = scalar_lea.vmem [#allocation0], 3
    %246 = vst.msk [vmem:[%s245] ss:$16 sm:$0x3] %vm244, %v243
    %s247 = scalar_lea.vmem [#allocation0], 35
    %248 = vst.msk [vmem:[%s247] ss:$16 sm:$0xc] %vm244, %v243
    %s249 = scalar_lea.vmem [#allocation0], 67
    %250 = vst.msk [vmem:[%s249] ss:$16 sm:$0x30] %vm244, %v243
    %s251 = scalar_lea.vmem [#allocation0], 99
    %252 = vst.msk [vmem:[%s251] ss:$16 sm:$0xc0] %vm244, %v243
    %s253 = scalar_lea.vmem [#allocation1], 4
    %v254 = vld.sshfl [vmem:[%s253] sm:$0xff pattern:$0xb3a29180]
    %255 = vrot.lane.b32.xlu0 %v254, 104
    %v256 = vpop.permute.xlu0 %255
    %vm257 = vcmask 64512
    %s258 = scalar_lea.vmem [#allocation0], 259
    %259 = vst.msk [vmem:[%s258] ss:$16 sm:$0x3] %vm257, %v256
    %s260 = scalar_lea.vmem [#allocation0], 291
    %261 = vst.msk [vmem:[%s260] ss:$16 sm:$0xc] %vm257, %v256
    %s262 = scalar_lea.vmem [#allocation0], 323
    %263 = vst.msk [vmem:[%s262] ss:$16 sm:$0x30] %vm257, %v256
    %s264 = scalar_lea.vmem [#allocation0], 355
    %265 = vst.msk [vmem:[%s264] ss:$16 sm:$0xc0] %vm257, %v256
    %s266 = scalar_lea.vmem [#allocation1], 16
    %v267 = vld.sshfl [vmem:[%s266] sm:$0xff pattern:$0xb3a29180]
    %268 = vrot.lane.b32.xlu0 %v267, 104
    %v269 = vpop.permute.xlu0 %268
    %vm270 = vcmask 64512
    %s271 = scalar_lea.vmem [#allocation0], 35
    %272 = vst.msk [vmem:[%s271] ss:$16 sm:$0x3] %vm270, %v269
    %s273 = scalar_lea.vmem [#allocation0], 67
    %274 = vst.msk [vmem:[%s273] ss:$16 sm:$0xc] %vm270, %v269
    %s275 = scalar_lea.vmem [#allocation0], 99
    %276 = vst.msk [vmem:[%s275] ss:$16 sm:$0x30] %vm270, %v269
    %s277 = scalar_lea.vmem [#allocation0], 131
    %278 = vst.msk [vmem:[%s277] ss:$16 sm:$0xc0] %vm270, %v269
    %s279 = scalar_lea.vmem [#allocation1], 20
    %v280 = vld.sshfl [vmem:[%s279] sm:$0xff pattern:$0xb3a29180]
    %281 = vrot.lane.b32.xlu0 %v280, 104
    %v282 = vpop.permute.xlu0 %281
    %vm283 = vcmask 64512
    %s284 = scalar_lea.vmem [#allocation0], 291
    %285 = vst.msk [vmem:[%s284] ss:$16 sm:$0x3] %vm283, %v282
    %s286 = scalar_lea.vmem [#allocation0], 323
    %287 = vst.msk [vmem:[%s286] ss:$16 sm:$0xc] %vm283, %v282
    %s288 = scalar_lea.vmem [#allocation0], 355
    %289 = vst.msk [vmem:[%s288] ss:$16 sm:$0x30] %vm283, %v282
    %s290 = scalar_lea.vmem [#allocation0], 387
    %291 = vst.msk [vmem:[%s290] ss:$16 sm:$0xc0] %vm283, %v282
    %v292 = vld.sshfl [vmem:[#allocation1] sm:$0xff pattern:$0xb3a29180]
    %293 = vrot.lane.b32.xlu0 %v292, 96
    %v294 = vpop.permute.xlu0 %293
    %vm295 = vcmask 64512
    %s296 = scalar_lea.vmem [#allocation0], 4
    %297 = vst.msk [vmem:[%s296] ss:$16 sm:$0x3] %vm295, %v294
    %s298 = scalar_lea.vmem [#allocation0], 36
    %299 = vst.msk [vmem:[%s298] ss:$16 sm:$0xc] %vm295, %v294
    %s300 = scalar_lea.vmem [#allocation0], 68
    %301 = vst.msk [vmem:[%s300] ss:$16 sm:$0x30] %vm295, %v294
    %s302 = scalar_lea.vmem [#allocation0], 100
    %303 = vst.msk [vmem:[%s302] ss:$16 sm:$0xc0] %vm295, %v294
    %s304 = scalar_lea.vmem [#allocation1], 4
    %v305 = vld.sshfl [vmem:[%s304] sm:$0xff pattern:$0xb3a29180]
    %306 = vrot.lane.b32.xlu0 %v305, 96
    %v307 = vpop.permute.xlu0 %306
    %vm308 = vcmask 64512
    %s309 = scalar_lea.vmem [#allocation0], 260
    %310 = vst.msk [vmem:[%s309] ss:$16 sm:$0x3] %vm308, %v307
    %s311 = scalar_lea.vmem [#allocation0], 292
    %312 = vst.msk [vmem:[%s311] ss:$16 sm:$0xc] %vm308, %v307
    %s313 = scalar_lea.vmem [#allocation0], 324
    %314 = vst.msk [vmem:[%s313] ss:$16 sm:$0x30] %vm308, %v307
    %s315 = scalar_lea.vmem [#allocation0], 356
    %316 = vst.msk [vmem:[%s315] ss:$16 sm:$0xc0] %vm308, %v307
    %s317 = scalar_lea.vmem [#allocation1], 16
    %v318 = vld.sshfl [vmem:[%s317] sm:$0xff pattern:$0xb3a29180]
    %319 = vrot.lane.b32.xlu0 %v318, 96
    %v320 = vpop.permute.xlu0 %319
    %vm321 = vcmask 64512
    %s322 = scalar_lea.vmem [#allocation0], 36
    %323 = vst.msk [vmem:[%s322] ss:$16 sm:$0x3] %vm321, %v320
    %s324 = scalar_lea.vmem [#allocation0], 68
    %325 = vst.msk [vmem:[%s324] ss:$16 sm:$0xc] %vm321, %v320
    %s326 = scalar_lea.vmem [#allocation0], 100
    %327 = vst.msk [vmem:[%s326] ss:$16 sm:$0x30] %vm321, %v320
    %s328 = scalar_lea.vmem [#allocation0], 132
    %329 = vst.msk [vmem:[%s328] ss:$16 sm:$0xc0] %vm321, %v320
    %s330 = scalar_lea.vmem [#allocation1], 20
    %v331 = vld.sshfl [vmem:[%s330] sm:$0xff pattern:$0xb3a29180]
    %332 = vrot.lane.b32.xlu0 %v331, 96
    %v333 = vpop.permute.xlu0 %332
    %vm334 = vcmask 64512
    %s335 = scalar_lea.vmem [#allocation0], 292
    %336 = vst.msk [vmem:[%s335] ss:$16 sm:$0x3] %vm334, %v333
    %s337 = scalar_lea.vmem [#allocation0], 324
    %338 = vst.msk [vmem:[%s337] ss:$16 sm:$0xc] %vm334, %v333
    %s339 = scalar_lea.vmem [#allocation0], 356
    %340 = vst.msk [vmem:[%s339] ss:$16 sm:$0x30] %vm334, %v333
    %s341 = scalar_lea.vmem [#allocation0], 388
    %342 = vst.msk [vmem:[%s341] ss:$16 sm:$0xc0] %vm334, %v333
    %v343 = vld.sshfl [vmem:[#allocation1] sm:$0xff pattern:$0xb3a29180]
    %344 = vrot.lane.b32.xlu0 %v343, 88
    %v345 = vpop.permute.xlu0 %344
    %vm346 = vcmask 64512
    %s347 = scalar_lea.vmem [#allocation0], 5
    %348 = vst.msk [vmem:[%s347] ss:$16 sm:$0x3] %vm346, %v345
    %s349 = scalar_lea.vmem [#allocation0], 37
    %350 = vst.msk [vmem:[%s349] ss:$16 sm:$0xc] %vm346, %v345
    %s351 = scalar_lea.vmem [#allocation0], 69
    %352 = vst.msk [vmem:[%s351] ss:$16 sm:$0x30] %vm346, %v345
    %s353 = scalar_lea.vmem [#allocation0], 101
    %354 = vst.msk [vmem:[%s353] ss:$16 sm:$0xc0] %vm346, %v345
    %s355 = scalar_lea.vmem [#allocation1], 4
    %v356 = vld.sshfl [vmem:[%s355] sm:$0xff pattern:$0xb3a29180]
    %357 = vrot.lane.b32.xlu0 %v356, 88
    %v358 = vpop.permute.xlu0 %357
    %vm359 = vcmask 64512
    %s360 = scalar_lea.vmem [#allocation0], 261
    %361 = vst.msk [vmem:[%s360] ss:$16 sm:$0x3] %vm359, %v358
    %s362 = scalar_lea.vmem [#allocation0], 293
    %363 = vst.msk [vmem:[%s362] ss:$16 sm:$0xc] %vm359, %v358
    %s364 = scalar_lea.vmem [#allocation0], 325
    %365 = vst.msk [vmem:[%s364] ss:$16 sm:$0x30] %vm359, %v358
    %s366 = scalar_lea.vmem [#allocation0], 357
    %367 = vst.msk [vmem:[%s366] ss:$16 sm:$0xc0] %vm359, %v358
    %s368 = scalar_lea.vmem [#allocation1], 16
    %v369 = vld.sshfl [vmem:[%s368] sm:$0xff pattern:$0xb3a29180]
    %370 = vrot.lane.b32.xlu0 %v369, 88
    %v371 = vpop.permute.xlu0 %370
    %vm372 = vcmask 64512
    %s373 = scalar_lea.vmem [#allocation0], 37
    %374 = vst.msk [vmem:[%s373] ss:$16 sm:$0x3] %vm372, %v371
    %s375 = scalar_lea.vmem [#allocation0], 69
    %376 = vst.msk [vmem:[%s375] ss:$16 sm:$0xc] %vm372, %v371
    %s377 = scalar_lea.vmem [#allocation0], 101
    %378 = vst.msk [vmem:[%s377] ss:$16 sm:$0x30] %vm372, %v371
    %s379 = scalar_lea.vmem [#allocation0], 133
    %380 = vst.msk [vmem:[%s379] ss:$16 sm:$0xc0] %vm372, %v371
    %s381 = scalar_lea.vmem [#allocation1], 20
    %v382 = vld.sshfl [vmem:[%s381] sm:$0xff pattern:$0xb3a29180]
    %383 = vrot.lane.b32.xlu0 %v382, 88
    %v384 = vpop.permute.xlu0 %383
    %vm385 = vcmask 64512
    %s386 = scalar_lea.vmem [#allocation0], 293
    %387 = vst.msk [vmem:[%s386] ss:$16 sm:$0x3] %vm385, %v384
    %s388 = scalar_lea.vmem [#allocation0], 325
    %389 = vst.msk [vmem:[%s388] ss:$16 sm:$0xc] %vm385, %v384
    %s390 = scalar_lea.vmem [#allocation0], 357
    %391 = vst.msk [vmem:[%s390] ss:$16 sm:$0x30] %vm385, %v384
    %s392 = scalar_lea.vmem [#allocation0], 389
    %393 = vst.msk [vmem:[%s392] ss:$16 sm:$0xc0] %vm385, %v384
    %v394 = vld.sshfl [vmem:[#allocation1] sm:$0xff pattern:$0xb3a29180]
    %395 = vrot.lane.b32.xlu0 %v394, 80
    %v396 = vpop.permute.xlu0 %395
    %vm397 = vcmask 64512
    %s398 = scalar_lea.vmem [#allocation0], 6
    %399 = vst.msk [vmem:[%s398] ss:$16 sm:$0x3] %vm397, %v396
    %s400 = scalar_lea.vmem [#allocation0], 38
    %401 = vst.msk [vmem:[%s400] ss:$16 sm:$0xc] %vm397, %v396
    %s402 = scalar_lea.vmem [#allocation0], 70
    %403 = vst.msk [vmem:[%s402] ss:$16 sm:$0x30] %vm397, %v396
    %s404 = scalar_lea.vmem [#allocation0], 102
    %405 = vst.msk [vmem:[%s404] ss:$16 sm:$0xc0] %vm397, %v396
    %s406 = scalar_lea.vmem [#allocation1], 4
    %v407 = vld.sshfl [vmem:[%s406] sm:$0xff pattern:$0xb3a29180]
    %408 = vrot.lane.b32.xlu0 %v407, 80
    %v409 = vpop.permute.xlu0 %408
    %vm410 = vcmask 64512
    %s411 = scalar_lea.vmem [#allocation0], 262
    %412 = vst.msk [vmem:[%s411] ss:$16 sm:$0x3] %vm410, %v409
    %s413 = scalar_lea.vmem [#allocation0], 294
    %414 = vst.msk [vmem:[%s413] ss:$16 sm:$0xc] %vm410, %v409
    %s415 = scalar_lea.vmem [#allocation0], 326
    %416 = vst.msk [vmem:[%s415] ss:$16 sm:$0x30] %vm410, %v409
    %s417 = scalar_lea.vmem [#allocation0], 358
    %418 = vst.msk [vmem:[%s417] ss:$16 sm:$0xc0] %vm410, %v409
    %s419 = scalar_lea.vmem [#allocation1], 16
    %v420 = vld.sshfl [vmem:[%s419] sm:$0xff pattern:$0xb3a29180]
    %421 = vrot.lane.b32.xlu0 %v420, 80
    %v422 = vpop.permute.xlu0 %421
    %vm423 = vcmask 64512
    %s424 = scalar_lea.vmem [#allocation0], 38
    %425 = vst.msk [vmem:[%s424] ss:$16 sm:$0x3] %vm423, %v422
    %s426 = scalar_lea.vmem [#allocation0], 70
    %427 = vst.msk [vmem:[%s426] ss:$16 sm:$0xc] %vm423, %v422
    %s428 = scalar_lea.vmem [#allocation0], 102
    %429 = vst.msk [vmem:[%s428] ss:$16 sm:$0x30] %vm423, %v422
    %s430 = scalar_lea.vmem [#allocation0], 134
    %431 = vst.msk [vmem:[%s430] ss:$16 sm:$0xc0] %vm423, %v422
    %s432 = scalar_lea.vmem [#allocation1], 20
    %v433 = vld.sshfl [vmem:[%s432] sm:$0xff pattern:$0xb3a29180]
    %434 = vrot.lane.b32.xlu0 %v433, 80
    %v435 = vpop.permute.xlu0 %434
    %vm436 = vcmask 64512
    %s437 = scalar_lea.vmem [#allocation0], 294
    %438 = vst.msk [vmem:[%s437] ss:$16 sm:$0x3] %vm436, %v435
    %s439 = scalar_lea.vmem [#allocation0], 326
    %440 = vst.msk [vmem:[%s439] ss:$16 sm:$0xc] %vm436, %v435
    %s441 = scalar_lea.vmem [#allocation0], 358
    %442 = vst.msk [vmem:[%s441] ss:$16 sm:$0x30] %vm436, %v435
    %s443 = scalar_lea.vmem [#allocation0], 390
    %444 = vst.msk [vmem:[%s443] ss:$16 sm:$0xc0] %vm436, %v435
    %v445 = vld.sshfl [vmem:[#allocation1] sm:$0xff pattern:$0xb3a29180]
    %446 = vrot.lane.b32.xlu0 %v445, 72
    %v447 = vpop.permute.xlu0 %446
    %vm448 = vcmask 64512
    %s449 = scalar_lea.vmem [#allocation0], 7
    %450 = vst.msk [vmem:[%s449] ss:$16 sm:$0x3] %vm448, %v447
    %s451 = scalar_lea.vmem [#allocation0], 39
    %452 = vst.msk [vmem:[%s451] ss:$16 sm:$0xc] %vm448, %v447
    %s453 = scalar_lea.vmem [#allocation0], 71
    %454 = vst.msk [vmem:[%s453] ss:$16 sm:$0x30] %vm448, %v447
    %s455 = scalar_lea.vmem [#allocation0], 103
    %456 = vst.msk [vmem:[%s455] ss:$16 sm:$0xc0] %vm448, %v447
    %s457 = scalar_lea.vmem [#allocation1], 4
    %v458 = vld.sshfl [vmem:[%s457] sm:$0xff pattern:$0xb3a29180]
    %459 = vrot.lane.b32.xlu0 %v458, 72
    %v460 = vpop.permute.xlu0 %459
    %vm461 = vcmask 64512
    %s462 = scalar_lea.vmem [#allocation0], 263
    %463 = vst.msk [vmem:[%s462] ss:$16 sm:$0x3] %vm461, %v460
    %s464 = scalar_lea.vmem [#allocation0], 295
    %465 = vst.msk [vmem:[%s464] ss:$16 sm:$0xc] %vm461, %v460
    %s466 = scalar_lea.vmem [#allocation0], 327
    %467 = vst.msk [vmem:[%s466] ss:$16 sm:$0x30] %vm461, %v460
    %s468 = scalar_lea.vmem [#allocation0], 359
    %469 = vst.msk [vmem:[%s468] ss:$16 sm:$0xc0] %vm461, %v460
    %s470 = scalar_lea.vmem [#allocation1], 16
    %v471 = vld.sshfl [vmem:[%s470] sm:$0xff pattern:$0xb3a29180]
    %472 = vrot.lane.b32.xlu0 %v471, 72
    %v473 = vpop.permute.xlu0 %472
    %vm474 = vcmask 64512
    %s475 = scalar_lea.vmem [#allocation0], 39
    %476 = vst.msk [vmem:[%s475] ss:$16 sm:$0x3] %vm474, %v473
    %s477 = scalar_lea.vmem [#allocation0], 71
    %478 = vst.msk [vmem:[%s477] ss:$16 sm:$0xc] %vm474, %v473
    %s479 = scalar_lea.vmem [#allocation0], 103
    %480 = vst.msk [vmem:[%s479] ss:$16 sm:$0x30] %vm474, %v473
    %s481 = scalar_lea.vmem [#allocation0], 135
    %482 = vst.msk [vmem:[%s481] ss:$16 sm:$0xc0] %vm474, %v473
    %s483 = scalar_lea.vmem [#allocation1], 20
    %v484 = vld.sshfl [vmem:[%s483] sm:$0xff pattern:$0xb3a29180]
    %485 = vrot.lane.b32.xlu0 %v484, 72
    %v486 = vpop.permute.xlu0 %485
    %vm487 = vcmask 64512
    %s488 = scalar_lea.vmem [#allocation0], 295
    %489 = vst.msk [vmem:[%s488] ss:$16 sm:$0x3] %vm487, %v486
    %s490 = scalar_lea.vmem [#allocation0], 327
    %491 = vst.msk [vmem:[%s490] ss:$16 sm:$0xc] %vm487, %v486
    %s492 = scalar_lea.vmem [#allocation0], 359
    %493 = vst.msk [vmem:[%s492] ss:$16 sm:$0x30] %vm487, %v486
    %s494 = scalar_lea.vmem [#allocation0], 391
    %495 = vst.msk [vmem:[%s494] ss:$16 sm:$0xc0] %vm487, %v486
    %v496 = vld.sshfl [vmem:[#allocation1] sm:$0xff pattern:$0xb3a29180]
    %497 = vrot.lane.b32.xlu0 %v496, 64
    %v498 = vpop.permute.xlu0 %497
    %vm499 = vcmask 64512
    %s500 = scalar_lea.vmem [#allocation0], 8
    %501 = vst.msk [vmem:[%s500] ss:$16 sm:$0x3] %vm499, %v498
    %s502 = scalar_lea.vmem [#allocation0], 40
    %503 = vst.msk [vmem:[%s502] ss:$16 sm:$0xc] %vm499, %v498
    %s504 = scalar_lea.vmem [#allocation0], 72
    %505 = vst.msk [vmem:[%s504] ss:$16 sm:$0x30] %vm499, %v498
    %s506 = scalar_lea.vmem [#allocation0], 104
    %507 = vst.msk [vmem:[%s506] ss:$16 sm:$0xc0] %vm499, %v498
    %s508 = scalar_lea.vmem [#allocation1], 4
    %v509 = vld.sshfl [vmem:[%s508] sm:$0xff pattern:$0xb3a29180]
    %510 = vrot.lane.b32.xlu0 %v509, 64
    %v511 = vpop.permute.xlu0 %510
    %vm512 = vcmask 64512
    %s513 = scalar_lea.vmem [#allocation0], 264
    %514 = vst.msk [vmem:[%s513] ss:$16 sm:$0x3] %vm512, %v511
    %s515 = scalar_lea.vmem [#allocation0], 296
    %516 = vst.msk [vmem:[%s515] ss:$16 sm:$0xc] %vm512, %v511
    %s517 = scalar_lea.vmem [#allocation0], 328
    %518 = vst.msk [vmem:[%s517] ss:$16 sm:$0x30] %vm512, %v511
    %s519 = scalar_lea.vmem [#allocation0], 360
    %520 = vst.msk [vmem:[%s519] ss:$16 sm:$0xc0] %vm512, %v511
    %s521 = scalar_lea.vmem [#allocation1], 16
    %v522 = vld.sshfl [vmem:[%s521] sm:$0xff pattern:$0xb3a29180]
    %523 = vrot.lane.b32.xlu0 %v522, 64
    %v524 = vpop.permute.xlu0 %523
    %vm525 = vcmask 64512
    %s526 = scalar_lea.vmem [#allocation0], 40
    %527 = vst.msk [vmem:[%s526] ss:$16 sm:$0x3] %vm525, %v524
    %s528 = scalar_lea.vmem [#allocation0], 72
    %529 = vst.msk [vmem:[%s528] ss:$16 sm:$0xc] %vm525, %v524
    %s530 = scalar_lea.vmem [#allocation0], 104
    %531 = vst.msk [vmem:[%s530] ss:$16 sm:$0x30] %vm525, %v524
    %s532 = scalar_lea.vmem [#allocation0], 136
    %533 = vst.msk [vmem:[%s532] ss:$16 sm:$0xc0] %vm525, %v524
    %s534 = scalar_lea.vmem [#allocation1], 20
    %v535 = vld.sshfl [vmem:[%s534] sm:$0xff pattern:$0xb3a29180]
    %536 = vrot.lane.b32.xlu0 %v535, 64
    %v537 = vpop.permute.xlu0 %536
    %vm538 = vcmask 64512
    %s539 = scalar_lea.vmem [#allocation0], 296
    %540 = vst.msk [vmem:[%s539] ss:$16 sm:$0x3] %vm538, %v537
    %s541 = scalar_lea.vmem [#allocation0], 328
    %542 = vst.msk [vmem:[%s541] ss:$16 sm:$0xc] %vm538, %v537
    %s543 = scalar_lea.vmem [#allocation0], 360
    %544 = vst.msk [vmem:[%s543] ss:$16 sm:$0x30] %vm538, %v537
    %s545 = scalar_lea.vmem [#allocation0], 392
    %546 = vst.msk [vmem:[%s545] ss:$16 sm:$0xc0] %vm538, %v537
    %v547 = vld.sshfl [vmem:[#allocation1] sm:$0xff pattern:$0xb3a29180]
    %548 = vrot.lane.b32.xlu0 %v547, 56
    %v549 = vpop.permute.xlu0 %548
    %vm550 = vcmask 64512
    %s551 = scalar_lea.vmem [#allocation0], 9
    %552 = vst.msk [vmem:[%s551] ss:$16 sm:$0x3] %vm550, %v549
    %s553 = scalar_lea.vmem [#allocation0], 41
    %554 = vst.msk [vmem:[%s553] ss:$16 sm:$0xc] %vm550, %v549
    %s555 = scalar_lea.vmem [#allocation0], 73
    %556 = vst.msk [vmem:[%s555] ss:$16 sm:$0x30] %vm550, %v549
    %s557 = scalar_lea.vmem [#allocation0], 105
    %558 = vst.msk [vmem:[%s557] ss:$16 sm:$0xc0] %vm550, %v549
    %s559 = scalar_lea.vmem [#allocation1], 4
    %v560 = vld.sshfl [vmem:[%s559] sm:$0xff pattern:$0xb3a29180]
    %561 = vrot.lane.b32.xlu0 %v560, 56
    %v562 = vpop.permute.xlu0 %561
    %vm563 = vcmask 64512
    %s564 = scalar_lea.vmem [#allocation0], 265
    %565 = vst.msk [vmem:[%s564] ss:$16 sm:$0x3] %vm563, %v562
    %s566 = scalar_lea.vmem [#allocation0], 297
    %567 = vst.msk [vmem:[%s566] ss:$16 sm:$0xc] %vm563, %v562
    %s568 = scalar_lea.vmem [#allocation0], 329
    %569 = vst.msk [vmem:[%s568] ss:$16 sm:$0x30] %vm563, %v562
    %s570 = scalar_lea.vmem [#allocation0], 361
    %571 = vst.msk [vmem:[%s570] ss:$16 sm:$0xc0] %vm563, %v562
    %s572 = scalar_lea.vmem [#allocation1], 16
    %v573 = vld.sshfl [vmem:[%s572] sm:$0xff pattern:$0xb3a29180]
    %574 = vrot.lane.b32.xlu0 %v573, 56
    %v575 = vpop.permute.xlu0 %574
    %vm576 = vcmask 64512
    %s577 = scalar_lea.vmem [#allocation0], 41
    %578 = vst.msk [vmem:[%s577] ss:$16 sm:$0x3] %vm576, %v575
    %s579 = scalar_lea.vmem [#allocation0], 73
    %580 = vst.msk [vmem:[%s579] ss:$16 sm:$0xc] %vm576, %v575
    %s581 = scalar_lea.vmem [#allocation0], 105
    %582 = vst.msk [vmem:[%s581] ss:$16 sm:$0x30] %vm576, %v575
    %s583 = scalar_lea.vmem [#allocation0], 137
    %584 = vst.msk [vmem:[%s583] ss:$16 sm:$0xc0] %vm576, %v575
    %s585 = scalar_lea.vmem [#allocation1], 20
    %v586 = vld.sshfl [vmem:[%s585] sm:$0xff pattern:$0xb3a29180]
    %587 = vrot.lane.b32.xlu0 %v586, 56
    %v588 = vpop.permute.xlu0 %587
    %vm589 = vcmask 64512
    %s590 = scalar_lea.vmem [#allocation0], 297
    %591 = vst.msk [vmem:[%s590] ss:$16 sm:$0x3] %vm589, %v588
    %s592 = scalar_lea.vmem [#allocation0], 329
    %593 = vst.msk [vmem:[%s592] ss:$16 sm:$0xc] %vm589, %v588
    %s594 = scalar_lea.vmem [#allocation0], 361
    %595 = vst.msk [vmem:[%s594] ss:$16 sm:$0x30] %vm589, %v588
    %s596 = scalar_lea.vmem [#allocation0], 393
    %597 = vst.msk [vmem:[%s596] ss:$16 sm:$0xc0] %vm589, %v588
    %v598 = vld.sshfl [vmem:[#allocation1] sm:$0xff pattern:$0xb3a29180]
    %599 = vrot.lane.b32.xlu0 %v598, 48
    %v600 = vpop.permute.xlu0 %599
    %vm601 = vcmask 64512
    %s602 = scalar_lea.vmem [#allocation0], 10
    %603 = vst.msk [vmem:[%s602] ss:$16 sm:$0x3] %vm601, %v600
    %s604 = scalar_lea.vmem [#allocation0], 42
    %605 = vst.msk [vmem:[%s604] ss:$16 sm:$0xc] %vm601, %v600
    %s606 = scalar_lea.vmem [#allocation0], 74
    %607 = vst.msk [vmem:[%s606] ss:$16 sm:$0x30] %vm601, %v600
    %s608 = scalar_lea.vmem [#allocation0], 106
    %609 = vst.msk [vmem:[%s608] ss:$16 sm:$0xc0] %vm601, %v600
    %s610 = scalar_lea.vmem [#allocation1], 4
    %v611 = vld.sshfl [vmem:[%s610] sm:$0xff pattern:$0xb3a29180]
    %612 = vrot.lane.b32.xlu0 %v611, 48
    %v613 = vpop.permute.xlu0 %612
    %vm614 = vcmask 64512
    %s615 = scalar_lea.vmem [#allocation0], 266
    %616 = vst.msk [vmem:[%s615] ss:$16 sm:$0x3] %vm614, %v613
    %s617 = scalar_lea.vmem [#allocation0], 298
    %618 = vst.msk [vmem:[%s617] ss:$16 sm:$0xc] %vm614, %v613
    %s619 = scalar_lea.vmem [#allocation0], 330
    %620 = vst.msk [vmem:[%s619] ss:$16 sm:$0x30] %vm614, %v613
    %s621 = scalar_lea.vmem [#allocation0], 362
    %622 = vst.msk [vmem:[%s621] ss:$16 sm:$0xc0] %vm614, %v613
    %s623 = scalar_lea.vmem [#allocation1], 16
    %v624 = vld.sshfl [vmem:[%s623] sm:$0xff pattern:$0xb3a29180]
    %625 = vrot.lane.b32.xlu0 %v624, 48
    %v626 = vpop.permute.xlu0 %625
    %vm627 = vcmask 64512
    %s628 = scalar_lea.vmem [#allocation0], 42
    %629 = vst.msk [vmem:[%s628] ss:$16 sm:$0x3] %vm627, %v626
    %s630 = scalar_lea.vmem [#allocation0], 74
    %631 = vst.msk [vmem:[%s630] ss:$16 sm:$0xc] %vm627, %v626
    %s632 = scalar_lea.vmem [#allocation0], 106
    %633 = vst.msk [vmem:[%s632] ss:$16 sm:$0x30] %vm627, %v626
    %s634 = scalar_lea.vmem [#allocation0], 138
    %635 = vst.msk [vmem:[%s634] ss:$16 sm:$0xc0] %vm627, %v626
    %s636 = scalar_lea.vmem [#allocation1], 20
    %v637 = vld.sshfl [vmem:[%s636] sm:$0xff pattern:$0xb3a29180]
    %638 = vrot.lane.b32.xlu0 %v637, 48
    %v639 = vpop.permute.xlu0 %638
    %vm640 = vcmask 64512
    %s641 = scalar_lea.vmem [#allocation0], 298
    %642 = vst.msk [vmem:[%s641] ss:$16 sm:$0x3] %vm640, %v639
    %s643 = scalar_lea.vmem [#allocation0], 330
    %644 = vst.msk [vmem:[%s643] ss:$16 sm:$0xc] %vm640, %v639
    %s645 = scalar_lea.vmem [#allocation0], 362
    %646 = vst.msk [vmem:[%s645] ss:$16 sm:$0x30] %vm640, %v639
    %s647 = scalar_lea.vmem [#allocation0], 394
    %648 = vst.msk [vmem:[%s647] ss:$16 sm:$0xc0] %vm640, %v639
    %v649 = vld.sshfl [vmem:[#allocation1] sm:$0xff pattern:$0xb3a29180]
    %650 = vrot.lane.b32.xlu0 %v649, 40
    %v651 = vpop.permute.xlu0 %650
    %vm652 = vcmask 64512
    %s653 = scalar_lea.vmem [#allocation0], 11
    %654 = vst.msk [vmem:[%s653] ss:$16 sm:$0x3] %vm652, %v651
    %s655 = scalar_lea.vmem [#allocation0], 43
    %656 = vst.msk [vmem:[%s655] ss:$16 sm:$0xc] %vm652, %v651
    %s657 = scalar_lea.vmem [#allocation0], 75
    %658 = vst.msk [vmem:[%s657] ss:$16 sm:$0x30] %vm652, %v651
    %s659 = scalar_lea.vmem [#allocation0], 107
    %660 = vst.msk [vmem:[%s659] ss:$16 sm:$0xc0] %vm652, %v651
    %s661 = scalar_lea.vmem [#allocation1], 4
    %v662 = vld.sshfl [vmem:[%s661] sm:$0xff pattern:$0xb3a29180]
    %663 = vrot.lane.b32.xlu0 %v662, 40
    %v664 = vpop.permute.xlu0 %663
    %vm665 = vcmask 64512
    %s666 = scalar_lea.vmem [#allocation0], 267
    %667 = vst.msk [vmem:[%s666] ss:$16 sm:$0x3] %vm665, %v664
    %s668 = scalar_lea.vmem [#allocation0], 299
    %669 = vst.msk [vmem:[%s668] ss:$16 sm:$0xc] %vm665, %v664
    %s670 = scalar_lea.vmem [#allocation0], 331
    %671 = vst.msk [vmem:[%s670] ss:$16 sm:$0x30] %vm665, %v664
    %s672 = scalar_lea.vmem [#allocation0], 363
    %673 = vst.msk [vmem:[%s672] ss:$16 sm:$0xc0] %vm665, %v664
    %s674 = scalar_lea.vmem [#allocation1], 16
    %v675 = vld.sshfl [vmem:[%s674] sm:$0xff pattern:$0xb3a29180]
    %676 = vrot.lane.b32.xlu0 %v675, 40
    %v677 = vpop.permute.xlu0 %676
    %vm678 = vcmask 64512
    %s679 = scalar_lea.vmem [#allocation0], 43
    %680 = vst.msk [vmem:[%s679] ss:$16 sm:$0x3] %vm678, %v677
    %s681 = scalar_lea.vmem [#allocation0], 75
    %682 = vst.msk [vmem:[%s681] ss:$16 sm:$0xc] %vm678, %v677
    %s683 = scalar_lea.vmem [#allocation0], 107
    %684 = vst.msk [vmem:[%s683] ss:$16 sm:$0x30] %vm678, %v677
    %s685 = scalar_lea.vmem [#allocation0], 139
    %686 = vst.msk [vmem:[%s685] ss:$16 sm:$0xc0] %vm678, %v677
    %s687 = scalar_lea.vmem [#allocation1], 20
    %v688 = vld.sshfl [vmem:[%s687] sm:$0xff pattern:$0xb3a29180]
    %689 = vrot.lane.b32.xlu0 %v688, 40
    %v690 = vpop.permute.xlu0 %689
    %vm691 = vcmask 64512
    %s692 = scalar_lea.vmem [#allocation0], 299
    %693 = vst.msk [vmem:[%s692] ss:$16 sm:$0x3] %vm691, %v690
    %s694 = scalar_lea.vmem [#allocation0], 331
    %695 = vst.msk [vmem:[%s694] ss:$16 sm:$0xc] %vm691, %v690
    %s696 = scalar_lea.vmem [#allocation0], 363
    %697 = vst.msk [vmem:[%s696] ss:$16 sm:$0x30] %vm691, %v690
    %s698 = scalar_lea.vmem [#allocation0], 395
    %699 = vst.msk [vmem:[%s698] ss:$16 sm:$0xc0] %vm691, %v690
    %v700 = vld.sshfl [vmem:[#allocation1] sm:$0xff pattern:$0xb3a29180]
    %701 = vrot.lane.b32.xlu0 %v700, 32
    %v702 = vpop.permute.xlu0 %701
    %vm703 = vcmask 64512
    %s704 = scalar_lea.vmem [#allocation0], 12
    %705 = vst.msk [vmem:[%s704] ss:$16 sm:$0x3] %vm703, %v702
    %s706 = scalar_lea.vmem [#allocation0], 44
    %707 = vst.msk [vmem:[%s706] ss:$16 sm:$0xc] %vm703, %v702
    %s708 = scalar_lea.vmem [#allocation0], 76
    %709 = vst.msk [vmem:[%s708] ss:$16 sm:$0x30] %vm703, %v702
    %s710 = scalar_lea.vmem [#allocation0], 108
    %711 = vst.msk [vmem:[%s710] ss:$16 sm:$0xc0] %vm703, %v702
    %s712 = scalar_lea.vmem [#allocation1], 4
    %v713 = vld.sshfl [vmem:[%s712] sm:$0xff pattern:$0xb3a29180]
    %714 = vrot.lane.b32.xlu0 %v713, 32
    %v715 = vpop.permute.xlu0 %714
    %vm716 = vcmask 64512
    %s717 = scalar_lea.vmem [#allocation0], 268
    %718 = vst.msk [vmem:[%s717] ss:$16 sm:$0x3] %vm716, %v715
    %s719 = scalar_lea.vmem [#allocation0], 300
    %720 = vst.msk [vmem:[%s719] ss:$16 sm:$0xc] %vm716, %v715
    %s721 = scalar_lea.vmem [#allocation0], 332
    %722 = vst.msk [vmem:[%s721] ss:$16 sm:$0x30] %vm716, %v715
    %s723 = scalar_lea.vmem [#allocation0], 364
    %724 = vst.msk [vmem:[%s723] ss:$16 sm:$0xc0] %vm716, %v715
    %s725 = scalar_lea.vmem [#allocation1], 16
    %v726 = vld.sshfl [vmem:[%s725] sm:$0xff pattern:$0xb3a29180]
    %727 = vrot.lane.b32.xlu0 %v726, 32
    %v728 = vpop.permute.xlu0 %727
    %vm729 = vcmask 64512
    %s730 = scalar_lea.vmem [#allocation0], 44
    %731 = vst.msk [vmem:[%s730] ss:$16 sm:$0x3] %vm729, %v728
    %s732 = scalar_lea.vmem [#allocation0], 76
    %733 = vst.msk [vmem:[%s732] ss:$16 sm:$0xc] %vm729, %v728
    %s734 = scalar_lea.vmem [#allocation0], 108
    %735 = vst.msk [vmem:[%s734] ss:$16 sm:$0x30] %vm729, %v728
    %s736 = scalar_lea.vmem [#allocation0], 140
    %737 = vst.msk [vmem:[%s736] ss:$16 sm:$0xc0] %vm729, %v728
    %s738 = scalar_lea.vmem [#allocation1], 20
    %v739 = vld.sshfl [vmem:[%s738] sm:$0xff pattern:$0xb3a29180]
    %740 = vrot.lane.b32.xlu0 %v739, 32
    %v741 = vpop.permute.xlu0 %740
    %vm742 = vcmask 64512
    %s743 = scalar_lea.vmem [#allocation0], 300
    %744 = vst.msk [vmem:[%s743] ss:$16 sm:$0x3] %vm742, %v741
    %s745 = scalar_lea.vmem [#allocation0], 332
    %746 = vst.msk [vmem:[%s745] ss:$16 sm:$0xc] %vm742, %v741
    %s747 = scalar_lea.vmem [#allocation0], 364
    %748 = vst.msk [vmem:[%s747] ss:$16 sm:$0x30] %vm742, %v741
    %s749 = scalar_lea.vmem [#allocation0], 396
    %750 = vst.msk [vmem:[%s749] ss:$16 sm:$0xc0] %vm742, %v741
    %v751 = vld.sshfl [vmem:[#allocation1] sm:$0xff pattern:$0xb3a29180]
    %752 = vrot.lane.b32.xlu0 %v751, 24
    %v753 = vpop.permute.xlu0 %752
    %vm754 = vcmask 64512
    %s755 = scalar_lea.vmem [#allocation0], 13
    %756 = vst.msk [vmem:[%s755] ss:$16 sm:$0x3] %vm754, %v753
    %s757 = scalar_lea.vmem [#allocation0], 45
    %758 = vst.msk [vmem:[%s757] ss:$16 sm:$0xc] %vm754, %v753
    %s759 = scalar_lea.vmem [#allocation0], 77
    %760 = vst.msk [vmem:[%s759] ss:$16 sm:$0x30] %vm754, %v753
    %s761 = scalar_lea.vmem [#allocation0], 109
    %762 = vst.msk [vmem:[%s761] ss:$16 sm:$0xc0] %vm754, %v753
    %s763 = scalar_lea.vmem [#allocation1], 4
    %v764 = vld.sshfl [vmem:[%s763] sm:$0xff pattern:$0xb3a29180]
    %765 = vrot.lane.b32.xlu0 %v764, 24
    %v766 = vpop.permute.xlu0 %765
    %vm767 = vcmask 64512
    %s768 = scalar_lea.vmem [#allocation0], 269
    %769 = vst.msk [vmem:[%s768] ss:$16 sm:$0x3] %vm767, %v766
    %s770 = scalar_lea.vmem [#allocation0], 301
    %771 = vst.msk [vmem:[%s770] ss:$16 sm:$0xc] %vm767, %v766
    %s772 = scalar_lea.vmem [#allocation0], 333
    %773 = vst.msk [vmem:[%s772] ss:$16 sm:$0x30] %vm767, %v766
    %s774 = scalar_lea.vmem [#allocation0], 365
    %775 = vst.msk [vmem:[%s774] ss:$16 sm:$0xc0] %vm767, %v766
    %s776 = scalar_lea.vmem [#allocation1], 16
    %v777 = vld.sshfl [vmem:[%s776] sm:$0xff pattern:$0xb3a29180]
    %778 = vrot.lane.b32.xlu0 %v777, 24
    %v779 = vpop.permute.xlu0 %778
    %vm780 = vcmask 64512
    %s781 = scalar_lea.vmem [#allocation0], 45
    %782 = vst.msk [vmem:[%s781] ss:$16 sm:$0x3] %vm780, %v779
    %s783 = scalar_lea.vmem [#allocation0], 77
    %784 = vst.msk [vmem:[%s783] ss:$16 sm:$0xc] %vm780, %v779
    %s785 = scalar_lea.vmem [#allocation0], 109
    %786 = vst.msk [vmem:[%s785] ss:$16 sm:$0x30] %vm780, %v779
    %s787 = scalar_lea.vmem [#allocation0], 141
    %788 = vst.msk [vmem:[%s787] ss:$16 sm:$0xc0] %vm780, %v779
    %s789 = scalar_lea.vmem [#allocation1], 20
    %v790 = vld.sshfl [vmem:[%s789] sm:$0xff pattern:$0xb3a29180]
    %791 = vrot.lane.b32.xlu0 %v790, 24
    %v792 = vpop.permute.xlu0 %791
    %vm793 = vcmask 64512
    %s794 = scalar_lea.vmem [#allocation0], 301
    %795 = vst.msk [vmem:[%s794] ss:$16 sm:$0x3] %vm793, %v792
    %s796 = scalar_lea.vmem [#allocation0], 333
    %797 = vst.msk [vmem:[%s796] ss:$16 sm:$0xc] %vm793, %v792
    %s798 = scalar_lea.vmem [#allocation0], 365
    %799 = vst.msk [vmem:[%s798] ss:$16 sm:$0x30] %vm793, %v792
    %s800 = scalar_lea.vmem [#allocation0], 397
    %801 = vst.msk [vmem:[%s800] ss:$16 sm:$0xc0] %vm793, %v792
    %v802 = vld.sshfl [vmem:[#allocation1] sm:$0xff pattern:$0xb3a29180]
    %803 = vrot.lane.b32.xlu0 %v802, 16
    %v804 = vpop.permute.xlu0 %803
    %vm805 = vcmask 64512
    %s806 = scalar_lea.vmem [#allocation0], 14
    %807 = vst.msk [vmem:[%s806] ss:$16 sm:$0x3] %vm805, %v804
    %s808 = scalar_lea.vmem [#allocation0], 46
    %809 = vst.msk [vmem:[%s808] ss:$16 sm:$0xc] %vm805, %v804
    %s810 = scalar_lea.vmem [#allocation0], 78
    %811 = vst.msk [vmem:[%s810] ss:$16 sm:$0x30] %vm805, %v804
    %s812 = scalar_lea.vmem [#allocation0], 110
    %813 = vst.msk [vmem:[%s812] ss:$16 sm:$0xc0] %vm805, %v804
    %s814 = scalar_lea.vmem [#allocation1], 4
    %v815 = vld.sshfl [vmem:[%s814] sm:$0xff pattern:$0xb3a29180]
    %816 = vrot.lane.b32.xlu0 %v815, 16
    %v817 = vpop.permute.xlu0 %816
    %vm818 = vcmask 64512
    %s819 = scalar_lea.vmem [#allocation0], 270
    %820 = vst.msk [vmem:[%s819] ss:$16 sm:$0x3] %vm818, %v817
    %s821 = scalar_lea.vmem [#allocation0], 302
    %822 = vst.msk [vmem:[%s821] ss:$16 sm:$0xc] %vm818, %v817
    %s823 = scalar_lea.vmem [#allocation0], 334
    %824 = vst.msk [vmem:[%s823] ss:$16 sm:$0x30] %vm818, %v817
    %s825 = scalar_lea.vmem [#allocation0], 366
    %826 = vst.msk [vmem:[%s825] ss:$16 sm:$0xc0] %vm818, %v817
    %s827 = scalar_lea.vmem [#allocation1], 16
    %v828 = vld.sshfl [vmem:[%s827] sm:$0xff pattern:$0xb3a29180]
    %829 = vrot.lane.b32.xlu0 %v828, 16
    %v830 = vpop.permute.xlu0 %829
    %vm831 = vcmask 64512
    %s832 = scalar_lea.vmem [#allocation0], 46
    %833 = vst.msk [vmem:[%s832] ss:$16 sm:$0x3] %vm831, %v830
    %s834 = scalar_lea.vmem [#allocation0], 78
    %835 = vst.msk [vmem:[%s834] ss:$16 sm:$0xc] %vm831, %v830
    %s836 = scalar_lea.vmem [#allocation0], 110
    %837 = vst.msk [vmem:[%s836] ss:$16 sm:$0x30] %vm831, %v830
    %s838 = scalar_lea.vmem [#allocation0], 142
    %839 = vst.msk [vmem:[%s838] ss:$16 sm:$0xc0] %vm831, %v830
    %s840 = scalar_lea.vmem [#allocation1], 20
    %v841 = vld.sshfl [vmem:[%s840] sm:$0xff pattern:$0xb3a29180]
    %842 = vrot.lane.b32.xlu0 %v841, 16
    %v843 = vpop.permute.xlu0 %842
    %vm844 = vcmask 64512
    %s845 = scalar_lea.vmem [#allocation0], 302
    %846 = vst.msk [vmem:[%s845] ss:$16 sm:$0x3] %vm844, %v843
    %s847 = scalar_lea.vmem [#allocation0], 334
    %848 = vst.msk [vmem:[%s847] ss:$16 sm:$0xc] %vm844, %v843
    %s849 = scalar_lea.vmem [#allocation0], 366
    %850 = vst.msk [vmem:[%s849] ss:$16 sm:$0x30] %vm844, %v843
    %s851 = scalar_lea.vmem [#allocation0], 398
    %852 = vst.msk [vmem:[%s851] ss:$16 sm:$0xc0] %vm844, %v843
    %v853 = vld.sshfl [vmem:[#allocation1] sm:$0xff pattern:$0xb3a29180]
    %854 = vrot.lane.b32.xlu0 %v853, 8
    %v855 = vpop.permute.xlu0 %854
    %vm856 = vcmask 64512
    %s857 = scalar_lea.vmem [#allocation0], 15
    %858 = vst.msk [vmem:[%s857] ss:$16 sm:$0x3] %vm856, %v855
    %s859 = scalar_lea.vmem [#allocation0], 47
    %860 = vst.msk [vmem:[%s859] ss:$16 sm:$0xc] %vm856, %v855
    %s861 = scalar_lea.vmem [#allocation0], 79
    %862 = vst.msk [vmem:[%s861] ss:$16 sm:$0x30] %vm856, %v855
    %s863 = scalar_lea.vmem [#allocation0], 111
    %864 = vst.msk [vmem:[%s863] ss:$16 sm:$0xc0] %vm856, %v855
    %s865 = scalar_lea.vmem [#allocation1], 4
    %v866 = vld.sshfl [vmem:[%s865] sm:$0xff pattern:$0xb3a29180]
    %867 = vrot.lane.b32.xlu0 %v866, 8
    %v868 = vpop.permute.xlu0 %867
    %vm869 = vcmask 64512
    %s870 = scalar_lea.vmem [#allocation0], 271
    %871 = vst.msk [vmem:[%s870] ss:$16 sm:$0x3] %vm869, %v868
    %s872 = scalar_lea.vmem [#allocation0], 303
    %873 = vst.msk [vmem:[%s872] ss:$16 sm:$0xc] %vm869, %v868
    %s874 = scalar_lea.vmem [#allocation0], 335
    %875 = vst.msk [vmem:[%s874] ss:$16 sm:$0x30] %vm869, %v868
    %s876 = scalar_lea.vmem [#allocation0], 367
    %877 = vst.msk [vmem:[%s876] ss:$16 sm:$0xc0] %vm869, %v868
    %s878 = scalar_lea.vmem [#allocation1], 16
    %v879 = vld.sshfl [vmem:[%s878] sm:$0xff pattern:$0xb3a29180]
    %880 = vrot.lane.b32.xlu0 %v879, 8
    %v881 = vpop.permute.xlu0 %880
    %vm882 = vcmask 64512
    %s883 = scalar_lea.vmem [#allocation0], 47
    %884 = vst.msk [vmem:[%s883] ss:$16 sm:$0x3] %vm882, %v881
    %s885 = scalar_lea.vmem [#allocation0], 79
    %886 = vst.msk [vmem:[%s885] ss:$16 sm:$0xc] %vm882, %v881
    %s887 = scalar_lea.vmem [#allocation0], 111
    %888 = vst.msk [vmem:[%s887] ss:$16 sm:$0x30] %vm882, %v881
    %s889 = scalar_lea.vmem [#allocation0], 143
    %890 = vst.msk [vmem:[%s889] ss:$16 sm:$0xc0] %vm882, %v881
    %s891 = scalar_lea.vmem [#allocation1], 20
    %v892 = vld.sshfl [vmem:[%s891] sm:$0xff pattern:$0xb3a29180]
    %893 = vrot.lane.b32.xlu0 %v892, 8
    %v894 = vpop.permute.xlu0 %893
    %vm895 = vcmask 64512
    %s896 = scalar_lea.vmem [#allocation0], 303
    %897 = vst.msk [vmem:[%s896] ss:$16 sm:$0x3] %vm895, %v894
    %s898 = scalar_lea.vmem [#allocation0], 335
    %899 = vst.msk [vmem:[%s898] ss:$16 sm:$0xc] %vm895, %v894
    %s900 = scalar_lea.vmem [#allocation0], 367
    %901 = vst.msk [vmem:[%s900] ss:$16 sm:$0x30] %vm895, %v894
    %s902 = scalar_lea.vmem [#allocation0], 399
    %903 = vst.msk [vmem:[%s902] ss:$16 sm:$0xc0] %vm895, %v894
    %s905 = smul.u32 4, 2
    %s906 = sshllo.u32 0, %s905
    %s907 = sshrl.u32 %s905, 1
    %v908 = vld [vmem:[#allocation0] sm:%s906]
    %v909 = vpack.c.bf16 0.0, %v908
    %s910 = sshllo.u32 0, %s907
    %911 = vst [vmem:[%s1] sm:%s910] %v909
    %s912 = scalar_lea.vmem [#allocation0], 8
    %v913 = vld [vmem:[%s912] sm:%s906]
    %v914 = vpack.c.bf16 0.0, %v913
    %s915 = sshllo.u32 0, %s907
    %s916 = scalar_lea.vmem %s1, 4
    %917 = vst [vmem:[%s916] sm:%s915] %v914
    %s918 = scalar_lea.vmem [#allocation0], 16
    %v919 = vld [vmem:[%s918] sm:%s906]
    %v920 = vpack.c.bf16 0.0, %v919
    %s921 = sshllo.u32 0, %s907
    %s922 = smul.addr 4, 2
    %s923 = scalar_lea.vmem %s1, %s922
    %924 = vst [vmem:[%s923] sm:%s921] %v920
    %s925 = scalar_lea.vmem [#allocation0], 24
    %v926 = vld [vmem:[%s925] sm:%s906]
    %v927 = vpack.c.bf16 0.0, %v926
    %s928 = sshllo.u32 0, %s907
    %s929 = smul.addr 4, 3
    %s930 = scalar_lea.vmem %s1, %s929
    %931 = vst [vmem:[%s930] sm:%s928] %v927
    %s932 = scalar_lea.vmem [#allocation0], 32
    %v933 = vld [vmem:[%s932] sm:%s906]
    %v934 = vpack.c.bf16 0.0, %v933
    %s935 = sshllo.u32 0, %s907
    %s936 = smul.addr 4, 4
    %s937 = scalar_lea.vmem %s1, %s936
    %938 = vst [vmem:[%s937] sm:%s935] %v934
    %s939 = scalar_lea.vmem [#allocation0], 40
    %v940 = vld [vmem:[%s939] sm:%s906]
    %v941 = vpack.c.bf16 0.0, %v940
    %s942 = sshllo.u32 0, %s907
    %s943 = smul.addr 4, 5
    %s944 = scalar_lea.vmem %s1, %s943
    %945 = vst [vmem:[%s944] sm:%s942] %v941
    %s946 = scalar_lea.vmem [#allocation0], 48
    %v947 = vld [vmem:[%s946] sm:%s906]
    %v948 = vpack.c.bf16 0.0, %v947
    %s949 = sshllo.u32 0, %s907
    %s950 = smul.addr 4, 6
    %s951 = scalar_lea.vmem %s1, %s950
    %952 = vst [vmem:[%s951] sm:%s949] %v948
    %s953 = scalar_lea.vmem [#allocation0], 56
    %v954 = vld [vmem:[%s953] sm:%s906]
    %v955 = vpack.c.bf16 0.0, %v954
    %s956 = sshllo.u32 0, %s907
    %s957 = smul.addr 4, 7
    %s958 = scalar_lea.vmem %s1, %s957
    %959 = vst [vmem:[%s958] sm:%s956] %v955
    %s960 = scalar_lea.vmem [#allocation0], 64
    %v961 = vld [vmem:[%s960] sm:%s906]
    %v962 = vpack.c.bf16 0.0, %v961
    %s963 = sshllo.u32 0, %s907
    %s964 = smul.addr 4, 8
    %s965 = scalar_lea.vmem %s1, %s964
    %966 = vst [vmem:[%s965] sm:%s963] %v962
    %s967 = scalar_lea.vmem [#allocation0], 72
    %v968 = vld [vmem:[%s967] sm:%s906]
    %v969 = vpack.c.bf16 0.0, %v968
    %s970 = sshllo.u32 0, %s907
    %s971 = smul.addr 4, 9
    %s972 = scalar_lea.vmem %s1, %s971
    %973 = vst [vmem:[%s972] sm:%s970] %v969
    %s974 = scalar_lea.vmem [#allocation0], 80
    %v975 = vld [vmem:[%s974] sm:%s906]
    %v976 = vpack.c.bf16 0.0, %v975
    %s977 = sshllo.u32 0, %s907
    %s978 = smul.addr 4, 10
    %s979 = scalar_lea.vmem %s1, %s978
    %980 = vst [vmem:[%s979] sm:%s977] %v976
    %s981 = scalar_lea.vmem [#allocation0], 88
    %v982 = vld [vmem:[%s981] sm:%s906]
    %v983 = vpack.c.bf16 0.0, %v982
    %s984 = sshllo.u32 0, %s907
    %s985 = smul.addr 4, 11
    %s986 = scalar_lea.vmem %s1, %s985
    %987 = vst [vmem:[%s986] sm:%s984] %v983
    %s988 = scalar_lea.vmem [#allocation0], 96
    %v989 = vld [vmem:[%s988] sm:%s906]
    %v990 = vpack.c.bf16 0.0, %v989
    %s991 = sshllo.u32 0, %s907
    %s992 = smul.addr 4, 12
    %s993 = scalar_lea.vmem %s1, %s992
    %994 = vst [vmem:[%s993] sm:%s991] %v990
    %s995 = scalar_lea.vmem [#allocation0], 104
    %v996 = vld [vmem:[%s995] sm:%s906]
    %v997 = vpack.c.bf16 0.0, %v996
    %s998 = sshllo.u32 0, %s907
    %s999 = smul.addr 4, 13
    %s1000 = scalar_lea.vmem %s1, %s999
    %1001 = vst [vmem:[%s1000] sm:%s998] %v997
    %s1002 = scalar_lea.vmem [#allocation0], 112
    %v1003 = vld [vmem:[%s1002] sm:%s906]
    %v1004 = vpack.c.bf16 0.0, %v1003
    %s1005 = sshllo.u32 0, %s907
    %s1006 = smul.addr 4, 14
    %s1007 = scalar_lea.vmem %s1, %s1006
    %1008 = vst [vmem:[%s1007] sm:%s1005] %v1004
    %s1009 = scalar_lea.vmem [#allocation0], 120
    %v1010 = vld [vmem:[%s1009] sm:%s906]
    %v1011 = vpack.c.bf16 0.0, %v1010
    %s1012 = sshllo.u32 0, %s907
    %s1013 = smul.addr 4, 15
    %s1014 = scalar_lea.vmem %s1, %s1013
    %1015 = vst [vmem:[%s1014] sm:%s1012] %v1011
    %s1016 = scalar_lea.vmem [#allocation0], 128
    %v1017 = vld [vmem:[%s1016] sm:%s906]
    %v1018 = vpack.c.bf16 0.0, %v1017
    %s1019 = sshllo.u32 0, %s907
    %s1020 = smul.addr 4, 16
    %s1021 = scalar_lea.vmem %s1, %s1020
    %1022 = vst [vmem:[%s1021] sm:%s1019] %v1018
    %s1023 = scalar_lea.vmem [#allocation0], 136
    %v1024 = vld [vmem:[%s1023] sm:%s906]
    %v1025 = vpack.c.bf16 0.0, %v1024
    %s1026 = sshllo.u32 0, %s907
    %s1027 = smul.addr 4, 17
    %s1028 = scalar_lea.vmem %s1, %s1027
    %1029 = vst [vmem:[%s1028] sm:%s1026] %v1025
    %s1030 = scalar_lea.vmem [#allocation0], 144
    %v1031 = vld [vmem:[%s1030] sm:%s906]
    %v1032 = vpack.c.bf16 0.0, %v1031
    %s1033 = sshllo.u32 0, %s907
    %s1034 = smul.addr 4, 18
    %s1035 = scalar_lea.vmem %s1, %s1034
    %1036 = vst [vmem:[%s1035] sm:%s1033] %v1032
    %s1037 = scalar_lea.vmem [#allocation0], 152
    %v1038 = vld [vmem:[%s1037] sm:%s906]
    %v1039 = vpack.c.bf16 0.0, %v1038
    %s1040 = sshllo.u32 0, %s907
    %s1041 = smul.addr 4, 19
    %s1042 = scalar_lea.vmem %s1, %s1041
    %1043 = vst [vmem:[%s1042] sm:%s1040] %v1039
    %s1044 = scalar_lea.vmem [#allocation0], 160
    %v1045 = vld [vmem:[%s1044] sm:%s906]
    %v1046 = vpack.c.bf16 0.0, %v1045
    %s1047 = sshllo.u32 0, %s907
    %s1048 = smul.addr 4, 20
    %s1049 = scalar_lea.vmem %s1, %s1048
    %1050 = vst [vmem:[%s1049] sm:%s1047] %v1046
    %s1051 = scalar_lea.vmem [#allocation0], 168
    %v1052 = vld [vmem:[%s1051] sm:%s906]
    %v1053 = vpack.c.bf16 0.0, %v1052
    %s1054 = sshllo.u32 0, %s907
    %s1055 = smul.addr 4, 21
    %s1056 = scalar_lea.vmem %s1, %s1055
    %1057 = vst [vmem:[%s1056] sm:%s1054] %v1053
    %s1058 = scalar_lea.vmem [#allocation0], 176
    %v1059 = vld [vmem:[%s1058] sm:%s906]
    %v1060 = vpack.c.bf16 0.0, %v1059
    %s1061 = sshllo.u32 0, %s907
    %s1062 = smul.addr 4, 22
    %s1063 = scalar_lea.vmem %s1, %s1062
    %1064 = vst [vmem:[%s1063] sm:%s1061] %v1060
    %s1065 = scalar_lea.vmem [#allocation0], 184
    %v1066 = vld [vmem:[%s1065] sm:%s906]
    %v1067 = vpack.c.bf16 0.0, %v1066
    %s1068 = sshllo.u32 0, %s907
    %s1069 = smul.addr 4, 23
    %s1070 = scalar_lea.vmem %s1, %s1069
    %1071 = vst [vmem:[%s1070] sm:%s1068] %v1067
    %s1072 = scalar_lea.vmem [#allocation0], 192
    %v1073 = vld [vmem:[%s1072] sm:%s906]
    %v1074 = vpack.c.bf16 0.0, %v1073
    %s1075 = sshllo.u32 0, %s907
    %s1076 = smul.addr 4, 24
    %s1077 = scalar_lea.vmem %s1, %s1076
    %1078 = vst [vmem:[%s1077] sm:%s1075] %v1074
    %s1079 = scalar_lea.vmem [#allocation0], 200
    %v1080 = vld [vmem:[%s1079] sm:%s906]
    %v1081 = vpack.c.bf16 0.0, %v1080
    %s1082 = sshllo.u32 0, %s907
    %s1083 = smul.addr 4, 25
    %s1084 = scalar_lea.vmem %s1, %s1083
    %1085 = vst [vmem:[%s1084] sm:%s1082] %v1081
    %s1086 = scalar_lea.vmem [#allocation0], 208
    %v1087 = vld [vmem:[%s1086] sm:%s906]
    %v1088 = vpack.c.bf16 0.0, %v1087
    %s1089 = sshllo.u32 0, %s907
    %s1090 = smul.addr 4, 26
    %s1091 = scalar_lea.vmem %s1, %s1090
    %1092 = vst [vmem:[%s1091] sm:%s1089] %v1088
    %s1093 = scalar_lea.vmem [#allocation0], 216
    %v1094 = vld [vmem:[%s1093] sm:%s906]
    %v1095 = vpack.c.bf16 0.0, %v1094
    %s1096 = sshllo.u32 0, %s907
    %s1097 = smul.addr 4, 27
    %s1098 = scalar_lea.vmem %s1, %s1097
    %1099 = vst [vmem:[%s1098] sm:%s1096] %v1095
    %s1100 = scalar_lea.vmem [#allocation0], 224
    %v1101 = vld [vmem:[%s1100] sm:%s906]
    %v1102 = vpack.c.bf16 0.0, %v1101
    %s1103 = sshllo.u32 0, %s907
    %s1104 = smul.addr 4, 28
    %s1105 = scalar_lea.vmem %s1, %s1104
    %1106 = vst [vmem:[%s1105] sm:%s1103] %v1102
    %s1107 = scalar_lea.vmem [#allocation0], 232
    %v1108 = vld [vmem:[%s1107] sm:%s906]
    %v1109 = vpack.c.bf16 0.0, %v1108
    %s1110 = sshllo.u32 0, %s907
    %s1111 = smul.addr 4, 29
    %s1112 = scalar_lea.vmem %s1, %s1111
    %1113 = vst [vmem:[%s1112] sm:%s1110] %v1109
    %s1114 = scalar_lea.vmem [#allocation0], 240
    %v1115 = vld [vmem:[%s1114] sm:%s906]
    %v1116 = vpack.c.bf16 0.0, %v1115
    %s1117 = sshllo.u32 0, %s907
    %s1118 = smul.addr 4, 30
    %s1119 = scalar_lea.vmem %s1, %s1118
    %1120 = vst [vmem:[%s1119] sm:%s1117] %v1116
    %s1121 = scalar_lea.vmem [#allocation0], 248
    %v1122 = vld [vmem:[%s1121] sm:%s906]
    %v1123 = vpack.c.bf16 0.0, %v1122
    %s1124 = sshllo.u32 0, %s907
    %s1125 = smul.addr 4, 31
    %s1126 = scalar_lea.vmem %s1, %s1125
    %1127 = vst [vmem:[%s1126] sm:%s1124] %v1123
    %s1128 = scalar_lea.vmem [#allocation0], 256
    %v1129 = vld [vmem:[%s1128] sm:%s906]
    %v1130 = vpack.c.bf16 0.0, %v1129
    %s1131 = sshllo.u32 0, %s907
    %s1132 = smul.addr 4, 32
    %s1133 = scalar_lea.vmem %s1, %s1132
    %1134 = vst [vmem:[%s1133] sm:%s1131] %v1130
    %s1135 = scalar_lea.vmem [#allocation0], 264
    %v1136 = vld [vmem:[%s1135] sm:%s906]
    %v1137 = vpack.c.bf16 0.0, %v1136
    %s1138 = sshllo.u32 0, %s907
    %s1139 = smul.addr 4, 33
    %s1140 = scalar_lea.vmem %s1, %s1139
    %1141 = vst [vmem:[%s1140] sm:%s1138] %v1137
    %s1142 = scalar_lea.vmem [#allocation0], 272
    %v1143 = vld [vmem:[%s1142] sm:%s906]
    %v1144 = vpack.c.bf16 0.0, %v1143
    %s1145 = sshllo.u32 0, %s907
    %s1146 = smul.addr 4, 34
    %s1147 = scalar_lea.vmem %s1, %s1146
    %1148 = vst [vmem:[%s1147] sm:%s1145] %v1144
    %s1149 = scalar_lea.vmem [#allocation0], 280
    %v1150 = vld [vmem:[%s1149] sm:%s906]
    %v1151 = vpack.c.bf16 0.0, %v1150
    %s1152 = sshllo.u32 0, %s907
    %s1153 = smul.addr 4, 35
    %s1154 = scalar_lea.vmem %s1, %s1153
    %1155 = vst [vmem:[%s1154] sm:%s1152] %v1151
    %s1156 = scalar_lea.vmem [#allocation0], 288
    %v1157 = vld [vmem:[%s1156] sm:%s906]
    %v1158 = vpack.c.bf16 0.0, %v1157
    %s1159 = sshllo.u32 0, %s907
    %s1160 = smul.addr 4, 36
    %s1161 = scalar_lea.vmem %s1, %s1160
    %1162 = vst [vmem:[%s1161] sm:%s1159] %v1158
    %s1163 = scalar_lea.vmem [#allocation0], 296
    %v1164 = vld [vmem:[%s1163] sm:%s906]
    %v1165 = vpack.c.bf16 0.0, %v1164
    %s1166 = sshllo.u32 0, %s907
    %s1167 = smul.addr 4, 37
    %s1168 = scalar_lea.vmem %s1, %s1167
    %1169 = vst [vmem:[%s1168] sm:%s1166] %v1165
    %s1170 = scalar_lea.vmem [#allocation0], 304
    %v1171 = vld [vmem:[%s1170] sm:%s906]
    %v1172 = vpack.c.bf16 0.0, %v1171
    %s1173 = sshllo.u32 0, %s907
    %s1174 = smul.addr 4, 38
    %s1175 = scalar_lea.vmem %s1, %s1174
    %1176 = vst [vmem:[%s1175] sm:%s1173] %v1172
    %s1177 = scalar_lea.vmem [#allocation0], 312
    %v1178 = vld [vmem:[%s1177] sm:%s906]
    %v1179 = vpack.c.bf16 0.0, %v1178
    %s1180 = sshllo.u32 0, %s907
    %s1181 = smul.addr 4, 39
    %s1182 = scalar_lea.vmem %s1, %s1181
    %1183 = vst [vmem:[%s1182] sm:%s1180] %v1179
    %s1184 = scalar_lea.vmem [#allocation0], 320
    %v1185 = vld [vmem:[%s1184] sm:%s906]
    %v1186 = vpack.c.bf16 0.0, %v1185
    %s1187 = sshllo.u32 0, %s907
    %s1188 = smul.addr 4, 40
    %s1189 = scalar_lea.vmem %s1, %s1188
    %1190 = vst [vmem:[%s1189] sm:%s1187] %v1186
    %s1191 = scalar_lea.vmem [#allocation0], 328
    %v1192 = vld [vmem:[%s1191] sm:%s906]
    %v1193 = vpack.c.bf16 0.0, %v1192
    %s1194 = sshllo.u32 0, %s907
    %s1195 = smul.addr 4, 41
    %s1196 = scalar_lea.vmem %s1, %s1195
    %1197 = vst [vmem:[%s1196] sm:%s1194] %v1193
    %s1198 = scalar_lea.vmem [#allocation0], 336
    %v1199 = vld [vmem:[%s1198] sm:%s906]
    %v1200 = vpack.c.bf16 0.0, %v1199
    %s1201 = sshllo.u32 0, %s907
    %s1202 = smul.addr 4, 42
    %s1203 = scalar_lea.vmem %s1, %s1202
    %1204 = vst [vmem:[%s1203] sm:%s1201] %v1200
    %s1205 = scalar_lea.vmem [#allocation0], 344
    %v1206 = vld [vmem:[%s1205] sm:%s906]
    %v1207 = vpack.c.bf16 0.0, %v1206
    %s1208 = sshllo.u32 0, %s907
    %s1209 = smul.addr 4, 43
    %s1210 = scalar_lea.vmem %s1, %s1209
    %1211 = vst [vmem:[%s1210] sm:%s1208] %v1207
    %s1212 = scalar_lea.vmem [#allocation0], 352
    %v1213 = vld [vmem:[%s1212] sm:%s906]
    %v1214 = vpack.c.bf16 0.0, %v1213
    %s1215 = sshllo.u32 0, %s907
    %s1216 = smul.addr 4, 44
    %s1217 = scalar_lea.vmem %s1, %s1216
    %1218 = vst [vmem:[%s1217] sm:%s1215] %v1214
    %s1219 = scalar_lea.vmem [#allocation0], 360
    %v1220 = vld [vmem:[%s1219] sm:%s906]
    %v1221 = vpack.c.bf16 0.0, %v1220
    %s1222 = sshllo.u32 0, %s907
    %s1223 = smul.addr 4, 45
    %s1224 = scalar_lea.vmem %s1, %s1223
    %1225 = vst [vmem:[%s1224] sm:%s1222] %v1221
    %s1226 = scalar_lea.vmem [#allocation0], 368
    %v1227 = vld [vmem:[%s1226] sm:%s906]
    %v1228 = vpack.c.bf16 0.0, %v1227
    %s1229 = sshllo.u32 0, %s907
    %s1230 = smul.addr 4, 46
    %s1231 = scalar_lea.vmem %s1, %s1230
    %1232 = vst [vmem:[%s1231] sm:%s1229] %v1228
    %s1233 = scalar_lea.vmem [#allocation0], 376
    %v1234 = vld [vmem:[%s1233] sm:%s906]
    %v1235 = vpack.c.bf16 0.0, %v1234
    %s1236 = sshllo.u32 0, %s907
    %s1237 = smul.addr 4, 47
    %s1238 = scalar_lea.vmem %s1, %s1237
    %1239 = vst [vmem:[%s1238] sm:%s1236] %v1235
    %s1240 = scalar_lea.vmem [#allocation0], 384
    %v1241 = vld [vmem:[%s1240] sm:%s906]
    %v1242 = vpack.c.bf16 0.0, %v1241
    %s1243 = sshllo.u32 0, %s907
    %s1244 = smul.addr 4, 48
    %s1245 = scalar_lea.vmem %s1, %s1244
    %1246 = vst [vmem:[%s1245] sm:%s1243] %v1242
    %s1247 = scalar_lea.vmem [#allocation0], 392
    %v1248 = vld [vmem:[%s1247] sm:%s906]
    %v1249 = vpack.c.bf16 0.0, %v1248
    %s1250 = sshllo.u32 0, %s907
    %s1251 = smul.addr 4, 49
    %s1252 = scalar_lea.vmem %s1, %s1251
    %1253 = vst [vmem:[%s1252] sm:%s1250] %v1249
    %s1254 = scalar_lea.vmem [#allocation0], 400
    %v1255 = vld [vmem:[%s1254] sm:%s906]
    %v1256 = vpack.c.bf16 0.0, %v1255
    %s1257 = sshllo.u32 0, %s907
    %s1258 = smul.addr 4, 50
    %s1259 = scalar_lea.vmem %s1, %s1258
    %1260 = vst [vmem:[%s1259] sm:%s1257] %v1256
    %s1261 = scalar_lea.vmem [#allocation0], 408
    %v1262 = vld [vmem:[%s1261] sm:%s906]
    %v1263 = vpack.c.bf16 0.0, %v1262
    %s1264 = sshllo.u32 0, %s907
    %s1265 = smul.addr 4, 51
    %s1266 = scalar_lea.vmem %s1, %s1265
    %1267 = vst [vmem:[%s1266] sm:%s1264] %v1263
    %s1268 = scalar_lea.vmem [#allocation0], 416
    %v1269 = vld [vmem:[%s1268] sm:%s906]
    %v1270 = vpack.c.bf16 0.0, %v1269
    %s1271 = sshllo.u32 0, %s907
    %s1272 = smul.addr 4, 52
    %s1273 = scalar_lea.vmem %s1, %s1272
    %1274 = vst [vmem:[%s1273] sm:%s1271] %v1270
    %s1275 = scalar_lea.vmem [#allocation0], 424
    %v1276 = vld [vmem:[%s1275] sm:%s906]
    %v1277 = vpack.c.bf16 0.0, %v1276
    %s1278 = sshllo.u32 0, %s907
    %s1279 = smul.addr 4, 53
    %s1280 = scalar_lea.vmem %s1, %s1279
    %1281 = vst [vmem:[%s1280] sm:%s1278] %v1277
    %s1282 = scalar_lea.vmem [#allocation0], 432
    %v1283 = vld [vmem:[%s1282] sm:%s906]
    %v1284 = vpack.c.bf16 0.0, %v1283
    %s1285 = sshllo.u32 0, %s907
    %s1286 = smul.addr 4, 54
    %s1287 = scalar_lea.vmem %s1, %s1286
    %1288 = vst [vmem:[%s1287] sm:%s1285] %v1284
    %s1289 = scalar_lea.vmem [#allocation0], 440
    %v1290 = vld [vmem:[%s1289] sm:%s906]
    %v1291 = vpack.c.bf16 0.0, %v1290
    %s1292 = sshllo.u32 0, %s907
    %s1293 = smul.addr 4, 55
    %s1294 = scalar_lea.vmem %s1, %s1293
    %1295 = vst [vmem:[%s1294] sm:%s1292] %v1291
    %s1296 = scalar_lea.vmem [#allocation0], 448
    %v1297 = vld [vmem:[%s1296] sm:%s906]
    %v1298 = vpack.c.bf16 0.0, %v1297
    %s1299 = sshllo.u32 0, %s907
    %s1300 = smul.addr 4, 56
    %s1301 = scalar_lea.vmem %s1, %s1300
    %1302 = vst [vmem:[%s1301] sm:%s1299] %v1298
    %s1303 = scalar_lea.vmem [#allocation0], 456
    %v1304 = vld [vmem:[%s1303] sm:%s906]
    %v1305 = vpack.c.bf16 0.0, %v1304
    %s1306 = sshllo.u32 0, %s907
    %s1307 = smul.addr 4, 57
    %s1308 = scalar_lea.vmem %s1, %s1307
    %1309 = vst [vmem:[%s1308] sm:%s1306] %v1305
    %s1310 = scalar_lea.vmem [#allocation0], 464
    %v1311 = vld [vmem:[%s1310] sm:%s906]
    %v1312 = vpack.c.bf16 0.0, %v1311
    %s1313 = sshllo.u32 0, %s907
    %s1314 = smul.addr 4, 58
    %s1315 = scalar_lea.vmem %s1, %s1314
    %1316 = vst [vmem:[%s1315] sm:%s1313] %v1312
    %s1317 = scalar_lea.vmem [#allocation0], 472
    %v1318 = vld [vmem:[%s1317] sm:%s906]
    %v1319 = vpack.c.bf16 0.0, %v1318
    %s1320 = sshllo.u32 0, %s907
    %s1321 = smul.addr 4, 59
    %s1322 = scalar_lea.vmem %s1, %s1321
    %1323 = vst [vmem:[%s1322] sm:%s1320] %v1319
    %s1324 = scalar_lea.vmem [#allocation0], 480
    %v1325 = vld [vmem:[%s1324] sm:%s906]
    %v1326 = vpack.c.bf16 0.0, %v1325
    %s1327 = sshllo.u32 0, %s907
    %s1328 = smul.addr 4, 60
    %s1329 = scalar_lea.vmem %s1, %s1328
    %1330 = vst [vmem:[%s1329] sm:%s1327] %v1326
    %s1331 = scalar_lea.vmem [#allocation0], 488
    %v1332 = vld [vmem:[%s1331] sm:%s906]
    %v1333 = vpack.c.bf16 0.0, %v1332
    %s1334 = sshllo.u32 0, %s907
    %s1335 = smul.addr 4, 61
    %s1336 = scalar_lea.vmem %s1, %s1335
    %1337 = vst [vmem:[%s1336] sm:%s1334] %v1333
    %s1338 = scalar_lea.vmem [#allocation0], 496
    %v1339 = vld [vmem:[%s1338] sm:%s906]
    %v1340 = vpack.c.bf16 0.0, %v1339
    %s1341 = sshllo.u32 0, %s907
    %s1342 = smul.addr 4, 62
    %s1343 = scalar_lea.vmem %s1, %s1342
    %1344 = vst [vmem:[%s1343] sm:%s1341] %v1340
    %s1345 = scalar_lea.vmem [#allocation0], 504
    %v1346 = vld [vmem:[%s1345] sm:%s906]
    %v1347 = vpack.c.bf16 0.0, %v1346
    %s1348 = sshllo.u32 0, %s907
    %s1349 = smul.addr 4, 63
    %s1350 = scalar_lea.vmem %s1, %s1349
    %1351 = vst [vmem:[%s1350] sm:%s1348] %v1347

// kernel: hourglass_forward.16
$region0: #{hourglass_forward.16}
  #allocation0 [shape = 'u32[]', space=smem, size = 0x4, offset = 0x4, fixed_abs, tag = 'smem constant byte address 0x4 - core index']
  #allocation1 [shape = 'u32[144,128]{1,0:T(1,128)}', space=vmem, size = 0x12000, scoped, tag = 'internal scratch']
  %s0 = inlined_call_operand.vmem [shape: bf16[1,8,108], index: 0, kind: input, shape index: {}]
  %s1 = inlined_call_operand.vmem [shape: bf16[1,108,512], index: 1, kind: input, shape index: {}]
  %s2 = inlined_call_operand.vmem [shape: f32[8,1], index: 2, kind: input, shape index: {}]
  %s3 = inlined_call_operand.vmem [shape: bf16[1,8,512], index: 3, kind: output, shape index: {}]
  %s4 = sld [smem:[#allocation0]]
  $region83: #{hourglass_forward.16} parent=0
    _
  %s6 = ssub.s32 1, %s4
  %s7 = scalar_select 0, %s6, %s4
  $region1: #{hourglass_forward.16} parent=0
    #allocation2 [shape = 'u8[114688]{0}', space=vmem, size = 0x1c000, scoped, tag = 'input window, operand 1']
    loop: start=0, step=1, limit=4
    $region2: #{hourglass_forward.16} parent=1 // loop_pre_header
      _
    $region3: #{hourglass_forward.16} parent=1 // loop_header
      %s9 = sphi 0, %s13
      %p10 = scmp.ge.s32.totalorder %s9, 4
      %s16 = sphi 0, %s28
      %s17 = sphi 0, %s24
      %s18 = sphi 0, %s16
      %s19 = sphi 0, %s17
      %s20 = sphi 0, %s18
      %s21 = sphi 0, %s19
      %s31 = sphi 0, %s33
      %s34 = sphi 0, %s31
      %s35 = sphi 0, %s34
      %s51 = sphi 0, %s35
      %s59 = sphi 0, %s61
      %s62 = sphi 0, %s59
      %s63 = sphi 0, %s62
      %s79 = sphi 0, %s63
      %s83 = sphi 0, %s83
      %s85 = sphi 0, %s83
      %s86 = sphi 0, %s85
      %s100 = sphi 0, %s86
      %s108 = sphi 0, %s110
      %s111 = sphi 0, %s108
      %s112 = sphi 0, %s111
      %s128 = sphi 0, %s112
    $region4: #{hourglass_forward.16} parent=1 // loop_header_branch
      %12 = sbr.rel (%p10) target = $region8
    $region5: #{hourglass_forward.16} parent=1 // loop_body
      %s14 = ssub.s32 %s9, 1
      %s15 = ssub.s32 %s9, 2
      %s22 = sadd.s32 1, %s17
      %p23 = scmp.ge.s32.totalorder %s22, 2
      %s24 = scalar_select %p23, 0, %s22
      %s25 = sadd.s32 1, %s16
      %s26 = scalar_select %p23, %s25, %s16
      %p27 = scmp.ge.s32.totalorder %s26, 1
      %s28 = scalar_select %p27, 0, %s26
      %s29 = ssub.s32 %s16, %s28
      %p30 = scmp.eq.s32.totalorder %s29, 0
      %s32 = sadd.s32 %s31, 1
      %s33 = scalar_select %p30, %s31, %s32
      %p36 = pneg %p30
      %p37 = scmp.eq.s32.totalorder %s9, 1
      %p38 = por %p36, %p37
      %p39 = scmp.ne.s32.totalorder %s31, %s34
      %p40 = scmp.eq.s32.totalorder %s9, 0
      %p41 = por %p39, %p40
      %p42 = scmp.ne.s32.totalorder %s31, %s34
      %p43 = scmp.eq.s32.totalorder %s14, 1
      %p44 = por %p42, %p43
      %p45 = scmp.ne.s32.totalorder %s34, %s35
      %p46 = scmp.eq.s32.totalorder %s14, 0
      %p47 = por %p45, %p46
      %p48 = scmp.ne.s32.totalorder %s34, %s35
      %p49 = scmp.eq.s32.totalorder %s15, 1
      %p50 = por %p48, %p49
      %p52 = scmp.ne.s32.totalorder %s35, %s51
      %p53 = scmp.eq.s32.totalorder %s15, 0
      %p54 = por %p52, %p53
      %s55 = ssub.s32 %s16, %s28
      %s56 = ssub.s32 %s17, %s24
      %s57 = sor.u32 %s55, %s56
      %p58 = scmp.eq.s32.totalorder %s57, 0
      %s60 = sadd.s32 %s59, 1
      %s61 = scalar_select %p58, %s59, %s60
      %p64 = pneg %p58
      %p65 = scmp.eq.s32.totalorder %s9, 1
      %p66 = por %p64, %p65
      %p67 = scmp.ne.s32.totalorder %s59, %s62
      %p68 = scmp.eq.s32.totalorder %s9, 0
      %p69 = por %p67, %p68
      %p70 = scmp.ne.s32.totalorder %s59, %s62
      %p71 = scmp.eq.s32.totalorder %s14, 1
      %p72 = por %p70, %p71
      %p73 = scmp.ne.s32.totalorder %s62, %s63
      %p74 = scmp.eq.s32.totalorder %s14, 0
      %p75 = por %p73, %p74
      %p76 = scmp.ne.s32.totalorder %s62, %s63
      %p77 = scmp.eq.s32.totalorder %s15, 1
      %p78 = por %p76, %p77
      %p80 = scmp.ne.s32.totalorder %s63, %s79
      %p81 = scmp.eq.s32.totalorder %s15, 0
      %p82 = por %p80, %p81
      %s84 = sadd.s32 %s83, 1
      %p87 = scmp.eq.s32.totalorder %s9, 1
      %p88 = scmp.ne.s32.totalorder %s83, %s85
      %p89 = scmp.eq.s32.totalorder %s9, 0
      %p90 = por %p88, %p89
      %p91 = scmp.ne.s32.totalorder %s83, %s85
      %p92 = scmp.eq.s32.totalorder %s14, 1
      %p93 = por %p91, %p92
      %p94 = scmp.ne.s32.totalorder %s85, %s86
      %p95 = scmp.eq.s32.totalorder %s14, 0
      %p96 = por %p94, %p95
      %p97 = scmp.ne.s32.totalorder %s85, %s86
      %p98 = scmp.eq.s32.totalorder %s15, 1
      %p99 = por %p97, %p98
      %p101 = scmp.ne.s32.totalorder %s86, %s100
      %p102 = scmp.eq.s32.totalorder %s15, 0
      %p103 = por %p101, %p102
      %s104 = ssub.s32 %s16, %s28
      %s105 = ssub.s32 %s17, %s24
      %s106 = sor.u32 %s104, %s105
      %p107 = scmp.eq.s32.totalorder %s106, 0
      %s109 = sadd.s32 %s108, 1
      %s110 = scalar_select %p107, %s108, %s109
      %p113 = pneg %p107
      %p114 = scmp.eq.s32.totalorder %s9, 1
      %p115 = por %p113, %p114
      %p116 = scmp.ne.s32.totalorder %s108, %s111
      %p117 = scmp.eq.s32.totalorder %s9, 0
      %p118 = por %p116, %p117
      %p119 = scmp.ne.s32.totalorder %s108, %s111
      %p120 = scmp.eq.s32.totalorder %s14, 1
      %p121 = por %p119, %p120
      %p122 = scmp.ne.s32.totalorder %s111, %s112
      %p123 = scmp.eq.s32.totalorder %s14, 0
      %p124 = por %p122, %p123
      %p125 = scmp.ne.s32.totalorder %s111, %s112
      %p126 = scmp.eq.s32.totalorder %s15, 1
      %p127 = por %p125, %p126
      %p129 = scmp.ne.s32.totalorder %s112, %s128
      %p130 = scmp.eq.s32.totalorder %s15, 0
      %p131 = por %p129, %p130
      %p132 = scmp.le.s32.totalorder 1, %s9
      %p133 = scmp.lt.s32.totalorder %s9, 3
      %p134 = pnand %p132, %p133
      %p135 = pneg %p134
      // Predicated region
      $region9: #{hourglass_forward.16} parent=5 // pred_check
        _
      $region10: #{hourglass_forward.16} parent=5 // pred_check_branch
        %137 = sbr.rel (%p134) target = $region12
      $region11: #{hourglass_forward.16} parent=5 // pred_region
        %s138 = ssub.s32 %s9, 1
        // Predicated region
        $region13: #{hourglass_forward.16} parent=11 // pred_check
          %p139 = pneg %p47
        $region14: #{hourglass_forward.16} parent=11 // pred_check_branch
          %141 = sbr.rel (%p139) target = $region16
        $region15: #{hourglass_forward.16} parent=11 // pred_region
          %p142 = scmp.lt.s32.totalorder %s18, 0
          %s143 = scalar_select %p142, %s18, 0
          %s144 = smul.addr %s143, 4
          %s145 = scalar_lea.vmem %s0, %s144
        $region16: #{hourglass_forward.16} parent=11 // pred_fallthru
          _
        // Predicated region
        $region17: #{hourglass_forward.16} parent=11 // pred_check
          %p146 = pneg %p96
        $region18: #{hourglass_forward.16} parent=11 // pred_check_branch
          %148 = sbr.rel (%p146) target = $region20
        $region19: #{hourglass_forward.16} parent=11 // pred_region
          _
        $region20: #{hourglass_forward.16} parent=11 // pred_fallthru
          _
      $region12: #{hourglass_forward.16} parent=5 // pred_fallthru
        _
      %p149 = scmp.lt.s32.totalorder %s9, 2
      // Predicated region
      $region21: #{hourglass_forward.16} parent=5 // pred_check
        %p150 = pneg %p149
      $region22: #{hourglass_forward.16} parent=5 // pred_check_branch
        %152 = sbr.rel (%p150) target = $region24
      $region23: #{hourglass_forward.16} parent=5 // pred_region
        // Predicated region
        $region25: #{hourglass_forward.16} parent=23 // pred_check
          %p153 = pneg %p69
        $region26: #{hourglass_forward.16} parent=23 // pred_check_branch
          %155 = sbr.rel (%p153) target = $region28
        $region27: #{hourglass_forward.16} parent=23 // pred_region
          %s156 = sand.u32 %s59, 1
          %s157 = sand.u32 %s59, 1
          %s158 = smul.addr %s157, 112
          %s159 = scalar_lea.vmem [#allocation2], %s158
          %s160 = smul.u32 2, %s17
          %s161 = smul.addr %s16, 56
          %s162 = sadd.s32 %s160, %s161
          %s163 = smul.addr %s162, 4
          %s164 = scalar_lea.vmem %s1, %s163
          // Predicated region
          $region29: #{hourglass_forward.16} parent=27 // pred_check
            _
          $region30: #{hourglass_forward.16} parent=27 // pred_check_branch
            %166 = sbr.rel (0) target = $region32
          $region31: #{hourglass_forward.16} parent=27 // pred_region
            // Predicated region
            $region33: #{hourglass_forward.16} parent=31 // pred_check
              _
            $region34: #{hourglass_forward.16} parent=31 // pred_check_branch
              %168 = sbr.rel (0) target = $region36
            $region35: #{hourglass_forward.16} parent=31 // pred_region
              // Predicated region
              $region48: #{hourglass_forward.16} parent=35 // pred_check
                _
              $region49: #{hourglass_forward.16} parent=35 // pred_check_branch
                %209 = sbr.rel (0) target = $region51
              $region50: #{hourglass_forward.16} parent=35 // pred_region
                loop: start=0, step=1, limit=1
                $region52: #{hourglass_forward.16} parent=50 // loop_pre_header
                  _
                $region53: #{hourglass_forward.16} parent=50 // loop_header
                  %s211 = sphi 0, %s215
                  %p212 = scmp.ge.s32.totalorder %s211, 1
                  %s216 = sphi %s164, %s164
                  %s217 = sphi %s159, %s159
                $region54: #{hourglass_forward.16} parent=50 // loop_header_branch
                  %214 = sbr.rel (%p212) target = $region58
                $region55: #{hourglass_forward.16} parent=50 // loop_body
                  %v218 = vld [vmem:[%s216] sm:$0xff]
                  %219 = vst [vmem:[%s217] sm:$0xff] %v218
                  %v220 = vld [vmem:[%s216 + $0x10] sm:$0xff]
                  %221 = vst [vmem:[%s217 + $0x8] sm:$0xff] %v220
                  %v222 = vld [vmem:[%s216 + $0x20] sm:$0xff]
                  %223 = vst [vmem:[%s217 + $0x10] sm:$0xff] %v222
                  %v224 = vld [vmem:[%s216 + $0x30] sm:$0xff]
                  %225 = vst [vmem:[%s217 + $0x18] sm:$0xff] %v224
                  %v226 = vld [vmem:[%s216 + $0x40] sm:$0xff]
                  %227 = vst [vmem:[%s217 + $0x20] sm:$0xff] %v226
                  %v228 = vld [vmem:[%s216 + $0x50] sm:$0xff]
                  %229 = vst [vmem:[%s217 + $0x28] sm:$0xff] %v228
                  %v230 = vld [vmem:[%s216 + $0x60] sm:$0xff]
                  %231 = vst [vmem:[%s217 + $0x30] sm:$0xff] %v230
                  %v232 = vld [vmem:[%s216 + $0x70] sm:$0xff]
                  %233 = vst [vmem:[%s217 + $0x38] sm:$0xff] %v232
                  %v234 = vld [vmem:[%s216 + $0x80] sm:$0xff]
                  %235 = vst [vmem:[%s217 + $0x40] sm:$0xff] %v234
                  %v236 = vld [vmem:[%s216 + $0x90] sm:$0xff]
                  %237 = vst [vmem:[%s217 + $0x48] sm:$0xff] %v236
                  %v238 = vld [vmem:[%s216 + $0xa0] sm:$0xff]
                  %239 = vst [vmem:[%s217 + $0x50] sm:$0xff] %v238
                  %v240 = vld [vmem:[%s216 + $0xb0] sm:$0xff]
                  %241 = vst [vmem:[%s217 + $0x58] sm:$0xff] %v240
                  %v242 = vld [vmem:[%s216 + $0xc0] sm:$0xff]
                  %243 = vst [vmem:[%s217 + $0x60] sm:$0xff] %v242
                  %v244 = vld [vmem:[%s216 + $0xd0] sm:$0xff]
                  %245 = vst [vmem:[%s217 + $0x68] sm:$0xff] %v244
                $region56: #{hourglass_forward.16} parent=50 // loop_footer
                  %s215 = sadd.s32 1, %s211
                $region57: #{hourglass_forward.16} parent=50 // loop_footer_branch
                  %210 = sbr.rel target = $region53
                $region58: #{hourglass_forward.16} parent=50 // loop_exit
                  _
              $region51: #{hourglass_forward.16} parent=35 // pred_fallthru
                _
              // Predicated region
              $region59: #{hourglass_forward.16} parent=35 // pred_check
                _
              $region60: #{hourglass_forward.16} parent=35 // pred_check_branch
                %247 = sbr.rel target = $region62
              $region61: #{hourglass_forward.16} parent=35 // pred_region
                _
              $region62: #{hourglass_forward.16} parent=35 // pred_fallthru
                _
            $region36: #{hourglass_forward.16} parent=31 // pred_fallthru
              _
            // Predicated region
            $region37: #{hourglass_forward.16} parent=31 // pred_check
              _
            $region38: #{hourglass_forward.16} parent=31 // pred_check_branch
              %170 = sbr.rel target = $region40
            $region39: #{hourglass_forward.16} parent=31 // pred_region
              loop: start=0, step=1, limit=1
              $region41: #{hourglass_forward.16} parent=39 // loop_pre_header
                _
              $region42: #{hourglass_forward.16} parent=39 // loop_header
                %s173 = sphi 0, %s177
                %p174 = scmp.ge.s32.totalorder %s173, 1
                %s178 = sphi %s164, %s164
                %s179 = sphi %s159, %s159
              $region43: #{hourglass_forward.16} parent=39 // loop_header_branch
                %176 = sbr.rel (%p174) target = $region47
              $region44: #{hourglass_forward.16} parent=39 // loop_body
                %v180 = vld [vmem:[%s178] sm:$0xff]
                %181 = vst [vmem:[%s179] sm:$0xff] %v180
                %v182 = vld [vmem:[%s178 + $0x10] sm:$0xff]
                %183 = vst [vmem:[%s179 + $0x8] sm:$0xff] %v182
                %v184 = vld [vmem:[%s178 + $0x20] sm:$0xff]
                %185 = vst [vmem:[%s179 + $0x10] sm:$0xff] %v184
                %v186 = vld [vmem:[%s178 + $0x30] sm:$0xff]
                %187 = vst [vmem:[%s179 + $0x18] sm:$0xff] %v186
                %v188 = vld [vmem:[%s178 + $0x40] sm:$0xff]
                %189 = vst [vmem:[%s179 + $0x20] sm:$0xff] %v188
                %v190 = vld [vmem:[%s178 + $0x50] sm:$0xff]
                %191 = vst [vmem:[%s179 + $0x28] sm:$0xff] %v190
                %v192 = vld [vmem:[%s178 + $0x60] sm:$0xff]
                %193 = vst [vmem:[%s179 + $0x30] sm:$0xff] %v192
                %v194 = vld [vmem:[%s178 + $0x70] sm:$0xff]
                %195 = vst [vmem:[%s179 + $0x38] sm:$0xff] %v194
                %v196 = vld [vmem:[%s178 + $0x80] sm:$0xff]
                %197 = vst [vmem:[%s179 + $0x40] sm:$0xff] %v196
                %v198 = vld [vmem:[%s178 + $0x90] sm:$0xff]
                %199 = vst [vmem:[%s179 + $0x48] sm:$0xff] %v198
                %v200 = vld [vmem:[%s178 + $0xa0] sm:$0xff]
                %201 = vst [vmem:[%s179 + $0x50] sm:$0xff] %v200
                %v202 = vld [vmem:[%s178 + $0xb0] sm:$0xff]
                %203 = vst [vmem:[%s179 + $0x58] sm:$0xff] %v202
                %v204 = vld [vmem:[%s178 + $0xc0] sm:$0xff]
                %205 = vst [vmem:[%s179 + $0x60] sm:$0xff] %v204
                %v206 = vld [vmem:[%s178 + $0xd0] sm:$0xff]
                %207 = vst [vmem:[%s179 + $0x68] sm:$0xff] %v206
              $region45: #{hourglass_forward.16} parent=39 // loop_footer
                %s177 = sadd.s32 1, %s173
              $region46: #{hourglass_forward.16} parent=39 // loop_footer_branch
                %172 = sbr.rel target = $region42
              $region47: #{hourglass_forward.16} parent=39 // loop_exit
                _
            $region40: #{hourglass_forward.16} parent=31 // pred_fallthru
              _
          $region32: #{hourglass_forward.16} parent=27 // pred_fallthru
            _
          %248 = vnop
        $region28: #{hourglass_forward.16} parent=23 // pred_fallthru
          _
      $region24: #{hourglass_forward.16} parent=5 // pred_fallthru
        _
      %p249 = scmp.le.s32.totalorder 1, %s9
      %p250 = scmp.lt.s32.totalorder %s9, 3
      %p251 = pnand %p249, %p250
      %p252 = pneg %p251
      // Predicated region
      $region63: #{hourglass_forward.16} parent=5 // pred_check
        _
      $region64: #{hourglass_forward.16} parent=5 // pred_check_branch
        %254 = sbr.rel (%p251) target = $region66
      $region65: #{hourglass_forward.16} parent=5 // pred_region
        %s255 = ssub.s32 %s9, 1
        %s256 = sand.u32 %s62, 1
        %s257 = sand.u32 %s62, 1
        %s258 = smul.addr %s257, 112
        %s259 = scalar_lea.vmem [#allocation2], %s258
        // Predicated region
        $region67: #{hourglass_forward.16} parent=65 // pred_check
          %p260 = pneg %p75
        $region68: #{hourglass_forward.16} parent=65 // pred_check_branch
          %262 = sbr.rel (%p260) target = $region70
        $region69: #{hourglass_forward.16} parent=65 // pred_region
          _
        $region70: #{hourglass_forward.16} parent=65 // pred_fallthru
          _
        %p263 = scmp.lt.s32.totalorder %s18, 0
        %s264 = scalar_select %p263, %s18, 0
        %s265 = smul.addr %s264, 4
        %s266 = scalar_lea.vmem %s0, %s265
        %p267 = pneg %p47
        %p268 = pneg %p44
        %s269 = sand.u32 %s62, 1
        %s270 = sand.u32 %s62, 1
        %s271 = smul.addr %s270, 112
        %s272 = scalar_lea.vmem [#allocation2], %s271
        %p273 = pneg %p75
        %p274 = pneg %p72
        %p275 = pneg %p96
        %p276 = pneg %p93
        %p277 = pneg %p124
        %p278 = pneg %p121
        %s279 = smul.u32 2, %s19
        %p280 = scmp.lt.s32.totalorder %s18, 0
        %s281 = scalar_select %p280, %s18, 0
        %p282 = scmp.lt.s32.totalorder %s279, 3
        %s283 = scalar_select %p282, %s279, 3
        %s284 = smul.addr %s281, 4
        %s285 = sadd.s32 %s283, %s284
        %s286 = smul.addr %s285, 4
        %s287 = scalar_lea.vmem %s3, %s286
        %p288 = scmp.lt.s32.totalorder %s18, 0
        %s289 = scalar_select %p288, %s18, 0
        %s290 = smul.addr %s289, 4
        %s291 = scalar_lea.vmem %s0, %s290
        %s292 = smul.u32 2, %s19
        %s293 = smul.u32 2, %s19
        %p294 = scmp.lt.s32.totalorder %s18, 0
        %s295 = scalar_select %p294, %s18, 0
        %p296 = scmp.lt.s32.totalorder %s293, 3
        %s297 = scalar_select %p296, %s293, 3
        %s298 = smul.addr %s295, 4
        %s299 = sadd.s32 %s297, %s298
        %s300 = smul.addr %s299, 4
        %s301 = scalar_lea.vmem %s3, %s300
        %s302 = smul.u32 2, %s19
        %v304 = vld [vmem:[%s291] sm:$0xf]
        %v305 = vld [vmem:[%s259] sm:$0xff]
        %v306 = vld [vmem:[%s259 + $0x8] sm:$0xff]
        %v307 = vld [vmem:[%s259 + $0x10] sm:$0xff]
        %v308 = vld [vmem:[%s259 + $0x18] sm:$0xff]
        %v309 = vld [vmem:[%s259 + $0x20] sm:$0xff]
        %v310 = vld [vmem:[%s259 + $0x28] sm:$0xff]
        %v311 = vld [vmem:[%s259 + $0x30] sm:$0xff]
        %v312 = vld [vmem:[%s259 + $0x38] sm:$0xff]
        %v313 = vld [vmem:[%s259 + $0x40] sm:$0xff]
        %v314 = vld [vmem:[%s259 + $0x48] sm:$0xff]
        %v315 = vld [vmem:[%s259 + $0x50] sm:$0xff]
        %v316 = vld [vmem:[%s259 + $0x58] sm:$0xff]
        %v317 = vld [vmem:[%s259 + $0x60] sm:$0xff]
        %v318 = vld [vmem:[%s259 + $0x68] sm:$0x33]
        %v319 = vld [vmem:[%s2] sm:$0xff]
        %321 = vset.pattern.permute.xlu0 0
        %322 = vperm.xlu0 %321, %v319
        %v323 = vpop.permute.xlu0 %322
        %v339 = vunpack.c.l.b16 %v305
        %v340 = vunpack.c.h.b16 %v305
        %v341 = vunpack.c.l.b16 %v306
        %v342 = vunpack.c.h.b16 %v306
        %v343 = vunpack.c.l.b16 %v307
        %v344 = vunpack.c.h.b16 %v307
        %v345 = vunpack.c.l.b16 %v308
        %v346 = vunpack.c.h.b16 %v308
        %v347 = vunpack.c.l.b16 %v309
        %v348 = vunpack.c.h.b16 %v309
        %v349 = vunpack.c.l.b16 %v310
        %v350 = vunpack.c.h.b16 %v310
        %v351 = vunpack.c.l.b16 %v311
        %v352 = vunpack.c.h.b16 %v311
        %v353 = vunpack.c.l.b16 %v312
        %v354 = vunpack.c.h.b16 %v312
        %v355 = vunpack.c.l.b16 %v313
        %v356 = vunpack.c.h.b16 %v313
        %v357 = vunpack.c.l.b16 %v314
        %v358 = vunpack.c.h.b16 %v314
        %v359 = vunpack.c.l.b16 %v315
        %v360 = vunpack.c.h.b16 %v315
        %v361 = vunpack.c.l.b16 %v316
        %v362 = vunpack.c.h.b16 %v316
        %v363 = vunpack.c.l.b16 %v317
        %v364 = vunpack.c.h.b16 %v317
        %v365 = vunpack.c.l.b16 %v318
        %v366 = vunpack.c.h.b16 %v318
        %v367 = vpack.c.b16 %v341, %v339
        %v368 = vpack.c.b16 %v342, %v340
        %v369 = vpack.c.b16 %v345, %v343
        %v370 = vpack.c.b16 %v346, %v344
        %v371 = vpack.c.b16 %v349, %v347
        %v372 = vpack.c.b16 %v350, %v348
        %v373 = vpack.c.b16 %v353, %v351
        %v374 = vpack.c.b16 %v354, %v352
        %v375 = vpack.c.b16 %v357, %v355
        %v376 = vpack.c.b16 %v358, %v356
        %v377 = vpack.c.b16 %v361, %v359
        %v378 = vpack.c.b16 %v362, %v360
        %v379 = vpack.c.b16 %v365, %v363
        %v380 = vpack.c.b16 %v366, %v364
        %vm393 = vcmask 883712
        %v395 = vsel %vm393, %v304, 0
        %vm397 = vcmask 1045504
        %v399 = vsel %vm397, %v379, 0
        %v402 = vsel %vm397, %v380, 0
        %404 = vmatprep.subr.bf16.mxu0 %v368
        %405 = vmatpush1.bf16.msra.mxu0 %v367
        %406 = vmatprep.subr.bf16.mxu0 %v370
        %407 = vmatpush1.bf16.msra.mxu0 %v369
        %408 = vmatprep.subr.bf16.mxu0 %v372
        %409 = vmatpush1.bf16.msra.mxu0 %v371
        %410 = vmatprep.subr.bf16.mxu0 %v374
        %411 = vmatpush1.bf16.msra.mxu0 %v373
        %412 = vmatprep.subr.bf16.mxu0 %v376
        %413 = vmatpush1.bf16.msra.mxu0 %v375
        %414 = vmatprep.subr.bf16.mxu0 %v378
        %415 = vmatpush1.bf16.msra.mxu0 %v377
        %416 = vmatprep.subr.bf16.mxu0 %v402
        %417 = vmatpush1.bf16.msra.mxu0 %v399
        %418 = vmatprep.subr.bf16.mxu0 0
        %419 = vmatpush1.bf16.msra.mxu0 0
        %420 = vmatprep.subr.bf16.mxu0 0
        %421 = vmatpush1.bf16.msra.mxu0 0
        %422 = vmatprep.subr.bf16.mxu0 0
        %423 = vmatpush1.bf16.msra.mxu0 0
        %424 = vmatprep.subr.bf16.mxu0 0
        %425 = vmatpush1.bf16.msra.mxu0 0
        %426 = vmatprep.subr.bf16.mxu0 0
        %427 = vmatpush1.bf16.msra.mxu0 0
        %428 = vmatprep.subr.bf16.mxu0 0
        %429 = vmatpush1.bf16.msra.mxu0 0
        %430 = vmatprep.subr.bf16.mxu0 0
        %431 = vmatpush1.bf16.msra.mxu0 0
        %432 = vmatprep.subr.bf16.mxu0 0
        %433 = vmatpush1.bf16.msra.mxu0 0
        %434 = vmatprep.subr.bf16.mxu0 0
        %435 = vmatpush1.bf16.msra.mxu0 0
        %436 = vmatprep.mubr.bf16.mxu0 0
        %437 = vmatmul.mubr.bf16.gmra.mrb[0].mxu0 %v395
        %v438 = vpop.f32.mrb[0].mxu0
        %v439 = vadd.f32 %v323, %v438
        %v440 = vpop.f32.mrb[0].mxu0
        %v441 = vadd.f32 %v323, %v440
        %v442 = vpop.f32.mrb[0].mxu0
        %v443 = vpop.f32.mrb[0].mxu0
        %444 = vdwg.mxu0
        %v445 = vmax.f32 %v439, 0.0
        %v446 = vmax.f32 %v441, 0.0
        %v447 = vpack.c.bf16 %v445, %v445
        %v448 = vpack.c.bf16 %v446, %v446
        %v451 = vunpack.c.l.b16 %v447
        %v452 = vunpack.c.l.b16 %v448
        %v453 = vpack.c.b16 %v452, %v451
        %455 = vst [vmem:[%s301] sm:$0xff] %v453
        %s456 = smul.u32 2, %s19
        %p457 = scmp.lt.s32.totalorder %s18, 0
        %s458 = scalar_select %p457, %s18, 0
        %p459 = scmp.lt.s32.totalorder %s456, 3
        %s460 = scalar_select %p459, %s456, 3
        %s461 = smul.addr %s458, 4
        %s462 = sadd.s32 %s460, %s461
        %s463 = smul.addr %s462, 4
        %s464 = scalar_lea.vmem %s3, %s463
        // Predicated region
        $region71: #{hourglass_forward.16} parent=65 // pred_check
          %p465 = pneg %p121
        $region72: #{hourglass_forward.16} parent=65 // pred_check_branch
          %467 = sbr.rel (%p465) target = $region74
        $region73: #{hourglass_forward.16} parent=65 // pred_region
          %s468 = smul.u32 2, %s19
        $region74: #{hourglass_forward.16} parent=65 // pred_fallthru
          _
      $region66: #{hourglass_forward.16} parent=5 // pred_fallthru
        _
      %p469 = scmp.le.s32.totalorder 2, %s9
      // Predicated region
      $region75: #{hourglass_forward.16} parent=5 // pred_check
        %p470 = pneg %p469
      $region76: #{hourglass_forward.16} parent=5 // pred_check_branch
        %472 = sbr.rel (%p470) target = $region78
      $region77: #{hourglass_forward.16} parent=5 // pred_region
        %s473 = ssub.s32 %s9, 2
        // Predicated region
        $region79: #{hourglass_forward.16} parent=77 // pred_check
          %p474 = pneg %p127
        $region80: #{hourglass_forward.16} parent=77 // pred_check_branch
          %476 = sbr.rel (%p474) target = $region82
        $region81: #{hourglass_forward.16} parent=77 // pred_region
          %s477 = smul.u32 2, %s21
          %p478 = scmp.lt.s32.totalorder %s20, 0
          %s479 = scalar_select %p478, %s20, 0
          %p480 = scmp.lt.s32.totalorder %s477, 3
          %s481 = scalar_select %p480, %s477, 3
          %s482 = smul.addr %s479, 4
          %s483 = sadd.s32 %s481, %s482
          %s484 = smul.addr %s483, 4
          %s485 = scalar_lea.vmem %s3, %s484
        $region82: #{hourglass_forward.16} parent=77 // pred_fallthru
          _
      $region78: #{hourglass_forward.16} parent=5 // pred_fallthru
        _
    $region6: #{hourglass_forward.16} parent=1 // loop_footer
      %s13 = sadd.s32 1, %s9
    $region7: #{hourglass_forward.16} parent=1 // loop_footer_branch
      %8 = sbr.rel target = $region3
    $region8: #{hourglass_forward.16} parent=1 // loop_exit
      _

// kernel: hourglass_forward.17
$region0: #{hourglass_forward.17}
  #allocation0 [shape = 'u32[]', space=smem, size = 0x4, offset = 0x4, fixed_abs, tag = 'smem constant byte address 0x4 - core index']
  #allocation1 [shape = 'u32[144,128]{1,0:T(1,128)}', space=vmem, size = 0x12000, scoped, tag = 'internal scratch']
  %s0 = inlined_call_operand.vmem [shape: bf16[1,8,216], index: 0, kind: input, shape index: {}]
  %s1 = inlined_call_operand.vmem [shape: bf16[1,216,512], index: 1, kind: input, shape index: {}]
  %s2 = inlined_call_operand.vmem [shape: f32[8,1], index: 2, kind: input, shape index: {}]
  %s3 = inlined_call_operand.vmem [shape: bf16[1,8,512], index: 3, kind: output, shape index: {}]
  %s4 = sld [smem:[#allocation0]]
  $region83: #{hourglass_forward.17} parent=0
    _
  %s6 = ssub.s32 1, %s4
  %s7 = scalar_select 0, %s6, %s4
  $region1: #{hourglass_forward.17} parent=0
    #allocation2 [shape = 'u8[221184]{0}', space=vmem, size = 0x36000, scoped, tag = 'input window, operand 1']
    loop: start=0, step=1, limit=4
    $region2: #{hourglass_forward.17} parent=1 // loop_pre_header
      _
    $region3: #{hourglass_forward.17} parent=1 // loop_header
      %s9 = sphi 0, %s13
      %p10 = scmp.ge.s32.totalorder %s9, 4
      %s16 = sphi 0, %s28
      %s17 = sphi 0, %s24
      %s18 = sphi 0, %s16
      %s19 = sphi 0, %s17
      %s20 = sphi 0, %s18
      %s21 = sphi 0, %s19
      %s31 = sphi 0, %s33
      %s34 = sphi 0, %s31
      %s35 = sphi 0, %s34
      %s51 = sphi 0, %s35
      %s59 = sphi 0, %s61
      %s62 = sphi 0, %s59
      %s63 = sphi 0, %s62
      %s79 = sphi 0, %s63
      %s83 = sphi 0, %s83
      %s85 = sphi 0, %s83
      %s86 = sphi 0, %s85
      %s100 = sphi 0, %s86
      %s108 = sphi 0, %s110
      %s111 = sphi 0, %s108
      %s112 = sphi 0, %s111
      %s128 = sphi 0, %s112
    $region4: #{hourglass_forward.17} parent=1 // loop_header_branch
      %12 = sbr.rel (%p10) target = $region8
    $region5: #{hourglass_forward.17} parent=1 // loop_body
      %s14 = ssub.s32 %s9, 1
      %s15 = ssub.s32 %s9, 2
      %s22 = sadd.s32 1, %s17
      %p23 = scmp.ge.s32.totalorder %s22, 2
      %s24 = scalar_select %p23, 0, %s22
      %s25 = sadd.s32 1, %s16
      %s26 = scalar_select %p23, %s25, %s16
      %p27 = scmp.ge.s32.totalorder %s26, 1
      %s28 = scalar_select %p27, 0, %s26
      %s29 = ssub.s32 %s16, %s28
      %p30 = scmp.eq.s32.totalorder %s29, 0
      %s32 = sadd.s32 %s31, 1
      %s33 = scalar_select %p30, %s31, %s32
      %p36 = pneg %p30
      %p37 = scmp.eq.s32.totalorder %s9, 1
      %p38 = por %p36, %p37
      %p39 = scmp.ne.s32.totalorder %s31, %s34
      %p40 = scmp.eq.s32.totalorder %s9, 0
      %p41 = por %p39, %p40
      %p42 = scmp.ne.s32.totalorder %s31, %s34
      %p43 = scmp.eq.s32.totalorder %s14, 1
      %p44 = por %p42, %p43
      %p45 = scmp.ne.s32.totalorder %s34, %s35
      %p46 = scmp.eq.s32.totalorder %s14, 0
      %p47 = por %p45, %p46
      %p48 = scmp.ne.s32.totalorder %s34, %s35
      %p49 = scmp.eq.s32.totalorder %s15, 1
      %p50 = por %p48, %p49
      %p52 = scmp.ne.s32.totalorder %s35, %s51
      %p53 = scmp.eq.s32.totalorder %s15, 0
      %p54 = por %p52, %p53
      %s55 = ssub.s32 %s16, %s28
      %s56 = ssub.s32 %s17, %s24
      %s57 = sor.u32 %s55, %s56
      %p58 = scmp.eq.s32.totalorder %s57, 0
      %s60 = sadd.s32 %s59, 1
      %s61 = scalar_select %p58, %s59, %s60
      %p64 = pneg %p58
      %p65 = scmp.eq.s32.totalorder %s9, 1
      %p66 = por %p64, %p65
      %p67 = scmp.ne.s32.totalorder %s59, %s62
      %p68 = scmp.eq.s32.totalorder %s9, 0
      %p69 = por %p67, %p68
      %p70 = scmp.ne.s32.totalorder %s59, %s62
      %p71 = scmp.eq.s32.totalorder %s14, 1
      %p72 = por %p70, %p71
      %p73 = scmp.ne.s32.totalorder %s62, %s63
      %p74 = scmp.eq.s32.totalorder %s14, 0
      %p75 = por %p73, %p74
      %p76 = scmp.ne.s32.totalorder %s62, %s63
      %p77 = scmp.eq.s32.totalorder %s15, 1
      %p78 = por %p76, %p77
      %p80 = scmp.ne.s32.totalorder %s63, %s79
      %p81 = scmp.eq.s32.totalorder %s15, 0
      %p82 = por %p80, %p81
      %s84 = sadd.s32 %s83, 1
      %p87 = scmp.eq.s32.totalorder %s9, 1
      %p88 = scmp.ne.s32.totalorder %s83, %s85
      %p89 = scmp.eq.s32.totalorder %s9, 0
      %p90 = por %p88, %p89
      %p91 = scmp.ne.s32.totalorder %s83, %s85
      %p92 = scmp.eq.s32.totalorder %s14, 1
      %p93 = por %p91, %p92
      %p94 = scmp.ne.s32.totalorder %s85, %s86
      %p95 = scmp.eq.s32.totalorder %s14, 0
      %p96 = por %p94, %p95
      %p97 = scmp.ne.s32.totalorder %s85, %s86
      %p98 = scmp.eq.s32.totalorder %s15, 1
      %p99 = por %p97, %p98
      %p101 = scmp.ne.s32.totalorder %s86, %s100
      %p102 = scmp.eq.s32.totalorder %s15, 0
      %p103 = por %p101, %p102
      %s104 = ssub.s32 %s16, %s28
      %s105 = ssub.s32 %s17, %s24
      %s106 = sor.u32 %s104, %s105
      %p107 = scmp.eq.s32.totalorder %s106, 0
      %s109 = sadd.s32 %s108, 1
      %s110 = scalar_select %p107, %s108, %s109
      %p113 = pneg %p107
      %p114 = scmp.eq.s32.totalorder %s9, 1
      %p115 = por %p113, %p114
      %p116 = scmp.ne.s32.totalorder %s108, %s111
      %p117 = scmp.eq.s32.totalorder %s9, 0
      %p118 = por %p116, %p117
      %p119 = scmp.ne.s32.totalorder %s108, %s111
      %p120 = scmp.eq.s32.totalorder %s14, 1
      %p121 = por %p119, %p120
      %p122 = scmp.ne.s32.totalorder %s111, %s112
      %p123 = scmp.eq.s32.totalorder %s14, 0
      %p124 = por %p122, %p123
      %p125 = scmp.ne.s32.totalorder %s111, %s112
      %p126 = scmp.eq.s32.totalorder %s15, 1
      %p127 = por %p125, %p126
      %p129 = scmp.ne.s32.totalorder %s112, %s128
      %p130 = scmp.eq.s32.totalorder %s15, 0
      %p131 = por %p129, %p130
      %p132 = scmp.le.s32.totalorder 1, %s9
      %p133 = scmp.lt.s32.totalorder %s9, 3
      %p134 = pnand %p132, %p133
      %p135 = pneg %p134
      // Predicated region
      $region9: #{hourglass_forward.17} parent=5 // pred_check
        _
      $region10: #{hourglass_forward.17} parent=5 // pred_check_branch
        %137 = sbr.rel (%p134) target = $region12
      $region11: #{hourglass_forward.17} parent=5 // pred_region
        %s138 = ssub.s32 %s9, 1
        // Predicated region
        $region13: #{hourglass_forward.17} parent=11 // pred_check
          %p139 = pneg %p47
        $region14: #{hourglass_forward.17} parent=11 // pred_check_branch
          %141 = sbr.rel (%p139) target = $region16
        $region15: #{hourglass_forward.17} parent=11 // pred_region
          %p142 = scmp.lt.s32.totalorder %s18, 0
          %s143 = scalar_select %p142, %s18, 0
          %s144 = smul.addr %s143, 2
          %s145 = smul.addr %s144, 4
          %s146 = scalar_lea.vmem %s0, %s145
        $region16: #{hourglass_forward.17} parent=11 // pred_fallthru
          _
        // Predicated region
        $region17: #{hourglass_forward.17} parent=11 // pred_check
          %p147 = pneg %p96
        $region18: #{hourglass_forward.17} parent=11 // pred_check_branch
          %149 = sbr.rel (%p147) target = $region20
        $region19: #{hourglass_forward.17} parent=11 // pred_region
          _
        $region20: #{hourglass_forward.17} parent=11 // pred_fallthru
          _
      $region12: #{hourglass_forward.17} parent=5 // pred_fallthru
        _
      %p150 = scmp.lt.s32.totalorder %s9, 2
      // Predicated region
      $region21: #{hourglass_forward.17} parent=5 // pred_check
        %p151 = pneg %p150
      $region22: #{hourglass_forward.17} parent=5 // pred_check_branch
        %153 = sbr.rel (%p151) target = $region24
      $region23: #{hourglass_forward.17} parent=5 // pred_region
        // Predicated region
        $region25: #{hourglass_forward.17} parent=23 // pred_check
          %p154 = pneg %p69
        $region26: #{hourglass_forward.17} parent=23 // pred_check_branch
          %156 = sbr.rel (%p154) target = $region28
        $region27: #{hourglass_forward.17} parent=23 // pred_region
          %s157 = sand.u32 %s59, 1
          %s158 = sand.u32 %s59, 1
          %s159 = smul.addr %s158, 216
          %s160 = scalar_lea.vmem [#allocation2], %s159
          %s161 = smul.u32 2, %s17
          %s162 = smul.addr %s16, 108
          %s163 = sadd.s32 %s161, %s162
          %s164 = smul.addr %s163, 4
          %s165 = scalar_lea.vmem %s1, %s164
          // Predicated region
          $region29: #{hourglass_forward.17} parent=27 // pred_check
            _
          $region30: #{hourglass_forward.17} parent=27 // pred_check_branch
            %167 = sbr.rel (0) target = $region32
          $region31: #{hourglass_forward.17} parent=27 // pred_region
            // Predicated region
            $region33: #{hourglass_forward.17} parent=31 // pred_check
              _
            $region34: #{hourglass_forward.17} parent=31 // pred_check_branch
              %169 = sbr.rel (0) target = $region36
            $region35: #{hourglass_forward.17} parent=31 // pred_region
              // Predicated region
              $region48: #{hourglass_forward.17} parent=35 // pred_check
                _
              $region49: #{hourglass_forward.17} parent=35 // pred_check_branch
                %236 = sbr.rel (0) target = $region51
              $region50: #{hourglass_forward.17} parent=35 // pred_region
                loop: start=0, step=1, limit=1
                $region52: #{hourglass_forward.17} parent=50 // loop_pre_header
                  _
                $region53: #{hourglass_forward.17} parent=50 // loop_header
                  %s238 = sphi 0, %s242
                  %p239 = scmp.ge.s32.totalorder %s238, 1
                  %s243 = sphi %s165, %s165
                  %s244 = sphi %s160, %s160
                $region54: #{hourglass_forward.17} parent=50 // loop_header_branch
                  %241 = sbr.rel (%p239) target = $region58
                $region55: #{hourglass_forward.17} parent=50 // loop_body
                  %v245 = vld [vmem:[%s243] sm:$0xff]
                  %246 = vst [vmem:[%s244] sm:$0xff] %v245
                  %v247 = vld [vmem:[%s243 + $0x10] sm:$0xff]
                  %248 = vst [vmem:[%s244 + $0x8] sm:$0xff] %v247
                  %v249 = vld [vmem:[%s243 + $0x20] sm:$0xff]
                  %250 = vst [vmem:[%s244 + $0x10] sm:$0xff] %v249
                  %v251 = vld [vmem:[%s243 + $0x30] sm:$0xff]
                  %252 = vst [vmem:[%s244 + $0x18] sm:$0xff] %v251
                  %v253 = vld [vmem:[%s243 + $0x40] sm:$0xff]
                  %254 = vst [vmem:[%s244 + $0x20] sm:$0xff] %v253
                  %v255 = vld [vmem:[%s243 + $0x50] sm:$0xff]
                  %256 = vst [vmem:[%s244 + $0x28] sm:$0xff] %v255
                  %v257 = vld [vmem:[%s243 + $0x60] sm:$0xff]
                  %258 = vst [vmem:[%s244 + $0x30] sm:$0xff] %v257
                  %v259 = vld [vmem:[%s243 + $0x70] sm:$0xff]
                  %260 = vst [vmem:[%s244 + $0x38] sm:$0xff] %v259
                  %v261 = vld [vmem:[%s243 + $0x80] sm:$0xff]
                  %262 = vst [vmem:[%s244 + $0x40] sm:$0xff] %v261
                  %v263 = vld [vmem:[%s243 + $0x90] sm:$0xff]
                  %264 = vst [vmem:[%s244 + $0x48] sm:$0xff] %v263
                  %v265 = vld [vmem:[%s243 + $0xa0] sm:$0xff]
                  %266 = vst [vmem:[%s244 + $0x50] sm:$0xff] %v265
                  %v267 = vld [vmem:[%s243 + $0xb0] sm:$0xff]
                  %268 = vst [vmem:[%s244 + $0x58] sm:$0xff] %v267
                  %v269 = vld [vmem:[%s243 + $0xc0] sm:$0xff]
                  %270 = vst [vmem:[%s244 + $0x60] sm:$0xff] %v269
                  %v271 = vld [vmem:[%s243 + $0xd0] sm:$0xff]
                  %272 = vst [vmem:[%s244 + $0x68] sm:$0xff] %v271
                  %v273 = vld [vmem:[%s243 + $0xe0] sm:$0xff]
                  %274 = vst [vmem:[%s244 + $0x70] sm:$0xff] %v273
                  %v275 = vld [vmem:[%s243 + $0xf0] sm:$0xff]
                  %276 = vst [vmem:[%s244 + $0x78] sm:$0xff] %v275
                  %v277 = vld [vmem:[%s243 + $0x100] sm:$0xff]
                  %278 = vst [vmem:[%s244 + $0x80] sm:$0xff] %v277
                  %v279 = vld [vmem:[%s243 + $0x110] sm:$0xff]
                  %280 = vst [vmem:[%s244 + $0x88] sm:$0xff] %v279
                  %v281 = vld [vmem:[%s243 + $0x120] sm:$0xff]
                  %282 = vst [vmem:[%s244 + $0x90] sm:$0xff] %v281
                  %v283 = vld [vmem:[%s243 + $0x130] sm:$0xff]
                  %284 = vst [vmem:[%s244 + $0x98] sm:$0xff] %v283
                  %v285 = vld [vmem:[%s243 + $0x140] sm:$0xff]
                  %286 = vst [vmem:[%s244 + $0xa0] sm:$0xff] %v285
                  %v287 = vld [vmem:[%s243 + $0x150] sm:$0xff]
                  %288 = vst [vmem:[%s244 + $0xa8] sm:$0xff] %v287
                  %v289 = vld [vmem:[%s243 + $0x160] sm:$0xff]
                  %290 = vst [vmem:[%s244 + $0xb0] sm:$0xff] %v289
                  %v291 = vld [vmem:[%s243 + $0x170] sm:$0xff]
                  %292 = vst [vmem:[%s244 + $0xb8] sm:$0xff] %v291
                  %v293 = vld [vmem:[%s243 + $0x180] sm:$0xff]
                  %294 = vst [vmem:[%s244 + $0xc0] sm:$0xff] %v293
                  %v295 = vld [vmem:[%s243 + $0x190] sm:$0xff]
                  %296 = vst [vmem:[%s244 + $0xc8] sm:$0xff] %v295
                  %v297 = vld [vmem:[%s243 + $0x1a0] sm:$0xff]
                  %298 = vst [vmem:[%s244 + $0xd0] sm:$0xff] %v297
                $region56: #{hourglass_forward.17} parent=50 // loop_footer
                  %s242 = sadd.s32 1, %s238
                $region57: #{hourglass_forward.17} parent=50 // loop_footer_branch
                  %237 = sbr.rel target = $region53
                $region58: #{hourglass_forward.17} parent=50 // loop_exit
                  _
              $region51: #{hourglass_forward.17} parent=35 // pred_fallthru
                _
              // Predicated region
              $region59: #{hourglass_forward.17} parent=35 // pred_check
                _
              $region60: #{hourglass_forward.17} parent=35 // pred_check_branch
                %300 = sbr.rel target = $region62
              $region61: #{hourglass_forward.17} parent=35 // pred_region
                _
              $region62: #{hourglass_forward.17} parent=35 // pred_fallthru
                _
            $region36: #{hourglass_forward.17} parent=31 // pred_fallthru
              _
            // Predicated region
            $region37: #{hourglass_forward.17} parent=31 // pred_check
              _
            $region38: #{hourglass_forward.17} parent=31 // pred_check_branch
              %171 = sbr.rel target = $region40
            $region39: #{hourglass_forward.17} parent=31 // pred_region
              loop: start=0, step=1, limit=1
              $region41: #{hourglass_forward.17} parent=39 // loop_pre_header
                _
              $region42: #{hourglass_forward.17} parent=39 // loop_header
                %s174 = sphi 0, %s178
                %p175 = scmp.ge.s32.totalorder %s174, 1
                %s179 = sphi %s165, %s165
                %s180 = sphi %s160, %s160
              $region43: #{hourglass_forward.17} parent=39 // loop_header_branch
                %177 = sbr.rel (%p175) target = $region47
              $region44: #{hourglass_forward.17} parent=39 // loop_body
                %v181 = vld [vmem:[%s179] sm:$0xff]
                %182 = vst [vmem:[%s180] sm:$0xff] %v181
                %v183 = vld [vmem:[%s179 + $0x10] sm:$0xff]
                %184 = vst [vmem:[%s180 + $0x8] sm:$0xff] %v183
                %v185 = vld [vmem:[%s179 + $0x20] sm:$0xff]
                %186 = vst [vmem:[%s180 + $0x10] sm:$0xff] %v185
                %v187 = vld [vmem:[%s179 + $0x30] sm:$0xff]
                %188 = vst [vmem:[%s180 + $0x18] sm:$0xff] %v187
                %v189 = vld [vmem:[%s179 + $0x40] sm:$0xff]
                %190 = vst [vmem:[%s180 + $0x20] sm:$0xff] %v189
                %v191 = vld [vmem:[%s179 + $0x50] sm:$0xff]
                %192 = vst [vmem:[%s180 + $0x28] sm:$0xff] %v191
                %v193 = vld [vmem:[%s179 + $0x60] sm:$0xff]
                %194 = vst [vmem:[%s180 + $0x30] sm:$0xff] %v193
                %v195 = vld [vmem:[%s179 + $0x70] sm:$0xff]
                %196 = vst [vmem:[%s180 + $0x38] sm:$0xff] %v195
                %v197 = vld [vmem:[%s179 + $0x80] sm:$0xff]
                %198 = vst [vmem:[%s180 + $0x40] sm:$0xff] %v197
                %v199 = vld [vmem:[%s179 + $0x90] sm:$0xff]
                %200 = vst [vmem:[%s180 + $0x48] sm:$0xff] %v199
                %v201 = vld [vmem:[%s179 + $0xa0] sm:$0xff]
                %202 = vst [vmem:[%s180 + $0x50] sm:$0xff] %v201
                %v203 = vld [vmem:[%s179 + $0xb0] sm:$0xff]
                %204 = vst [vmem:[%s180 + $0x58] sm:$0xff] %v203
                %v205 = vld [vmem:[%s179 + $0xc0] sm:$0xff]
                %206 = vst [vmem:[%s180 + $0x60] sm:$0xff] %v205
                %v207 = vld [vmem:[%s179 + $0xd0] sm:$0xff]
                %208 = vst [vmem:[%s180 + $0x68] sm:$0xff] %v207
                %v209 = vld [vmem:[%s179 + $0xe0] sm:$0xff]
                %210 = vst [vmem:[%s180 + $0x70] sm:$0xff] %v209
                %v211 = vld [vmem:[%s179 + $0xf0] sm:$0xff]
                %212 = vst [vmem:[%s180 + $0x78] sm:$0xff] %v211
                %v213 = vld [vmem:[%s179 + $0x100] sm:$0xff]
                %214 = vst [vmem:[%s180 + $0x80] sm:$0xff] %v213
                %v215 = vld [vmem:[%s179 + $0x110] sm:$0xff]
                %216 = vst [vmem:[%s180 + $0x88] sm:$0xff] %v215
                %v217 = vld [vmem:[%s179 + $0x120] sm:$0xff]
                %218 = vst [vmem:[%s180 + $0x90] sm:$0xff] %v217
                %v219 = vld [vmem:[%s179 + $0x130] sm:$0xff]
                %220 = vst [vmem:[%s180 + $0x98] sm:$0xff] %v219
                %v221 = vld [vmem:[%s179 + $0x140] sm:$0xff]
                %222 = vst [vmem:[%s180 + $0xa0] sm:$0xff] %v221
                %v223 = vld [vmem:[%s179 + $0x150] sm:$0xff]
                %224 = vst [vmem:[%s180 + $0xa8] sm:$0xff] %v223
                %v225 = vld [vmem:[%s179 + $0x160] sm:$0xff]
                %226 = vst [vmem:[%s180 + $0xb0] sm:$0xff] %v225
                %v227 = vld [vmem:[%s179 + $0x170] sm:$0xff]
                %228 = vst [vmem:[%s180 + $0xb8] sm:$0xff] %v227
                %v229 = vld [vmem:[%s179 + $0x180] sm:$0xff]
                %230 = vst [vmem:[%s180 + $0xc0] sm:$0xff] %v229
                %v231 = vld [vmem:[%s179 + $0x190] sm:$0xff]
                %232 = vst [vmem:[%s180 + $0xc8] sm:$0xff] %v231
                %v233 = vld [vmem:[%s179 + $0x1a0] sm:$0xff]
                %234 = vst [vmem:[%s180 + $0xd0] sm:$0xff] %v233
              $region45: #{hourglass_forward.17} parent=39 // loop_footer
                %s178 = sadd.s32 1, %s174
              $region46: #{hourglass_forward.17} parent=39 // loop_footer_branch
                %173 = sbr.rel target = $region42
              $region47: #{hourglass_forward.17} parent=39 // loop_exit
                _
            $region40: #{hourglass_forward.17} parent=31 // pred_fallthru
              _
          $region32: #{hourglass_forward.17} parent=27 // pred_fallthru
            _
          %301 = vnop
        $region28: #{hourglass_forward.17} parent=23 // pred_fallthru
          _
      $region24: #{hourglass_forward.17} parent=5 // pred_fallthru
        _
      %p302 = scmp.le.s32.totalorder 1, %s9
      %p303 = scmp.lt.s32.totalorder %s9, 3
      %p304 = pnand %p302, %p303
      %p305 = pneg %p304
      // Predicated region
      $region63: #{hourglass_forward.17} parent=5 // pred_check
        _
      $region64: #{hourglass_forward.17} parent=5 // pred_check_branch
        %307 = sbr.rel (%p304) target = $region66
      $region65: #{hourglass_forward.17} parent=5 // pred_region
        %s308 = ssub.s32 %s9, 1
        %s309 = sand.u32 %s62, 1
        %s310 = sand.u32 %s62, 1
        %s311 = smul.addr %s310, 216
        %s312 = scalar_lea.vmem [#allocation2], %s311
        // Predicated region
        $region67: #{hourglass_forward.17} parent=65 // pred_check
          %p313 = pneg %p75
        $region68: #{hourglass_forward.17} parent=65 // pred_check_branch
          %315 = sbr.rel (%p313) target = $region70
        $region69: #{hourglass_forward.17} parent=65 // pred_region
          _
        $region70: #{hourglass_forward.17} parent=65 // pred_fallthru
          _
        %p316 = scmp.lt.s32.totalorder %s18, 0
        %s317 = scalar_select %p316, %s18, 0
        %s318 = smul.addr %s317, 2
        %s319 = smul.addr %s318, 4
        %s320 = scalar_lea.vmem %s0, %s319
        %p321 = pneg %p47
        %p322 = pneg %p44
        %s323 = sand.u32 %s62, 1
        %s324 = sand.u32 %s62, 1
        %s325 = smul.addr %s324, 216
        %s326 = scalar_lea.vmem [#allocation2], %s325
        %p327 = pneg %p75
        %p328 = pneg %p72
        %p329 = pneg %p96
        %p330 = pneg %p93
        %p331 = pneg %p124
        %p332 = pneg %p121
        %s333 = smul.u32 2, %s19
        %p334 = scmp.lt.s32.totalorder %s18, 0
        %s335 = scalar_select %p334, %s18, 0
        %p336 = scmp.lt.s32.totalorder %s333, 3
        %s337 = scalar_select %p336, %s333, 3
        %s338 = smul.addr %s335, 4
        %s339 = sadd.s32 %s337, %s338
        %s340 = smul.addr %s339, 4
        %s341 = scalar_lea.vmem %s3, %s340
        %p342 = scmp.lt.s32.totalorder %s18, 0
        %s343 = scalar_select %p342, %s18, 0
        %s344 = smul.addr %s343, 2
        %s345 = smul.addr %s344, 4
        %s346 = scalar_lea.vmem %s0, %s345
        %s347 = smul.u32 2, %s19
        %s348 = smul.u32 2, %s19
        %p349 = scmp.lt.s32.totalorder %s18, 0
        %s350 = scalar_select %p349, %s18, 0
        %p351 = scmp.lt.s32.totalorder %s348, 3
        %s352 = scalar_select %p351, %s348, 3
        %s353 = smul.addr %s350, 4
        %s354 = sadd.s32 %s352, %s353
        %s355 = smul.addr %s354, 4
        %s356 = scalar_lea.vmem %s3, %s355
        %s357 = smul.u32 2, %s19
        %v359 = vld [vmem:[%s346] sm:$0xff]
        %v360 = vld [vmem:[%s312] sm:$0xff]
        %v361 = vld [vmem:[%s312 + $0x8] sm:$0xff]
        %v362 = vld [vmem:[%s312 + $0x10] sm:$0xff]
        %v363 = vld [vmem:[%s312 + $0x18] sm:$0xff]
        %v364 = vld [vmem:[%s312 + $0x20] sm:$0xff]
        %v365 = vld [vmem:[%s312 + $0x28] sm:$0xff]
        %v366 = vld [vmem:[%s312 + $0x30] sm:$0xff]
        %v367 = vld [vmem:[%s312 + $0x38] sm:$0xff]
        %v368 = vld [vmem:[%s312 + $0x40] sm:$0xff]
        %v369 = vld [vmem:[%s312 + $0x48] sm:$0xff]
        %v370 = vld [vmem:[%s312 + $0x50] sm:$0xff]
        %v371 = vld [vmem:[%s312 + $0x58] sm:$0xff]
        %v372 = vld [vmem:[%s312 + $0x60] sm:$0xff]
        %v373 = vld [vmem:[%s312 + $0x68] sm:$0xff]
        %v374 = vld [vmem:[%s312 + $0x70] sm:$0xff]
        %v375 = vld [vmem:[%s312 + $0x78] sm:$0xff]
        %v376 = vld [vmem:[%s312 + $0x80] sm:$0xff]
        %v377 = vld [vmem:[%s312 + $0x88] sm:$0xff]
        %v378 = vld [vmem:[%s312 + $0x90] sm:$0xff]
        %v379 = vld [vmem:[%s312 + $0x98] sm:$0xff]
        %v380 = vld [vmem:[%s312 + $0xa0] sm:$0xff]
        %v381 = vld [vmem:[%s312 + $0xa8] sm:$0xff]
        %v382 = vld [vmem:[%s312 + $0xb0] sm:$0xff]
        %v383 = vld [vmem:[%s312 + $0xb8] sm:$0xff]
        %v384 = vld [vmem:[%s312 + $0xc0] sm:$0xff]
        %v385 = vld [vmem:[%s312 + $0xc8] sm:$0xff]
        %v386 = vld [vmem:[%s312 + $0xd0] sm:$0xff]
        %v387 = vld [vmem:[%s2] sm:$0xff]
        %389 = vset.pattern.permute.xlu0 0
        %390 = vperm.xlu0 %389, %v387
        %v391 = vpop.permute.xlu0 %390
        %v394 = vunpack.c.l.b16 %v359
        %v395 = vunpack.c.h.b16 %v359
        %v396 = vpack.c.b16 %v394, %v394
        %v397 = vpack.c.b16 %v395, %v395
        %v426 = vunpack.c.l.b16 %v360
        %v427 = vunpack.c.h.b16 %v360
        %v428 = vunpack.c.l.b16 %v361
        %v429 = vunpack.c.h.b16 %v361
        %v430 = vunpack.c.l.b16 %v362
        %v431 = vunpack.c.h.b16 %v362
        %v432 = vunpack.c.l.b16 %v363
        %v433 = vunpack.c.h.b16 %v363
        %v434 = vunpack.c.l.b16 %v364
        %v435 = vunpack.c.h.b16 %v364
        %v436 = vunpack.c.l.b16 %v365
        %v437 = vunpack.c.h.b16 %v365
        %v438 = vunpack.c.l.b16 %v366
        %v439 = vunpack.c.h.b16 %v366
        %v440 = vunpack.c.l.b16 %v367
        %v441 = vunpack.c.h.b16 %v367
        %v442 = vunpack.c.l.b16 %v368
        %v443 = vunpack.c.h.b16 %v368
        %v444 = vunpack.c.l.b16 %v369
        %v445 = vunpack.c.h.b16 %v369
        %v446 = vunpack.c.l.b16 %v370
        %v447 = vunpack.c.h.b16 %v370
        %v448 = vunpack.c.l.b16 %v371
        %v449 = vunpack.c.h.b16 %v371
        %v450 = vunpack.c.l.b16 %v372
        %v451 = vunpack.c.h.b16 %v372
        %v452 = vunpack.c.l.b16 %v373
        %v453 = vunpack.c.h.b16 %v373
        %v454 = vunpack.c.l.b16 %v374
        %v455 = vunpack.c.h.b16 %v374
        %v456 = vunpack.c.l.b16 %v375
        %v457 = vunpack.c.h.b16 %v375
        %v458 = vunpack.c.l.b16 %v376
        %v459 = vunpack.c.h.b16 %v376
        %v460 = vunpack.c.l.b16 %v377
        %v461 = vunpack.c.h.b16 %v377
        %v462 = vunpack.c.l.b16 %v378
        %v463 = vunpack.c.h.b16 %v378
        %v464 = vunpack.c.l.b16 %v379
        %v465 = vunpack.c.h.b16 %v379
        %v466 = vunpack.c.l.b16 %v380
        %v467 = vunpack.c.h.b16 %v380
        %v468 = vunpack.c.l.b16 %v381
        %v469 = vunpack.c.h.b16 %v381
        %v470 = vunpack.c.l.b16 %v382
        %v471 = vunpack.c.h.b16 %v382
        %v472 = vunpack.c.l.b16 %v383
        %v473 = vunpack.c.h.b16 %v383
        %v474 = vunpack.c.l.b16 %v384
        %v475 = vunpack.c.h.b16 %v384
        %v476 = vunpack.c.l.b16 %v385
        %v477 = vunpack.c.h.b16 %v385
        %v478 = vunpack.c.l.b16 %v386
        %v479 = vunpack.c.h.b16 %v386
        %v480 = vpack.c.b16 %v428, %v426
        %v481 = vpack.c.b16 %v429, %v427
        %v482 = vpack.c.b16 %v432, %v430
        %v483 = vpack.c.b16 %v433, %v431
        %v484 = vpack.c.b16 %v436, %v434
        %v485 = vpack.c.b16 %v437, %v435
        %v486 = vpack.c.b16 %v440, %v438
        %v487 = vpack.c.b16 %v441, %v439
        %v488 = vpack.c.b16 %v444, %v442
        %v489 = vpack.c.b16 %v445, %v443
        %v490 = vpack.c.b16 %v448, %v446
        %v491 = vpack.c.b16 %v449, %v447
        %v492 = vpack.c.b16 %v452, %v450
        %v493 = vpack.c.b16 %v453, %v451
        %v494 = vpack.c.b16 %v456, %v454
        %v495 = vpack.c.b16 %v457, %v455
        %v496 = vpack.c.b16 %v460, %v458
        %v497 = vpack.c.b16 %v461, %v459
        %v498 = vpack.c.b16 %v464, %v462
        %v499 = vpack.c.b16 %v465, %v463
        %v500 = vpack.c.b16 %v468, %v466
        %v501 = vpack.c.b16 %v469, %v467
        %v502 = vpack.c.b16 %v472, %v470
        %v503 = vpack.c.b16 %v473, %v471
        %v504 = vpack.c.b16 %v476, %v474
        %v505 = vpack.c.b16 %v477, %v475
        %v506 = vpack.c.b16 %v478, %v478
        %v507 = vpack.c.b16 %v479, %v479
        %vm534 = vcmask 719872
        %v536 = vsel %vm534, %v397, 0
        %vm538 = vcmask 1043456
        %v540 = vsel %vm538, %v506, 0
        %v543 = vsel %vm538, %v507, 0
        %545 = vmatprep.subr.bf16.mxu0 %v481
        %546 = vmatpush1.bf16.msra.mxu0 %v480
        %547 = vmatprep.subr.bf16.mxu0 %v483
        %548 = vmatpush1.bf16.msra.mxu0 %v482
        %549 = vmatprep.subr.bf16.mxu0 %v485
        %550 = vmatpush1.bf16.msra.mxu0 %v484
        %551 = vmatprep.subr.bf16.mxu0 %v487
        %552 = vmatpush1.bf16.msra.mxu0 %v486
        %553 = vmatprep.subr.bf16.mxu0 %v489
        %554 = vmatpush1.bf16.msra.mxu0 %v488
        %555 = vmatprep.subr.bf16.mxu0 %v491
        %556 = vmatpush1.bf16.msra.mxu0 %v490
        %557 = vmatprep.subr.bf16.mxu0 %v493
        %558 = vmatpush1.bf16.msra.mxu0 %v492
        %559 = vmatprep.subr.bf16.mxu0 %v495
        %560 = vmatpush1.bf16.msra.mxu0 %v494
        %561 = vmatprep.subr.bf16.mxu0 %v497
        %562 = vmatpush1.bf16.msra.mxu0 %v496
        %563 = vmatprep.subr.bf16.mxu0 %v499
        %564 = vmatpush1.bf16.msra.mxu0 %v498
        %565 = vmatprep.subr.bf16.mxu0 %v501
        %566 = vmatpush1.bf16.msra.mxu0 %v500
        %567 = vmatprep.subr.bf16.mxu0 %v503
        %568 = vmatpush1.bf16.msra.mxu0 %v502
        %569 = vmatprep.subr.bf16.mxu0 %v505
        %570 = vmatpush1.bf16.msra.mxu0 %v504
        %571 = vmatprep.subr.bf16.mxu0 %v543
        %572 = vmatpush1.bf16.msra.mxu0 %v540
        %573 = vmatprep.subr.bf16.mxu0 0
        %574 = vmatpush1.bf16.msra.mxu0 0
        %575 = vmatprep.subr.bf16.mxu0 0
        %576 = vmatpush1.bf16.msra.mxu0 0
        %577 = vmatprep.mubr.bf16.mxu0 %v536
        %578 = vmatmul.mubr.bf16.gmra.mrb[0].mxu0 %v396
        %v579 = vpop.f32.mrb[0].mxu0
        %v580 = vadd.f32 %v391, %v579
        %v581 = vpop.f32.mrb[0].mxu0
        %v582 = vadd.f32 %v391, %v581
        %v583 = vpop.f32.mrb[0].mxu0
        %v584 = vpop.f32.mrb[0].mxu0
        %585 = vdwg.mxu0
        %v586 = vmax.f32 %v580, 0.0
        %v587 = vmax.f32 %v582, 0.0
        %v588 = vpack.c.bf16 %v586, %v586
        %v589 = vpack.c.bf16 %v587, %v587
        %v592 = vunpack.c.l.b16 %v588
        %v593 = vunpack.c.l.b16 %v589
        %v594 = vpack.c.b16 %v593, %v592
        %596 = vst [vmem:[%s356] sm:$0xff] %v594
        %s597 = smul.u32 2, %s19
        %p598 = scmp.lt.s32.totalorder %s18, 0
        %s599 = scalar_select %p598, %s18, 0
        %p600 = scmp.lt.s32.totalorder %s597, 3
        %s601 = scalar_select %p600, %s597, 3
        %s602 = smul.addr %s599, 4
        %s603 = sadd.s32 %s601, %s602
        %s604 = smul.addr %s603, 4
        %s605 = scalar_lea.vmem %s3, %s604
        // Predicated region
        $region71: #{hourglass_forward.17} parent=65 // pred_check
          %p606 = pneg %p121
        $region72: #{hourglass_forward.17} parent=65 // pred_check_branch
          %608 = sbr.rel (%p606) target = $region74
        $region73: #{hourglass_forward.17} parent=65 // pred_region
          %s609 = smul.u32 2, %s19
        $region74: #{hourglass_forward.17} parent=65 // pred_fallthru
          _
      $region66: #{hourglass_forward.17} parent=5 // pred_fallthru
        _
      %p610 = scmp.le.s32.totalorder 2, %s9
      // Predicated region
      $region75: #{hourglass_forward.17} parent=5 // pred_check
        %p611 = pneg %p610
      $region76: #{hourglass_forward.17} parent=5 // pred_check_branch
        %613 = sbr.rel (%p611) target = $region78
      $region77: #{hourglass_forward.17} parent=5 // pred_region
        %s614 = ssub.s32 %s9, 2
        // Predicated region
        $region79: #{hourglass_forward.17} parent=77 // pred_check
          %p615 = pneg %p127
        $region80: #{hourglass_forward.17} parent=77 // pred_check_branch
          %617 = sbr.rel (%p615) target = $region82
        $region81: #{hourglass_forward.17} parent=77 // pred_region
          %s618 = smul.u32 2, %s21
          %p619 = scmp.lt.s32.totalorder %s20, 0
          %s620 = scalar_select %p619, %s20, 0
          %p621 = scmp.lt.s32.totalorder %s618, 3
          %s622 = scalar_select %p621, %s618, 3
          %s623 = smul.addr %s620, 4
          %s624 = sadd.s32 %s622, %s623
          %s625 = smul.addr %s624, 4
          %s626 = scalar_lea.vmem %s3, %s625
        $region82: #{hourglass_forward.17} parent=77 // pred_fallthru
          _
      $region78: #{hourglass_forward.17} parent=5 // pred_fallthru
        _
    $region6: #{hourglass_forward.17} parent=1 // loop_footer
      %s13 = sadd.s32 1, %s9
    $region7: #{hourglass_forward.17} parent=1 // loop_footer_branch
      %8 = sbr.rel target = $region3
    $region8: #{hourglass_forward.17} parent=1 // loop_exit
      _

// kernel: hourglass_forward.18
$region0: #{hourglass_forward.18}
  #allocation0 [shape = 'u32[]', space=smem, size = 0x4, offset = 0x4, fixed_abs, tag = 'smem constant byte address 0x4 - core index']
  #allocation1 [shape = 'u32[144,128]{1,0:T(1,128)}', space=vmem, size = 0x12000, scoped, tag = 'internal scratch']
  %s0 = inlined_call_operand.vmem [shape: bf16[1,8,216], index: 0, kind: input, shape index: {}]
  %s1 = inlined_call_operand.vmem [shape: bf16[1,216,64], index: 1, kind: input, shape index: {}]
  %s2 = inlined_call_operand.vmem [shape: f32[8,1], index: 2, kind: input, shape index: {}]
  %s3 = inlined_call_operand.vmem [shape: bf16[1,8,64], index: 3, kind: output, shape index: {}]
  %s4 = sld [smem:[#allocation0]]
  $region22: #{hourglass_forward.18} parent=0
    _
  %s6 = ssub.s32 1, %s4
  %s7 = scalar_select 0, %s6, %s4
  // Predicated region
  $region2: #{hourglass_forward.18} parent=0 // pred_check
    _
  $region3: #{hourglass_forward.18} parent=0 // pred_check_branch
    %9 = sbr.rel (0) target = $region5
  $region4: #{hourglass_forward.18} parent=0 // pred_region
    _
  $region5: #{hourglass_forward.18} parent=0 // pred_fallthru
    _
  // Predicated region
  $region6: #{hourglass_forward.18} parent=0 // pred_check
    _
  $region7: #{hourglass_forward.18} parent=0 // pred_check_branch
    %11 = sbr.rel (0) target = $region9
  $region8: #{hourglass_forward.18} parent=0 // pred_region
    _
  $region9: #{hourglass_forward.18} parent=0 // pred_fallthru
    _
  // Predicated region
  $region10: #{hourglass_forward.18} parent=0 // pred_check
    _
  $region11: #{hourglass_forward.18} parent=0 // pred_check_branch
    %13 = sbr.rel (0) target = $region13
  $region12: #{hourglass_forward.18} parent=0 // pred_region
    _
  $region13: #{hourglass_forward.18} parent=0 // pred_fallthru
    _
  %v15 = vld [vmem:[%s0] sm:$0xff]
  %v16 = vld [vmem:[%s1] sm:$0xf]
  %v17 = vld [vmem:[%s1 + $0x4] sm:$0xf]
  %v18 = vld [vmem:[%s1 + $0x8] sm:$0xf]
  %v19 = vld [vmem:[%s1 + $0xc] sm:$0xf]
  %v20 = vld [vmem:[%s1 + $0x10] sm:$0xf]
  %v21 = vld [vmem:[%s1 + $0x14] sm:$0xf]
  %v22 = vld [vmem:[%s1 + $0x18] sm:$0xf]
  %v23 = vld [vmem:[%s1 + $0x1c] sm:$0xf]
  %v24 = vld [vmem:[%s1 + $0x20] sm:$0xf]
  %v25 = vld [vmem:[%s1 + $0x24] sm:$0xf]
  %v26 = vld [vmem:[%s1 + $0x28] sm:$0xf]
  %v27 = vld [vmem:[%s1 + $0x2c] sm:$0xf]
  %v28 = vld [vmem:[%s1 + $0x30] sm:$0xf]
  %v29 = vld [vmem:[%s1 + $0x34] sm:$0xf]
  %v30 = vld [vmem:[%s1 + $0x38] sm:$0xf]
  %v31 = vld [vmem:[%s1 + $0x3c] sm:$0xf]
  %v32 = vld [vmem:[%s1 + $0x40] sm:$0xf]
  %v33 = vld [vmem:[%s1 + $0x44] sm:$0xf]
  %v34 = vld [vmem:[%s1 + $0x48] sm:$0xf]
  %v35 = vld [vmem:[%s1 + $0x4c] sm:$0xf]
  %v36 = vld [vmem:[%s1 + $0x50] sm:$0xf]
  %v37 = vld [vmem:[%s1 + $0x54] sm:$0xf]
  %v38 = vld [vmem:[%s1 + $0x58] sm:$0xf]
  %v39 = vld [vmem:[%s1 + $0x5c] sm:$0xf]
  %v40 = vld [vmem:[%s1 + $0x60] sm:$0xf]
  %v41 = vld [vmem:[%s1 + $0x64] sm:$0xf]
  %v42 = vld [vmem:[%s1 + $0x68] sm:$0xf]
  %v43 = vld [vmem:[%s2] sm:$0xff]
  %45 = vset.pattern.permute.xlu0 0
  %46 = vperm.xlu0 %45, %v43
  %v47 = vpop.permute.xlu0 %46
  %v50 = vunpack.c.l.b16 %v15
  %v51 = vunpack.c.h.b16 %v15
  %v52 = vpack.c.b16 %v50, %v50
  %v53 = vpack.c.b16 %v51, %v51
  %v82 = vunpack.c.l.b16 %v16
  %v83 = vunpack.c.l.b16 %v17
  %v84 = vunpack.c.l.b16 %v18
  %v85 = vunpack.c.l.b16 %v19
  %v86 = vunpack.c.l.b16 %v20
  %v87 = vunpack.c.l.b16 %v21
  %v88 = vunpack.c.l.b16 %v22
  %v89 = vunpack.c.l.b16 %v23
  %v90 = vunpack.c.l.b16 %v24
  %v91 = vunpack.c.l.b16 %v25
  %v92 = vunpack.c.l.b16 %v26
  %v93 = vunpack.c.l.b16 %v27
  %v94 = vunpack.c.l.b16 %v28
  %v95 = vunpack.c.l.b16 %v29
  %v96 = vunpack.c.l.b16 %v30
  %v97 = vunpack.c.l.b16 %v31
  %v98 = vunpack.c.l.b16 %v32
  %v99 = vunpack.c.l.b16 %v33
  %v100 = vunpack.c.l.b16 %v34
  %v101 = vunpack.c.l.b16 %v35
  %v102 = vunpack.c.l.b16 %v36
  %v103 = vunpack.c.l.b16 %v37
  %v104 = vunpack.c.l.b16 %v38
  %v105 = vunpack.c.l.b16 %v39
  %v106 = vunpack.c.l.b16 %v40
  %v107 = vunpack.c.l.b16 %v41
  %v108 = vunpack.c.l.b16 %v42
  %v109 = vpack.c.b16 %v83, %v82
  %v110 = vpack.c.b16 %v85, %v84
  %v111 = vpack.c.b16 %v87, %v86
  %v112 = vpack.c.b16 %v89, %v88
  %v113 = vpack.c.b16 %v91, %v90
  %v114 = vpack.c.b16 %v93, %v92
  %v115 = vpack.c.b16 %v95, %v94
  %v116 = vpack.c.b16 %v97, %v96
  %v117 = vpack.c.b16 %v99, %v98
  %v118 = vpack.c.b16 %v101, %v100
  %v119 = vpack.c.b16 %v103, %v102
  %v120 = vpack.c.b16 %v105, %v104
  %v121 = vpack.c.b16 %v107, %v106
  %v122 = vpack.c.b16 %v108, %v108
  %vm136 = vcmask 719872
  %v138 = vsel %vm136, %v53, 0
  %vm140 = vcmask 1043456
  %v142 = vsel %vm140, %v122, 0
  %144 = vmatprep.subr.bf16.mxu0 0
  %145 = vmatpush1.bf16.msra.mxu0 %v109
  %146 = vmatprep.subr.bf16.mxu0 0
  %147 = vmatpush1.bf16.msra.mxu0 %v110
  %148 = vmatprep.subr.bf16.mxu0 0
  %149 = vmatpush1.bf16.msra.mxu0 %v111
  %150 = vmatprep.subr.bf16.mxu0 0
  %151 = vmatpush1.bf16.msra.mxu0 %v112
  %152 = vmatprep.subr.bf16.mxu0 0
  %153 = vmatpush1.bf16.msra.mxu0 %v113
  %154 = vmatprep.subr.bf16.mxu0 0
  %155 = vmatpush1.bf16.msra.mxu0 %v114
  %156 = vmatprep.subr.bf16.mxu0 0
  %157 = vmatpush1.bf16.msra.mxu0 %v115
  %158 = vmatprep.subr.bf16.mxu0 0
  %159 = vmatpush1.bf16.msra.mxu0 %v116
  %160 = vmatprep.subr.bf16.mxu0 0
  %161 = vmatpush1.bf16.msra.mxu0 %v117
  %162 = vmatprep.subr.bf16.mxu0 0
  %163 = vmatpush1.bf16.msra.mxu0 %v118
  %164 = vmatprep.subr.bf16.mxu0 0
  %165 = vmatpush1.bf16.msra.mxu0 %v119
  %166 = vmatprep.subr.bf16.mxu0 0
  %167 = vmatpush1.bf16.msra.mxu0 %v120
  %168 = vmatprep.subr.bf16.mxu0 0
  %169 = vmatpush1.bf16.msra.mxu0 %v121
  %170 = vmatprep.subr.bf16.mxu0 0
  %171 = vmatpush1.bf16.msra.mxu0 %v142
  %172 = vmatprep.subr.bf16.mxu0 0
  %173 = vmatpush1.bf16.msra.mxu0 0
  %174 = vmatprep.subr.bf16.mxu0 0
  %175 = vmatpush1.bf16.msra.mxu0 0
  %176 = vmatprep.mubr.bf16.mxu0 %v138
  %177 = vmatmul.mubr.bf16.gmra.mrb[0].mxu0 %v52
  %v178 = vpop.f32.mrb[0].mxu0
  %v179 = vadd.f32 %v47, %v178
  %v180 = vpop.f32.mrb[0].mxu0
  %v181 = vpop.f32.mrb[0].mxu0
  %v182 = vpop.f32.mrb[0].mxu0
  %183 = vdwg.mxu0
  %v184 = vmax.f32 %v179, 0.0
  %v185 = vpack.c.bf16 %v184, %v184
  %vm186 = vcmask 519168
  %187 = vst.msk [vmem:[%s3] sm:$0xf] %vm186, %v185
  // Predicated region
  $region14: #{hourglass_forward.18} parent=0 // pred_check
    _
  $region15: #{hourglass_forward.18} parent=0 // pred_check_branch
    %189 = sbr.rel (0) target = $region17
  $region16: #{hourglass_forward.18} parent=0 // pred_region
    _
  $region17: #{hourglass_forward.18} parent=0 // pred_fallthru
    _
  // Predicated region
  $region18: #{hourglass_forward.18} parent=0 // pred_check
    _
  $region19: #{hourglass_forward.18} parent=0 // pred_check_branch
    %191 = sbr.rel (0) target = $region21
  $region20: #{hourglass_forward.18} parent=0 // pred_region
    _
  $region21: #{hourglass_forward.18} parent=0 // pred_fallthru
    _

// kernel: hourglass_forward.25
$region0: #{hourglass_forward.25}
  #allocation0 [shape = 'u32[]', space=smem, size = 0x4, offset = 0x4, fixed_abs, tag = 'smem constant byte address 0x4 - core index']
  #allocation1 [shape = 'u32[144,128]{1,0:T(1,128)}', space=vmem, size = 0x12000, scoped, tag = 'internal scratch']
  %s0 = inlined_call_operand.vmem [shape: bf16[8,8,64], index: 0, kind: input, shape index: {}, may-alias: {0,4}]
  %s1 = inlined_call_operand.vmem [shape: bf16[1,8,16], index: 1, kind: input, shape index: {}]
  %s2 = inlined_call_operand.vmem [shape: bf16[1,16,64], index: 2, kind: input, shape index: {}]
  %s3 = inlined_call_operand.vmem [shape: f32[8,1], index: 3, kind: input, shape index: {}]
  %s4 = inlined_call_operand.vmem [shape: bf16[8,8,64], index: 4, kind: output, shape index: {}, may-alias: {0,4}]
  %s5 = sld [smem:[#allocation0]]
  $region52: #{hourglass_forward.25} parent=0
    _
  %s7 = ssub.s32 1, %s5
  %s8 = scalar_select 0, %s7, %s5
  $region1: #{hourglass_forward.25} parent=0
    #allocation2 [shape = 'u8[2048]{0}', space=vmem, size = 0x800, scoped, tag = 'output window, operand 0, single buffered']
    // Predicated region
    $region2: #{hourglass_forward.25} parent=1 // pred_check
      _
    $region3: #{hourglass_forward.25} parent=1 // pred_check_branch
      %10 = sbr.rel (0) target = $region5
    $region4: #{hourglass_forward.25} parent=1 // pred_region
      _
    $region5: #{hourglass_forward.25} parent=1 // pred_fallthru
      _
    // Predicated region
    $region6: #{hourglass_forward.25} parent=1 // pred_check
      _
    $region7: #{hourglass_forward.25} parent=1 // pred_check_branch
      %12 = sbr.rel (0) target = $region9
    $region8: #{hourglass_forward.25} parent=1 // pred_region
      _
    $region9: #{hourglass_forward.25} parent=1 // pred_fallthru
      _
    // Predicated region
    $region10: #{hourglass_forward.25} parent=1 // pred_check
      _
    $region11: #{hourglass_forward.25} parent=1 // pred_check_branch
      %14 = sbr.rel (0) target = $region13
    $region12: #{hourglass_forward.25} parent=1 // pred_region
      _
    $region13: #{hourglass_forward.25} parent=1 // pred_fallthru
      _
    %v16 = vld [vmem:[%s1] sm:$0xf]
    %v17 = vld [vmem:[%s2] sm:$0xf]
    %v18 = vld [vmem:[%s2 + $0x4] sm:$0xf]
    %v19 = vld [vmem:[%s3] sm:$0xff]
    %21 = vset.pattern.permute.xlu0 0
    %22 = vperm.xlu0 %21, %v19
    %v23 = vpop.permute.xlu0 %22
    %v27 = vunpack.c.l.b16 %v17
    %v28 = vunpack.c.l.b16 %v18
    %v29 = vpack.c.b16 %v28, %v27
    %vm31 = vcmask 130048
    %v33 = vsel %vm31, %v16, 0
    %35 = vmatprep.subr.bf16.mxu0 0
    %36 = vmatpush1.bf16.msra.mxu0 %v29
    %37 = vmatprep.subr.bf16.mxu0 0
    %38 = vmatpush1.bf16.msra.mxu0 0
    %39 = vmatprep.subr.bf16.mxu0 0
    %40 = vmatpush1.bf16.msra.mxu0 0
    %41 = vmatprep.subr.bf16.mxu0 0
    %42 = vmatpush1.bf16.msra.mxu0 0
    %43 = vmatprep.subr.bf16.mxu0 0
    %44 = vmatpush1.bf16.msra.mxu0 0
    %45 = vmatprep.subr.bf16.mxu0 0
    %46 = vmatpush1.bf16.msra.mxu0 0
    %47 = vmatprep.subr.bf16.mxu0 0
    %48 = vmatpush1.bf16.msra.mxu0 0
    %49 = vmatprep.subr.bf16.mxu0 0
    %50 = vmatpush1.bf16.msra.mxu0 0
    %51 = vmatprep.subr.bf16.mxu0 0
    %52 = vmatpush1.bf16.msra.mxu0 0
    %53 = vmatprep.subr.bf16.mxu0 0
    %54 = vmatpush1.bf16.msra.mxu0 0
    %55 = vmatprep.subr.bf16.mxu0 0
    %56 = vmatpush1.bf16.msra.mxu0 0
    %57 = vmatprep.subr.bf16.mxu0 0
    %58 = vmatpush1.bf16.msra.mxu0 0
    %59 = vmatprep.subr.bf16.mxu0 0
    %60 = vmatpush1.bf16.msra.mxu0 0
    %61 = vmatprep.subr.bf16.mxu0 0
    %62 = vmatpush1.bf16.msra.mxu0 0
    %63 = vmatprep.subr.bf16.mxu0 0
    %64 = vmatpush1.bf16.msra.mxu0 0
    %65 = vmatprep.subr.bf16.mxu0 0
    %66 = vmatpush1.bf16.msra.mxu0 0
    %67 = vmatprep.mubr.bf16.mxu0 0
    %68 = vmatmul.mubr.bf16.gmra.mrb[0].mxu0 %v33
    %v69 = vpop.f32.mrb[0].mxu0
    %v70 = vadd.f32 %v23, %v69
    %v71 = vpop.f32.mrb[0].mxu0
    %v72 = vpop.f32.mrb[0].mxu0
    %v73 = vpop.f32.mrb[0].mxu0
    %74 = vdwg.mxu0
    %v75 = vmax.f32 %v70, 0.0
    %v76 = vpack.c.bf16 %v75, %v75
    %vm77 = vcmask 519168
    %78 = vst.msk [vmem:[#allocation2] sm:$0xf] %vm77, %v76
    // Predicated region
    $region14: #{hourglass_forward.25} parent=1 // pred_check
      _
    $region15: #{hourglass_forward.25} parent=1 // pred_check_branch
      %80 = sbr.rel (0) target = $region17
    $region16: #{hourglass_forward.25} parent=1 // pred_region
      // Predicated region
      $region18: #{hourglass_forward.25} parent=16 // pred_check
        _
      $region19: #{hourglass_forward.25} parent=16 // pred_check_branch
        %82 = sbr.rel (0) target = $region21
      $region20: #{hourglass_forward.25} parent=16 // pred_region
        // Predicated region
        $region22: #{hourglass_forward.25} parent=20 // pred_check
          _
        $region23: #{hourglass_forward.25} parent=20 // pred_check_branch
          %84 = sbr.rel target = $region25
        $region24: #{hourglass_forward.25} parent=20 // pred_region
          // Predicated region
          $region37: #{hourglass_forward.25} parent=24 // pred_check
            _
          $region38: #{hourglass_forward.25} parent=24 // pred_check_branch
            %99 = sbr.rel (0) target = $region40
          $region39: #{hourglass_forward.25} parent=24 // pred_region
            loop: start=0, step=1, limit=1
            $region41: #{hourglass_forward.25} parent=39 // loop_pre_header
              _
            $region42: #{hourglass_forward.25} parent=39 // loop_header
              %s102 = sphi 0, %s106
              %p103 = scmp.ge.s32.totalorder %s102, 1
              %s107 = sphi [#allocation2], [#allocation2]
              %s108 = sphi %s4, %s4
            $region43: #{hourglass_forward.25} parent=39 // loop_header_branch
              %105 = sbr.rel (%p103) target = $region47
            $region44: #{hourglass_forward.25} parent=39 // loop_body
              %v109 = vld [vmem:[%s107] sm:$0xf]
              %110 = vst [vmem:[%s108] sm:$0xf] %v109
            $region45: #{hourglass_forward.25} parent=39 // loop_footer
              %s106 = sadd.s32 1, %s102
            $region46: #{hourglass_forward.25} parent=39 // loop_footer_branch
              %101 = sbr.rel target = $region42
            $region47: #{hourglass_forward.25} parent=39 // loop_exit
              _
          $region40: #{hourglass_forward.25} parent=24 // pred_fallthru
            _
        $region25: #{hourglass_forward.25} parent=20 // pred_fallthru
          _
        // Predicated region
        $region26: #{hourglass_forward.25} parent=20 // pred_check
          _
        $region27: #{hourglass_forward.25} parent=20 // pred_check_branch
          %86 = sbr.rel (0) target = $region29
        $region28: #{hourglass_forward.25} parent=20 // pred_region
          loop: start=0, step=1, limit=1
          $region30: #{hourglass_forward.25} parent=28 // loop_pre_header
            _
          $region31: #{hourglass_forward.25} parent=28 // loop_header
            %s89 = sphi 0, %s93
            %p90 = scmp.ge.s32.totalorder %s89, 1
            %s94 = sphi [#allocation2], [#allocation2]
            %s95 = sphi %s4, %s4
          $region32: #{hourglass_forward.25} parent=28 // loop_header_branch
            %92 = sbr.rel (%p90) target = $region36
          $region33: #{hourglass_forward.25} parent=28 // loop_body
            %v96 = vld [vmem:[%s94] sm:$0xf]
            %97 = vst [vmem:[%s95] sm:$0xf] %v96
          $region34: #{hourglass_forward.25} parent=28 // loop_footer
            %s93 = sadd.s32 1, %s89
          $region35: #{hourglass_forward.25} parent=28 // loop_footer_branch
            %88 = sbr.rel target = $region31
          $region36: #{hourglass_forward.25} parent=28 // loop_exit
            _
        $region29: #{hourglass_forward.25} parent=20 // pred_fallthru
          _
      $region21: #{hourglass_forward.25} parent=16 // pred_fallthru
        _
      %111 = vnop
    $region17: #{hourglass_forward.25} parent=1 // pred_fallthru
      _
    // Predicated region
    $region48: #{hourglass_forward.25} parent=1 // pred_check
      _
    $region49: #{hourglass_forward.25} parent=1 // pred_check_branch
      %113 = sbr.rel (0) target = $region51
    $region50: #{hourglass_forward.25} parent=1 // pred_region
      _
    $region51: #{hourglass_forward.25} parent=1 // pred_fallthru
      _

// kernel: hourglass_forward.20
$region0: #{hourglass_forward.20}
  #allocation0 [shape = 'u32[]', space=smem, size = 0x4, offset = 0x4, fixed_abs, tag = 'smem constant byte address 0x4 - core index']
  #allocation1 [shape = 'u32[144,128]{1,0:T(1,128)}', space=vmem, size = 0x12000, scoped, tag = 'internal scratch']
  %s0 = inlined_call_operand.vmem [shape: bf16[3,8,24], index: 0, kind: input, shape index: {}]
  %s1 = inlined_call_operand.vmem [shape: bf16[3,24,64], index: 1, kind: input, shape index: {}]
  %s2 = inlined_call_operand.vmem [shape: f32[8,1], index: 2, kind: input, shape index: {}]
  %s3 = inlined_call_operand.vmem [shape: bf16[3,8,64], index: 3, kind: output, shape index: {}]
  %s4 = sld [smem:[#allocation0]]
  $region45: #{hourglass_forward.20} parent=0
    _
  %s6 = ssub.s32 1, %s4
  %s7 = scalar_select 0, %s6, %s4
  loop: start=0, step=1, limit=5
  $region2: #{hourglass_forward.20} parent=0 // loop_pre_header
    _
  $region3: #{hourglass_forward.20} parent=0 // loop_header
    %s9 = sphi 0, %s13
    %p10 = scmp.ge.s32.totalorder %s9, 5
    %s16 = sphi 0, %s28
    %s17 = sphi 0, %s24
    %s18 = sphi 0, %s16
    %s19 = sphi 0, %s17
    %s20 = sphi 0, %s18
    %s21 = sphi 0, %s19
    %s31 = sphi 0, %s33
    %s34 = sphi 0, %s31
    %s35 = sphi 0, %s34
    %s51 = sphi 0, %s35
    %s59 = sphi 0, %s61
    %s62 = sphi 0, %s59
    %s63 = sphi 0, %s62
    %s79 = sphi 0, %s63
    %s83 = sphi 0, %s83
    %s85 = sphi 0, %s83
    %s86 = sphi 0, %s85
    %s100 = sphi 0, %s86
    %s108 = sphi 0, %s110
    %s111 = sphi 0, %s108
    %s112 = sphi 0, %s111
    %s128 = sphi 0, %s112
  $region4: #{hourglass_forward.20} parent=0 // loop_header_branch
    %12 = sbr.rel (%p10) target = $region8
  $region5: #{hourglass_forward.20} parent=0 // loop_body
    %s14 = ssub.s32 %s9, 1
    %s15 = ssub.s32 %s9, 2
    %s22 = sadd.s32 1, %s17
    %p23 = scmp.ge.s32.totalorder %s22, 1
    %s24 = scalar_select %p23, 0, %s22
    %s25 = sadd.s32 1, %s16
    %s26 = scalar_select %p23, %s25, %s16
    %p27 = scmp.ge.s32.totalorder %s26, 3
    %s28 = scalar_select %p27, 0, %s26
    %s29 = ssub.s32 %s16, %s28
    %p30 = scmp.eq.s32.totalorder %s29, 0
    %s32 = sadd.s32 %s31, 1
    %s33 = scalar_select %p30, %s31, %s32
    %p36 = pneg %p30
    %p37 = scmp.eq.s32.totalorder %s9, 2
    %p38 = por %p36, %p37
    %p39 = scmp.ne.s32.totalorder %s31, %s34
    %p40 = scmp.eq.s32.totalorder %s9, 0
    %p41 = por %p39, %p40
    %p42 = scmp.ne.s32.totalorder %s31, %s34
    %p43 = scmp.eq.s32.totalorder %s14, 2
    %p44 = por %p42, %p43
    %p45 = scmp.ne.s32.totalorder %s34, %s35
    %p46 = scmp.eq.s32.totalorder %s14, 0
    %p47 = por %p45, %p46
    %p48 = scmp.ne.s32.totalorder %s34, %s35
    %p49 = scmp.eq.s32.totalorder %s15, 2
    %p50 = por %p48, %p49
    %p52 = scmp.ne.s32.totalorder %s35, %s51
    %p53 = scmp.eq.s32.totalorder %s15, 0
    %p54 = por %p52, %p53
    %s55 = ssub.s32 %s16, %s28
    %s56 = ssub.s32 %s17, %s24
    %s57 = sor.u32 %s55, %s56
    %p58 = scmp.eq.s32.totalorder %s57, 0
    %s60 = sadd.s32 %s59, 1
    %s61 = scalar_select %p58, %s59, %s60
    %p64 = pneg %p58
    %p65 = scmp.eq.s32.totalorder %s9, 2
    %p66 = por %p64, %p65
    %p67 = scmp.ne.s32.totalorder %s59, %s62
    %p68 = scmp.eq.s32.totalorder %s9, 0
    %p69 = por %p67, %p68
    %p70 = scmp.ne.s32.totalorder %s59, %s62
    %p71 = scmp.eq.s32.totalorder %s14, 2
    %p72 = por %p70, %p71
    %p73 = scmp.ne.s32.totalorder %s62, %s63
    %p74 = scmp.eq.s32.totalorder %s14, 0
    %p75 = por %p73, %p74
    %p76 = scmp.ne.s32.totalorder %s62, %s63
    %p77 = scmp.eq.s32.totalorder %s15, 2
    %p78 = por %p76, %p77
    %p80 = scmp.ne.s32.totalorder %s63, %s79
    %p81 = scmp.eq.s32.totalorder %s15, 0
    %p82 = por %p80, %p81
    %s84 = sadd.s32 %s83, 1
    %p87 = scmp.eq.s32.totalorder %s9, 2
    %p88 = scmp.ne.s32.totalorder %s83, %s85
    %p89 = scmp.eq.s32.totalorder %s9, 0
    %p90 = por %p88, %p89
    %p91 = scmp.ne.s32.totalorder %s83, %s85
    %p92 = scmp.eq.s32.totalorder %s14, 2
    %p93 = por %p91, %p92
    %p94 = scmp.ne.s32.totalorder %s85, %s86
    %p95 = scmp.eq.s32.totalorder %s14, 0
    %p96 = por %p94, %p95
    %p97 = scmp.ne.s32.totalorder %s85, %s86
    %p98 = scmp.eq.s32.totalorder %s15, 2
    %p99 = por %p97, %p98
    %p101 = scmp.ne.s32.totalorder %s86, %s100
    %p102 = scmp.eq.s32.totalorder %s15, 0
    %p103 = por %p101, %p102
    %s104 = ssub.s32 %s16, %s28
    %s105 = ssub.s32 %s17, %s24
    %s106 = sor.u32 %s104, %s105
    %p107 = scmp.eq.s32.totalorder %s106, 0
    %s109 = sadd.s32 %s108, 1
    %s110 = scalar_select %p107, %s108, %s109
    %p113 = pneg %p107
    %p114 = scmp.eq.s32.totalorder %s9, 2
    %p115 = por %p113, %p114
    %p116 = scmp.ne.s32.totalorder %s108, %s111
    %p117 = scmp.eq.s32.totalorder %s9, 0
    %p118 = por %p116, %p117
    %p119 = scmp.ne.s32.totalorder %s108, %s111
    %p120 = scmp.eq.s32.totalorder %s14, 2
    %p121 = por %p119, %p120
    %p122 = scmp.ne.s32.totalorder %s111, %s112
    %p123 = scmp.eq.s32.totalorder %s14, 0
    %p124 = por %p122, %p123
    %p125 = scmp.ne.s32.totalorder %s111, %s112
    %p126 = scmp.eq.s32.totalorder %s15, 2
    %p127 = por %p125, %p126
    %p129 = scmp.ne.s32.totalorder %s112, %s128
    %p130 = scmp.eq.s32.totalorder %s15, 0
    %p131 = por %p129, %p130
    %p132 = scmp.le.s32.totalorder 1, %s9
    %p133 = scmp.lt.s32.totalorder %s9, 4
    %p134 = pnand %p132, %p133
    %p135 = pneg %p134
    // Predicated region
    $region9: #{hourglass_forward.20} parent=5 // pred_check
      _
    $region10: #{hourglass_forward.20} parent=5 // pred_check_branch
      %137 = sbr.rel (%p134) target = $region12
    $region11: #{hourglass_forward.20} parent=5 // pred_region
      %s138 = ssub.s32 %s9, 1
      // Predicated region
      $region13: #{hourglass_forward.20} parent=11 // pred_check
        %p139 = pneg %p96
      $region14: #{hourglass_forward.20} parent=11 // pred_check_branch
        %141 = sbr.rel (%p139) target = $region16
      $region15: #{hourglass_forward.20} parent=11 // pred_region
        _
      $region16: #{hourglass_forward.20} parent=11 // pred_fallthru
        _
    $region12: #{hourglass_forward.20} parent=5 // pred_fallthru
      _
    %p142 = scmp.lt.s32.totalorder %s9, 3
    // Predicated region
    $region17: #{hourglass_forward.20} parent=5 // pred_check
      %p143 = pneg %p142
    $region18: #{hourglass_forward.20} parent=5 // pred_check_branch
      %145 = sbr.rel (%p143) target = $region20
    $region19: #{hourglass_forward.20} parent=5 // pred_region
      // Predicated region
      $region21: #{hourglass_forward.20} parent=19 // pred_check
        %p146 = pneg %p41
      $region22: #{hourglass_forward.20} parent=19 // pred_check_branch
        %148 = sbr.rel (%p146) target = $region24
      $region23: #{hourglass_forward.20} parent=19 // pred_region
        %p149 = scmp.lt.s32.totalorder %s16, 2
        %s150 = scalar_select %p149, %s16, 2
        %s151 = smul.addr %s150, 4
        %s152 = scalar_lea.vmem %s0, %s151
      $region24: #{hourglass_forward.20} parent=19 // pred_fallthru
        _
      // Predicated region
      $region25: #{hourglass_forward.20} parent=19 // pred_check
        %p153 = pneg %p69
      $region26: #{hourglass_forward.20} parent=19 // pred_check_branch
        %155 = sbr.rel (%p153) target = $region28
      $region27: #{hourglass_forward.20} parent=19 // pred_region
        %p156 = scmp.lt.s32.totalorder %s16, 2
        %s157 = scalar_select %p156, %s16, 2
        %p158 = scmp.lt.s32.totalorder %s17, 0
        %s159 = scalar_select %p158, %s17, 0
        %s160 = smul.addr %s157, 3
        %s161 = sadd.s32 %s159, %s160
        %s162 = smul.addr %s161, 4
        %s163 = scalar_lea.vmem %s1, %s162
      $region28: #{hourglass_forward.20} parent=19 // pred_fallthru
        _
    $region20: #{hourglass_forward.20} parent=5 // pred_fallthru
      _
    %p164 = scmp.le.s32.totalorder 1, %s9
    %p165 = scmp.lt.s32.totalorder %s9, 4
    %p166 = pnand %p164, %p165
    %p167 = pneg %p166
    // Predicated region
    $region29: #{hourglass_forward.20} parent=5 // pred_check
      _
    $region30: #{hourglass_forward.20} parent=5 // pred_check_branch
      %169 = sbr.rel (%p166) target = $region32
    $region31: #{hourglass_forward.20} parent=5 // pred_region
      %s170 = ssub.s32 %s9, 1
      %p171 = scmp.lt.s32.totalorder %s18, 2
      %s172 = scalar_select %p171, %s18, 2
      %s173 = smul.addr %s172, 4
      %s174 = scalar_lea.vmem %s0, %s173
      %p175 = pneg %p47
      %p176 = pneg %p44
      %p177 = scmp.lt.s32.totalorder %s18, 2
      %s178 = scalar_select %p177, %s18, 2
      %p179 = scmp.lt.s32.totalorder %s19, 0
      %s180 = scalar_select %p179, %s19, 0
      %s181 = smul.addr %s178, 3
      %s182 = sadd.s32 %s180, %s181
      %s183 = smul.addr %s182, 4
      %s184 = scalar_lea.vmem %s1, %s183
      %p185 = pneg %p75
      %p186 = pneg %p72
      %p187 = pneg %p96
      %p188 = pneg %p93
      %p189 = pneg %p124
      %p190 = pneg %p121
      %p191 = scmp.lt.s32.totalorder %s18, 2
      %s192 = scalar_select %p191, %s18, 2
      %p193 = scmp.lt.s32.totalorder %s19, 0
      %s194 = scalar_select %p193, %s19, 0
      %s195 = sadd.s32 %s194, %s192
      %s196 = smul.addr %s195, 4
      %s197 = scalar_lea.vmem %s3, %s196
      %p198 = scmp.lt.s32.totalorder %s18, 2
      %s199 = scalar_select %p198, %s18, 2
      %s200 = smul.addr %s199, 4
      %s201 = scalar_lea.vmem %s0, %s200
      %p202 = scmp.lt.s32.totalorder %s18, 2
      %s203 = scalar_select %p202, %s18, 2
      %p204 = scmp.lt.s32.totalorder %s19, 0
      %s205 = scalar_select %p204, %s19, 0
      %s206 = smul.addr %s203, 3
      %s207 = sadd.s32 %s205, %s206
      %s208 = smul.addr %s207, 4
      %s209 = scalar_lea.vmem %s1, %s208
      %p210 = scmp.lt.s32.totalorder %s18, 2
      %s211 = scalar_select %p210, %s18, 2
      %p212 = scmp.lt.s32.totalorder %s19, 0
      %s213 = scalar_select %p212, %s19, 0
      %s214 = sadd.s32 %s213, %s211
      %s215 = smul.addr %s214, 4
      %s216 = scalar_lea.vmem %s3, %s215
      %v218 = vld [vmem:[%s201] sm:$0xf]
      %v219 = vld [vmem:[%s209] sm:$0xf]
      %v220 = vld [vmem:[%s209 + $0x4] sm:$0xf]
      %v221 = vld [vmem:[%s209 + $0x8] sm:$0xf]
      %v222 = vld [vmem:[%s2] sm:$0xff]
      %224 = vset.pattern.permute.xlu0 0
      %225 = vperm.xlu0 %224, %v222
      %v226 = vpop.permute.xlu0 %225
      %v231 = vunpack.c.l.b16 %v219
      %v232 = vunpack.c.l.b16 %v220
      %v233 = vunpack.c.l.b16 %v221
      %v234 = vpack.c.b16 %v232, %v231
      %v235 = vpack.c.b16 %v233, %v233
      %vm237 = vcmask 195584
      %v239 = vsel %vm237, %v218, 0
      %vm241 = vcmask 1043456
      %v243 = vsel %vm241, %v235, 0
      %245 = vmatprep.subr.bf16.mxu0 0
      %246 = vmatpush1.bf16.msra.mxu0 %v234
      %247 = vmatprep.subr.bf16.mxu0 0
      %248 = vmatpush1.bf16.msra.mxu0 %v243
      %249 = vmatprep.subr.bf16.mxu0 0
      %250 = vmatpush1.bf16.msra.mxu0 0
      %251 = vmatprep.subr.bf16.mxu0 0
      %252 = vmatpush1.bf16.msra.mxu0 0
      %253 = vmatprep.subr.bf16.mxu0 0
      %254 = vmatpush1.bf16.msra.mxu0 0
      %255 = vmatprep.subr.bf16.mxu0 0
      %256 = vmatpush1.bf16.msra.mxu0 0
      %257 = vmatprep.subr.bf16.mxu0 0
      %258 = vmatpush1.bf16.msra.mxu0 0
      %259 = vmatprep.subr.bf16.mxu0 0
      %260 = vmatpush1.bf16.msra.mxu0 0
      %261 = vmatprep.subr.bf16.mxu0 0
      %262 = vmatpush1.bf16.msra.mxu0 0
      %263 = vmatprep.subr.bf16.mxu0 0
      %264 = vmatpush1.bf16.msra.mxu0 0
      %265 = vmatprep.subr.bf16.mxu0 0
      %266 = vmatpush1.bf16.msra.mxu0 0
      %267 = vmatprep.subr.bf16.mxu0 0
      %268 = vmatpush1.bf16.msra.mxu0 0
      %269 = vmatprep.subr.bf16.mxu0 0
      %270 = vmatpush1.bf16.msra.mxu0 0
      %271 = vmatprep.subr.bf16.mxu0 0
      %272 = vmatpush1.bf16.msra.mxu0 0
      %273 = vmatprep.subr.bf16.mxu0 0
      %274 = vmatpush1.bf16.msra.mxu0 0
      %275 = vmatprep.subr.bf16.mxu0 0
      %276 = vmatpush1.bf16.msra.mxu0 0
      %277 = vmatprep.mubr.bf16.mxu0 0
      %278 = vmatmul.mubr.bf16.gmra.mrb[0].mxu0 %v239
      %v279 = vpop.f32.mrb[0].mxu0
      %v280 = vadd.f32 %v226, %v279
      %v281 = vpop.f32.mrb[0].mxu0
      %v282 = vpop.f32.mrb[0].mxu0
      %v283 = vpop.f32.mrb[0].mxu0
      %284 = vdwg.mxu0
      %v285 = vmax.f32 %v280, 0.0
      %v286 = vpack.c.bf16 %v285, %v285
      %vm287 = vcmask 519168
      %288 = vst.msk [vmem:[%s216] sm:$0xf] %vm287, %v286
      %p289 = scmp.lt.s32.totalorder %s18, 2
      %s290 = scalar_select %p289, %s18, 2
      %p291 = scmp.lt.s32.totalorder %s19, 0
      %s292 = scalar_select %p291, %s19, 0
      %s293 = sadd.s32 %s292, %s290
      %s294 = smul.addr %s293, 4
      %s295 = scalar_lea.vmem %s3, %s294
      // Predicated region
      $region33: #{hourglass_forward.20} parent=31 // pred_check
        %p296 = pneg %p121
      $region34: #{hourglass_forward.20} parent=31 // pred_check_branch
        %298 = sbr.rel (%p296) target = $region36
      $region35: #{hourglass_forward.20} parent=31 // pred_region
        _
      $region36: #{hourglass_forward.20} parent=31 // pred_fallthru
        _
    $region32: #{hourglass_forward.20} parent=5 // pred_fallthru
      _
    %p299 = scmp.le.s32.totalorder 2, %s9
    // Predicated region
    $region37: #{hourglass_forward.20} parent=5 // pred_check
      %p300 = pneg %p299
    $region38: #{hourglass_forward.20} parent=5 // pred_check_branch
      %302 = sbr.rel (%p300) target = $region40
    $region39: #{hourglass_forward.20} parent=5 // pred_region
      %s303 = ssub.s32 %s9, 2
      // Predicated region
      $region41: #{hourglass_forward.20} parent=39 // pred_check
        %p304 = pneg %p127
      $region42: #{hourglass_forward.20} parent=39 // pred_check_branch
        %306 = sbr.rel (%p304) target = $region44
      $region43: #{hourglass_forward.20} parent=39 // pred_region
        %p307 = scmp.lt.s32.totalorder %s20, 2
        %s308 = scalar_select %p307, %s20, 2
        %p309 = scmp.lt.s32.totalorder %s21, 0
        %s310 = scalar_select %p309, %s21, 0
        %s311 = sadd.s32 %s310, %s308
        %s312 = smul.addr %s311, 4
        %s313 = scalar_lea.vmem %s3, %s312
      $region44: #{hourglass_forward.20} parent=39 // pred_fallthru
        _
    $region40: #{hourglass_forward.20} parent=5 // pred_fallthru
      _
  $region6: #{hourglass_forward.20} parent=0 // loop_footer
    %s13 = sadd.s32 1, %s9
  $region7: #{hourglass_forward.20} parent=0 // loop_footer_branch
    %8 = sbr.rel target = $region3
  $region8: #{hourglass_forward.20} parent=0 // loop_exit
    _

// kernel: hourglass_forward.21
$region0: #{hourglass_forward.21}
  #allocation0 [shape = 'u32[]', space=smem, size = 0x4, offset = 0x4, fixed_abs, tag = 'smem constant byte address 0x4 - core index']
  #allocation1 [shape = 'u32[144,128]{1,0:T(1,128)}', space=vmem, size = 0x12000, scoped, tag = 'internal scratch']
  %s0 = inlined_call_operand.vmem [shape: bf16[3,8,40], index: 0, kind: input, shape index: {}]
  %s1 = inlined_call_operand.vmem [shape: bf16[3,40,64], index: 1, kind: input, shape index: {}]
  %s2 = inlined_call_operand.vmem [shape: f32[8,1], index: 2, kind: input, shape index: {}]
  %s3 = inlined_call_operand.vmem [shape: bf16[3,8,64], index: 3, kind: output, shape index: {}]
  %s4 = sld [smem:[#allocation0]]
  $region45: #{hourglass_forward.21} parent=0
    _
  %s6 = ssub.s32 1, %s4
  %s7 = scalar_select 0, %s6, %s4
  loop: start=0, step=1, limit=5
  $region2: #{hourglass_forward.21} parent=0 // loop_pre_header
    _
  $region3: #{hourglass_forward.21} parent=0 // loop_header
    %s9 = sphi 0, %s13
    %p10 = scmp.ge.s32.totalorder %s9, 5
    %s16 = sphi 0, %s28
    %s17 = sphi 0, %s24
    %s18 = sphi 0, %s16
    %s19 = sphi 0, %s17
    %s20 = sphi 0, %s18
    %s21 = sphi 0, %s19
    %s31 = sphi 0, %s33
    %s34 = sphi 0, %s31
    %s35 = sphi 0, %s34
    %s51 = sphi 0, %s35
    %s59 = sphi 0, %s61
    %s62 = sphi 0, %s59
    %s63 = sphi 0, %s62
    %s79 = sphi 0, %s63
    %s83 = sphi 0, %s83
    %s85 = sphi 0, %s83
    %s86 = sphi 0, %s85
    %s100 = sphi 0, %s86
    %s108 = sphi 0, %s110
    %s111 = sphi 0, %s108
    %s112 = sphi 0, %s111
    %s128 = sphi 0, %s112
  $region4: #{hourglass_forward.21} parent=0 // loop_header_branch
    %12 = sbr.rel (%p10) target = $region8
  $region5: #{hourglass_forward.21} parent=0 // loop_body
    %s14 = ssub.s32 %s9, 1
    %s15 = ssub.s32 %s9, 2
    %s22 = sadd.s32 1, %s17
    %p23 = scmp.ge.s32.totalorder %s22, 1
    %s24 = scalar_select %p23, 0, %s22
    %s25 = sadd.s32 1, %s16
    %s26 = scalar_select %p23, %s25, %s16
    %p27 = scmp.ge.s32.totalorder %s26, 3
    %s28 = scalar_select %p27, 0, %s26
    %s29 = ssub.s32 %s16, %s28
    %p30 = scmp.eq.s32.totalorder %s29, 0
    %s32 = sadd.s32 %s31, 1
    %s33 = scalar_select %p30, %s31, %s32
    %p36 = pneg %p30
    %p37 = scmp.eq.s32.totalorder %s9, 2
    %p38 = por %p36, %p37
    %p39 = scmp.ne.s32.totalorder %s31, %s34
    %p40 = scmp.eq.s32.totalorder %s9, 0
    %p41 = por %p39, %p40
    %p42 = scmp.ne.s32.totalorder %s31, %s34
    %p43 = scmp.eq.s32.totalorder %s14, 2
    %p44 = por %p42, %p43
    %p45 = scmp.ne.s32.totalorder %s34, %s35
    %p46 = scmp.eq.s32.totalorder %s14, 0
    %p47 = por %p45, %p46
    %p48 = scmp.ne.s32.totalorder %s34, %s35
    %p49 = scmp.eq.s32.totalorder %s15, 2
    %p50 = por %p48, %p49
    %p52 = scmp.ne.s32.totalorder %s35, %s51
    %p53 = scmp.eq.s32.totalorder %s15, 0
    %p54 = por %p52, %p53
    %s55 = ssub.s32 %s16, %s28
    %s56 = ssub.s32 %s17, %s24
    %s57 = sor.u32 %s55, %s56
    %p58 = scmp.eq.s32.totalorder %s57, 0
    %s60 = sadd.s32 %s59, 1
    %s61 = scalar_select %p58, %s59, %s60
    %p64 = pneg %p58
    %p65 = scmp.eq.s32.totalorder %s9, 2
    %p66 = por %p64, %p65
    %p67 = scmp.ne.s32.totalorder %s59, %s62
    %p68 = scmp.eq.s32.totalorder %s9, 0
    %p69 = por %p67, %p68
    %p70 = scmp.ne.s32.totalorder %s59, %s62
    %p71 = scmp.eq.s32.totalorder %s14, 2
    %p72 = por %p70, %p71
    %p73 = scmp.ne.s32.totalorder %s62, %s63
    %p74 = scmp.eq.s32.totalorder %s14, 0
    %p75 = por %p73, %p74
    %p76 = scmp.ne.s32.totalorder %s62, %s63
    %p77 = scmp.eq.s32.totalorder %s15, 2
    %p78 = por %p76, %p77
    %p80 = scmp.ne.s32.totalorder %s63, %s79
    %p81 = scmp.eq.s32.totalorder %s15, 0
    %p82 = por %p80, %p81
    %s84 = sadd.s32 %s83, 1
    %p87 = scmp.eq.s32.totalorder %s9, 2
    %p88 = scmp.ne.s32.totalorder %s83, %s85
    %p89 = scmp.eq.s32.totalorder %s9, 0
    %p90 = por %p88, %p89
    %p91 = scmp.ne.s32.totalorder %s83, %s85
    %p92 = scmp.eq.s32.totalorder %s14, 2
    %p93 = por %p91, %p92
    %p94 = scmp.ne.s32.totalorder %s85, %s86
    %p95 = scmp.eq.s32.totalorder %s14, 0
    %p96 = por %p94, %p95
    %p97 = scmp.ne.s32.totalorder %s85, %s86
    %p98 = scmp.eq.s32.totalorder %s15, 2
    %p99 = por %p97, %p98
    %p101 = scmp.ne.s32.totalorder %s86, %s100
    %p102 = scmp.eq.s32.totalorder %s15, 0
    %p103 = por %p101, %p102
    %s104 = ssub.s32 %s16, %s28
    %s105 = ssub.s32 %s17, %s24
    %s106 = sor.u32 %s104, %s105
    %p107 = scmp.eq.s32.totalorder %s106, 0
    %s109 = sadd.s32 %s108, 1
    %s110 = scalar_select %p107, %s108, %s109
    %p113 = pneg %p107
    %p114 = scmp.eq.s32.totalorder %s9, 2
    %p115 = por %p113, %p114
    %p116 = scmp.ne.s32.totalorder %s108, %s111
    %p117 = scmp.eq.s32.totalorder %s9, 0
    %p118 = por %p116, %p117
    %p119 = scmp.ne.s32.totalorder %s108, %s111
    %p120 = scmp.eq.s32.totalorder %s14, 2
    %p121 = por %p119, %p120
    %p122 = scmp.ne.s32.totalorder %s111, %s112
    %p123 = scmp.eq.s32.totalorder %s14, 0
    %p124 = por %p122, %p123
    %p125 = scmp.ne.s32.totalorder %s111, %s112
    %p126 = scmp.eq.s32.totalorder %s15, 2
    %p127 = por %p125, %p126
    %p129 = scmp.ne.s32.totalorder %s112, %s128
    %p130 = scmp.eq.s32.totalorder %s15, 0
    %p131 = por %p129, %p130
    %p132 = scmp.le.s32.totalorder 1, %s9
    %p133 = scmp.lt.s32.totalorder %s9, 4
    %p134 = pnand %p132, %p133
    %p135 = pneg %p134
    // Predicated region
    $region9: #{hourglass_forward.21} parent=5 // pred_check
      _
    $region10: #{hourglass_forward.21} parent=5 // pred_check_branch
      %137 = sbr.rel (%p134) target = $region12
    $region11: #{hourglass_forward.21} parent=5 // pred_region
      %s138 = ssub.s32 %s9, 1
      // Predicated region
      $region13: #{hourglass_forward.21} parent=11 // pred_check
        %p139 = pneg %p96
      $region14: #{hourglass_forward.21} parent=11 // pred_check_branch
        %141 = sbr.rel (%p139) target = $region16
      $region15: #{hourglass_forward.21} parent=11 // pred_region
        _
      $region16: #{hourglass_forward.21} parent=11 // pred_fallthru
        _
    $region12: #{hourglass_forward.21} parent=5 // pred_fallthru
      _
    %p142 = scmp.lt.s32.totalorder %s9, 3
    // Predicated region
    $region17: #{hourglass_forward.21} parent=5 // pred_check
      %p143 = pneg %p142
    $region18: #{hourglass_forward.21} parent=5 // pred_check_branch
      %145 = sbr.rel (%p143) target = $region20
    $region19: #{hourglass_forward.21} parent=5 // pred_region
      // Predicated region
      $region21: #{hourglass_forward.21} parent=19 // pred_check
        %p146 = pneg %p41
      $region22: #{hourglass_forward.21} parent=19 // pred_check_branch
        %148 = sbr.rel (%p146) target = $region24
      $region23: #{hourglass_forward.21} parent=19 // pred_region
        %p149 = scmp.lt.s32.totalorder %s16, 2
        %s150 = scalar_select %p149, %s16, 2
        %s151 = smul.addr %s150, 4
        %s152 = scalar_lea.vmem %s0, %s151
      $region24: #{hourglass_forward.21} parent=19 // pred_fallthru
        _
      // Predicated region
      $region25: #{hourglass_forward.21} parent=19 // pred_check
        %p153 = pneg %p69
      $region26: #{hourglass_forward.21} parent=19 // pred_check_branch
        %155 = sbr.rel (%p153) target = $region28
      $region27: #{hourglass_forward.21} parent=19 // pred_region
        %p156 = scmp.lt.s32.totalorder %s16, 2
        %s157 = scalar_select %p156, %s16, 2
        %p158 = scmp.lt.s32.totalorder %s17, 0
        %s159 = scalar_select %p158, %s17, 0
        %s160 = smul.addr %s157, 5
        %s161 = sadd.s32 %s159, %s160
        %s162 = smul.addr %s161, 4
        %s163 = scalar_lea.vmem %s1, %s162
      $region28: #{hourglass_forward.21} parent=19 // pred_fallthru
        _
    $region20: #{hourglass_forward.21} parent=5 // pred_fallthru
      _
    %p164 = scmp.le.s32.totalorder 1, %s9
    %p165 = scmp.lt.s32.totalorder %s9, 4
    %p166 = pnand %p164, %p165
    %p167 = pneg %p166
    // Predicated region
    $region29: #{hourglass_forward.21} parent=5 // pred_check
      _
    $region30: #{hourglass_forward.21} parent=5 // pred_check_branch
      %169 = sbr.rel (%p166) target = $region32
    $region31: #{hourglass_forward.21} parent=5 // pred_region
      %s170 = ssub.s32 %s9, 1
      %p171 = scmp.lt.s32.totalorder %s18, 2
      %s172 = scalar_select %p171, %s18, 2
      %s173 = smul.addr %s172, 4
      %s174 = scalar_lea.vmem %s0, %s173
      %p175 = pneg %p47
      %p176 = pneg %p44
      %p177 = scmp.lt.s32.totalorder %s18, 2
      %s178 = scalar_select %p177, %s18, 2
      %p179 = scmp.lt.s32.totalorder %s19, 0
      %s180 = scalar_select %p179, %s19, 0
      %s181 = smul.addr %s178, 5
      %s182 = sadd.s32 %s180, %s181
      %s183 = smul.addr %s182, 4
      %s184 = scalar_lea.vmem %s1, %s183
      %p185 = pneg %p75
      %p186 = pneg %p72
      %p187 = pneg %p96
      %p188 = pneg %p93
      %p189 = pneg %p124
      %p190 = pneg %p121
      %p191 = scmp.lt.s32.totalorder %s18, 2
      %s192 = scalar_select %p191, %s18, 2
      %p193 = scmp.lt.s32.totalorder %s19, 0
      %s194 = scalar_select %p193, %s19, 0
      %s195 = sadd.s32 %s194, %s192
      %s196 = smul.addr %s195, 4
      %s197 = scalar_lea.vmem %s3, %s196
      %p198 = scmp.lt.s32.totalorder %s18, 2
      %s199 = scalar_select %p198, %s18, 2
      %s200 = smul.addr %s199, 4
      %s201 = scalar_lea.vmem %s0, %s200
      %p202 = scmp.lt.s32.totalorder %s18, 2
      %s203 = scalar_select %p202, %s18, 2
      %p204 = scmp.lt.s32.totalorder %s19, 0
      %s205 = scalar_select %p204, %s19, 0
      %s206 = smul.addr %s203, 5
      %s207 = sadd.s32 %s205, %s206
      %s208 = smul.addr %s207, 4
      %s209 = scalar_lea.vmem %s1, %s208
      %p210 = scmp.lt.s32.totalorder %s18, 2
      %s211 = scalar_select %p210, %s18, 2
      %p212 = scmp.lt.s32.totalorder %s19, 0
      %s213 = scalar_select %p212, %s19, 0
      %s214 = sadd.s32 %s213, %s211
      %s215 = smul.addr %s214, 4
      %s216 = scalar_lea.vmem %s3, %s215
      %v218 = vld [vmem:[%s201] sm:$0xf]
      %v219 = vld [vmem:[%s209] sm:$0xf]
      %v220 = vld [vmem:[%s209 + $0x4] sm:$0xf]
      %v221 = vld [vmem:[%s209 + $0x8] sm:$0xf]
      %v222 = vld [vmem:[%s209 + $0xc] sm:$0xf]
      %v223 = vld [vmem:[%s209 + $0x10] sm:$0xf]
      %v224 = vld [vmem:[%s2] sm:$0xff]
      %226 = vset.pattern.permute.xlu0 0
      %227 = vperm.xlu0 %226, %v224
      %v228 = vpop.permute.xlu0 %227
      %v235 = vunpack.c.l.b16 %v219
      %v236 = vunpack.c.l.b16 %v220
      %v237 = vunpack.c.l.b16 %v221
      %v238 = vunpack.c.l.b16 %v222
      %v239 = vunpack.c.l.b16 %v223
      %v240 = vpack.c.b16 %v236, %v235
      %v241 = vpack.c.b16 %v238, %v237
      %v242 = vpack.c.b16 %v239, %v239
      %vm245 = vcmask 326656
      %v247 = vsel %vm245, %v218, 0
      %vm249 = vcmask 1043456
      %v251 = vsel %vm249, %v242, 0
      %253 = vmatprep.subr.bf16.mxu0 0
      %254 = vmatpush1.bf16.msra.mxu0 %v240
      %255 = vmatprep.subr.bf16.mxu0 0
      %256 = vmatpush1.bf16.msra.mxu0 %v241
      %257 = vmatprep.subr.bf16.mxu0 0
      %258 = vmatpush1.bf16.msra.mxu0 %v251
      %259 = vmatprep.subr.bf16.mxu0 0
      %260 = vmatpush1.bf16.msra.mxu0 0
      %261 = vmatprep.subr.bf16.mxu0 0
      %262 = vmatpush1.bf16.msra.mxu0 0
      %263 = vmatprep.subr.bf16.mxu0 0
      %264 = vmatpush1.bf16.msra.mxu0 0
      %265 = vmatprep.subr.bf16.mxu0 0
      %266 = vmatpush1.bf16.msra.mxu0 0
      %267 = vmatprep.subr.bf16.mxu0 0
      %268 = vmatpush1.bf16.msra.mxu0 0
      %269 = vmatprep.subr.bf16.mxu0 0
      %270 = vmatpush1.bf16.msra.mxu0 0
      %271 = vmatprep.subr.bf16.mxu0 0
      %272 = vmatpush1.bf16.msra.mxu0 0
      %273 = vmatprep.subr.bf16.mxu0 0
      %274 = vmatpush1.bf16.msra.mxu0 0
      %275 = vmatprep.subr.bf16.mxu0 0
      %276 = vmatpush1.bf16.msra.mxu0 0
      %277 = vmatprep.subr.bf16.mxu0 0
      %278 = vmatpush1.bf16.msra.mxu0 0
      %279 = vmatprep.subr.bf16.mxu0 0
      %280 = vmatpush1.bf16.msra.mxu0 0
      %281 = vmatprep.subr.bf16.mxu0 0
      %282 = vmatpush1.bf16.msra.mxu0 0
      %283 = vmatprep.subr.bf16.mxu0 0
      %284 = vmatpush1.bf16.msra.mxu0 0
      %285 = vmatprep.mubr.bf16.mxu0 0
      %286 = vmatmul.mubr.bf16.gmra.mrb[0].mxu0 %v247
      %v287 = vpop.f32.mrb[0].mxu0
      %v288 = vadd.f32 %v228, %v287
      %v289 = vpop.f32.mrb[0].mxu0
      %v290 = vpop.f32.mrb[0].mxu0
      %v291 = vpop.f32.mrb[0].mxu0
      %292 = vdwg.mxu0
      %v293 = vmax.f32 %v288, 0.0
      %v294 = vpack.c.bf16 %v293, %v293
      %vm295 = vcmask 519168
      %296 = vst.msk [vmem:[%s216] sm:$0xf] %vm295, %v294
      %p297 = scmp.lt.s32.totalorder %s18, 2
      %s298 = scalar_select %p297, %s18, 2
      %p299 = scmp.lt.s32.totalorder %s19, 0
      %s300 = scalar_select %p299, %s19, 0
      %s301 = sadd.s32 %s300, %s298
      %s302 = smul.addr %s301, 4
      %s303 = scalar_lea.vmem %s3, %s302
      // Predicated region
      $region33: #{hourglass_forward.21} parent=31 // pred_check
        %p304 = pneg %p121
      $region34: #{hourglass_forward.21} parent=31 // pred_check_branch
        %306 = sbr.rel (%p304) target = $region36
      $region35: #{hourglass_forward.21} parent=31 // pred_region
        _
      $region36: #{hourglass_forward.21} parent=31 // pred_fallthru
        _
    $region32: #{hourglass_forward.21} parent=5 // pred_fallthru
      _
    %p307 = scmp.le.s32.totalorder 2, %s9
    // Predicated region
    $region37: #{hourglass_forward.21} parent=5 // pred_check
      %p308 = pneg %p307
    $region38: #{hourglass_forward.21} parent=5 // pred_check_branch
      %310 = sbr.rel (%p308) target = $region40
    $region39: #{hourglass_forward.21} parent=5 // pred_region
      %s311 = ssub.s32 %s9, 2
      // Predicated region
      $region41: #{hourglass_forward.21} parent=39 // pred_check
        %p312 = pneg %p127
      $region42: #{hourglass_forward.21} parent=39 // pred_check_branch
        %314 = sbr.rel (%p312) target = $region44
      $region43: #{hourglass_forward.21} parent=39 // pred_region
        %p315 = scmp.lt.s32.totalorder %s20, 2
        %s316 = scalar_select %p315, %s20, 2
        %p317 = scmp.lt.s32.totalorder %s21, 0
        %s318 = scalar_select %p317, %s21, 0
        %s319 = sadd.s32 %s318, %s316
        %s320 = smul.addr %s319, 4
        %s321 = scalar_lea.vmem %s3, %s320
      $region44: #{hourglass_forward.21} parent=39 // pred_fallthru
        _
    $region40: #{hourglass_forward.21} parent=5 // pred_fallthru
      _
  $region6: #{hourglass_forward.21} parent=0 // loop_footer
    %s13 = sadd.s32 1, %s9
  $region7: #{hourglass_forward.21} parent=0 // loop_footer_branch
    %8 = sbr.rel target = $region3
  $region8: #{hourglass_forward.21} parent=0 // loop_exit
    _

// kernel: hourglass_forward.24
$region0: #{hourglass_forward.24}
  #allocation0 [shape = 'u32[]', space=smem, size = 0x4, offset = 0x4, fixed_abs, tag = 'smem constant byte address 0x4 - core index']
  #allocation1 [shape = 'u32[144,128]{1,0:T(1,128)}', space=vmem, size = 0x12000, scoped, tag = 'internal scratch']
  %s0 = inlined_call_operand.vmem [shape: bf16[8,8,64], index: 0, kind: input, shape index: {}, may-alias: {0,4}]
  %s1 = inlined_call_operand.vmem [shape: bf16[1,8,72], index: 1, kind: input, shape index: {}]
  %s2 = inlined_call_operand.vmem [shape: bf16[1,72,64], index: 2, kind: input, shape index: {}]
  %s3 = inlined_call_operand.vmem [shape: f32[8,1], index: 3, kind: input, shape index: {}]
  %s4 = inlined_call_operand.vmem [shape: bf16[8,8,64], index: 4, kind: output, shape index: {}, may-alias: {0,4}]
  %s5 = scalar_lea.vmem %s4, 28
  %s6 = sld [smem:[#allocation0]]
  $region52: #{hourglass_forward.24} parent=0
    _
  %s8 = ssub.s32 1, %s6
  %s9 = scalar_select 0, %s8, %s6
  $region1: #{hourglass_forward.24} parent=0
    #allocation2 [shape = 'u8[2048]{0}', space=vmem, size = 0x800, scoped, tag = 'output window, operand 0, single buffered']
    // Predicated region
    $region2: #{hourglass_forward.24} parent=1 // pred_check
      _
    $region3: #{hourglass_forward.24} parent=1 // pred_check_branch
      %11 = sbr.rel (0) target = $region5
    $region4: #{hourglass_forward.24} parent=1 // pred_region
      _
    $region5: #{hourglass_forward.24} parent=1 // pred_fallthru
      _
    // Predicated region
    $region6: #{hourglass_forward.24} parent=1 // pred_check
      _
    $region7: #{hourglass_forward.24} parent=1 // pred_check_branch
      %13 = sbr.rel (0) target = $region9
    $region8: #{hourglass_forward.24} parent=1 // pred_region
      _
    $region9: #{hourglass_forward.24} parent=1 // pred_fallthru
      _
    // Predicated region
    $region10: #{hourglass_forward.24} parent=1 // pred_check
      _
    $region11: #{hourglass_forward.24} parent=1 // pred_check_branch
      %15 = sbr.rel (0) target = $region13
    $region12: #{hourglass_forward.24} parent=1 // pred_region
      _
    $region13: #{hourglass_forward.24} parent=1 // pred_fallthru
      _
    %v17 = vld [vmem:[%s1] sm:$0xf]
    %v18 = vld [vmem:[%s2] sm:$0xf]
    %v19 = vld [vmem:[%s2 + $0x4] sm:$0xf]
    %v20 = vld [vmem:[%s2 + $0x8] sm:$0xf]
    %v21 = vld [vmem:[%s2 + $0xc] sm:$0xf]
    %v22 = vld [vmem:[%s2 + $0x10] sm:$0xf]
    %v23 = vld [vmem:[%s2 + $0x14] sm:$0xf]
    %v24 = vld [vmem:[%s2 + $0x18] sm:$0xf]
    %v25 = vld [vmem:[%s2 + $0x1c] sm:$0xf]
    %v26 = vld [vmem:[%s2 + $0x20] sm:$0xf]
    %v27 = vld [vmem:[%s3] sm:$0xff]
    %29 = vset.pattern.permute.xlu0 0
    %30 = vperm.xlu0 %29, %v27
    %v31 = vpop.permute.xlu0 %30
    %v42 = vunpack.c.l.b16 %v18
    %v43 = vunpack.c.l.b16 %v19
    %v44 = vunpack.c.l.b16 %v20
    %v45 = vunpack.c.l.b16 %v21
    %v46 = vunpack.c.l.b16 %v22
    %v47 = vunpack.c.l.b16 %v23
    %v48 = vunpack.c.l.b16 %v24
    %v49 = vunpack.c.l.b16 %v25
    %v50 = vunpack.c.l.b16 %v26
    %v51 = vpack.c.b16 %v43, %v42
    %v52 = vpack.c.b16 %v45, %v44
    %v53 = vpack.c.b16 %v47, %v46
    %v54 = vpack.c.b16 %v49, %v48
    %v55 = vpack.c.b16 %v50, %v50
    %vm60 = vcmask 588800
    %v62 = vsel %vm60, %v17, 0
    %vm64 = vcmask 1043456
    %v66 = vsel %vm64, %v55, 0
    %68 = vmatprep.subr.bf16.mxu0 0
    %69 = vmatpush1.bf16.msra.mxu0 %v51
    %70 = vmatprep.subr.bf16.mxu0 0
    %71 = vmatpush1.bf16.msra.mxu0 %v52
    %72 = vmatprep.subr.bf16.mxu0 0
    %73 = vmatpush1.bf16.msra.mxu0 %v53
    %74 = vmatprep.subr.bf16.mxu0 0
    %75 = vmatpush1.bf16.msra.mxu0 %v54
    %76 = vmatprep.subr.bf16.mxu0 0
    %77 = vmatpush1.bf16.msra.mxu0 %v66
    %78 = vmatprep.subr.bf16.mxu0 0
    %79 = vmatpush1.bf16.msra.mxu0 0
    %80 = vmatprep.subr.bf16.mxu0 0
    %81 = vmatpush1.bf16.msra.mxu0 0
    %82 = vmatprep.subr.bf16.mxu0 0
    %83 = vmatpush1.bf16.msra.mxu0 0
    %84 = vmatprep.subr.bf16.mxu0 0
    %85 = vmatpush1.bf16.msra.mxu0 0
    %86 = vmatprep.subr.bf16.mxu0 0
    %87 = vmatpush1.bf16.msra.mxu0 0
    %88 = vmatprep.subr.bf16.mxu0 0
    %89 = vmatpush1.bf16.msra.mxu0 0
    %90 = vmatprep.subr.bf16.mxu0 0
    %91 = vmatpush1.bf16.msra.mxu0 0
    %92 = vmatprep.subr.bf16.mxu0 0
    %93 = vmatpush1.bf16.msra.mxu0 0
    %94 = vmatprep.subr.bf16.mxu0 0
    %95 = vmatpush1.bf16.msra.mxu0 0
    %96 = vmatprep.subr.bf16.mxu0 0
    %97 = vmatpush1.bf16.msra.mxu0 0
    %98 = vmatprep.subr.bf16.mxu0 0
    %99 = vmatpush1.bf16.msra.mxu0 0
    %100 = vmatprep.mubr.bf16.mxu0 0
    %101 = vmatmul.mubr.bf16.gmra.mrb[0].mxu0 %v62
    %v102 = vpop.f32.mrb[0].mxu0
    %v103 = vadd.f32 %v31, %v102
    %v104 = vpop.f32.mrb[0].mxu0
    %v105 = vpop.f32.mrb[0].mxu0
    %v106 = vpop.f32.mrb[0].mxu0
    %107 = vdwg.mxu0
    %v108 = vmax.f32 %v103, 0.0
    %v109 = vpack.c.bf16 %v108, %v108
    %vm110 = vcmask 519168
    %111 = vst.msk [vmem:[#allocation2] sm:$0xf] %vm110, %v109
    // Predicated region
    $region14: #{hourglass_forward.24} parent=1 // pred_check
      _
    $region15: #{hourglass_forward.24} parent=1 // pred_check_branch
      %113 = sbr.rel (0) target = $region17
    $region16: #{hourglass_forward.24} parent=1 // pred_region
      // Predicated region
      $region18: #{hourglass_forward.24} parent=16 // pred_check
        _
      $region19: #{hourglass_forward.24} parent=16 // pred_check_branch
        %115 = sbr.rel (0) target = $region21
      $region20: #{hourglass_forward.24} parent=16 // pred_region
        // Predicated region
        $region22: #{hourglass_forward.24} parent=20 // pred_check
          _
        $region23: #{hourglass_forward.24} parent=20 // pred_check_branch
          %117 = sbr.rel target = $region25
        $region24: #{hourglass_forward.24} parent=20 // pred_region
          // Predicated region
          $region37: #{hourglass_forward.24} parent=24 // pred_check
            _
          $region38: #{hourglass_forward.24} parent=24 // pred_check_branch
            %132 = sbr.rel (0) target = $region40
          $region39: #{hourglass_forward.24} parent=24 // pred_region
            loop: start=0, step=1, limit=1
            $region41: #{hourglass_forward.24} parent=39 // loop_pre_header
              _
            $region42: #{hourglass_forward.24} parent=39 // loop_header
              %s135 = sphi 0, %s139
              %p136 = scmp.ge.s32.totalorder %s135, 1
              %s140 = sphi [#allocation2], [#allocation2]
              %s141 = sphi %s5, %s5
            $region43: #{hourglass_forward.24} parent=39 // loop_header_branch
              %138 = sbr.rel (%p136) target = $region47
            $region44: #{hourglass_forward.24} parent=39 // loop_body
              %v142 = vld [vmem:[%s140] sm:$0xf]
              %143 = vst [vmem:[%s141] sm:$0xf] %v142
            $region45: #{hourglass_forward.24} parent=39 // loop_footer
              %s139 = sadd.s32 1, %s135
            $region46: #{hourglass_forward.24} parent=39 // loop_footer_branch
              %134 = sbr.rel target = $region42
            $region47: #{hourglass_forward.24} parent=39 // loop_exit
              _
          $region40: #{hourglass_forward.24} parent=24 // pred_fallthru
            _
        $region25: #{hourglass_forward.24} parent=20 // pred_fallthru
          _
        // Predicated region
        $region26: #{hourglass_forward.24} parent=20 // pred_check
          _
        $region27: #{hourglass_forward.24} parent=20 // pred_check_branch
          %119 = sbr.rel (0) target = $region29
        $region28: #{hourglass_forward.24} parent=20 // pred_region
          loop: start=0, step=1, limit=1
          $region30: #{hourglass_forward.24} parent=28 // loop_pre_header
            _
          $region31: #{hourglass_forward.24} parent=28 // loop_header
            %s122 = sphi 0, %s126
            %p123 = scmp.ge.s32.totalorder %s122, 1
            %s127 = sphi [#allocation2], [#allocation2]
            %s128 = sphi %s5, %s5
          $region32: #{hourglass_forward.24} parent=28 // loop_header_branch
            %125 = sbr.rel (%p123) target = $region36
          $region33: #{hourglass_forward.24} parent=28 // loop_body
            %v129 = vld [vmem:[%s127] sm:$0xf]
            %130 = vst [vmem:[%s128] sm:$0xf] %v129
          $region34: #{hourglass_forward.24} parent=28 // loop_footer
            %s126 = sadd.s32 1, %s122
          $region35: #{hourglass_forward.24} parent=28 // loop_footer_branch
            %121 = sbr.rel target = $region31
          $region36: #{hourglass_forward.24} parent=28 // loop_exit
            _
        $region29: #{hourglass_forward.24} parent=20 // pred_fallthru
          _
      $region21: #{hourglass_forward.24} parent=16 // pred_fallthru
        _
      %144 = vnop
    $region17: #{hourglass_forward.24} parent=1 // pred_fallthru
      _
    // Predicated region
    $region48: #{hourglass_forward.24} parent=1 // pred_check
      _
    $region49: #{hourglass_forward.24} parent=1 // pred_check_branch
      %146 = sbr.rel (0) target = $region51
    $region50: #{hourglass_forward.24} parent=1 // pred_region
      _
    $region51: #{hourglass_forward.24} parent=1 // pred_fallthru
      _

// kernel: hourglass_forward.27
$region0: #{hourglass_forward.27}
  #allocation0 [shape = 'u32[]', space=smem, size = 0x4, offset = 0x4, fixed_abs, tag = 'smem constant byte address 0x4 - core index']
  #allocation1 [shape = 'u32[144,128]{1,0:T(1,128)}', space=vmem, size = 0x12000, scoped, tag = 'internal scratch']
  %s0 = inlined_call_operand.vmem [shape: f32[8,4,512], index: 0, kind: input, shape index: {}, may-alias: {0,4}]
  %s1 = inlined_call_operand.vmem [shape: bf16[1,4,12], index: 1, kind: input, shape index: {}]
  %s2 = inlined_call_operand.vmem [shape: bf16[1,12,512], index: 2, kind: input, shape index: {}]
  %s3 = inlined_call_operand.vmem [shape: f32[4,1], index: 3, kind: input, shape index: {}]
  %s4 = inlined_call_operand.vmem [shape: f32[8,4,512], index: 4, kind: output, shape index: {}, may-alias: {0,4}]
  %s5 = sld [smem:[#allocation0]]
  $region117: #{hourglass_forward.27} parent=0
    _
  %s7 = ssub.s32 1, %s5
  %s8 = scalar_select 0, %s7, %s5
  $region1: #{hourglass_forward.27} parent=0
    #allocation2 [shape = 'u8[16384]{0}', space=vmem, size = 0x4000, scoped, tag = 'input window, operand 1']
    #allocation3 [shape = 'u8[8192]{0}', space=vmem, size = 0x2000, scoped, tag = 'output window, operand 0']
    loop: start=0, step=1, limit=4
    $region2: #{hourglass_forward.27} parent=1 // loop_pre_header
      _
    $region3: #{hourglass_forward.27} parent=1 // loop_header
      %s10 = sphi 0, %s14
      %p11 = scmp.ge.s32.totalorder %s10, 4
      %s17 = sphi 0, %s29
      %s18 = sphi 0, %s25
      %s19 = sphi 0, %s17
      %s20 = sphi 0, %s18
      %s21 = sphi 0, %s19
      %s22 = sphi 0, %s20
      %s32 = sphi 0, %s34
      %s35 = sphi 0, %s32
      %s36 = sphi 0, %s35
      %s52 = sphi 0, %s36
      %s60 = sphi 0, %s62
      %s63 = sphi 0, %s60
      %s64 = sphi 0, %s63
      %s80 = sphi 0, %s64
      %s84 = sphi 0, %s84
      %s86 = sphi 0, %s84
      %s87 = sphi 0, %s86
      %s101 = sphi 0, %s87
      %s109 = sphi 0, %s111
      %s112 = sphi 0, %s109
      %s113 = sphi 0, %s112
      %s129 = sphi 0, %s113
    $region4: #{hourglass_forward.27} parent=1 // loop_header_branch
      %13 = sbr.rel (%p11) target = $region8
    $region5: #{hourglass_forward.27} parent=1 // loop_body
      %s15 = ssub.s32 %s10, 1
      %s16 = ssub.s32 %s10, 2
      %s23 = sadd.s32 1, %s18
      %p24 = scmp.ge.s32.totalorder %s23, 2
      %s25 = scalar_select %p24, 0, %s23
      %s26 = sadd.s32 1, %s17
      %s27 = scalar_select %p24, %s26, %s17
      %p28 = scmp.ge.s32.totalorder %s27, 1
      %s29 = scalar_select %p28, 0, %s27
      %s30 = ssub.s32 %s17, %s29
      %p31 = scmp.eq.s32.totalorder %s30, 0
      %s33 = sadd.s32 %s32, 1
      %s34 = scalar_select %p31, %s32, %s33
      %p37 = pneg %p31
      %p38 = scmp.eq.s32.totalorder %s10, 1
      %p39 = por %p37, %p38
      %p40 = scmp.ne.s32.totalorder %s32, %s35
      %p41 = scmp.eq.s32.totalorder %s10, 0
      %p42 = por %p40, %p41
      %p43 = scmp.ne.s32.totalorder %s32, %s35
      %p44 = scmp.eq.s32.totalorder %s15, 1
      %p45 = por %p43, %p44
      %p46 = scmp.ne.s32.totalorder %s35, %s36
      %p47 = scmp.eq.s32.totalorder %s15, 0
      %p48 = por %p46, %p47
      %p49 = scmp.ne.s32.totalorder %s35, %s36
      %p50 = scmp.eq.s32.totalorder %s16, 1
      %p51 = por %p49, %p50
      %p53 = scmp.ne.s32.totalorder %s36, %s52
      %p54 = scmp.eq.s32.totalorder %s16, 0
      %p55 = por %p53, %p54
      %s56 = ssub.s32 %s17, %s29
      %s57 = ssub.s32 %s18, %s25
      %s58 = sor.u32 %s56, %s57
      %p59 = scmp.eq.s32.totalorder %s58, 0
      %s61 = sadd.s32 %s60, 1
      %s62 = scalar_select %p59, %s60, %s61
      %p65 = pneg %p59
      %p66 = scmp.eq.s32.totalorder %s10, 1
      %p67 = por %p65, %p66
      %p68 = scmp.ne.s32.totalorder %s60, %s63
      %p69 = scmp.eq.s32.totalorder %s10, 0
      %p70 = por %p68, %p69
      %p71 = scmp.ne.s32.totalorder %s60, %s63
      %p72 = scmp.eq.s32.totalorder %s15, 1
      %p73 = por %p71, %p72
      %p74 = scmp.ne.s32.totalorder %s63, %s64
      %p75 = scmp.eq.s32.totalorder %s15, 0
      %p76 = por %p74, %p75
      %p77 = scmp.ne.s32.totalorder %s63, %s64
      %p78 = scmp.eq.s32.totalorder %s16, 1
      %p79 = por %p77, %p78
      %p81 = scmp.ne.s32.totalorder %s64, %s80
      %p82 = scmp.eq.s32.totalorder %s16, 0
      %p83 = por %p81, %p82
      %s85 = sadd.s32 %s84, 1
      %p88 = scmp.eq.s32.totalorder %s10, 1
      %p89 = scmp.ne.s32.totalorder %s84, %s86
      %p90 = scmp.eq.s32.totalorder %s10, 0
      %p91 = por %p89, %p90
      %p92 = scmp.ne.s32.totalorder %s84, %s86
      %p93 = scmp.eq.s32.totalorder %s15, 1
      %p94 = por %p92, %p93
      %p95 = scmp.ne.s32.totalorder %s86, %s87
      %p96 = scmp.eq.s32.totalorder %s15, 0
      %p97 = por %p95, %p96
      %p98 = scmp.ne.s32.totalorder %s86, %s87
      %p99 = scmp.eq.s32.totalorder %s16, 1
      %p100 = por %p98, %p99
      %p102 = scmp.ne.s32.totalorder %s87, %s101
      %p103 = scmp.eq.s32.totalorder %s16, 0
      %p104 = por %p102, %p103
      %s105 = ssub.s32 %s17, %s29
      %s106 = ssub.s32 %s18, %s25
      %s107 = sor.u32 %s105, %s106
      %p108 = scmp.eq.s32.totalorder %s107, 0
      %s110 = sadd.s32 %s109, 1
      %s111 = scalar_select %p108, %s109, %s110
      %p114 = pneg %p108
      %p115 = scmp.eq.s32.totalorder %s10, 1
      %p116 = por %p114, %p115
      %p117 = scmp.ne.s32.totalorder %s109, %s112
      %p118 = scmp.eq.s32.totalorder %s10, 0
      %p119 = por %p117, %p118
      %p120 = scmp.ne.s32.totalorder %s109, %s112
      %p121 = scmp.eq.s32.totalorder %s15, 1
      %p122 = por %p120, %p121
      %p123 = scmp.ne.s32.totalorder %s112, %s113
      %p124 = scmp.eq.s32.totalorder %s15, 0
      %p125 = por %p123, %p124
      %p126 = scmp.ne.s32.totalorder %s112, %s113
      %p127 = scmp.eq.s32.totalorder %s16, 1
      %p128 = por %p126, %p127
      %p130 = scmp.ne.s32.totalorder %s113, %s129
      %p131 = scmp.eq.s32.totalorder %s16, 0
      %p132 = por %p130, %p131
      %p133 = scmp.le.s32.totalorder 1, %s10
      %p134 = scmp.lt.s32.totalorder %s10, 3
      %p135 = pnand %p133, %p134
      %p136 = pneg %p135
      // Predicated region
      $region9: #{hourglass_forward.27} parent=5 // pred_check
        _
      $region10: #{hourglass_forward.27} parent=5 // pred_check_branch
        %138 = sbr.rel (%p135) target = $region12
      $region11: #{hourglass_forward.27} parent=5 // pred_region
        %s139 = ssub.s32 %s10, 1
        // Predicated region
        $region13: #{hourglass_forward.27} parent=11 // pred_check
          %p140 = pneg %p48
        $region14: #{hourglass_forward.27} parent=11 // pred_check_branch
          %142 = sbr.rel (%p140) target = $region16
        $region15: #{hourglass_forward.27} parent=11 // pred_region
          %p143 = scmp.lt.s32.totalorder %s19, 0
          %s144 = scalar_select %p143, %s19, 0
          %s145 = smul.addr %s144, 2
          %s146 = scalar_lea.vmem %s1, %s145
        $region16: #{hourglass_forward.27} parent=11 // pred_fallthru
          _
        // Predicated region
        $region17: #{hourglass_forward.27} parent=11 // pred_check
          %p147 = pneg %p97
        $region18: #{hourglass_forward.27} parent=11 // pred_check_branch
          %149 = sbr.rel (%p147) target = $region20
        $region19: #{hourglass_forward.27} parent=11 // pred_region
          _
        $region20: #{hourglass_forward.27} parent=11 // pred_fallthru
          _
      $region12: #{hourglass_forward.27} parent=5 // pred_fallthru
        _
      %p150 = scmp.lt.s32.totalorder %s10, 2
      // Predicated region
      $region21: #{hourglass_forward.27} parent=5 // pred_check
        %p151 = pneg %p150
      $region22: #{hourglass_forward.27} parent=5 // pred_check_branch
        %153 = sbr.rel (%p151) target = $region24
      $region23: #{hourglass_forward.27} parent=5 // pred_region
        // Predicated region
        $region25: #{hourglass_forward.27} parent=23 // pred_check
          %p154 = pneg %p70
        $region26: #{hourglass_forward.27} parent=23 // pred_check_branch
          %156 = sbr.rel (%p154) target = $region28
        $region27: #{hourglass_forward.27} parent=23 // pred_region
          %s157 = sand.u32 %s60, 1
          %s158 = sand.u32 %s60, 1
          %s159 = smul.addr %s158, 16
          %s160 = scalar_lea.vmem [#allocation2], %s159
          %s161 = smul.u32 2, %s18
          %s162 = smul.addr %s17, 8
          %s163 = sadd.s32 %s161, %s162
          %s164 = smul.addr %s163, 4
          %s165 = scalar_lea.vmem %s2, %s164
          // Predicated region
          $region29: #{hourglass_forward.27} parent=27 // pred_check
            _
          $region30: #{hourglass_forward.27} parent=27 // pred_check_branch
            %167 = sbr.rel (0) target = $region32
          $region31: #{hourglass_forward.27} parent=27 // pred_region
            // Predicated region
            $region33: #{hourglass_forward.27} parent=31 // pred_check
              _
            $region34: #{hourglass_forward.27} parent=31 // pred_check_branch
              %169 = sbr.rel (0) target = $region36
            $region35: #{hourglass_forward.27} parent=31 // pred_region
              // Predicated region
              $region48: #{hourglass_forward.27} parent=35 // pred_check
                _
              $region49: #{hourglass_forward.27} parent=35 // pred_check_branch
                %186 = sbr.rel (0) target = $region51
              $region50: #{hourglass_forward.27} parent=35 // pred_region
                loop: start=0, step=1, limit=1
                $region52: #{hourglass_forward.27} parent=50 // loop_pre_header
                  _
                $region53: #{hourglass_forward.27} parent=50 // loop_header
                  %s188 = sphi 0, %s192
                  %p189 = scmp.ge.s32.totalorder %s188, 1
                  %s193 = sphi %s165, %s165
                  %s194 = sphi %s160, %s160
                $region54: #{hourglass_forward.27} parent=50 // loop_header_branch
                  %191 = sbr.rel (%p189) target = $region58
                $region55: #{hourglass_forward.27} parent=50 // loop_body
                  %v195 = vld [vmem:[%s193] sm:$0xff]
                  %196 = vst [vmem:[%s194] sm:$0xff] %v195
                  %v197 = vld [vmem:[%s193 + $0x10] sm:$0xff]
                  %198 = vst [vmem:[%s194 + $0x8] sm:$0xff] %v197
                $region56: #{hourglass_forward.27} parent=50 // loop_footer
                  %s192 = sadd.s32 1, %s188
                $region57: #{hourglass_forward.27} parent=50 // loop_footer_branch
                  %187 = sbr.rel target = $region53
                $region58: #{hourglass_forward.27} parent=50 // loop_exit
                  _
              $region51: #{hourglass_forward.27} parent=35 // pred_fallthru
                _
              // Predicated region
              $region59: #{hourglass_forward.27} parent=35 // pred_check
                _
              $region60: #{hourglass_forward.27} parent=35 // pred_check_branch
                %200 = sbr.rel target = $region62
              $region61: #{hourglass_forward.27} parent=35 // pred_region
                _
              $region62: #{hourglass_forward.27} parent=35 // pred_fallthru
                _
            $region36: #{hourglass_forward.27} parent=31 // pred_fallthru
              _
            // Predicated region
            $region37: #{hourglass_forward.27} parent=31 // pred_check
              _
            $region38: #{hourglass_forward.27} parent=31 // pred_check_branch
              %171 = sbr.rel target = $region40
            $region39: #{hourglass_forward.27} parent=31 // pred_region
              loop: start=0, step=1, limit=1
              $region41: #{hourglass_forward.27} parent=39 // loop_pre_header
                _
              $region42: #{hourglass_forward.27} parent=39 // loop_header
                %s174 = sphi 0, %s178
                %p175 = scmp.ge.s32.totalorder %s174, 1
                %s179 = sphi %s165, %s165
                %s180 = sphi %s160, %s160
              $region43: #{hourglass_forward.27} parent=39 // loop_header_branch
                %177 = sbr.rel (%p175) target = $region47
              $region44: #{hourglass_forward.27} parent=39 // loop_body
                %v181 = vld [vmem:[%s179] sm:$0xff]
                %182 = vst [vmem:[%s180] sm:$0xff] %v181
                %v183 = vld [vmem:[%s179 + $0x10] sm:$0xff]
                %184 = vst [vmem:[%s180 + $0x8] sm:$0xff] %v183
              $region45: #{hourglass_forward.27} parent=39 // loop_footer
                %s178 = sadd.s32 1, %s174
              $region46: #{hourglass_forward.27} parent=39 // loop_footer_branch
                %173 = sbr.rel target = $region42
              $region47: #{hourglass_forward.27} parent=39 // loop_exit
                _
            $region40: #{hourglass_forward.27} parent=31 // pred_fallthru
              _
          $region32: #{hourglass_forward.27} parent=27 // pred_fallthru
            _
          %201 = vnop
        $region28: #{hourglass_forward.27} parent=23 // pred_fallthru
          _
      $region24: #{hourglass_forward.27} parent=5 // pred_fallthru
        _
      %p202 = scmp.le.s32.totalorder 1, %s10
      %p203 = scmp.lt.s32.totalorder %s10, 3
      %p204 = pnand %p202, %p203
      %p205 = pneg %p204
      // Predicated region
      $region63: #{hourglass_forward.27} parent=5 // pred_check
        _
      $region64: #{hourglass_forward.27} parent=5 // pred_check_branch
        %207 = sbr.rel (%p204) target = $region66
      $region65: #{hourglass_forward.27} parent=5 // pred_region
        %s208 = ssub.s32 %s10, 1
        %s209 = sand.u32 %s63, 1
        %s210 = sand.u32 %s63, 1
        %s211 = smul.addr %s210, 16
        %s212 = scalar_lea.vmem [#allocation2], %s211
        // Predicated region
        $region67: #{hourglass_forward.27} parent=65 // pred_check
          %p213 = pneg %p76
        $region68: #{hourglass_forward.27} parent=65 // pred_check_branch
          %215 = sbr.rel (%p213) target = $region70
        $region69: #{hourglass_forward.27} parent=65 // pred_region
          _
        $region70: #{hourglass_forward.27} parent=65 // pred_fallthru
          _
        %p216 = scmp.lt.s32.totalorder %s19, 0
        %s217 = scalar_select %p216, %s19, 0
        %s218 = smul.addr %s217, 2
        %s219 = scalar_lea.vmem %s1, %s218
        %p220 = pneg %p48
        %p221 = pneg %p45
        %s222 = sand.u32 %s63, 1
        %s223 = sand.u32 %s63, 1
        %s224 = smul.addr %s223, 16
        %s225 = scalar_lea.vmem [#allocation2], %s224
        %p226 = pneg %p76
        %p227 = pneg %p73
        %p228 = pneg %p97
        %p229 = pneg %p94
        %p230 = pneg %p125
        %p231 = pneg %p122
        %s232 = sand.u32 %s112, 1
        %s233 = sand.u32 %s112, 1
        %s234 = smul.addr %s233, 8
        %s235 = scalar_lea.vmem [#allocation3], %s234
        %p236 = scmp.lt.s32.totalorder %s19, 0
        %s237 = scalar_select %p236, %s19, 0
        %s238 = smul.addr %s237, 2
        %s239 = scalar_lea.vmem %s1, %s238
        %s240 = smul.u32 2, %s20
        %s241 = smul.u32 2, %s20
        %v243 = vld [vmem:[%s239] sm:$0x3]
        %v244 = vld [vmem:[%s212] sm:$0xff]
        %v245 = vld [vmem:[%s212 + $0x8] sm:$0x33]
        %v246 = vld [vmem:[%s3] sm:$0xf]
        %248 = vset.pattern.permute.xlu0 0
        %249 = vperm.xlu0 %248, %v246
        %v250 = vpop.permute.xlu0 %249
        %v254 = vunpack.c.l.b16 %v244
        %v255 = vunpack.c.h.b16 %v244
        %v256 = vunpack.c.l.b16 %v245
        %v257 = vunpack.c.h.b16 %v245
        %v258 = vpack.c.b16 %v256, %v254
        %v259 = vpack.c.b16 %v257, %v255
        %vm260 = vcmask 97280
        %v262 = vsel %vm260, %v243, 0
        %vm264 = vcmask 1045504
        %v266 = vsel %vm264, %v258, 0
        %v269 = vsel %vm264, %v259, 0
        %271 = vmatprep.subr.bf16.mxu0 %v269
        %272 = vmatpush1.bf16.msra.mxu0 %v266
        %273 = vmatprep.subr.bf16.mxu0 0
        %274 = vmatpush1.bf16.msra.mxu0 0
        %275 = vmatprep.subr.bf16.mxu0 0
        %276 = vmatpush1.bf16.msra.mxu0 0
        %277 = vmatprep.subr.bf16.mxu0 0
        %278 = vmatpush1.bf16.msra.mxu0 0
        %279 = vmatprep.subr.bf16.mxu0 0
        %280 = vmatpush1.bf16.msra.mxu0 0
        %281 = vmatprep.subr.bf16.mxu0 0
        %282 = vmatpush1.bf16.msra.mxu0 0
        %283 = vmatprep.subr.bf16.mxu0 0
        %284 = vmatpush1.bf16.msra.mxu0 0
        %285 = vmatprep.subr.bf16.mxu0 0
        %286 = vmatpush1.bf16.msra.mxu0 0
        %287 = vmatprep.subr.bf16.mxu0 0
        %288 = vmatpush1.bf16.msra.mxu0 0
        %289 = vmatprep.subr.bf16.mxu0 0
        %290 = vmatpush1.bf16.msra.mxu0 0
        %291 = vmatprep.subr.bf16.mxu0 0
        %292 = vmatpush1.bf16.msra.mxu0 0
        %293 = vmatprep.subr.bf16.mxu0 0
        %294 = vmatpush1.bf16.msra.mxu0 0
        %295 = vmatprep.subr.bf16.mxu0 0
        %296 = vmatpush1.bf16.msra.mxu0 0
        %297 = vmatprep.subr.bf16.mxu0 0
        %298 = vmatpush1.bf16.msra.mxu0 0
        %299 = vmatprep.subr.bf16.mxu0 0
        %300 = vmatpush1.bf16.msra.mxu0 0
        %301 = vmatprep.subr.bf16.mxu0 0
        %302 = vmatpush1.bf16.msra.mxu0 0
        %303 = vmatprep.mubr.bf16.mxu0 0
        %304 = vmatmul.mubr.bf16.gmra.mrb[0].mxu0 %v262
        %v305 = vpop.f32.mrb[0].mxu0
        %v306 = vadd.f32 %v250, %v305
        %v307 = vpop.f32.mrb[0].mxu0
        %v308 = vadd.f32 %v250, %v307
        %v309 = vpop.f32.mrb[0].mxu0
        %v310 = vpop.f32.mrb[0].mxu0
        %311 = vdwg.mxu0
        %v312 = vmax.f32 %v306, 0.0
        %v313 = vmax.f32 %v308, 0.0
        %v316 = vcombine.low %v312, %v313
        %318 = vst [vmem:[%s235] sm:$0xff] %v316
        %s319 = sand.u32 %s112, 1
        %s320 = sand.u32 %s112, 1
        %s321 = smul.addr %s320, 8
        %s322 = scalar_lea.vmem [#allocation3], %s321
        // Predicated region
        $region71: #{hourglass_forward.27} parent=65 // pred_check
          %p323 = pneg %p122
        $region72: #{hourglass_forward.27} parent=65 // pred_check_branch
          %325 = sbr.rel (%p323) target = $region74
        $region73: #{hourglass_forward.27} parent=65 // pred_region
          %s326 = smul.u32 2, %s20
          %s327 = smul.addr %s19, 4
          %s328 = sadd.s32 %s326, %s327
          %s329 = smul.addr %s328, 4
          %s330 = scalar_lea.vmem %s4, %s329
          // Predicated region
          $region75: #{hourglass_forward.27} parent=73 // pred_check
            _
          $region76: #{hourglass_forward.27} parent=73 // pred_check_branch
            %332 = sbr.rel (0) target = $region78
          $region77: #{hourglass_forward.27} parent=73 // pred_region
            // Predicated region
            $region79: #{hourglass_forward.27} parent=77 // pred_check
              _
            $region80: #{hourglass_forward.27} parent=77 // pred_check_branch
              %334 = sbr.rel (0) target = $region82
            $region81: #{hourglass_forward.27} parent=77 // pred_region
              // Predicated region
              $region94: #{hourglass_forward.27} parent=81 // pred_check
                _
              $region95: #{hourglass_forward.27} parent=81 // pred_check_branch
                %349 = sbr.rel (0) target = $region97
              $region96: #{hourglass_forward.27} parent=81 // pred_region
                loop: start=0, step=1, limit=1
                $region98: #{hourglass_forward.27} parent=96 // loop_pre_header
                  _
                $region99: #{hourglass_forward.27} parent=96 // loop_header
                  %s351 = sphi 0, %s355
                  %p352 = scmp.ge.s32.totalorder %s351, 1
                  %s356 = sphi %s322, %s322
                  %s357 = sphi %s330, %s330
                $region100: #{hourglass_forward.27} parent=96 // loop_header_branch
                  %354 = sbr.rel (%p352) target = $region104
                $region101: #{hourglass_forward.27} parent=96 // loop_body
                  %v358 = vld [vmem:[%s356] sm:$0xff]
                  %359 = vst [vmem:[%s357] sm:$0xff] %v358
                $region102: #{hourglass_forward.27} parent=96 // loop_footer
                  %s355 = sadd.s32 1, %s351
                $region103: #{hourglass_forward.27} parent=96 // loop_footer_branch
                  %350 = sbr.rel target = $region99
                $region104: #{hourglass_forward.27} parent=96 // loop_exit
                  _
              $region97: #{hourglass_forward.27} parent=81 // pred_fallthru
                _
              // Predicated region
              $region105: #{hourglass_forward.27} parent=81 // pred_check
                _
              $region106: #{hourglass_forward.27} parent=81 // pred_check_branch
                %361 = sbr.rel target = $region108
              $region107: #{hourglass_forward.27} parent=81 // pred_region
                _
              $region108: #{hourglass_forward.27} parent=81 // pred_fallthru
                _
            $region82: #{hourglass_forward.27} parent=77 // pred_fallthru
              _
            // Predicated region
            $region83: #{hourglass_forward.27} parent=77 // pred_check
              _
            $region84: #{hourglass_forward.27} parent=77 // pred_check_branch
              %336 = sbr.rel target = $region86
            $region85: #{hourglass_forward.27} parent=77 // pred_region
              loop: start=0, step=1, limit=1
              $region87: #{hourglass_forward.27} parent=85 // loop_pre_header
                _
              $region88: #{hourglass_forward.27} parent=85 // loop_header
                %s339 = sphi 0, %s343
                %p340 = scmp.ge.s32.totalorder %s339, 1
                %s344 = sphi %s322, %s322
                %s345 = sphi %s330, %s330
              $region89: #{hourglass_forward.27} parent=85 // loop_header_branch
                %342 = sbr.rel (%p340) target = $region93
              $region90: #{hourglass_forward.27} parent=85 // loop_body
                %v346 = vld [vmem:[%s344] sm:$0xff]
                %347 = vst [vmem:[%s345] sm:$0xff] %v346
              $region91: #{hourglass_forward.27} parent=85 // loop_footer
                %s343 = sadd.s32 1, %s339
              $region92: #{hourglass_forward.27} parent=85 // loop_footer_branch
                %338 = sbr.rel target = $region88
              $region93: #{hourglass_forward.27} parent=85 // loop_exit
                _
            $region86: #{hourglass_forward.27} parent=77 // pred_fallthru
              _
          $region78: #{hourglass_forward.27} parent=73 // pred_fallthru
            _
          %362 = vnop
        $region74: #{hourglass_forward.27} parent=65 // pred_fallthru
          _
      $region66: #{hourglass_forward.27} parent=5 // pred_fallthru
        _
      %p363 = scmp.le.s32.totalorder 2, %s10
      // Predicated region
      $region109: #{hourglass_forward.27} parent=5 // pred_check
        %p364 = pneg %p363
      $region110: #{hourglass_forward.27} parent=5 // pred_check_branch
        %366 = sbr.rel (%p364) target = $region112
      $region111: #{hourglass_forward.27} parent=5 // pred_region
        %s367 = ssub.s32 %s10, 2
        // Predicated region
        $region113: #{hourglass_forward.27} parent=111 // pred_check
          %p368 = pneg %p128
        $region114: #{hourglass_forward.27} parent=111 // pred_check_branch
          %370 = sbr.rel (%p368) target = $region116
        $region115: #{hourglass_forward.27} parent=111 // pred_region
          %s371 = sand.u32 %s113, 1
          %s372 = sand.u32 %s113, 1
          %s373 = smul.addr %s372, 8
          %s374 = scalar_lea.vmem [#allocation3], %s373
        $region116: #{hourglass_forward.27} parent=111 // pred_fallthru
          _
      $region112: #{hourglass_forward.27} parent=5 // pred_fallthru
        _
    $region6: #{hourglass_forward.27} parent=1 // loop_footer
      %s14 = sadd.s32 1, %s10
    $region7: #{hourglass_forward.27} parent=1 // loop_footer_branch
      %9 = sbr.rel target = $region3
    $region8: #{hourglass_forward.27} parent=1 // loop_exit
      _

// kernel: hourglass_forward.22
$region0: #{hourglass_forward.22}
  #allocation0 [shape = 'u32[]', space=smem, size = 0x4, offset = 0x4, fixed_abs, tag = 'smem constant byte address 0x4 - core index']
  #allocation1 [shape = 'u32[144,128]{1,0:T(1,128)}', space=vmem, size = 0x12000, scoped, tag = 'internal scratch']
  %s0 = inlined_call_operand.vmem [shape: bf16[3,4,20], index: 0, kind: input, shape index: {}]
  %s1 = inlined_call_operand.vmem [shape: bf16[3,20,512], index: 1, kind: input, shape index: {}]
  %s2 = inlined_call_operand.vmem [shape: f32[4,1], index: 2, kind: input, shape index: {}]
  %s3 = inlined_call_operand.vmem [shape: f32[3,4,512], index: 3, kind: output, shape index: {}]
  %s4 = sld [smem:[#allocation0]]
  $region83: #{hourglass_forward.22} parent=0
    _
  %s6 = ssub.s32 1, %s4
  %s7 = scalar_select 0, %s6, %s4
  $region1: #{hourglass_forward.22} parent=0
    #allocation2 [shape = 'u8[24576]{0}', space=vmem, size = 0x6000, scoped, tag = 'input window, operand 1']
    loop: start=0, step=1, limit=8
    $region2: #{hourglass_forward.22} parent=1 // loop_pre_header
      _
    $region3: #{hourglass_forward.22} parent=1 // loop_header
      %s9 = sphi 0, %s13
      %p10 = scmp.ge.s32.totalorder %s9, 8
      %s16 = sphi 0, %s28
      %s17 = sphi 0, %s24
      %s18 = sphi 0, %s16
      %s19 = sphi 0, %s17
      %s20 = sphi 0, %s18
      %s21 = sphi 0, %s19
      %s31 = sphi 0, %s33
      %s34 = sphi 0, %s31
      %s35 = sphi 0, %s34
      %s51 = sphi 0, %s35
      %s59 = sphi 0, %s61
      %s62 = sphi 0, %s59
      %s63 = sphi 0, %s62
      %s79 = sphi 0, %s63
      %s83 = sphi 0, %s83
      %s85 = sphi 0, %s83
      %s86 = sphi 0, %s85
      %s100 = sphi 0, %s86
      %s108 = sphi 0, %s110
      %s111 = sphi 0, %s108
      %s112 = sphi 0, %s111
      %s128 = sphi 0, %s112
    $region4: #{hourglass_forward.22} parent=1 // loop_header_branch
      %12 = sbr.rel (%p10) target = $region8
    $region5: #{hourglass_forward.22} parent=1 // loop_body
      %s14 = ssub.s32 %s9, 1
      %s15 = ssub.s32 %s9, 2
      %s22 = sadd.s32 1, %s17
      %p23 = scmp.ge.s32.totalorder %s22, 2
      %s24 = scalar_select %p23, 0, %s22
      %s25 = sadd.s32 1, %s16
      %s26 = scalar_select %p23, %s25, %s16
      %p27 = scmp.ge.s32.totalorder %s26, 3
      %s28 = scalar_select %p27, 0, %s26
      %s29 = ssub.s32 %s16, %s28
      %p30 = scmp.eq.s32.totalorder %s29, 0
      %s32 = sadd.s32 %s31, 1
      %s33 = scalar_select %p30, %s31, %s32
      %p36 = pneg %p30
      %p37 = scmp.eq.s32.totalorder %s9, 5
      %p38 = por %p36, %p37
      %p39 = scmp.ne.s32.totalorder %s31, %s34
      %p40 = scmp.eq.s32.totalorder %s9, 0
      %p41 = por %p39, %p40
      %p42 = scmp.ne.s32.totalorder %s31, %s34
      %p43 = scmp.eq.s32.totalorder %s14, 5
      %p44 = por %p42, %p43
      %p45 = scmp.ne.s32.totalorder %s34, %s35
      %p46 = scmp.eq.s32.totalorder %s14, 0
      %p47 = por %p45, %p46
      %p48 = scmp.ne.s32.totalorder %s34, %s35
      %p49 = scmp.eq.s32.totalorder %s15, 5
      %p50 = por %p48, %p49
      %p52 = scmp.ne.s32.totalorder %s35, %s51
      %p53 = scmp.eq.s32.totalorder %s15, 0
      %p54 = por %p52, %p53
      %s55 = ssub.s32 %s16, %s28
      %s56 = ssub.s32 %s17, %s24
      %s57 = sor.u32 %s55, %s56
      %p58 = scmp.eq.s32.totalorder %s57, 0
      %s60 = sadd.s32 %s59, 1
      %s61 = scalar_select %p58, %s59, %s60
      %p64 = pneg %p58
      %p65 = scmp.eq.s32.totalorder %s9, 5
      %p66 = por %p64, %p65
      %p67 = scmp.ne.s32.totalorder %s59, %s62
      %p68 = scmp.eq.s32.totalorder %s9, 0
      %p69 = por %p67, %p68
      %p70 = scmp.ne.s32.totalorder %s59, %s62
      %p71 = scmp.eq.s32.totalorder %s14, 5
      %p72 = por %p70, %p71
      %p73 = scmp.ne.s32.totalorder %s62, %s63
      %p74 = scmp.eq.s32.totalorder %s14, 0
      %p75 = por %p73, %p74
      %p76 = scmp.ne.s32.totalorder %s62, %s63
      %p77 = scmp.eq.s32.totalorder %s15, 5
      %p78 = por %p76, %p77
      %p80 = scmp.ne.s32.totalorder %s63, %s79
      %p81 = scmp.eq.s32.totalorder %s15, 0
      %p82 = por %p80, %p81
      %s84 = sadd.s32 %s83, 1
      %p87 = scmp.eq.s32.totalorder %s9, 5
      %p88 = scmp.ne.s32.totalorder %s83, %s85
      %p89 = scmp.eq.s32.totalorder %s9, 0
      %p90 = por %p88, %p89
      %p91 = scmp.ne.s32.totalorder %s83, %s85
      %p92 = scmp.eq.s32.totalorder %s14, 5
      %p93 = por %p91, %p92
      %p94 = scmp.ne.s32.totalorder %s85, %s86
      %p95 = scmp.eq.s32.totalorder %s14, 0
      %p96 = por %p94, %p95
      %p97 = scmp.ne.s32.totalorder %s85, %s86
      %p98 = scmp.eq.s32.totalorder %s15, 5
      %p99 = por %p97, %p98
      %p101 = scmp.ne.s32.totalorder %s86, %s100
      %p102 = scmp.eq.s32.totalorder %s15, 0
      %p103 = por %p101, %p102
      %s104 = ssub.s32 %s16, %s28
      %s105 = ssub.s32 %s17, %s24
      %s106 = sor.u32 %s104, %s105
      %p107 = scmp.eq.s32.totalorder %s106, 0
      %s109 = sadd.s32 %s108, 1
      %s110 = scalar_select %p107, %s108, %s109
      %p113 = pneg %p107
      %p114 = scmp.eq.s32.totalorder %s9, 5
      %p115 = por %p113, %p114
      %p116 = scmp.ne.s32.totalorder %s108, %s111
      %p117 = scmp.eq.s32.totalorder %s9, 0
      %p118 = por %p116, %p117
      %p119 = scmp.ne.s32.totalorder %s108, %s111
      %p120 = scmp.eq.s32.totalorder %s14, 5
      %p121 = por %p119, %p120
      %p122 = scmp.ne.s32.totalorder %s111, %s112
      %p123 = scmp.eq.s32.totalorder %s14, 0
      %p124 = por %p122, %p123
      %p125 = scmp.ne.s32.totalorder %s111, %s112
      %p126 = scmp.eq.s32.totalorder %s15, 5
      %p127 = por %p125, %p126
      %p129 = scmp.ne.s32.totalorder %s112, %s128
      %p130 = scmp.eq.s32.totalorder %s15, 0
      %p131 = por %p129, %p130
      %p132 = scmp.le.s32.totalorder 1, %s9
      %p133 = scmp.lt.s32.totalorder %s9, 7
      %p134 = pnand %p132, %p133
      %p135 = pneg %p134
      // Predicated region
      $region9: #{hourglass_forward.22} parent=5 // pred_check
        _
      $region10: #{hourglass_forward.22} parent=5 // pred_check_branch
        %137 = sbr.rel (%p134) target = $region12
      $region11: #{hourglass_forward.22} parent=5 // pred_region
        %s138 = ssub.s32 %s9, 1
        // Predicated region
        $region13: #{hourglass_forward.22} parent=11 // pred_check
          %p139 = pneg %p96
        $region14: #{hourglass_forward.22} parent=11 // pred_check_branch
          %141 = sbr.rel (%p139) target = $region16
        $region15: #{hourglass_forward.22} parent=11 // pred_region
          _
        $region16: #{hourglass_forward.22} parent=11 // pred_fallthru
          _
      $region12: #{hourglass_forward.22} parent=5 // pred_fallthru
        _
      %p142 = scmp.lt.s32.totalorder %s9, 6
      // Predicated region
      $region17: #{hourglass_forward.22} parent=5 // pred_check
        %p143 = pneg %p142
      $region18: #{hourglass_forward.22} parent=5 // pred_check_branch
        %145 = sbr.rel (%p143) target = $region20
      $region19: #{hourglass_forward.22} parent=5 // pred_region
        // Predicated region
        $region21: #{hourglass_forward.22} parent=19 // pred_check
          %p146 = pneg %p41
        $region22: #{hourglass_forward.22} parent=19 // pred_check_branch
          %148 = sbr.rel (%p146) target = $region24
        $region23: #{hourglass_forward.22} parent=19 // pred_region
          %p149 = scmp.lt.s32.totalorder %s16, 2
          %s150 = scalar_select %p149, %s16, 2
          %s151 = smul.addr %s150, 2
          %s152 = scalar_lea.vmem %s0, %s151
        $region24: #{hourglass_forward.22} parent=19 // pred_fallthru
          _
        // Predicated region
        $region25: #{hourglass_forward.22} parent=19 // pred_check
          %p153 = pneg %p69
        $region26: #{hourglass_forward.22} parent=19 // pred_check_branch
          %155 = sbr.rel (%p153) target = $region28
        $region27: #{hourglass_forward.22} parent=19 // pred_region
          %s156 = sand.u32 %s59, 1
          %s157 = sand.u32 %s59, 1
          %s158 = smul.addr %s157, 24
          %s159 = scalar_lea.vmem [#allocation2], %s158
          %s160 = smul.u32 2, %s17
          %s161 = smul.addr %s16, 12
          %s162 = sadd.s32 %s160, %s161
          %s163 = smul.addr %s162, 4
          %s164 = scalar_lea.vmem %s1, %s163
          // Predicated region
          $region29: #{hourglass_forward.22} parent=27 // pred_check
            _
          $region30: #{hourglass_forward.22} parent=27 // pred_check_branch
            %166 = sbr.rel (0) target = $region32
          $region31: #{hourglass_forward.22} parent=27 // pred_region
            // Predicated region
            $region33: #{hourglass_forward.22} parent=31 // pred_check
              _
            $region34: #{hourglass_forward.22} parent=31 // pred_check_branch
              %168 = sbr.rel (0) target = $region36
            $region35: #{hourglass_forward.22} parent=31 // pred_region
              // Predicated region
              $region48: #{hourglass_forward.22} parent=35 // pred_check
                _
              $region49: #{hourglass_forward.22} parent=35 // pred_check_branch
                %187 = sbr.rel (0) target = $region51
              $region50: #{hourglass_forward.22} parent=35 // pred_region
                loop: start=0, step=1, limit=1
                $region52: #{hourglass_forward.22} parent=50 // loop_pre_header
                  _
                $region53: #{hourglass_forward.22} parent=50 // loop_header
                  %s189 = sphi 0, %s193
                  %p190 = scmp.ge.s32.totalorder %s189, 1
                  %s194 = sphi %s164, %s164
                  %s195 = sphi %s159, %s159
                $region54: #{hourglass_forward.22} parent=50 // loop_header_branch
                  %192 = sbr.rel (%p190) target = $region58
                $region55: #{hourglass_forward.22} parent=50 // loop_body
                  %v196 = vld [vmem:[%s194] sm:$0xff]
                  %197 = vst [vmem:[%s195] sm:$0xff] %v196
                  %v198 = vld [vmem:[%s194 + $0x10] sm:$0xff]
                  %199 = vst [vmem:[%s195 + $0x8] sm:$0xff] %v198
                  %v200 = vld [vmem:[%s194 + $0x20] sm:$0xff]
                  %201 = vst [vmem:[%s195 + $0x10] sm:$0xff] %v200
                $region56: #{hourglass_forward.22} parent=50 // loop_footer
                  %s193 = sadd.s32 1, %s189
                $region57: #{hourglass_forward.22} parent=50 // loop_footer_branch
                  %188 = sbr.rel target = $region53
                $region58: #{hourglass_forward.22} parent=50 // loop_exit
                  _
              $region51: #{hourglass_forward.22} parent=35 // pred_fallthru
                _
              // Predicated region
              $region59: #{hourglass_forward.22} parent=35 // pred_check
                _
              $region60: #{hourglass_forward.22} parent=35 // pred_check_branch
                %203 = sbr.rel target = $region62
              $region61: #{hourglass_forward.22} parent=35 // pred_region
                _
              $region62: #{hourglass_forward.22} parent=35 // pred_fallthru
                _
            $region36: #{hourglass_forward.22} parent=31 // pred_fallthru
              _
            // Predicated region
            $region37: #{hourglass_forward.22} parent=31 // pred_check
              _
            $region38: #{hourglass_forward.22} parent=31 // pred_check_branch
              %170 = sbr.rel target = $region40
            $region39: #{hourglass_forward.22} parent=31 // pred_region
              loop: start=0, step=1, limit=1
              $region41: #{hourglass_forward.22} parent=39 // loop_pre_header
                _
              $region42: #{hourglass_forward.22} parent=39 // loop_header
                %s173 = sphi 0, %s177
                %p174 = scmp.ge.s32.totalorder %s173, 1
                %s178 = sphi %s164, %s164
                %s179 = sphi %s159, %s159
              $region43: #{hourglass_forward.22} parent=39 // loop_header_branch
                %176 = sbr.rel (%p174) target = $region47
              $region44: #{hourglass_forward.22} parent=39 // loop_body
                %v180 = vld [vmem:[%s178] sm:$0xff]
                %181 = vst [vmem:[%s179] sm:$0xff] %v180
                %v182 = vld [vmem:[%s178 + $0x10] sm:$0xff]
                %183 = vst [vmem:[%s179 + $0x8] sm:$0xff] %v182
                %v184 = vld [vmem:[%s178 + $0x20] sm:$0xff]
                %185 = vst [vmem:[%s179 + $0x10] sm:$0xff] %v184
              $region45: #{hourglass_forward.22} parent=39 // loop_footer
                %s177 = sadd.s32 1, %s173
              $region46: #{hourglass_forward.22} parent=39 // loop_footer_branch
                %172 = sbr.rel target = $region42
              $region47: #{hourglass_forward.22} parent=39 // loop_exit
                _
            $region40: #{hourglass_forward.22} parent=31 // pred_fallthru
              _
          $region32: #{hourglass_forward.22} parent=27 // pred_fallthru
            _
          %204 = vnop
        $region28: #{hourglass_forward.22} parent=19 // pred_fallthru
          _
      $region20: #{hourglass_forward.22} parent=5 // pred_fallthru
        _
      %p205 = scmp.le.s32.totalorder 1, %s9
      %p206 = scmp.lt.s32.totalorder %s9, 7
      %p207 = pnand %p205, %p206
      %p208 = pneg %p207
      // Predicated region
      $region63: #{hourglass_forward.22} parent=5 // pred_check
        _
      $region64: #{hourglass_forward.22} parent=5 // pred_check_branch
        %210 = sbr.rel (%p207) target = $region66
      $region65: #{hourglass_forward.22} parent=5 // pred_region
        %s211 = ssub.s32 %s9, 1
        %s212 = sand.u32 %s62, 1
        %s213 = sand.u32 %s62, 1
        %s214 = smul.addr %s213, 24
        %s215 = scalar_lea.vmem [#allocation2], %s214
        // Predicated region
        $region67: #{hourglass_forward.22} parent=65 // pred_check
          %p216 = pneg %p75
        $region68: #{hourglass_forward.22} parent=65 // pred_check_branch
          %218 = sbr.rel (%p216) target = $region70
        $region69: #{hourglass_forward.22} parent=65 // pred_region
          _
        $region70: #{hourglass_forward.22} parent=65 // pred_fallthru
          _
        %p219 = scmp.lt.s32.totalorder %s18, 2
        %s220 = scalar_select %p219, %s18, 2
        %s221 = smul.addr %s220, 2
        %s222 = scalar_lea.vmem %s0, %s221
        %p223 = pneg %p47
        %p224 = pneg %p44
        %s225 = sand.u32 %s62, 1
        %s226 = sand.u32 %s62, 1
        %s227 = smul.addr %s226, 24
        %s228 = scalar_lea.vmem [#allocation2], %s227
        %p229 = pneg %p75
        %p230 = pneg %p72
        %p231 = pneg %p96
        %p232 = pneg %p93
        %p233 = pneg %p124
        %p234 = pneg %p121
        %s235 = smul.u32 2, %s19
        %p236 = scmp.lt.s32.totalorder %s18, 2
        %s237 = scalar_select %p236, %s18, 2
        %p238 = scmp.lt.s32.totalorder %s235, 3
        %s239 = scalar_select %p238, %s235, 3
        %s240 = smul.addr %s237, 4
        %s241 = sadd.s32 %s239, %s240
        %s242 = smul.addr %s241, 4
        %s243 = scalar_lea.vmem %s3, %s242
        %p244 = scmp.lt.s32.totalorder %s18, 2
        %s245 = scalar_select %p244, %s18, 2
        %s246 = smul.addr %s245, 2
        %s247 = scalar_lea.vmem %s0, %s246
        %s248 = smul.u32 2, %s19
        %s249 = smul.u32 2, %s19
        %p250 = scmp.lt.s32.totalorder %s18, 2
        %s251 = scalar_select %p250, %s18, 2
        %p252 = scmp.lt.s32.totalorder %s249, 3
        %s253 = scalar_select %p252, %s249, 3
        %s254 = smul.addr %s251, 4
        %s255 = sadd.s32 %s253, %s254
        %s256 = smul.addr %s255, 4
        %s257 = scalar_lea.vmem %s3, %s256
        %s258 = smul.u32 2, %s19
        %v260 = vld [vmem:[%s247] sm:$0x3]
        %v261 = vld [vmem:[%s215] sm:$0xff]
        %v262 = vld [vmem:[%s215 + $0x8] sm:$0xff]
        %v263 = vld [vmem:[%s215 + $0x10] sm:$0x33]
        %v264 = vld [vmem:[%s2] sm:$0xf]
        %266 = vset.pattern.permute.xlu0 0
        %267 = vperm.xlu0 %266, %v264
        %v268 = vpop.permute.xlu0 %267
        %v273 = vunpack.c.l.b16 %v261
        %v274 = vunpack.c.h.b16 %v261
        %v275 = vunpack.c.l.b16 %v262
        %v276 = vunpack.c.h.b16 %v262
        %v277 = vunpack.c.l.b16 %v263
        %v278 = vunpack.c.h.b16 %v263
        %v279 = vpack.c.b16 %v275, %v273
        %v280 = vpack.c.b16 %v276, %v274
        %v281 = vpack.c.b16 %v277, %v277
        %v282 = vpack.c.b16 %v278, %v278
        %vm285 = vcmask 162816
        %v287 = vsel %vm285, %v260, 0
        %vm289 = vcmask 1041408
        %v291 = vsel %vm289, %v281, 0
        %v294 = vsel %vm289, %v282, 0
        %296 = vmatprep.subr.bf16.mxu0 %v280
        %297 = vmatpush1.bf16.msra.mxu0 %v279
        %298 = vmatprep.subr.bf16.mxu0 %v294
        %299 = vmatpush1.bf16.msra.mxu0 %v291
        %300 = vmatprep.subr.bf16.mxu0 0
        %301 = vmatpush1.bf16.msra.mxu0 0
        %302 = vmatprep.subr.bf16.mxu0 0
        %303 = vmatpush1.bf16.msra.mxu0 0
        %304 = vmatprep.subr.bf16.mxu0 0
        %305 = vmatpush1.bf16.msra.mxu0 0
        %306 = vmatprep.subr.bf16.mxu0 0
        %307 = vmatpush1.bf16.msra.mxu0 0
        %308 = vmatprep.subr.bf16.mxu0 0
        %309 = vmatpush1.bf16.msra.mxu0 0
        %310 = vmatprep.subr.bf16.mxu0 0
        %311 = vmatpush1.bf16.msra.mxu0 0
        %312 = vmatprep.subr.bf16.mxu0 0
        %313 = vmatpush1.bf16.msra.mxu0 0
        %314 = vmatprep.subr.bf16.mxu0 0
        %315 = vmatpush1.bf16.msra.mxu0 0
        %316 = vmatprep.subr.bf16.mxu0 0
        %317 = vmatpush1.bf16.msra.mxu0 0
        %318 = vmatprep.subr.bf16.mxu0 0
        %319 = vmatpush1.bf16.msra.mxu0 0
        %320 = vmatprep.subr.bf16.mxu0 0
        %321 = vmatpush1.bf16.msra.mxu0 0
        %322 = vmatprep.subr.bf16.mxu0 0
        %323 = vmatpush1.bf16.msra.mxu0 0
        %324 = vmatprep.subr.bf16.mxu0 0
        %325 = vmatpush1.bf16.msra.mxu0 0
        %326 = vmatprep.subr.bf16.mxu0 0
        %327 = vmatpush1.bf16.msra.mxu0 0
        %328 = vmatprep.mubr.bf16.mxu0 0
        %329 = vmatmul.mubr.bf16.gmra.mrb[0].mxu0 %v287
        %v330 = vpop.f32.mrb[0].mxu0
        %v331 = vadd.f32 %v268, %v330
        %v332 = vpop.f32.mrb[0].mxu0
        %v333 = vadd.f32 %v268, %v332
        %v334 = vpop.f32.mrb[0].mxu0
        %v335 = vpop.f32.mrb[0].mxu0
        %336 = vdwg.mxu0
        %v337 = vmax.f32 %v331, 0.0
        %v338 = vmax.f32 %v333, 0.0
        %v341 = vcombine.low %v337, %v338
        %343 = vst [vmem:[%s257] sm:$0xff] %v341
        %s344 = smul.u32 2, %s19
        %p345 = scmp.lt.s32.totalorder %s18, 2
        %s346 = scalar_select %p345, %s18, 2
        %p347 = scmp.lt.s32.totalorder %s344, 3
        %s348 = scalar_select %p347, %s344, 3
        %s349 = smul.addr %s346, 4
        %s350 = sadd.s32 %s348, %s349
        %s351 = smul.addr %s350, 4
        %s352 = scalar_lea.vmem %s3, %s351
        // Predicated region
        $region71: #{hourglass_forward.22} parent=65 // pred_check
          %p353 = pneg %p121
        $region72: #{hourglass_forward.22} parent=65 // pred_check_branch
          %355 = sbr.rel (%p353) target = $region74
        $region73: #{hourglass_forward.22} parent=65 // pred_region
          %s356 = smul.u32 2, %s19
        $region74: #{hourglass_forward.22} parent=65 // pred_fallthru
          _
      $region66: #{hourglass_forward.22} parent=5 // pred_fallthru
        _
      %p357 = scmp.le.s32.totalorder 2, %s9
      // Predicated region
      $region75: #{hourglass_forward.22} parent=5 // pred_check
        %p358 = pneg %p357
      $region76: #{hourglass_forward.22} parent=5 // pred_check_branch
        %360 = sbr.rel (%p358) target = $region78
      $region77: #{hourglass_forward.22} parent=5 // pred_region
        %s361 = ssub.s32 %s9, 2
        // Predicated region
        $region79: #{hourglass_forward.22} parent=77 // pred_check
          %p362 = pneg %p127
        $region80: #{hourglass_forward.22} parent=77 // pred_check_branch
          %364 = sbr.rel (%p362) target = $region82
        $region81: #{hourglass_forward.22} parent=77 // pred_region
          %s365 = smul.u32 2, %s21
          %p366 = scmp.lt.s32.totalorder %s20, 2
          %s367 = scalar_select %p366, %s20, 2
          %p368 = scmp.lt.s32.totalorder %s365, 3
          %s369 = scalar_select %p368, %s365, 3
          %s370 = smul.addr %s367, 4
          %s371 = sadd.s32 %s369, %s370
          %s372 = smul.addr %s371, 4
          %s373 = scalar_lea.vmem %s3, %s372
        $region82: #{hourglass_forward.22} parent=77 // pred_fallthru
          _
      $region78: #{hourglass_forward.22} parent=5 // pred_fallthru
        _
    $region6: #{hourglass_forward.22} parent=1 // loop_footer
      %s13 = sadd.s32 1, %s9
    $region7: #{hourglass_forward.22} parent=1 // loop_footer_branch
      %8 = sbr.rel target = $region3
    $region8: #{hourglass_forward.22} parent=1 // loop_exit
      _

// kernel: hourglass_forward.23
$region0: #{hourglass_forward.23}
  #allocation0 [shape = 'u32[]', space=smem, size = 0x4, offset = 0x4, fixed_abs, tag = 'smem constant byte address 0x4 - core index']
  #allocation1 [shape = 'u32[144,128]{1,0:T(1,128)}', space=vmem, size = 0x12000, scoped, tag = 'internal scratch']
  %s0 = inlined_call_operand.vmem [shape: bf16[3,4,36], index: 0, kind: input, shape index: {}]
  %s1 = inlined_call_operand.vmem [shape: bf16[3,36,512], index: 1, kind: input, shape index: {}]
  %s2 = inlined_call_operand.vmem [shape: f32[4,1], index: 2, kind: input, shape index: {}]
  %s3 = inlined_call_operand.vmem [shape: f32[3,4,512], index: 3, kind: output, shape index: {}]
  %s4 = sld [smem:[#allocation0]]
  $region83: #{hourglass_forward.23} parent=0
    _
  %s6 = ssub.s32 1, %s4
  %s7 = scalar_select 0, %s6, %s4
  $region1: #{hourglass_forward.23} parent=0
    #allocation2 [shape = 'u8[40960]{0}', space=vmem, size = 0xa000, scoped, tag = 'input window, operand 1']
    loop: start=0, step=1, limit=8
    $region2: #{hourglass_forward.23} parent=1 // loop_pre_header
      _
    $region3: #{hourglass_forward.23} parent=1 // loop_header
      %s9 = sphi 0, %s13
      %p10 = scmp.ge.s32.totalorder %s9, 8
      %s16 = sphi 0, %s28
      %s17 = sphi 0, %s24
      %s18 = sphi 0, %s16
      %s19 = sphi 0, %s17
      %s20 = sphi 0, %s18
      %s21 = sphi 0, %s19
      %s31 = sphi 0, %s33
      %s34 = sphi 0, %s31
      %s35 = sphi 0, %s34
      %s51 = sphi 0, %s35
      %s59 = sphi 0, %s61
      %s62 = sphi 0, %s59
      %s63 = sphi 0, %s62
      %s79 = sphi 0, %s63
      %s83 = sphi 0, %s83
      %s85 = sphi 0, %s83
      %s86 = sphi 0, %s85
      %s100 = sphi 0, %s86
      %s108 = sphi 0, %s110
      %s111 = sphi 0, %s108
      %s112 = sphi 0, %s111
      %s128 = sphi 0, %s112
    $region4: #{hourglass_forward.23} parent=1 // loop_header_branch
      %12 = sbr.rel (%p10) target = $region8
    $region5: #{hourglass_forward.23} parent=1 // loop_body
      %s14 = ssub.s32 %s9, 1
      %s15 = ssub.s32 %s9, 2
      %s22 = sadd.s32 1, %s17
      %p23 = scmp.ge.s32.totalorder %s22, 2
      %s24 = scalar_select %p23, 0, %s22
      %s25 = sadd.s32 1, %s16
      %s26 = scalar_select %p23, %s25, %s16
      %p27 = scmp.ge.s32.totalorder %s26, 3
      %s28 = scalar_select %p27, 0, %s26
      %s29 = ssub.s32 %s16, %s28
      %p30 = scmp.eq.s32.totalorder %s29, 0
      %s32 = sadd.s32 %s31, 1
      %s33 = scalar_select %p30, %s31, %s32
      %p36 = pneg %p30
      %p37 = scmp.eq.s32.totalorder %s9, 5
      %p38 = por %p36, %p37
      %p39 = scmp.ne.s32.totalorder %s31, %s34
      %p40 = scmp.eq.s32.totalorder %s9, 0
      %p41 = por %p39, %p40
      %p42 = scmp.ne.s32.totalorder %s31, %s34
      %p43 = scmp.eq.s32.totalorder %s14, 5
      %p44 = por %p42, %p43
      %p45 = scmp.ne.s32.totalorder %s34, %s35
      %p46 = scmp.eq.s32.totalorder %s14, 0
      %p47 = por %p45, %p46
      %p48 = scmp.ne.s32.totalorder %s34, %s35
      %p49 = scmp.eq.s32.totalorder %s15, 5
      %p50 = por %p48, %p49
      %p52 = scmp.ne.s32.totalorder %s35, %s51
      %p53 = scmp.eq.s32.totalorder %s15, 0
      %p54 = por %p52, %p53
      %s55 = ssub.s32 %s16, %s28
      %s56 = ssub.s32 %s17, %s24
      %s57 = sor.u32 %s55, %s56
      %p58 = scmp.eq.s32.totalorder %s57, 0
      %s60 = sadd.s32 %s59, 1
      %s61 = scalar_select %p58, %s59, %s60
      %p64 = pneg %p58
      %p65 = scmp.eq.s32.totalorder %s9, 5
      %p66 = por %p64, %p65
      %p67 = scmp.ne.s32.totalorder %s59, %s62
      %p68 = scmp.eq.s32.totalorder %s9, 0
      %p69 = por %p67, %p68
      %p70 = scmp.ne.s32.totalorder %s59, %s62
      %p71 = scmp.eq.s32.totalorder %s14, 5
      %p72 = por %p70, %p71
      %p73 = scmp.ne.s32.totalorder %s62, %s63
      %p74 = scmp.eq.s32.totalorder %s14, 0
      %p75 = por %p73, %p74
      %p76 = scmp.ne.s32.totalorder %s62, %s63
      %p77 = scmp.eq.s32.totalorder %s15, 5
      %p78 = por %p76, %p77
      %p80 = scmp.ne.s32.totalorder %s63, %s79
      %p81 = scmp.eq.s32.totalorder %s15, 0
      %p82 = por %p80, %p81
      %s84 = sadd.s32 %s83, 1
      %p87 = scmp.eq.s32.totalorder %s9, 5
      %p88 = scmp.ne.s32.totalorder %s83, %s85
      %p89 = scmp.eq.s32.totalorder %s9, 0
      %p90 = por %p88, %p89
      %p91 = scmp.ne.s32.totalorder %s83, %s85
      %p92 = scmp.eq.s32.totalorder %s14, 5
      %p93 = por %p91, %p92
      %p94 = scmp.ne.s32.totalorder %s85, %s86
      %p95 = scmp.eq.s32.totalorder %s14, 0
      %p96 = por %p94, %p95
      %p97 = scmp.ne.s32.totalorder %s85, %s86
      %p98 = scmp.eq.s32.totalorder %s15, 5
      %p99 = por %p97, %p98
      %p101 = scmp.ne.s32.totalorder %s86, %s100
      %p102 = scmp.eq.s32.totalorder %s15, 0
      %p103 = por %p101, %p102
      %s104 = ssub.s32 %s16, %s28
      %s105 = ssub.s32 %s17, %s24
      %s106 = sor.u32 %s104, %s105
      %p107 = scmp.eq.s32.totalorder %s106, 0
      %s109 = sadd.s32 %s108, 1
      %s110 = scalar_select %p107, %s108, %s109
      %p113 = pneg %p107
      %p114 = scmp.eq.s32.totalorder %s9, 5
      %p115 = por %p113, %p114
      %p116 = scmp.ne.s32.totalorder %s108, %s111
      %p117 = scmp.eq.s32.totalorder %s9, 0
      %p118 = por %p116, %p117
      %p119 = scmp.ne.s32.totalorder %s108, %s111
      %p120 = scmp.eq.s32.totalorder %s14, 5
      %p121 = por %p119, %p120
      %p122 = scmp.ne.s32.totalorder %s111, %s112
      %p123 = scmp.eq.s32.totalorder %s14, 0
      %p124 = por %p122, %p123
      %p125 = scmp.ne.s32.totalorder %s111, %s112
      %p126 = scmp.eq.s32.totalorder %s15, 5
      %p127 = por %p125, %p126
      %p129 = scmp.ne.s32.totalorder %s112, %s128
      %p130 = scmp.eq.s32.totalorder %s15, 0
      %p131 = por %p129, %p130
      %p132 = scmp.le.s32.totalorder 1, %s9
      %p133 = scmp.lt.s32.totalorder %s9, 7
      %p134 = pnand %p132, %p133
      %p135 = pneg %p134
      // Predicated region
      $region9: #{hourglass_forward.23} parent=5 // pred_check
        _
      $region10: #{hourglass_forward.23} parent=5 // pred_check_branch
        %137 = sbr.rel (%p134) target = $region12
      $region11: #{hourglass_forward.23} parent=5 // pred_region
        %s138 = ssub.s32 %s9, 1
        // Predicated region
        $region13: #{hourglass_forward.23} parent=11 // pred_check
          %p139 = pneg %p96
        $region14: #{hourglass_forward.23} parent=11 // pred_check_branch
          %141 = sbr.rel (%p139) target = $region16
        $region15: #{hourglass_forward.23} parent=11 // pred_region
          _
        $region16: #{hourglass_forward.23} parent=11 // pred_fallthru
          _
      $region12: #{hourglass_forward.23} parent=5 // pred_fallthru
        _
      %p142 = scmp.lt.s32.totalorder %s9, 6
      // Predicated region
      $region17: #{hourglass_forward.23} parent=5 // pred_check
        %p143 = pneg %p142
      $region18: #{hourglass_forward.23} parent=5 // pred_check_branch
        %145 = sbr.rel (%p143) target = $region20
      $region19: #{hourglass_forward.23} parent=5 // pred_region
        // Predicated region
        $region21: #{hourglass_forward.23} parent=19 // pred_check
          %p146 = pneg %p41
        $region22: #{hourglass_forward.23} parent=19 // pred_check_branch
          %148 = sbr.rel (%p146) target = $region24
        $region23: #{hourglass_forward.23} parent=19 // pred_region
          %p149 = scmp.lt.s32.totalorder %s16, 2
          %s150 = scalar_select %p149, %s16, 2
          %s151 = smul.addr %s150, 2
          %s152 = scalar_lea.vmem %s0, %s151
        $region24: #{hourglass_forward.23} parent=19 // pred_fallthru
          _
        // Predicated region
        $region25: #{hourglass_forward.23} parent=19 // pred_check
          %p153 = pneg %p69
        $region26: #{hourglass_forward.23} parent=19 // pred_check_branch
          %155 = sbr.rel (%p153) target = $region28
        $region27: #{hourglass_forward.23} parent=19 // pred_region
          %s156 = sand.u32 %s59, 1
          %s157 = sand.u32 %s59, 1
          %s158 = smul.addr %s157, 40
          %s159 = scalar_lea.vmem [#allocation2], %s158
          %s160 = smul.u32 2, %s17
          %s161 = smul.addr %s16, 20
          %s162 = sadd.s32 %s160, %s161
          %s163 = smul.addr %s162, 4
          %s164 = scalar_lea.vmem %s1, %s163
          // Predicated region
          $region29: #{hourglass_forward.23} parent=27 // pred_check
            _
          $region30: #{hourglass_forward.23} parent=27 // pred_check_branch
            %166 = sbr.rel (0) target = $region32
          $region31: #{hourglass_forward.23} parent=27 // pred_region
            // Predicated region
            $region33: #{hourglass_forward.23} parent=31 // pred_check
              _
            $region34: #{hourglass_forward.23} parent=31 // pred_check_branch
              %168 = sbr.rel (0) target = $region36
            $region35: #{hourglass_forward.23} parent=31 // pred_region
              // Predicated region
              $region48: #{hourglass_forward.23} parent=35 // pred_check
                _
              $region49: #{hourglass_forward.23} parent=35 // pred_check_branch
                %191 = sbr.rel (0) target = $region51
              $region50: #{hourglass_forward.23} parent=35 // pred_region
                loop: start=0, step=1, limit=1
                $region52: #{hourglass_forward.23} parent=50 // loop_pre_header
                  _
                $region53: #{hourglass_forward.23} parent=50 // loop_header
                  %s193 = sphi 0, %s197
                  %p194 = scmp.ge.s32.totalorder %s193, 1
                  %s198 = sphi %s164, %s164
                  %s199 = sphi %s159, %s159
                $region54: #{hourglass_forward.23} parent=50 // loop_header_branch
                  %196 = sbr.rel (%p194) target = $region58
                $region55: #{hourglass_forward.23} parent=50 // loop_body
                  %v200 = vld [vmem:[%s198] sm:$0xff]
                  %201 = vst [vmem:[%s199] sm:$0xff] %v200
                  %v202 = vld [vmem:[%s198 + $0x10] sm:$0xff]
                  %203 = vst [vmem:[%s199 + $0x8] sm:$0xff] %v202
                  %v204 = vld [vmem:[%s198 + $0x20] sm:$0xff]
                  %205 = vst [vmem:[%s199 + $0x10] sm:$0xff] %v204
                  %v206 = vld [vmem:[%s198 + $0x30] sm:$0xff]
                  %207 = vst [vmem:[%s199 + $0x18] sm:$0xff] %v206
                  %v208 = vld [vmem:[%s198 + $0x40] sm:$0xff]
                  %209 = vst [vmem:[%s199 + $0x20] sm:$0xff] %v208
                $region56: #{hourglass_forward.23} parent=50 // loop_footer
                  %s197 = sadd.s32 1, %s193
                $region57: #{hourglass_forward.23} parent=50 // loop_footer_branch
                  %192 = sbr.rel target = $region53
                $region58: #{hourglass_forward.23} parent=50 // loop_exit
                  _
              $region51: #{hourglass_forward.23} parent=35 // pred_fallthru
                _
              // Predicated region
              $region59: #{hourglass_forward.23} parent=35 // pred_check
                _
              $region60: #{hourglass_forward.23} parent=35 // pred_check_branch
                %211 = sbr.rel target = $region62
              $region61: #{hourglass_forward.23} parent=35 // pred_region
                _
              $region62: #{hourglass_forward.23} parent=35 // pred_fallthru
                _
            $region36: #{hourglass_forward.23} parent=31 // pred_fallthru
              _
            // Predicated region
            $region37: #{hourglass_forward.23} parent=31 // pred_check
              _
            $region38: #{hourglass_forward.23} parent=31 // pred_check_branch
              %170 = sbr.rel target = $region40
            $region39: #{hourglass_forward.23} parent=31 // pred_region
              loop: start=0, step=1, limit=1
              $region41: #{hourglass_forward.23} parent=39 // loop_pre_header
                _
              $region42: #{hourglass_forward.23} parent=39 // loop_header
                %s173 = sphi 0, %s177
                %p174 = scmp.ge.s32.totalorder %s173, 1
                %s178 = sphi %s164, %s164
                %s179 = sphi %s159, %s159
              $region43: #{hourglass_forward.23} parent=39 // loop_header_branch
                %176 = sbr.rel (%p174) target = $region47
              $region44: #{hourglass_forward.23} parent=39 // loop_body
                %v180 = vld [vmem:[%s178] sm:$0xff]
                %181 = vst [vmem:[%s179] sm:$0xff] %v180
                %v182 = vld [vmem:[%s178 + $0x10] sm:$0xff]
                %183 = vst [vmem:[%s179 + $0x8] sm:$0xff] %v182
                %v184 = vld [vmem:[%s178 + $0x20] sm:$0xff]
                %185 = vst [vmem:[%s179 + $0x10] sm:$0xff] %v184
                %v186 = vld [vmem:[%s178 + $0x30] sm:$0xff]
                %187 = vst [vmem:[%s179 + $0x18] sm:$0xff] %v186
                %v188 = vld [vmem:[%s178 + $0x40] sm:$0xff]
                %189 = vst [vmem:[%s179 + $0x20] sm:$0xff] %v188
              $region45: #{hourglass_forward.23} parent=39 // loop_footer
                %s177 = sadd.s32 1, %s173
              $region46: #{hourglass_forward.23} parent=39 // loop_footer_branch
                %172 = sbr.rel target = $region42
              $region47: #{hourglass_forward.23} parent=39 // loop_exit
                _
            $region40: #{hourglass_forward.23} parent=31 // pred_fallthru
              _
          $region32: #{hourglass_forward.23} parent=27 // pred_fallthru
            _
          %212 = vnop
        $region28: #{hourglass_forward.23} parent=19 // pred_fallthru
          _
      $region20: #{hourglass_forward.23} parent=5 // pred_fallthru
        _
      %p213 = scmp.le.s32.totalorder 1, %s9
      %p214 = scmp.lt.s32.totalorder %s9, 7
      %p215 = pnand %p213, %p214
      %p216 = pneg %p215
      // Predicated region
      $region63: #{hourglass_forward.23} parent=5 // pred_check
        _
      $region64: #{hourglass_forward.23} parent=5 // pred_check_branch
        %218 = sbr.rel (%p215) target = $region66
      $region65: #{hourglass_forward.23} parent=5 // pred_region
        %s219 = ssub.s32 %s9, 1
        %s220 = sand.u32 %s62, 1
        %s221 = sand.u32 %s62, 1
        %s222 = smul.addr %s221, 40
        %s223 = scalar_lea.vmem [#allocation2], %s222
        // Predicated region
        $region67: #{hourglass_forward.23} parent=65 // pred_check
          %p224 = pneg %p75
        $region68: #{hourglass_forward.23} parent=65 // pred_check_branch
          %226 = sbr.rel (%p224) target = $region70
        $region69: #{hourglass_forward.23} parent=65 // pred_region
          _
        $region70: #{hourglass_forward.23} parent=65 // pred_fallthru
          _
        %p227 = scmp.lt.s32.totalorder %s18, 2
        %s228 = scalar_select %p227, %s18, 2
        %s229 = smul.addr %s228, 2
        %s230 = scalar_lea.vmem %s0, %s229
        %p231 = pneg %p47
        %p232 = pneg %p44
        %s233 = sand.u32 %s62, 1
        %s234 = sand.u32 %s62, 1
        %s235 = smul.addr %s234, 40
        %s236 = scalar_lea.vmem [#allocation2], %s235
        %p237 = pneg %p75
        %p238 = pneg %p72
        %p239 = pneg %p96
        %p240 = pneg %p93
        %p241 = pneg %p124
        %p242 = pneg %p121
        %s243 = smul.u32 2, %s19
        %p244 = scmp.lt.s32.totalorder %s18, 2
        %s245 = scalar_select %p244, %s18, 2
        %p246 = scmp.lt.s32.totalorder %s243, 3
        %s247 = scalar_select %p246, %s243, 3
        %s248 = smul.addr %s245, 4
        %s249 = sadd.s32 %s247, %s248
        %s250 = smul.addr %s249, 4
        %s251 = scalar_lea.vmem %s3, %s250
        %p252 = scmp.lt.s32.totalorder %s18, 2
        %s253 = scalar_select %p252, %s18, 2
        %s254 = smul.addr %s253, 2
        %s255 = scalar_lea.vmem %s0, %s254
        %s256 = smul.u32 2, %s19
        %s257 = smul.u32 2, %s19
        %p258 = scmp.lt.s32.totalorder %s18, 2
        %s259 = scalar_select %p258, %s18, 2
        %p260 = scmp.lt.s32.totalorder %s257, 3
        %s261 = scalar_select %p260, %s257, 3
        %s262 = smul.addr %s259, 4
        %s263 = sadd.s32 %s261, %s262
        %s264 = smul.addr %s263, 4
        %s265 = scalar_lea.vmem %s3, %s264
        %s266 = smul.u32 2, %s19
        %v268 = vld [vmem:[%s255] sm:$0x3]
        %v269 = vld [vmem:[%s223] sm:$0xff]
        %v270 = vld [vmem:[%s223 + $0x8] sm:$0xff]
        %v271 = vld [vmem:[%s223 + $0x10] sm:$0xff]
        %v272 = vld [vmem:[%s223 + $0x18] sm:$0xff]
        %v273 = vld [vmem:[%s223 + $0x20] sm:$0x33]
        %v274 = vld [vmem:[%s2] sm:$0xf]
        %276 = vset.pattern.permute.xlu0 0
        %277 = vperm.xlu0 %276, %v274
        %v278 = vpop.permute.xlu0 %277
        %v285 = vunpack.c.l.b16 %v269
        %v286 = vunpack.c.h.b16 %v269
        %v287 = vunpack.c.l.b16 %v270
        %v288 = vunpack.c.h.b16 %v270
        %v289 = vunpack.c.l.b16 %v271
        %v290 = vunpack.c.h.b16 %v271
        %v291 = vunpack.c.l.b16 %v272
        %v292 = vunpack.c.h.b16 %v272
        %v293 = vunpack.c.l.b16 %v273
        %v294 = vunpack.c.h.b16 %v273
        %v295 = vpack.c.b16 %v287, %v285
        %v296 = vpack.c.b16 %v288, %v286
        %v297 = vpack.c.b16 %v291, %v289
        %v298 = vpack.c.b16 %v292, %v290
        %v299 = vpack.c.b16 %v293, %v293
        %v300 = vpack.c.b16 %v294, %v294
        %vm305 = vcmask 293888
        %v307 = vsel %vm305, %v268, 0
        %vm309 = vcmask 1041408
        %v311 = vsel %vm309, %v299, 0
        %v314 = vsel %vm309, %v300, 0
        %316 = vmatprep.subr.bf16.mxu0 %v296
        %317 = vmatpush1.bf16.msra.mxu0 %v295
        %318 = vmatprep.subr.bf16.mxu0 %v298
        %319 = vmatpush1.bf16.msra.mxu0 %v297
        %320 = vmatprep.subr.bf16.mxu0 %v314
        %321 = vmatpush1.bf16.msra.mxu0 %v311
        %322 = vmatprep.subr.bf16.mxu0 0
        %323 = vmatpush1.bf16.msra.mxu0 0
        %324 = vmatprep.subr.bf16.mxu0 0
        %325 = vmatpush1.bf16.msra.mxu0 0
        %326 = vmatprep.subr.bf16.mxu0 0
        %327 = vmatpush1.bf16.msra.mxu0 0
        %328 = vmatprep.subr.bf16.mxu0 0
        %329 = vmatpush1.bf16.msra.mxu0 0
        %330 = vmatprep.subr.bf16.mxu0 0
        %331 = vmatpush1.bf16.msra.mxu0 0
        %332 = vmatprep.subr.bf16.mxu0 0
        %333 = vmatpush1.bf16.msra.mxu0 0
        %334 = vmatprep.subr.bf16.mxu0 0
        %335 = vmatpush1.bf16.msra.mxu0 0
        %336 = vmatprep.subr.bf16.mxu0 0
        %337 = vmatpush1.bf16.msra.mxu0 0
        %338 = vmatprep.subr.bf16.mxu0 0
        %339 = vmatpush1.bf16.msra.mxu0 0
        %340 = vmatprep.subr.bf16.mxu0 0
        %341 = vmatpush1.bf16.msra.mxu0 0
        %342 = vmatprep.subr.bf16.mxu0 0
        %343 = vmatpush1.bf16.msra.mxu0 0
        %344 = vmatprep.subr.bf16.mxu0 0
        %345 = vmatpush1.bf16.msra.mxu0 0
        %346 = vmatprep.subr.bf16.mxu0 0
        %347 = vmatpush1.bf16.msra.mxu0 0
        %348 = vmatprep.mubr.bf16.mxu0 0
        %349 = vmatmul.mubr.bf16.gmra.mrb[0].mxu0 %v307
        %v350 = vpop.f32.mrb[0].mxu0
        %v351 = vadd.f32 %v278, %v350
        %v352 = vpop.f32.mrb[0].mxu0
        %v353 = vadd.f32 %v278, %v352
        %v354 = vpop.f32.mrb[0].mxu0
        %v355 = vpop.f32.mrb[0].mxu0
        %356 = vdwg.mxu0
        %v357 = vmax.f32 %v351, 0.0
        %v358 = vmax.f32 %v353, 0.0
        %v361 = vcombine.low %v357, %v358
        %363 = vst [vmem:[%s265] sm:$0xff] %v361
        %s364 = smul.u32 2, %s19
        %p365 = scmp.lt.s32.totalorder %s18, 2
        %s366 = scalar_select %p365, %s18, 2
        %p367 = scmp.lt.s32.totalorder %s364, 3
        %s368 = scalar_select %p367, %s364, 3
        %s369 = smul.addr %s366, 4
        %s370 = sadd.s32 %s368, %s369
        %s371 = smul.addr %s370, 4
        %s372 = scalar_lea.vmem %s3, %s371
        // Predicated region
        $region71: #{hourglass_forward.23} parent=65 // pred_check
          %p373 = pneg %p121
        $region72: #{hourglass_forward.23} parent=65 // pred_check_branch
          %375 = sbr.rel (%p373) target = $region74
        $region73: #{hourglass_forward.23} parent=65 // pred_region
          %s376 = smul.u32 2, %s19
        $region74: #{hourglass_forward.23} parent=65 // pred_fallthru
          _
      $region66: #{hourglass_forward.23} parent=5 // pred_fallthru
        _
      %p377 = scmp.le.s32.totalorder 2, %s9
      // Predicated region
      $region75: #{hourglass_forward.23} parent=5 // pred_check
        %p378 = pneg %p377
      $region76: #{hourglass_forward.23} parent=5 // pred_check_branch
        %380 = sbr.rel (%p378) target = $region78
      $region77: #{hourglass_forward.23} parent=5 // pred_region
        %s381 = ssub.s32 %s9, 2
        // Predicated region
        $region79: #{hourglass_forward.23} parent=77 // pred_check
          %p382 = pneg %p127
        $region80: #{hourglass_forward.23} parent=77 // pred_check_branch
          %384 = sbr.rel (%p382) target = $region82
        $region81: #{hourglass_forward.23} parent=77 // pred_region
          %s385 = smul.u32 2, %s21
          %p386 = scmp.lt.s32.totalorder %s20, 2
          %s387 = scalar_select %p386, %s20, 2
          %p388 = scmp.lt.s32.totalorder %s385, 3
          %s389 = scalar_select %p388, %s385, 3
          %s390 = smul.addr %s387, 4
          %s391 = sadd.s32 %s389, %s390
          %s392 = smul.addr %s391, 4
          %s393 = scalar_lea.vmem %s3, %s392
        $region82: #{hourglass_forward.23} parent=77 // pred_fallthru
          _
      $region78: #{hourglass_forward.23} parent=5 // pred_fallthru
        _
    $region6: #{hourglass_forward.23} parent=1 // loop_footer
      %s13 = sadd.s32 1, %s9
    $region7: #{hourglass_forward.23} parent=1 // loop_footer_branch
      %8 = sbr.rel target = $region3
    $region8: #{hourglass_forward.23} parent=1 // loop_exit
      _

// kernel: hourglass_forward.26
$region0: #{hourglass_forward.26}
  #allocation0 [shape = 'u32[]', space=smem, size = 0x4, offset = 0x4, fixed_abs, tag = 'smem constant byte address 0x4 - core index']
  #allocation1 [shape = 'u32[144,128]{1,0:T(1,128)}', space=vmem, size = 0x12000, scoped, tag = 'internal scratch']
  %s0 = inlined_call_operand.vmem [shape: f32[8,4,512], index: 0, kind: input, shape index: {}, may-alias: {0,4}]
  %s1 = inlined_call_operand.vmem [shape: bf16[1,4,68], index: 1, kind: input, shape index: {}]
  %s2 = inlined_call_operand.vmem [shape: bf16[1,68,512], index: 2, kind: input, shape index: {}]
  %s3 = inlined_call_operand.vmem [shape: f32[4,1], index: 3, kind: input, shape index: {}]
  %s4 = inlined_call_operand.vmem [shape: f32[8,4,512], index: 4, kind: output, shape index: {}, may-alias: {0,4}]
  %s5 = scalar_lea.vmem %s4, 112
  %s6 = sld [smem:[#allocation0]]
  $region117: #{hourglass_forward.26} parent=0
    _
  %s8 = ssub.s32 1, %s6
  %s9 = scalar_select 0, %s8, %s6
  $region1: #{hourglass_forward.26} parent=0
    #allocation2 [shape = 'u8[73728]{0}', space=vmem, size = 0x12000, scoped, tag = 'input window, operand 1']
    #allocation3 [shape = 'u8[8192]{0}', space=vmem, size = 0x2000, scoped, tag = 'output window, operand 0']
    loop: start=0, step=1, limit=4
    $region2: #{hourglass_forward.26} parent=1 // loop_pre_header
      _
    $region3: #{hourglass_forward.26} parent=1 // loop_header
      %s11 = sphi 0, %s15
      %p12 = scmp.ge.s32.totalorder %s11, 4
      %s18 = sphi 0, %s30
      %s19 = sphi 0, %s26
      %s20 = sphi 0, %s18
      %s21 = sphi 0, %s19
      %s22 = sphi 0, %s20
      %s23 = sphi 0, %s21
      %s33 = sphi 0, %s35
      %s36 = sphi 0, %s33
      %s37 = sphi 0, %s36
      %s53 = sphi 0, %s37
      %s61 = sphi 0, %s63
      %s64 = sphi 0, %s61
      %s65 = sphi 0, %s64
      %s81 = sphi 0, %s65
      %s85 = sphi 0, %s85
      %s87 = sphi 0, %s85
      %s88 = sphi 0, %s87
      %s102 = sphi 0, %s88
      %s110 = sphi 0, %s112
      %s113 = sphi 0, %s110
      %s114 = sphi 0, %s113
      %s130 = sphi 0, %s114
    $region4: #{hourglass_forward.26} parent=1 // loop_header_branch
      %14 = sbr.rel (%p12) target = $region8
    $region5: #{hourglass_forward.26} parent=1 // loop_body
      %s16 = ssub.s32 %s11, 1
      %s17 = ssub.s32 %s11, 2
      %s24 = sadd.s32 1, %s19
      %p25 = scmp.ge.s32.totalorder %s24, 2
      %s26 = scalar_select %p25, 0, %s24
      %s27 = sadd.s32 1, %s18
      %s28 = scalar_select %p25, %s27, %s18
      %p29 = scmp.ge.s32.totalorder %s28, 1
      %s30 = scalar_select %p29, 0, %s28
      %s31 = ssub.s32 %s18, %s30
      %p32 = scmp.eq.s32.totalorder %s31, 0
      %s34 = sadd.s32 %s33, 1
      %s35 = scalar_select %p32, %s33, %s34
      %p38 = pneg %p32
      %p39 = scmp.eq.s32.totalorder %s11, 1
      %p40 = por %p38, %p39
      %p41 = scmp.ne.s32.totalorder %s33, %s36
      %p42 = scmp.eq.s32.totalorder %s11, 0
      %p43 = por %p41, %p42
      %p44 = scmp.ne.s32.totalorder %s33, %s36
      %p45 = scmp.eq.s32.totalorder %s16, 1
      %p46 = por %p44, %p45
      %p47 = scmp.ne.s32.totalorder %s36, %s37
      %p48 = scmp.eq.s32.totalorder %s16, 0
      %p49 = por %p47, %p48
      %p50 = scmp.ne.s32.totalorder %s36, %s37
      %p51 = scmp.eq.s32.totalorder %s17, 1
      %p52 = por %p50, %p51
      %p54 = scmp.ne.s32.totalorder %s37, %s53
      %p55 = scmp.eq.s32.totalorder %s17, 0
      %p56 = por %p54, %p55
      %s57 = ssub.s32 %s18, %s30
      %s58 = ssub.s32 %s19, %s26
      %s59 = sor.u32 %s57, %s58
      %p60 = scmp.eq.s32.totalorder %s59, 0
      %s62 = sadd.s32 %s61, 1
      %s63 = scalar_select %p60, %s61, %s62
      %p66 = pneg %p60
      %p67 = scmp.eq.s32.totalorder %s11, 1
      %p68 = por %p66, %p67
      %p69 = scmp.ne.s32.totalorder %s61, %s64
      %p70 = scmp.eq.s32.totalorder %s11, 0
      %p71 = por %p69, %p70
      %p72 = scmp.ne.s32.totalorder %s61, %s64
      %p73 = scmp.eq.s32.totalorder %s16, 1
      %p74 = por %p72, %p73
      %p75 = scmp.ne.s32.totalorder %s64, %s65
      %p76 = scmp.eq.s32.totalorder %s16, 0
      %p77 = por %p75, %p76
      %p78 = scmp.ne.s32.totalorder %s64, %s65
      %p79 = scmp.eq.s32.totalorder %s17, 1
      %p80 = por %p78, %p79
      %p82 = scmp.ne.s32.totalorder %s65, %s81
      %p83 = scmp.eq.s32.totalorder %s17, 0
      %p84 = por %p82, %p83
      %s86 = sadd.s32 %s85, 1
      %p89 = scmp.eq.s32.totalorder %s11, 1
      %p90 = scmp.ne.s32.totalorder %s85, %s87
      %p91 = scmp.eq.s32.totalorder %s11, 0
      %p92 = por %p90, %p91
      %p93 = scmp.ne.s32.totalorder %s85, %s87
      %p94 = scmp.eq.s32.totalorder %s16, 1
      %p95 = por %p93, %p94
      %p96 = scmp.ne.s32.totalorder %s87, %s88
      %p97 = scmp.eq.s32.totalorder %s16, 0
      %p98 = por %p96, %p97
      %p99 = scmp.ne.s32.totalorder %s87, %s88
      %p100 = scmp.eq.s32.totalorder %s17, 1
      %p101 = por %p99, %p100
      %p103 = scmp.ne.s32.totalorder %s88, %s102
      %p104 = scmp.eq.s32.totalorder %s17, 0
      %p105 = por %p103, %p104
      %s106 = ssub.s32 %s18, %s30
      %s107 = ssub.s32 %s19, %s26
      %s108 = sor.u32 %s106, %s107
      %p109 = scmp.eq.s32.totalorder %s108, 0
      %s111 = sadd.s32 %s110, 1
      %s112 = scalar_select %p109, %s110, %s111
      %p115 = pneg %p109
      %p116 = scmp.eq.s32.totalorder %s11, 1
      %p117 = por %p115, %p116
      %p118 = scmp.ne.s32.totalorder %s110, %s113
      %p119 = scmp.eq.s32.totalorder %s11, 0
      %p120 = por %p118, %p119
      %p121 = scmp.ne.s32.totalorder %s110, %s113
      %p122 = scmp.eq.s32.totalorder %s16, 1
      %p123 = por %p121, %p122
      %p124 = scmp.ne.s32.totalorder %s113, %s114
      %p125 = scmp.eq.s32.totalorder %s16, 0
      %p126 = por %p124, %p125
      %p127 = scmp.ne.s32.totalorder %s113, %s114
      %p128 = scmp.eq.s32.totalorder %s17, 1
      %p129 = por %p127, %p128
      %p131 = scmp.ne.s32.totalorder %s114, %s130
      %p132 = scmp.eq.s32.totalorder %s17, 0
      %p133 = por %p131, %p132
      %p134 = scmp.le.s32.totalorder 1, %s11
      %p135 = scmp.lt.s32.totalorder %s11, 3
      %p136 = pnand %p134, %p135
      %p137 = pneg %p136
      // Predicated region
      $region9: #{hourglass_forward.26} parent=5 // pred_check
        _
      $region10: #{hourglass_forward.26} parent=5 // pred_check_branch
        %139 = sbr.rel (%p136) target = $region12
      $region11: #{hourglass_forward.26} parent=5 // pred_region
        %s140 = ssub.s32 %s11, 1
        // Predicated region
        $region13: #{hourglass_forward.26} parent=11 // pred_check
          %p141 = pneg %p49
        $region14: #{hourglass_forward.26} parent=11 // pred_check_branch
          %143 = sbr.rel (%p141) target = $region16
        $region15: #{hourglass_forward.26} parent=11 // pred_region
          %p144 = scmp.lt.s32.totalorder %s20, 0
          %s145 = scalar_select %p144, %s20, 0
          %s146 = smul.addr %s145, 2
          %s147 = scalar_lea.vmem %s1, %s146
        $region16: #{hourglass_forward.26} parent=11 // pred_fallthru
          _
        // Predicated region
        $region17: #{hourglass_forward.26} parent=11 // pred_check
          %p148 = pneg %p98
        $region18: #{hourglass_forward.26} parent=11 // pred_check_branch
          %150 = sbr.rel (%p148) target = $region20
        $region19: #{hourglass_forward.26} parent=11 // pred_region
          _
        $region20: #{hourglass_forward.26} parent=11 // pred_fallthru
          _
      $region12: #{hourglass_forward.26} parent=5 // pred_fallthru
        _
      %p151 = scmp.lt.s32.totalorder %s11, 2
      // Predicated region
      $region21: #{hourglass_forward.26} parent=5 // pred_check
        %p152 = pneg %p151
      $region22: #{hourglass_forward.26} parent=5 // pred_check_branch
        %154 = sbr.rel (%p152) target = $region24
      $region23: #{hourglass_forward.26} parent=5 // pred_region
        // Predicated region
        $region25: #{hourglass_forward.26} parent=23 // pred_check
          %p155 = pneg %p71
        $region26: #{hourglass_forward.26} parent=23 // pred_check_branch
          %157 = sbr.rel (%p155) target = $region28
        $region27: #{hourglass_forward.26} parent=23 // pred_region
          %s158 = sand.u32 %s61, 1
          %s159 = sand.u32 %s61, 1
          %s160 = smul.addr %s159, 72
          %s161 = scalar_lea.vmem [#allocation2], %s160
          %s162 = smul.u32 2, %s19
          %s163 = smul.addr %s18, 36
          %s164 = sadd.s32 %s162, %s163
          %s165 = smul.addr %s164, 4
          %s166 = scalar_lea.vmem %s2, %s165
          // Predicated region
          $region29: #{hourglass_forward.26} parent=27 // pred_check
            _
          $region30: #{hourglass_forward.26} parent=27 // pred_check_branch
            %168 = sbr.rel (0) target = $region32
          $region31: #{hourglass_forward.26} parent=27 // pred_region
            // Predicated region
            $region33: #{hourglass_forward.26} parent=31 // pred_check
              _
            $region34: #{hourglass_forward.26} parent=31 // pred_check_branch
              %170 = sbr.rel (0) target = $region36
            $region35: #{hourglass_forward.26} parent=31 // pred_region
              // Predicated region
              $region48: #{hourglass_forward.26} parent=35 // pred_check
                _
              $region49: #{hourglass_forward.26} parent=35 // pred_check_branch
                %201 = sbr.rel (0) target = $region51
              $region50: #{hourglass_forward.26} parent=35 // pred_region
                loop: start=0, step=1, limit=1
                $region52: #{hourglass_forward.26} parent=50 // loop_pre_header
                  _
                $region53: #{hourglass_forward.26} parent=50 // loop_header
                  %s203 = sphi 0, %s207
                  %p204 = scmp.ge.s32.totalorder %s203, 1
                  %s208 = sphi %s166, %s166
                  %s209 = sphi %s161, %s161
                $region54: #{hourglass_forward.26} parent=50 // loop_header_branch
                  %206 = sbr.rel (%p204) target = $region58
                $region55: #{hourglass_forward.26} parent=50 // loop_body
                  %v210 = vld [vmem:[%s208] sm:$0xff]
                  %211 = vst [vmem:[%s209] sm:$0xff] %v210
                  %v212 = vld [vmem:[%s208 + $0x10] sm:$0xff]
                  %213 = vst [vmem:[%s209 + $0x8] sm:$0xff] %v212
                  %v214 = vld [vmem:[%s208 + $0x20] sm:$0xff]
                  %215 = vst [vmem:[%s209 + $0x10] sm:$0xff] %v214
                  %v216 = vld [vmem:[%s208 + $0x30] sm:$0xff]
                  %217 = vst [vmem:[%s209 + $0x18] sm:$0xff] %v216
                  %v218 = vld [vmem:[%s208 + $0x40] sm:$0xff]
                  %219 = vst [vmem:[%s209 + $0x20] sm:$0xff] %v218
                  %v220 = vld [vmem:[%s208 + $0x50] sm:$0xff]
                  %221 = vst [vmem:[%s209 + $0x28] sm:$0xff] %v220
                  %v222 = vld [vmem:[%s208 + $0x60] sm:$0xff]
                  %223 = vst [vmem:[%s209 + $0x30] sm:$0xff] %v222
                  %v224 = vld [vmem:[%s208 + $0x70] sm:$0xff]
                  %225 = vst [vmem:[%s209 + $0x38] sm:$0xff] %v224
                  %v226 = vld [vmem:[%s208 + $0x80] sm:$0xff]
                  %227 = vst [vmem:[%s209 + $0x40] sm:$0xff] %v226
                $region56: #{hourglass_forward.26} parent=50 // loop_footer
                  %s207 = sadd.s32 1, %s203
                $region57: #{hourglass_forward.26} parent=50 // loop_footer_branch
                  %202 = sbr.rel target = $region53
                $region58: #{hourglass_forward.26} parent=50 // loop_exit
                  _
              $region51: #{hourglass_forward.26} parent=35 // pred_fallthru
                _
              // Predicated region
              $region59: #{hourglass_forward.26} parent=35 // pred_check
                _
              $region60: #{hourglass_forward.26} parent=35 // pred_check_branch
                %229 = sbr.rel target = $region62
              $region61: #{hourglass_forward.26} parent=35 // pred_region
                _
              $region62: #{hourglass_forward.26} parent=35 // pred_fallthru
                _
            $region36: #{hourglass_forward.26} parent=31 // pred_fallthru
              _
            // Predicated region
            $region37: #{hourglass_forward.26} parent=31 // pred_check
              _
            $region38: #{hourglass_forward.26} parent=31 // pred_check_branch
              %172 = sbr.rel target = $region40
            $region39: #{hourglass_forward.26} parent=31 // pred_region
              loop: start=0, step=1, limit=1
              $region41: #{hourglass_forward.26} parent=39 // loop_pre_header
                _
              $region42: #{hourglass_forward.26} parent=39 // loop_header
                %s175 = sphi 0, %s179
                %p176 = scmp.ge.s32.totalorder %s175, 1
                %s180 = sphi %s166, %s166
                %s181 = sphi %s161, %s161
              $region43: #{hourglass_forward.26} parent=39 // loop_header_branch
                %178 = sbr.rel (%p176) target = $region47
              $region44: #{hourglass_forward.26} parent=39 // loop_body
                %v182 = vld [vmem:[%s180] sm:$0xff]
                %183 = vst [vmem:[%s181] sm:$0xff] %v182
                %v184 = vld [vmem:[%s180 + $0x10] sm:$0xff]
                %185 = vst [vmem:[%s181 + $0x8] sm:$0xff] %v184
                %v186 = vld [vmem:[%s180 + $0x20] sm:$0xff]
                %187 = vst [vmem:[%s181 + $0x10] sm:$0xff] %v186
                %v188 = vld [vmem:[%s180 + $0x30] sm:$0xff]
                %189 = vst [vmem:[%s181 + $0x18] sm:$0xff] %v188
                %v190 = vld [vmem:[%s180 + $0x40] sm:$0xff]
                %191 = vst [vmem:[%s181 + $0x20] sm:$0xff] %v190
                %v192 = vld [vmem:[%s180 + $0x50] sm:$0xff]
                %193 = vst [vmem:[%s181 + $0x28] sm:$0xff] %v192
                %v194 = vld [vmem:[%s180 + $0x60] sm:$0xff]
                %195 = vst [vmem:[%s181 + $0x30] sm:$0xff] %v194
                %v196 = vld [vmem:[%s180 + $0x70] sm:$0xff]
                %197 = vst [vmem:[%s181 + $0x38] sm:$0xff] %v196
                %v198 = vld [vmem:[%s180 + $0x80] sm:$0xff]
                %199 = vst [vmem:[%s181 + $0x40] sm:$0xff] %v198
              $region45: #{hourglass_forward.26} parent=39 // loop_footer
                %s179 = sadd.s32 1, %s175
              $region46: #{hourglass_forward.26} parent=39 // loop_footer_branch
                %174 = sbr.rel target = $region42
              $region47: #{hourglass_forward.26} parent=39 // loop_exit
                _
            $region40: #{hourglass_forward.26} parent=31 // pred_fallthru
              _
          $region32: #{hourglass_forward.26} parent=27 // pred_fallthru
            _
          %230 = vnop
        $region28: #{hourglass_forward.26} parent=23 // pred_fallthru
          _
      $region24: #{hourglass_forward.26} parent=5 // pred_fallthru
        _
      %p231 = scmp.le.s32.totalorder 1, %s11
      %p232 = scmp.lt.s32.totalorder %s11, 3
      %p233 = pnand %p231, %p232
      %p234 = pneg %p233
      // Predicated region
      $region63: #{hourglass_forward.26} parent=5 // pred_check
        _
      $region64: #{hourglass_forward.26} parent=5 // pred_check_branch
        %236 = sbr.rel (%p233) target = $region66
      $region65: #{hourglass_forward.26} parent=5 // pred_region
        %s237 = ssub.s32 %s11, 1
        %s238 = sand.u32 %s64, 1
        %s239 = sand.u32 %s64, 1
        %s240 = smul.addr %s239, 72
        %s241 = scalar_lea.vmem [#allocation2], %s240
        // Predicated region
        $region67: #{hourglass_forward.26} parent=65 // pred_check
          %p242 = pneg %p77
        $region68: #{hourglass_forward.26} parent=65 // pred_check_branch
          %244 = sbr.rel (%p242) target = $region70
        $region69: #{hourglass_forward.26} parent=65 // pred_region
          _
        $region70: #{hourglass_forward.26} parent=65 // pred_fallthru
          _
        %p245 = scmp.lt.s32.totalorder %s20, 0
        %s246 = scalar_select %p245, %s20, 0
        %s247 = smul.addr %s246, 2
        %s248 = scalar_lea.vmem %s1, %s247
        %p249 = pneg %p49
        %p250 = pneg %p46
        %s251 = sand.u32 %s64, 1
        %s252 = sand.u32 %s64, 1
        %s253 = smul.addr %s252, 72
        %s254 = scalar_lea.vmem [#allocation2], %s253
        %p255 = pneg %p77
        %p256 = pneg %p74
        %p257 = pneg %p98
        %p258 = pneg %p95
        %p259 = pneg %p126
        %p260 = pneg %p123
        %s261 = sand.u32 %s113, 1
        %s262 = sand.u32 %s113, 1
        %s263 = smul.addr %s262, 8
        %s264 = scalar_lea.vmem [#allocation3], %s263
        %p265 = scmp.lt.s32.totalorder %s20, 0
        %s266 = scalar_select %p265, %s20, 0
        %s267 = smul.addr %s266, 2
        %s268 = scalar_lea.vmem %s1, %s267
        %s269 = smul.u32 2, %s21
        %s270 = smul.u32 2, %s21
        %v272 = vld [vmem:[%s268] sm:$0x3]
        %v273 = vld [vmem:[%s241] sm:$0xff]
        %v274 = vld [vmem:[%s241 + $0x8] sm:$0xff]
        %v275 = vld [vmem:[%s241 + $0x10] sm:$0xff]
        %v276 = vld [vmem:[%s241 + $0x18] sm:$0xff]
        %v277 = vld [vmem:[%s241 + $0x20] sm:$0xff]
        %v278 = vld [vmem:[%s241 + $0x28] sm:$0xff]
        %v279 = vld [vmem:[%s241 + $0x30] sm:$0xff]
        %v280 = vld [vmem:[%s241 + $0x38] sm:$0xff]
        %v281 = vld [vmem:[%s241 + $0x40] sm:$0x33]
        %v282 = vld [vmem:[%s3] sm:$0xf]
        %284 = vset.pattern.permute.xlu0 0
        %285 = vperm.xlu0 %284, %v282
        %v286 = vpop.permute.xlu0 %285
        %v297 = vunpack.c.l.b16 %v273
        %v298 = vunpack.c.h.b16 %v273
        %v299 = vunpack.c.l.b16 %v274
        %v300 = vunpack.c.h.b16 %v274
        %v301 = vunpack.c.l.b16 %v275
        %v302 = vunpack.c.h.b16 %v275
        %v303 = vunpack.c.l.b16 %v276
        %v304 = vunpack.c.h.b16 %v276
        %v305 = vunpack.c.l.b16 %v277
        %v306 = vunpack.c.h.b16 %v277
        %v307 = vunpack.c.l.b16 %v278
        %v308 = vunpack.c.h.b16 %v278
        %v309 = vunpack.c.l.b16 %v279
        %v310 = vunpack.c.h.b16 %v279
        %v311 = vunpack.c.l.b16 %v280
        %v312 = vunpack.c.h.b16 %v280
        %v313 = vunpack.c.l.b16 %v281
        %v314 = vunpack.c.h.b16 %v281
        %v315 = vpack.c.b16 %v299, %v297
        %v316 = vpack.c.b16 %v300, %v298
        %v317 = vpack.c.b16 %v303, %v301
        %v318 = vpack.c.b16 %v304, %v302
        %v319 = vpack.c.b16 %v307, %v305
        %v320 = vpack.c.b16 %v308, %v306
        %v321 = vpack.c.b16 %v311, %v309
        %v322 = vpack.c.b16 %v312, %v310
        %v323 = vpack.c.b16 %v313, %v313
        %v324 = vpack.c.b16 %v314, %v314
        %vm333 = vcmask 556032
        %v335 = vsel %vm333, %v272, 0
        %vm337 = vcmask 1041408
        %v339 = vsel %vm337, %v323, 0
        %v342 = vsel %vm337, %v324, 0
        %344 = vmatprep.subr.bf16.mxu0 %v316
        %345 = vmatpush1.bf16.msra.mxu0 %v315
        %346 = vmatprep.subr.bf16.mxu0 %v318
        %347 = vmatpush1.bf16.msra.mxu0 %v317
        %348 = vmatprep.subr.bf16.mxu0 %v320
        %349 = vmatpush1.bf16.msra.mxu0 %v319
        %350 = vmatprep.subr.bf16.mxu0 %v322
        %351 = vmatpush1.bf16.msra.mxu0 %v321
        %352 = vmatprep.subr.bf16.mxu0 %v342
        %353 = vmatpush1.bf16.msra.mxu0 %v339
        %354 = vmatprep.subr.bf16.mxu0 0
        %355 = vmatpush1.bf16.msra.mxu0 0
        %356 = vmatprep.subr.bf16.mxu0 0
        %357 = vmatpush1.bf16.msra.mxu0 0
        %358 = vmatprep.subr.bf16.mxu0 0
        %359 = vmatpush1.bf16.msra.mxu0 0
        %360 = vmatprep.subr.bf16.mxu0 0
        %361 = vmatpush1.bf16.msra.mxu0 0
        %362 = vmatprep.subr.bf16.mxu0 0
        %363 = vmatpush1.bf16.msra.mxu0 0
        %364 = vmatprep.subr.bf16.mxu0 0
        %365 = vmatpush1.bf16.msra.mxu0 0
        %366 = vmatprep.subr.bf16.mxu0 0
        %367 = vmatpush1.bf16.msra.mxu0 0
        %368 = vmatprep.subr.bf16.mxu0 0
        %369 = vmatpush1.bf16.msra.mxu0 0
        %370 = vmatprep.subr.bf16.mxu0 0
        %371 = vmatpush1.bf16.msra.mxu0 0
        %372 = vmatprep.subr.bf16.mxu0 0
        %373 = vmatpush1.bf16.msra.mxu0 0
        %374 = vmatprep.subr.bf16.mxu0 0
        %375 = vmatpush1.bf16.msra.mxu0 0
        %376 = vmatprep.mubr.bf16.mxu0 0
        %377 = vmatmul.mubr.bf16.gmra.mrb[0].mxu0 %v335
        %v378 = vpop.f32.mrb[0].mxu0
        %v379 = vadd.f32 %v286, %v378
        %v380 = vpop.f32.mrb[0].mxu0
        %v381 = vadd.f32 %v286, %v380
        %v382 = vpop.f32.mrb[0].mxu0
        %v383 = vpop.f32.mrb[0].mxu0
        %384 = vdwg.mxu0
        %v385 = vmax.f32 %v379, 0.0
        %v386 = vmax.f32 %v381, 0.0
        %v389 = vcombine.low %v385, %v386
        %391 = vst [vmem:[%s264] sm:$0xff] %v389
        %s392 = sand.u32 %s113, 1
        %s393 = sand.u32 %s113, 1
        %s394 = smul.addr %s393, 8
        %s395 = scalar_lea.vmem [#allocation3], %s394
        // Predicated region
        $region71: #{hourglass_forward.26} parent=65 // pred_check
          %p396 = pneg %p123
        $region72: #{hourglass_forward.26} parent=65 // pred_check_branch
          %398 = sbr.rel (%p396) target = $region74
        $region73: #{hourglass_forward.26} parent=65 // pred_region
          %s399 = smul.u32 2, %s21
          %s400 = smul.addr %s20, 4
          %s401 = sadd.s32 %s399, %s400
          %s402 = smul.addr %s401, 4
          %s403 = scalar_lea.vmem %s5, %s402
          // Predicated region
          $region75: #{hourglass_forward.26} parent=73 // pred_check
            _
          $region76: #{hourglass_forward.26} parent=73 // pred_check_branch
            %405 = sbr.rel (0) target = $region78
          $region77: #{hourglass_forward.26} parent=73 // pred_region
            // Predicated region
            $region79: #{hourglass_forward.26} parent=77 // pred_check
              _
            $region80: #{hourglass_forward.26} parent=77 // pred_check_branch
              %407 = sbr.rel (0) target = $region82
            $region81: #{hourglass_forward.26} parent=77 // pred_region
              // Predicated region
              $region94: #{hourglass_forward.26} parent=81 // pred_check
                _
              $region95: #{hourglass_forward.26} parent=81 // pred_check_branch
                %422 = sbr.rel (0) target = $region97
              $region96: #{hourglass_forward.26} parent=81 // pred_region
                loop: start=0, step=1, limit=1
                $region98: #{hourglass_forward.26} parent=96 // loop_pre_header
                  _
                $region99: #{hourglass_forward.26} parent=96 // loop_header
                  %s424 = sphi 0, %s428
                  %p425 = scmp.ge.s32.totalorder %s424, 1
                  %s429 = sphi %s395, %s395
                  %s430 = sphi %s403, %s403
                $region100: #{hourglass_forward.26} parent=96 // loop_header_branch
                  %427 = sbr.rel (%p425) target = $region104
                $region101: #{hourglass_forward.26} parent=96 // loop_body
                  %v431 = vld [vmem:[%s429] sm:$0xff]
                  %432 = vst [vmem:[%s430] sm:$0xff] %v431
                $region102: #{hourglass_forward.26} parent=96 // loop_footer
                  %s428 = sadd.s32 1, %s424
                $region103: #{hourglass_forward.26} parent=96 // loop_footer_branch
                  %423 = sbr.rel target = $region99
                $region104: #{hourglass_forward.26} parent=96 // loop_exit
                  _
              $region97: #{hourglass_forward.26} parent=81 // pred_fallthru
                _
              // Predicated region
              $region105: #{hourglass_forward.26} parent=81 // pred_check
                _
              $region106: #{hourglass_forward.26} parent=81 // pred_check_branch
                %434 = sbr.rel target = $region108
              $region107: #{hourglass_forward.26} parent=81 // pred_region
                _
              $region108: #{hourglass_forward.26} parent=81 // pred_fallthru
                _
            $region82: #{hourglass_forward.26} parent=77 // pred_fallthru
              _
            // Predicated region
            $region83: #{hourglass_forward.26} parent=77 // pred_check
              _
            $region84: #{hourglass_forward.26} parent=77 // pred_check_branch
              %409 = sbr.rel target = $region86
            $region85: #{hourglass_forward.26} parent=77 // pred_region
              loop: start=0, step=1, limit=1
              $region87: #{hourglass_forward.26} parent=85 // loop_pre_header
                _
              $region88: #{hourglass_forward.26} parent=85 // loop_header
                %s412 = sphi 0, %s416
                %p413 = scmp.ge.s32.totalorder %s412, 1
                %s417 = sphi %s395, %s395
                %s418 = sphi %s403, %s403
              $region89: #{hourglass_forward.26} parent=85 // loop_header_branch
                %415 = sbr.rel (%p413) target = $region93
              $region90: #{hourglass_forward.26} parent=85 // loop_body
                %v419 = vld [vmem:[%s417] sm:$0xff]
                %420 = vst [vmem:[%s418] sm:$0xff] %v419
              $region91: #{hourglass_forward.26} parent=85 // loop_footer
                %s416 = sadd.s32 1, %s412
              $region92: #{hourglass_forward.26} parent=85 // loop_footer_branch
                %411 = sbr.rel target = $region88
              $region93: #{hourglass_forward.26} parent=85 // loop_exit
                _
            $region86: #{hourglass_forward.26} parent=77 // pred_fallthru
              _
          $region78: #{hourglass_forward.26} parent=73 // pred_fallthru
            _
          %435 = vnop
        $region74: #{hourglass_forward.26} parent=65 // pred_fallthru
          _
      $region66: #{hourglass_forward.26} parent=5 // pred_fallthru
        _
      %p436 = scmp.le.s32.totalorder 2, %s11
      // Predicated region
      $region109: #{hourglass_forward.26} parent=5 // pred_check
        %p437 = pneg %p436
      $region110: #{hourglass_forward.26} parent=5 // pred_check_branch
        %439 = sbr.rel (%p437) target = $region112
      $region111: #{hourglass_forward.26} parent=5 // pred_region
        %s440 = ssub.s32 %s11, 2
        // Predicated region
        $region113: #{hourglass_forward.26} parent=111 // pred_check
          %p441 = pneg %p129
        $region114: #{hourglass_forward.26} parent=111 // pred_check_branch
          %443 = sbr.rel (%p441) target = $region116
        $region115: #{hourglass_forward.26} parent=111 // pred_region
          %s444 = sand.u32 %s114, 1
          %s445 = sand.u32 %s114, 1
          %s446 = smul.addr %s445, 8
          %s447 = scalar_lea.vmem [#allocation3], %s446
        $region116: #{hourglass_forward.26} parent=111 // pred_fallthru
          _
      $region112: #{hourglass_forward.26} parent=5 // pred_fallthru
        _
    $region6: #{hourglass_forward.26} parent=1 // loop_footer
      %s15 = sadd.s32 1, %s11
    $region7: #{hourglass_forward.26} parent=1 // loop_footer_branch
      %10 = sbr.rel target = $region3
    $region8: #{hourglass_forward.26} parent=1 // loop_exit
      _

</llo_original>
